<compile_context>
chip_gen: v7x
topology: tpu7x:2x2x1
jax: 0.10.0
libtpu: 0.0.40
codegen_flags: <defaults>
</compile_context>

<pallas_src>
import math
import functools

import jax
import jax.numpy as jnp
import numpy as np
from jax import lax
from jax.experimental import pallas as pl
from jax.experimental.pallas import tpu as pltpu


def _pos_embed_kernel(mask_ref, l_ref, u_ref, inv_ref, ph_ref, out_ref, flat_scr,
                      *, normalize, scale, rows_per_tile, dot_precision):
    Bt, H, W = mask_ref.shape
    P = inv_ref.shape[0]
    rpt = rows_per_tile
    tile = rpt * W

    t = pl.program_id(1)                        # HW (row-group) tile index
    row0 = pl.multiple_of(t * rpt, rpt)         # first global row of this tile

    u = u_ref[...]                              # (W, W) upper-tri ones  -> cumsum along W
    l_t = l_ref[pl.ds(row0, rpt), :]            # (rpt, H) rows of lower-tri ones -> cumsum along H

    # Hoisted once per grid step (JAX does not CSE broadcast_in_dim inside the unrolled b loop).
    inv_b = jnp.broadcast_to(inv_ref[...], (P, tile))    # 1 / dim_t per channel
    ph_b = jnp.broadcast_to(ph_ref[...], (P, tile))      # 0 (even ch) or pi/2 (odd ch)

    for b in range(Bt):                         # Bt is small and static -> unrolled
        m = mask_ref[b]                         # (H, W)
        m_t = mask_ref[b, pl.ds(row0, rpt), :]  # (rpt, W) rows belonging to this tile

        # Cumulative sums for this row tile as triangular matmuls on the MXU
        # (exact for 0/1 operands with f32 accumulation).
        y_t = jnp.dot(l_t, m, preferred_element_type=jnp.float32,
                      precision=dot_precision)   # (rpt, W): cumsum over H for rows [row0, row0+rpt)
        x_t = jnp.dot(m_t, u, preferred_element_type=jnp.float32,
                      precision=dot_precision)   # (rpt, W): cumsum over W for those rows

        if normalize:
            eps = 1e-6
            col_tot = jnp.sum(m.astype(jnp.float32), axis=0, keepdims=True)   # (1, W) column totals
            y_t = y_t / (col_tot + eps) * scale
            x_t = x_t / (x_t[:, W - 1:W] + eps) * scale

        # Flatten (rpt, W) -> (1, rpt*W) onto the lane axis with static row stores into this batch
        # element's own scratch rows (per-b scratch: the unrolled loop does not serialize on it).
        for r in range(rpt):
            flat_scr[2 * b:2 * b + 1, r * W:(r + 1) * W] = y_t[r:r + 1, :]
            flat_scr[2 * b + 1:2 * b + 2, r * W:(r + 1) * W] = x_t[r:r + 1, :]
        y_flat = flat_scr[2 * b:2 * b + 1, :]           # (1, tile)
        x_flat = flat_scr[2 * b + 1:2 * b + 2, :]       # (1, tile)

        # Channel c of each P-group: sin(embed / dim_t[c] + phase[c])
        #   == sin(arg) for even c, cos(arg) for odd c  (valid because dim_t[2k] == dim_t[2k+1]).
        out_ref[b, 0:P, :] = jnp.sin(y_flat * inv_b + ph_b).astype(out_ref.dtype)       # pos_y
        out_ref[b, P:2 * P, :] = jnp.sin(x_flat * inv_b + ph_b).astype(out_ref.dtype)   # pos_x


def _vmem_capacity_bytes():
    try:
        return int(pltpu.get_tpu_info().vmem_capacity_bytes)
    except Exception:
        return 64 * 1024 * 1024     # conservative default (v7x per-TC VMEM)


def _pick_row_tile(H, W, max_lanes=8192, max_rows=64):
    """Rows per HW tile.  Prefers rpt | H with (rpt*W) % 128 == 0 (lane-dense stores), a short
    static flatten (rpt <= max_rows) and <= max_lanes lanes.  Falls back to the full map (always
    layout-legal since the block then equals the array dims)."""
    if H <= max_rows and H * W <= max_lanes:
        return H
    best = None
    for rpt in range(1, min(H, max_rows) + 1):
        if H % rpt or (rpt * W) % 128 or rpt * W > max_lanes:
            continue
        best = rpt
    return best if best is not None else H


def _pick_batch_tile(batch, per_batch_block_bytes, target_bytes, max_bt):
    """Largest divisor of `batch` (<= max_bt) whose output block stays <= target_bytes.
    No minimum-grid-steps constraint: the HW-tile grid axis supplies parallel steps."""
    best = 1
    for d in range(1, min(batch, max_bt) + 1):
        if batch % d == 0 and d * per_batch_block_bytes <= target_bytes:
            best = d
    return best


def position_embedding_sine(mask, *, num_pos_feats=64, temperature=10000,
                            normalize=False, scale=None, out_dtype=jnp.float32):
    """Matches PositionEmbeddingSine.forward(x, mask); `x` only supplies device/dtype.

    mask: (B, H, W) bool / int (exact bf16 MXU path) or float (f32 HIGHEST-precision path).
    Returns (B, 2*num_pos_feats, H, W) in `out_dtype` (float32 by default), NCHW.
    NOTE: as specified, the module cumsums `mask` directly (standard DETR uses ~mask);
    pass the inverted mask if the DETR convention is needed.
    """
    if scale is not None and normalize is False:
        raise ValueError("normalize should be True if scale is passed")
    if scale is None:
        scale = 2 * math.pi

    B, H, W = mask.shape
    P = num_pos_feats
    HW = H * W

    binary_mask = (jnp.issubdtype(mask.dtype, jnp.bool_)
                   or jnp.issubdtype(mask.dtype, jnp.integer))
    mat_dtype = jnp.bfloat16 if binary_mask else jnp.float32           # 0/1 values exact in bf16
    dot_precision = None if binary_mask else lax.Precision.HIGHEST     # keep float masks in f32

    mask_c = mask.astype(mat_dtype)

    # Loop-invariant constants, built once in the wrapper (hoisted out of the kernel body).
    L = (jnp.arange(H)[None, :] <= jnp.arange(H)[:, None]).astype(mat_dtype)   # (H, H) lower-tri
    U = (jnp.arange(W)[:, None] <= jnp.arange(W)[None, :]).astype(mat_dtype)   # (W, W) upper-tri
    i = jnp.arange(P, dtype=jnp.float32)
    dim_t = jnp.asarray(temperature, jnp.float32) ** (2.0 * jnp.floor(i / 2.0) / P)
    inv_dim = (1.0 / dim_t).reshape(P, 1)
    # dim_t[2k] == dim_t[2k+1]  =>  odd channels are cos(arg) = sin(arg + pi/2).
    phase = jnp.where((jnp.arange(P) % 2) == 1,
                      jnp.float32(math.pi / 2.0), jnp.float32(0.0)).reshape(P, 1)

    # --- tiling / VMEM budgeting -------------------------------------------------------------
    rpt = _pick_row_tile(H, W)
    tile = rpt * W
    n_t = H // rpt

    out_elem = np.dtype(out_dtype).itemsize
    mat_elem = np.dtype(mat_dtype).itemsize
    per_batch_block_bytes = 2 * P * tile * out_elem

    vmem_cap = _vmem_capacity_bytes()
    big_vmem = vmem_cap >= 96 * 1024 * 1024          # v5e / v6e (single TC, 128 MiB VMEM)
    bt = _pick_batch_tile(B, per_batch_block_bytes,
                          target_bytes=(8 << 20) if big_vmem else (4 << 20),
                          max_bt=16 if big_vmem else 8)

    out_block_bytes = bt * per_batch_block_bytes
    mask_block_bytes = bt * H * W * mat_elem
    const_bytes = (H * H + W * W) * mat_elem + 8 * P
    scratch_bytes = 2 * bt * tile * 4
    hoisted_bytes = 2 * P * tile * 4                 # broadcast 1/dim_t and phase
    budget = (2 * out_block_bytes + 2 * mask_block_bytes + const_bytes
              + scratch_bytes + hoisted_bytes + (16 << 20))
    vmem_limit = int(min(48 << 20, max(32 << 20, budget)))

    kernel = functools.partial(_pos_embed_kernel, normalize=normalize, scale=float(scale),
                               rows_per_tile=rpt, dot_precision=dot_precision)

    out_flat = pl.pallas_call(
        kernel,
        out_shape=jax.ShapeDtypeStruct((B, 2 * P, HW), out_dtype),
        grid_spec=pltpu.PrefetchScalarGridSpec(
            num_scalar_prefetch=0,
            grid=(B // bt, n_t),
            in_specs=[
                pl.BlockSpec((bt, H, W), lambda b, t: (b, 0, 0)),   # mask (constant across t)
                pl.BlockSpec((H, H), lambda b, t: (0, 0)),          # L (constant -> fetched once)
                pl.BlockSpec((W, W), lambda b, t: (0, 0)),          # U
                pl.BlockSpec((P, 1), lambda b, t: (0, 0)),          # 1 / dim_t
                pl.BlockSpec((P, 1), lambda b, t: (0, 0)),          # phase
            ],
            out_specs=pl.BlockSpec((bt, 2 * P, tile), lambda b, t: (b, 0, t)),
            scratch_shapes=[pltpu.VMEM((2 * bt, tile), jnp.float32)],
        ),
        compiler_params=pltpu.CompilerParams(
            dimension_semantics=("parallel", "parallel"),
            vmem_limit_bytes=vmem_limit,
        ),
    )(mask_c, L, U, inv_dim, phase)

    # Free metadata reshape to PyTorch NCHW (no data movement, no transpose).
    return out_flat.reshape(B, 2 * P, H, W)


def _reference(mask, *, num_pos_feats=64, temperature=10000, normalize=False, scale=None):
    """Pure-JAX reference mirroring the PyTorch forward."""
    if scale is None:
        scale = 2 * math.pi
    mask = mask.astype(jnp.float32)
    y_embed = jnp.cumsum(mask, axis=1)
    x_embed = jnp.cumsum(mask, axis=2)
    if normalize:
        eps = 1e-6
        y_embed = y_embed / (y_embed[:, -1:, :] + eps) * scale
        x_embed = x_embed / (x_embed[:, :, -1:] + eps) * scale
    i = jnp.arange(num_pos_feats, dtype=jnp.float32)
    dim_t = jnp.asarray(temperature, jnp.float32) ** (2.0 * jnp.floor(i / 2.0) / num_pos_feats)
    pos_x = x_embed[:, :, :, None] / dim_t
    pos_y = y_embed[:, :, :, None] / dim_t
    pos_x = jnp.stack((jnp.sin(pos_x[:, :, :, 0::2]), jnp.cos(pos_x[:, :, :, 1::2])),
                      axis=4).reshape(*pos_x.shape[:3], -1)
    pos_y = jnp.stack((jnp.sin(pos_y[:, :, :, 0::2]), jnp.cos(pos_y[:, :, :, 1::2])),
                      axis=4).reshape(*pos_y.shape[:3], -1)
    pos = jnp.concatenate((pos_y, pos_x), axis=3)
    return jnp.transpose(pos, (0, 3, 1, 2))


if __name__ == "__main__":
    key = jax.random.PRNGKey(0)
    kx, km, km4, kbig = jax.random.split(key, 4)

    B, C, H, W = 2, 4, 16, 16
    P = 64

    # x only supplies device/dtype in the PyTorch module; the embedding depends on mask alone.
    x = jax.random.normal(kx, (B, C, H, W), jnp.float32)
    mask = jax.random.uniform(km, (B, H, W)) > 0.2      # bool mask (mostly valid pixels)

    # default module config (normalize=False)
    out = position_embedding_sine(mask, num_pos_feats=P, temperature=10000, normalize=False)
    out = jax.block_until_ready(out)
    ref = _reference(mask, num_pos_feats=P, temperature=10000, normalize=False)
    assert out.shape == (B, 2 * P, H, W)
    assert jnp.allclose(out, ref, atol=1e-4, rtol=1e-4)

    # normalize=True path (DETR default usage)
    out_n = position_embedding_sine(mask, num_pos_feats=P, normalize=True)
    out_n = jax.block_until_ready(out_n)
    ref_n = _reference(mask, num_pos_feats=P, normalize=True)
    assert jnp.allclose(out_n, ref_n, atol=1e-4, rtol=1e-4)

    # larger batch exercises the batch-tiled (bt > 1) path
    mask4 = jax.random.uniform(km4, (4, H, W)) > 0.2
    out4 = position_embedding_sine(mask4, num_pos_feats=P, normalize=True)
    out4 = jax.block_until_ready(out4)
    ref4 = _reference(mask4, num_pos_feats=P, normalize=True)
    assert jnp.allclose(out4, ref4, atol=1e-4, rtol=1e-4)

    # larger feature map exercises the tiled H*W grid axis (rows_per_tile < H, n_t > 1)
    mask_big = jax.random.uniform(kbig, (2, 64, 256)) > 0.3
    out_big = position_embedding_sine(mask_big, num_pos_feats=P, normalize=True)
    out_big = jax.block_until_ready(out_big)
    ref_big = _reference(mask_big, num_pos_feats=P, normalize=True)
    assert out_big.shape == (2, 2 * P, 64, 256)
    assert jnp.allclose(out_big, ref_big, atol=1e-4, rtol=1e-4)

    # optional bf16 output (halves HBM writeback; looser tolerance by construction)
    out_bf = position_embedding_sine(mask, num_pos_feats=P, normalize=True,
                                     out_dtype=jnp.bfloat16)
    out_bf = jax.block_until_ready(out_bf)
    assert out_bf.dtype == jnp.bfloat16
    assert jnp.allclose(out_bf.astype(jnp.float32), ref_n, atol=1e-2, rtol=1e-2)

    print("KERNEL_OK")
</pallas_src>

<mosaic_0001>
module attributes {stable_mosaic.version = 11 : i64} {
  func.func @_pos_embed_kernel(%arg0: i32, %arg1: i32, %arg2: memref<2x16x16xbf16, #tpu.memory_space<vmem>>, %arg3: memref<16x16xbf16, #tpu.memory_space<vmem>>, %arg4: memref<16x16xbf16, #tpu.memory_space<vmem>>, %arg5: memref<64x1xf32, #tpu.memory_space<vmem>>, %arg6: memref<64x1xf32, #tpu.memory_space<vmem>>, %arg7: memref<2x128x256xf32, #tpu.memory_space<vmem>>, %arg8: memref<4x256xf32, #tpu.memory_space<vmem>>) attributes {dimension_semantics = [#tpu.dimension_semantics<parallel>, #tpu.dimension_semantics<parallel>], iteration_bounds = array<i64: 1, 1>, scalar_prefetch = 0 : i64, scratch_operands = 1 : i64, tpu.core_type = #tpu.core_type<tc>, window_params = [{transform_indices = @transform_0, window_bounds = array<i64: 2, 16, 16>}, {pipeline_mode = #tpu.pipeline_mode<synchronous>, transform_indices = @transform_1, window_bounds = array<i64: 16, 16>}, {pipeline_mode = #tpu.pipeline_mode<synchronous>, transform_indices = @transform_2, window_bounds = array<i64: 16, 16>}, {pipeline_mode = #tpu.pipeline_mode<synchronous>, transform_indices = @transform_3, window_bounds = array<i64: 64, 1>}, {pipeline_mode = #tpu.pipeline_mode<synchronous>, transform_indices = @transform_4, window_bounds = array<i64: 64, 1>}, {transform_indices = @transform_5, window_bounds = array<i64: 2, 128, 256>}]} {
    %c16_i32 = arith.constant 16 : i32
    %0 = arith.muli %arg1, %c16_i32 : i32
    %1 = tpu.assume_multiple %0, 16 : i32
    %c0 = arith.constant 0 : index
    %c0_0 = arith.constant 0 : index
    %2 = vector.load %arg4[%c0, %c0_0] : memref<16x16xbf16, #tpu.memory_space<vmem>>, vector<16x16xbf16>
    %3 = arith.index_cast %1 : i32 to index
    %c0_1 = arith.constant 0 : index
    %4 = vector.load %arg3[%3, %c0_1] : memref<16x16xbf16, #tpu.memory_space<vmem>>, vector<16x16xbf16>
    %c0_2 = arith.constant 0 : index
    %c0_3 = arith.constant 0 : index
    %5 = vector.load %arg5[%c0_2, %c0_3] : memref<64x1xf32, #tpu.memory_space<vmem>>, vector<64x1xf32>
    %6 = vector.shape_cast %5 : vector<64x1xf32> to vector<64x1xf32>
    %7 = vector.broadcast %6 : vector<64x1xf32> to vector<64x256xf32>
    %c0_4 = arith.constant 0 : index
    %c0_5 = arith.constant 0 : index
    %8 = vector.load %arg6[%c0_4, %c0_5] : memref<64x1xf32, #tpu.memory_space<vmem>>, vector<64x1xf32>
    %9 = vector.shape_cast %8 : vector<64x1xf32> to vector<64x1xf32>
    %10 = vector.broadcast %9 : vector<64x1xf32> to vector<64x256xf32>
    %c0_6 = arith.constant 0 : index
    %c0_7 = arith.constant 0 : index
    %c0_8 = arith.constant 0 : index
    %11 = vector.load %arg2[%c0_6, %c0_7, %c0_8] : memref<2x16x16xbf16, #tpu.memory_space<vmem>>, vector<1x16x16xbf16>
    %12 = vector.shape_cast %11 : vector<1x16x16xbf16> to vector<16x16xbf16>
    %c0_9 = arith.constant 0 : index
    %13 = arith.index_cast %1 : i32 to index
    %c0_10 = arith.constant 0 : index
    %14 = vector.load %arg2[%c0_9, %13, %c0_10] : memref<2x16x16xbf16, #tpu.memory_space<vmem>>, vector<1x16x16xbf16>
    %15 = vector.shape_cast %14 : vector<1x16x16xbf16> to vector<16x16xbf16>
    %cst = arith.constant dense<0.000000e+00> : vector<16x16xf32>
    %16 = tpu.matmul %4, %12, %cst {dimension_numbers = #tpu.dot_dimension_numbers<[1], [0], [0], [1], [0, 0, 1, 1], [], []>} : vector<16x16xbf16>, vector<16x16xbf16>, vector<16x16xf32> -> vector<16x16xf32>
    %cst_11 = arith.constant dense<0.000000e+00> : vector<16x16xf32>
    %17 = tpu.matmul %15, %2, %cst_11 {dimension_numbers = #tpu.dot_dimension_numbers<[1], [0], [0], [1], [0, 0, 1, 1], [], []>} : vector<16x16xbf16>, vector<16x16xbf16>, vector<16x16xf32> -> vector<16x16xf32>
    %18 = vector.extract_strided_slice %16 {offsets = [0, 0], sizes = [1, 16], strides = [1, 1]} : vector<16x16xf32> to vector<1x16xf32>
    %c0_12 = arith.constant 0 : index
    %c0_13 = arith.constant 0 : index
    %19 = vector.load %arg8[%c0_12, %c0_13] : memref<4x256xf32, #tpu.memory_space<vmem>>, vector<1x16xf32>
    tpu.vector_store %arg8[%c0_12, %c0_13], %18 {strides = array<i32>} : memref<4x256xf32, #tpu.memory_space<vmem>>, vector<1x16xf32>,
    %20 = vector.extract_strided_slice %17 {offsets = [0, 0], sizes = [1, 16], strides = [1, 1]} : vector<16x16xf32> to vector<1x16xf32>
    %c1 = arith.constant 1 : index
    %c0_14 = arith.constant 0 : index
    %21 = vector.load %arg8[%c1, %c0_14] : memref<4x256xf32, #tpu.memory_space<vmem>>, vector<1x16xf32>
    tpu.vector_store %arg8[%c1, %c0_14], %20 {strides = array<i32>} : memref<4x256xf32, #tpu.memory_space<vmem>>, vector<1x16xf32>,
    %22 = vector.extract_strided_slice %16 {offsets = [1, 0], sizes = [1, 16], strides = [1, 1]} : vector<16x16xf32> to vector<1x16xf32>
    %c0_15 = arith.constant 0 : index
    %c16 = arith.constant 16 : index
    %23 = vector.load %arg8[%c0_15, %c16] : memref<4x256xf32, #tpu.memory_space<vmem>>, vector<1x16xf32>
    tpu.vector_store %arg8[%c0_15, %c16], %22 {strides = array<i32>} : memref<4x256xf32, #tpu.memory_space<vmem>>, vector<1x16xf32>,
    %24 = vector.extract_strided_slice %17 {offsets = [1, 0], sizes = [1, 16], strides = [1, 1]} : vector<16x16xf32> to vector<1x16xf32>
    %c1_16 = arith.constant 1 : index
    %c16_17 = arith.constant 16 : index
    %25 = vector.load %arg8[%c1_16, %c16_17] : memref<4x256xf32, #tpu.memory_space<vmem>>, vector<1x16xf32>
    tpu.vector_store %arg8[%c1_16, %c16_17], %24 {strides = array<i32>} : memref<4x256xf32, #tpu.memory_space<vmem>>, vector<1x16xf32>,
    %26 = vector.extract_strided_slice %16 {offsets = [2, 0], sizes = [1, 16], strides = [1, 1]} : vector<16x16xf32> to vector<1x16xf32>
    %c0_18 = arith.constant 0 : index
    %c32 = arith.constant 32 : index
    %27 = vector.load %arg8[%c0_18, %c32] : memref<4x256xf32, #tpu.memory_space<vmem>>, vector<1x16xf32>
    tpu.vector_store %arg8[%c0_18, %c32], %26 {strides = array<i32>} : memref<4x256xf32, #tpu.memory_space<vmem>>, vector<1x16xf32>,
    %28 = vector.extract_strided_slice %17 {offsets = [2, 0], sizes = [1, 16], strides = [1, 1]} : vector<16x16xf32> to vector<1x16xf32>
    %c1_19 = arith.constant 1 : index
    %c32_20 = arith.constant 32 : index
    %29 = vector.load %arg8[%c1_19, %c32_20] : memref<4x256xf32, #tpu.memory_space<vmem>>, vector<1x16xf32>
    tpu.vector_store %arg8[%c1_19, %c32_20], %28 {strides = array<i32>} : memref<4x256xf32, #tpu.memory_space<vmem>>, vector<1x16xf32>,
    %30 = vector.extract_strided_slice %16 {offsets = [3, 0], sizes = [1, 16], strides = [1, 1]} : vector<16x16xf32> to vector<1x16xf32>
    %c0_21 = arith.constant 0 : index
    %c48 = arith.constant 48 : index
    %31 = vector.load %arg8[%c0_21, %c48] : memref<4x256xf32, #tpu.memory_space<vmem>>, vector<1x16xf32>
    tpu.vector_store %arg8[%c0_21, %c48], %30 {strides = array<i32>} : memref<4x256xf32, #tpu.memory_space<vmem>>, vector<1x16xf32>,
    %32 = vector.extract_strided_slice %17 {offsets = [3, 0], sizes = [1, 16], strides = [1, 1]} : vector<16x16xf32> to vector<1x16xf32>
    %c1_22 = arith.constant 1 : index
    %c48_23 = arith.constant 48 : index
    %33 = vector.load %arg8[%c1_22, %c48_23] : memref<4x256xf32, #tpu.memory_space<vmem>>, vector<1x16xf32>
    tpu.vector_store %arg8[%c1_22, %c48_23], %32 {strides = array<i32>} : memref<4x256xf32, #tpu.memory_space<vmem>>, vector<1x16xf32>,
    %34 = vector.extract_strided_slice %16 {offsets = [4, 0], sizes = [1, 16], strides = [1, 1]} : vector<16x16xf32> to vector<1x16xf32>
    %c0_24 = arith.constant 0 : index
    %c64 = arith.constant 64 : index
    %35 = vector.load %arg8[%c0_24, %c64] : memref<4x256xf32, #tpu.memory_space<vmem>>, vector<1x16xf32>
    tpu.vector_store %arg8[%c0_24, %c64], %34 {strides = array<i32>} : memref<4x256xf32, #tpu.memory_space<vmem>>, vector<1x16xf32>,
    %36 = vector.extract_strided_slice %17 {offsets = [4, 0], sizes = [1, 16], strides = [1, 1]} : vector<16x16xf32> to vector<1x16xf32>
    %c1_25 = arith.constant 1 : index
    %c64_26 = arith.constant 64 : index
    %37 = vector.load %arg8[%c1_25, %c64_26] : memref<4x256xf32, #tpu.memory_space<vmem>>, vector<1x16xf32>
    tpu.vector_store %arg8[%c1_25, %c64_26], %36 {strides = array<i32>} : memref<4x256xf32, #tpu.memory_space<vmem>>, vector<1x16xf32>,
    %38 = vector.extract_strided_slice %16 {offsets = [5, 0], sizes = [1, 16], strides = [1, 1]} : vector<16x16xf32> to vector<1x16xf32>
    %c0_27 = arith.constant 0 : index
    %c80 = arith.constant 80 : index
    %39 = vector.load %arg8[%c0_27, %c80] : memref<4x256xf32, #tpu.memory_space<vmem>>, vector<1x16xf32>
    tpu.vector_store %arg8[%c0_27, %c80], %38 {strides = array<i32>} : memref<4x256xf32, #tpu.memory_space<vmem>>, vector<1x16xf32>,
    %40 = vector.extract_strided_slice %17 {offsets = [5, 0], sizes = [1, 16], strides = [1, 1]} : vector<16x16xf32> to vector<1x16xf32>
    %c1_28 = arith.constant 1 : index
    %c80_29 = arith.constant 80 : index
    %41 = vector.load %arg8[%c1_28, %c80_29] : memref<4x256xf32, #tpu.memory_space<vmem>>, vector<1x16xf32>
    tpu.vector_store %arg8[%c1_28, %c80_29], %40 {strides = array<i32>} : memref<4x256xf32, #tpu.memory_space<vmem>>, vector<1x16xf32>,
    %42 = vector.extract_strided_slice %16 {offsets = [6, 0], sizes = [1, 16], strides = [1, 1]} : vector<16x16xf32> to vector<1x16xf32>
    %c0_30 = arith.constant 0 : index
    %c96 = arith.constant 96 : index
    %43 = vector.load %arg8[%c0_30, %c96] : memref<4x256xf32, #tpu.memory_space<vmem>>, vector<1x16xf32>
    tpu.vector_store %arg8[%c0_30, %c96], %42 {strides = array<i32>} : memref<4x256xf32, #tpu.memory_space<vmem>>, vector<1x16xf32>,
    %44 = vector.extract_strided_slice %17 {offsets = [6, 0], sizes = [1, 16], strides = [1, 1]} : vector<16x16xf32> to vector<1x16xf32>
    %c1_31 = arith.constant 1 : index
    %c96_32 = arith.constant 96 : index
    %45 = vector.load %arg8[%c1_31, %c96_32] : memref<4x256xf32, #tpu.memory_space<vmem>>, vector<1x16xf32>
    tpu.vector_store %arg8[%c1_31, %c96_32], %44 {strides = array<i32>} : memref<4x256xf32, #tpu.memory_space<vmem>>, vector<1x16xf32>,
    %46 = vector.extract_strided_slice %16 {offsets = [7, 0], sizes = [1, 16], strides = [1, 1]} : vector<16x16xf32> to vector<1x16xf32>
    %c0_33 = arith.constant 0 : index
    %c112 = arith.constant 112 : index
    %47 = vector.load %arg8[%c0_33, %c112] : memref<4x256xf32, #tpu.memory_space<vmem>>, vector<1x16xf32>
    tpu.vector_store %arg8[%c0_33, %c112], %46 {strides = array<i32>} : memref<4x256xf32, #tpu.memory_space<vmem>>, vector<1x16xf32>,
    %48 = vector.extract_strided_slice %17 {offsets = [7, 0], sizes = [1, 16], strides = [1, 1]} : vector<16x16xf32> to vector<1x16xf32>
    %c1_34 = arith.constant 1 : index
    %c112_35 = arith.constant 112 : index
    %49 = vector.load %arg8[%c1_34, %c112_35] : memref<4x256xf32, #tpu.memory_space<vmem>>, vector<1x16xf32>
    tpu.vector_store %arg8[%c1_34, %c112_35], %48 {strides = array<i32>} : memref<4x256xf32, #tpu.memory_space<vmem>>, vector<1x16xf32>,
    %50 = vector.extract_strided_slice %16 {offsets = [8, 0], sizes = [1, 16], strides = [1, 1]} : vector<16x16xf32> to vector<1x16xf32>
    %c0_36 = arith.constant 0 : index
    %c128 = arith.constant 128 : index
    %51 = vector.load %arg8[%c0_36, %c128] : memref<4x256xf32, #tpu.memory_space<vmem>>, vector<1x16xf32>
    tpu.vector_store %arg8[%c0_36, %c128], %50 {strides = array<i32>} : memref<4x256xf32, #tpu.memory_space<vmem>>, vector<1x16xf32>,
    %52 = vector.extract_strided_slice %17 {offsets = [8, 0], sizes = [1, 16], strides = [1, 1]} : vector<16x16xf32> to vector<1x16xf32>
    %c1_37 = arith.constant 1 : index
    %c128_38 = arith.constant 128 : index
    %53 = vector.load %arg8[%c1_37, %c128_38] : memref<4x256xf32, #tpu.memory_space<vmem>>, vector<1x16xf32>
    tpu.vector_store %arg8[%c1_37, %c128_38], %52 {strides = array<i32>} : memref<4x256xf32, #tpu.memory_space<vmem>>, vector<1x16xf32>,
    %54 = vector.extract_strided_slice %16 {offsets = [9, 0], sizes = [1, 16], strides = [1, 1]} : vector<16x16xf32> to vector<1x16xf32>
    %c0_39 = arith.constant 0 : index
    %c144 = arith.constant 144 : index
    %55 = vector.load %arg8[%c0_39, %c144] : memref<4x256xf32, #tpu.memory_space<vmem>>, vector<1x16xf32>
    tpu.vector_store %arg8[%c0_39, %c144], %54 {strides = array<i32>} : memref<4x256xf32, #tpu.memory_space<vmem>>, vector<1x16xf32>,
    %56 = vector.extract_strided_slice %17 {offsets = [9, 0], sizes = [1, 16], strides = [1, 1]} : vector<16x16xf32> to vector<1x16xf32>
    %c1_40 = arith.constant 1 : index
    %c144_41 = arith.constant 144 : index
    %57 = vector.load %arg8[%c1_40, %c144_41] : memref<4x256xf32, #tpu.memory_space<vmem>>, vector<1x16xf32>
    tpu.vector_store %arg8[%c1_40, %c144_41], %56 {strides = array<i32>} : memref<4x256xf32, #tpu.memory_space<vmem>>, vector<1x16xf32>,
    %58 = vector.extract_strided_slice %16 {offsets = [10, 0], sizes = [1, 16], strides = [1, 1]} : vector<16x16xf32> to vector<1x16xf32>
    %c0_42 = arith.constant 0 : index
    %c160 = arith.constant 160 : index
    %59 = vector.load %arg8[%c0_42, %c160] : memref<4x256xf32, #tpu.memory_space<vmem>>, vector<1x16xf32>
    tpu.vector_store %arg8[%c0_42, %c160], %58 {strides = array<i32>} : memref<4x256xf32, #tpu.memory_space<vmem>>, vector<1x16xf32>,
    %60 = vector.extract_strided_slice %17 {offsets = [10, 0], sizes = [1, 16], strides = [1, 1]} : vector<16x16xf32> to vector<1x16xf32>
    %c1_43 = arith.constant 1 : index
    %c160_44 = arith.constant 160 : index
    %61 = vector.load %arg8[%c1_43, %c160_44] : memref<4x256xf32, #tpu.memory_space<vmem>>, vector<1x16xf32>
    tpu.vector_store %arg8[%c1_43, %c160_44], %60 {strides = array<i32>} : memref<4x256xf32, #tpu.memory_space<vmem>>, vector<1x16xf32>,
    %62 = vector.extract_strided_slice %16 {offsets = [11, 0], sizes = [1, 16], strides = [1, 1]} : vector<16x16xf32> to vector<1x16xf32>
    %c0_45 = arith.constant 0 : index
    %c176 = arith.constant 176 : index
    %63 = vector.load %arg8[%c0_45, %c176] : memref<4x256xf32, #tpu.memory_space<vmem>>, vector<1x16xf32>
    tpu.vector_store %arg8[%c0_45, %c176], %62 {strides = array<i32>} : memref<4x256xf32, #tpu.memory_space<vmem>>, vector<1x16xf32>,
    %64 = vector.extract_strided_slice %17 {offsets = [11, 0], sizes = [1, 16], strides = [1, 1]} : vector<16x16xf32> to vector<1x16xf32>
    %c1_46 = arith.constant 1 : index
    %c176_47 = arith.constant 176 : index
    %65 = vector.load %arg8[%c1_46, %c176_47] : memref<4x256xf32, #tpu.memory_space<vmem>>, vector<1x16xf32>
    tpu.vector_store %arg8[%c1_46, %c176_47], %64 {strides = array<i32>} : memref<4x256xf32, #tpu.memory_space<vmem>>, vector<1x16xf32>,
    %66 = vector.extract_strided_slice %16 {offsets = [12, 0], sizes = [1, 16], strides = [1, 1]} : vector<16x16xf32> to vector<1x16xf32>
    %c0_48 = arith.constant 0 : index
    %c192 = arith.constant 192 : index
    %67 = vector.load %arg8[%c0_48, %c192] : memref<4x256xf32, #tpu.memory_space<vmem>>, vector<1x16xf32>
    tpu.vector_store %arg8[%c0_48, %c192], %66 {strides = array<i32>} : memref<4x256xf32, #tpu.memory_space<vmem>>, vector<1x16xf32>,
    %68 = vector.extract_strided_slice %17 {offsets = [12, 0], sizes = [1, 16], strides = [1, 1]} : vector<16x16xf32> to vector<1x16xf32>
    %c1_49 = arith.constant 1 : index
    %c192_50 = arith.constant 192 : index
    %69 = vector.load %arg8[%c1_49, %c192_50] : memref<4x256xf32, #tpu.memory_space<vmem>>, vector<1x16xf32>
    tpu.vector_store %arg8[%c1_49, %c192_50], %68 {strides = array<i32>} : memref<4x256xf32, #tpu.memory_space<vmem>>, vector<1x16xf32>,
    %70 = vector.extract_strided_slice %16 {offsets = [13, 0], sizes = [1, 16], strides = [1, 1]} : vector<16x16xf32> to vector<1x16xf32>
    %c0_51 = arith.constant 0 : index
    %c208 = arith.constant 208 : index
    %71 = vector.load %arg8[%c0_51, %c208] : memref<4x256xf32, #tpu.memory_space<vmem>>, vector<1x16xf32>
    tpu.vector_store %arg8[%c0_51, %c208], %70 {strides = array<i32>} : memref<4x256xf32, #tpu.memory_space<vmem>>, vector<1x16xf32>,
    %72 = vector.extract_strided_slice %17 {offsets = [13, 0], sizes = [1, 16], strides = [1, 1]} : vector<16x16xf32> to vector<1x16xf32>
    %c1_52 = arith.constant 1 : index
    %c208_53 = arith.constant 208 : index
    %73 = vector.load %arg8[%c1_52, %c208_53] : memref<4x256xf32, #tpu.memory_space<vmem>>, vector<1x16xf32>
    tpu.vector_store %arg8[%c1_52, %c208_53], %72 {strides = array<i32>} : memref<4x256xf32, #tpu.memory_space<vmem>>, vector<1x16xf32>,
    %74 = vector.extract_strided_slice %16 {offsets = [14, 0], sizes = [1, 16], strides = [1, 1]} : vector<16x16xf32> to vector<1x16xf32>
    %c0_54 = arith.constant 0 : index
    %c224 = arith.constant 224 : index
    %75 = vector.load %arg8[%c0_54, %c224] : memref<4x256xf32, #tpu.memory_space<vmem>>, vector<1x16xf32>
    tpu.vector_store %arg8[%c0_54, %c224], %74 {strides = array<i32>} : memref<4x256xf32, #tpu.memory_space<vmem>>, vector<1x16xf32>,
    %76 = vector.extract_strided_slice %17 {offsets = [14, 0], sizes = [1, 16], strides = [1, 1]} : vector<16x16xf32> to vector<1x16xf32>
    %c1_55 = arith.constant 1 : index
    %c224_56 = arith.constant 224 : index
    %77 = vector.load %arg8[%c1_55, %c224_56] : memref<4x256xf32, #tpu.memory_space<vmem>>, vector<1x16xf32>
    tpu.vector_store %arg8[%c1_55, %c224_56], %76 {strides = array<i32>} : memref<4x256xf32, #tpu.memory_space<vmem>>, vector<1x16xf32>,
    %78 = vector.extract_strided_slice %16 {offsets = [15, 0], sizes = [1, 16], strides = [1, 1]} : vector<16x16xf32> to vector<1x16xf32>
    %c0_57 = arith.constant 0 : index
    %c240 = arith.constant 240 : index
    %79 = vector.load %arg8[%c0_57, %c240] : memref<4x256xf32, #tpu.memory_space<vmem>>, vector<1x16xf32>
    tpu.vector_store %arg8[%c0_57, %c240], %78 {strides = array<i32>} : memref<4x256xf32, #tpu.memory_space<vmem>>, vector<1x16xf32>,
    %80 = vector.extract_strided_slice %17 {offsets = [15, 0], sizes = [1, 16], strides = [1, 1]} : vector<16x16xf32> to vector<1x16xf32>
    %c1_58 = arith.constant 1 : index
    %c240_59 = arith.constant 240 : index
    %81 = vector.load %arg8[%c1_58, %c240_59] : memref<4x256xf32, #tpu.memory_space<vmem>>, vector<1x16xf32>
    tpu.vector_store %arg8[%c1_58, %c240_59], %80 {strides = array<i32>} : memref<4x256xf32, #tpu.memory_space<vmem>>, vector<1x16xf32>,
    %c0_60 = arith.constant 0 : index
    %c0_61 = arith.constant 0 : index
    %82 = vector.load %arg8[%c0_60, %c0_61] : memref<4x256xf32, #tpu.memory_space<vmem>>, vector<1x256xf32>
    %c1_62 = arith.constant 1 : index
    %c0_63 = arith.constant 0 : index
    %83 = vector.load %arg8[%c1_62, %c0_63] : memref<4x256xf32, #tpu.memory_space<vmem>>, vector<1x256xf32>
    %84 = vector.broadcast %82 : vector<1x256xf32> to vector<64x256xf32>
    %85 = arith.mulf %84, %7 : vector<64x256xf32>
    %86 = arith.addf %85, %10 : vector<64x256xf32>
    %87 = math.sin %86 : vector<64x256xf32>
    %c0_64 = arith.constant 0 : index
    %c0_65 = arith.constant 0 : index
    %c0_66 = arith.constant 0 : index
    %88 = vector.load %arg7[%c0_64, %c0_65, %c0_66] : memref<2x128x256xf32, #tpu.memory_space<vmem>>, vector<1x64x256xf32>
    %89 = vector.shape_cast %88 : vector<1x64x256xf32> to vector<64x256xf32>
    %90 = vector.shape_cast %87 : vector<64x256xf32> to vector<1x64x256xf32>
    tpu.vector_store %arg7[%c0_64, %c0_65, %c0_66], %90 {strides = array<i32>} : memref<2x128x256xf32, #tpu.memory_space<vmem>>, vector<1x64x256xf32>,
    %91 = vector.broadcast %83 : vector<1x256xf32> to vector<64x256xf32>
    %92 = arith.mulf %91, %7 : vector<64x256xf32>
    %93 = arith.addf %92, %10 : vector<64x256xf32>
    %94 = math.sin %93 : vector<64x256xf32>
    %c0_67 = arith.constant 0 : index
    %c64_68 = arith.constant 64 : index
    %c0_69 = arith.constant 0 : index
    %95 = vector.load %arg7[%c0_67, %c64_68, %c0_69] : memref<2x128x256xf32, #tpu.memory_space<vmem>>, vector<1x64x256xf32>
    %96 = vector.shape_cast %95 : vector<1x64x256xf32> to vector<64x256xf32>
    %97 = vector.shape_cast %94 : vector<64x256xf32> to vector<1x64x256xf32>
    tpu.vector_store %arg7[%c0_67, %c64_68, %c0_69], %97 {strides = array<i32>} : memref<2x128x256xf32, #tpu.memory_space<vmem>>, vector<1x64x256xf32>,
    %c1_70 = arith.constant 1 : index
    %c0_71 = arith.constant 0 : index
    %c0_72 = arith.constant 0 : index
    %98 = vector.load %arg2[%c1_70, %c0_71, %c0_72] : memref<2x16x16xbf16, #tpu.memory_space<vmem>>, vector<1x16x16xbf16>
    %99 = vector.shape_cast %98 : vector<1x16x16xbf16> to vector<16x16xbf16>
    %c1_73 = arith.constant 1 : index
    %100 = arith.index_cast %1 : i32 to index
    %c0_74 = arith.constant 0 : index
    %101 = vector.load %arg2[%c1_73, %100, %c0_74] : memref<2x16x16xbf16, #tpu.memory_space<vmem>>, vector<1x16x16xbf16>
    %102 = vector.shape_cast %101 : vector<1x16x16xbf16> to vector<16x16xbf16>
    %cst_75 = arith.constant dense<0.000000e+00> : vector<16x16xf32>
    %103 = tpu.matmul %4, %99, %cst_75 {dimension_numbers = #tpu.dot_dimension_numbers<[1], [0], [0], [1], [0, 0, 1, 1], [], []>} : vector<16x16xbf16>, vector<16x16xbf16>, vector<16x16xf32> -> vector<16x16xf32>
    %cst_76 = arith.constant dense<0.000000e+00> : vector<16x16xf32>
    %104 = tpu.matmul %102, %2, %cst_76 {dimension_numbers = #tpu.dot_dimension_numbers<[1], [0], [0], [1], [0, 0, 1, 1], [], []>} : vector<16x16xbf16>, vector<16x16xbf16>, vector<16x16xf32> -> vector<16x16xf32>
    %105 = vector.extract_strided_slice %103 {offsets = [0, 0], sizes = [1, 16], strides = [1, 1]} : vector<16x16xf32> to vector<1x16xf32>
    %c2 = arith.constant 2 : index
    %c0_77 = arith.constant 0 : index
    %106 = vector.load %arg8[%c2, %c0_77] : memref<4x256xf32, #tpu.memory_space<vmem>>, vector<1x16xf32>
    tpu.vector_store %arg8[%c2, %c0_77], %105 {strides = array<i32>} : memref<4x256xf32, #tpu.memory_space<vmem>>, vector<1x16xf32>,
    %107 = vector.extract_strided_slice %104 {offsets = [0, 0], sizes = [1, 16], strides = [1, 1]} : vector<16x16xf32> to vector<1x16xf32>
    %c3 = arith.constant 3 : index
    %c0_78 = arith.constant 0 : index
    %108 = vector.load %arg8[%c3, %c0_78] : memref<4x256xf32, #tpu.memory_space<vmem>>, vector<1x16xf32>
    tpu.vector_store %arg8[%c3, %c0_78], %107 {strides = array<i32>} : memref<4x256xf32, #tpu.memory_space<vmem>>, vector<1x16xf32>,
    %109 = vector.extract_strided_slice %103 {offsets = [1, 0], sizes = [1, 16], strides = [1, 1]} : vector<16x16xf32> to vector<1x16xf32>
    %c2_79 = arith.constant 2 : index
    %c16_80 = arith.constant 16 : index
    %110 = vector.load %arg8[%c2_79, %c16_80] : memref<4x256xf32, #tpu.memory_space<vmem>>, vector<1x16xf32>
    tpu.vector_store %arg8[%c2_79, %c16_80], %109 {strides = array<i32>} : memref<4x256xf32, #tpu.memory_space<vmem>>, vector<1x16xf32>,
    %111 = vector.extract_strided_slice %104 {offsets = [1, 0], sizes = [1, 16], strides = [1, 1]} : vector<16x16xf32> to vector<1x16xf32>
    %c3_81 = arith.constant 3 : index
    %c16_82 = arith.constant 16 : index
    %112 = vector.load %arg8[%c3_81, %c16_82] : memref<4x256xf32, #tpu.memory_space<vmem>>, vector<1x16xf32>
    tpu.vector_store %arg8[%c3_81, %c16_82], %111 {strides = array<i32>} : memref<4x256xf32, #tpu.memory_space<vmem>>, vector<1x16xf32>,
    %113 = vector.extract_strided_slice %103 {offsets = [2, 0], sizes = [1, 16], strides = [1, 1]} : vector<16x16xf32> to vector<1x16xf32>
    %c2_83 = arith.constant 2 : index
    %c32_84 = arith.constant 32 : index
    %114 = vector.load %arg8[%c2_83, %c32_84] : memref<4x256xf32, #tpu.memory_space<vmem>>, vector<1x16xf32>
    tpu.vector_store %arg8[%c2_83, %c32_84], %113 {strides = array<i32>} : memref<4x256xf32, #tpu.memory_space<vmem>>, vector<1x16xf32>,
    %115 = vector.extract_strided_slice %104 {offsets = [2, 0], sizes = [1, 16], strides = [1, 1]} : vector<16x16xf32> to vector<1x16xf32>
    %c3_85 = arith.constant 3 : index
    %c32_86 = arith.constant 32 : index
    %116 = vector.load %arg8[%c3_85, %c32_86] : memref<4x256xf32, #tpu.memory_space<vmem>>, vector<1x16xf32>
    tpu.vector_store %arg8[%c3_85, %c32_86], %115 {strides = array<i32>} : memref<4x256xf32, #tpu.memory_space<vmem>>, vector<1x16xf32>,
    %117 = vector.extract_strided_slice %103 {offsets = [3, 0], sizes = [1, 16], strides = [1, 1]} : vector<16x16xf32> to vector<1x16xf32>
    %c2_87 = arith.constant 2 : index
    %c48_88 = arith.constant 48 : index
    %118 = vector.load %arg8[%c2_87, %c48_88] : memref<4x256xf32, #tpu.memory_space<vmem>>, vector<1x16xf32>
    tpu.vector_store %arg8[%c2_87, %c48_88], %117 {strides = array<i32>} : memref<4x256xf32, #tpu.memory_space<vmem>>, vector<1x16xf32>,
    %119 = vector.extract_strided_slice %104 {offsets = [3, 0], sizes = [1, 16], strides = [1, 1]} : vector<16x16xf32> to vector<1x16xf32>
    %c3_89 = arith.constant 3 : index
    %c48_90 = arith.constant 48 : index
    %120 = vector.load %arg8[%c3_89, %c48_90] : memref<4x256xf32, #tpu.memory_space<vmem>>, vector<1x16xf32>
    tpu.vector_store %arg8[%c3_89, %c48_90], %119 {strides = array<i32>} : memref<4x256xf32, #tpu.memory_space<vmem>>, vector<1x16xf32>,
    %121 = vector.extract_strided_slice %103 {offsets = [4, 0], sizes = [1, 16], strides = [1, 1]} : vector<16x16xf32> to vector<1x16xf32>
    %c2_91 = arith.constant 2 : index
    %c64_92 = arith.constant 64 : index
    %122 = vector.load %arg8[%c2_91, %c64_92] : memref<4x256xf32, #tpu.memory_space<vmem>>, vector<1x16xf32>
    tpu.vector_store %arg8[%c2_91, %c64_92], %121 {strides = array<i32>} : memref<4x256xf32, #tpu.memory_space<vmem>>, vector<1x16xf32>,
    %123 = vector.extract_strided_slice %104 {offsets = [4, 0], sizes = [1, 16], strides = [1, 1]} : vector<16x16xf32> to vector<1x16xf32>
    %c3_93 = arith.constant 3 : index
    %c64_94 = arith.constant 64 : index
    %124 = vector.load %arg8[%c3_93, %c64_94] : memref<4x256xf32, #tpu.memory_space<vmem>>, vector<1x16xf32>
    tpu.vector_store %arg8[%c3_93, %c64_94], %123 {strides = array<i32>} : memref<4x256xf32, #tpu.memory_space<vmem>>, vector<1x16xf32>,
    %125 = vector.extract_strided_slice %103 {offsets = [5, 0], sizes = [1, 16], strides = [1, 1]} : vector<16x16xf32> to vector<1x16xf32>
    %c2_95 = arith.constant 2 : index
    %c80_96 = arith.constant 80 : index
    %126 = vector.load %arg8[%c2_95, %c80_96] : memref<4x256xf32, #tpu.memory_space<vmem>>, vector<1x16xf32>
    tpu.vector_store %arg8[%c2_95, %c80_96], %125 {strides = array<i32>} : memref<4x256xf32, #tpu.memory_space<vmem>>, vector<1x16xf32>,
    %127 = vector.extract_strided_slice %104 {offsets = [5, 0], sizes = [1, 16], strides = [1, 1]} : vector<16x16xf32> to vector<1x16xf32>
    %c3_97 = arith.constant 3 : index
    %c80_98 = arith.constant 80 : index
    %128 = vector.load %arg8[%c3_97, %c80_98] : memref<4x256xf32, #tpu.memory_space<vmem>>, vector<1x16xf32>
    tpu.vector_store %arg8[%c3_97, %c80_98], %127 {strides = array<i32>} : memref<4x256xf32, #tpu.memory_space<vmem>>, vector<1x16xf32>,
    %129 = vector.extract_strided_slice %103 {offsets = [6, 0], sizes = [1, 16], strides = [1, 1]} : vector<16x16xf32> to vector<1x16xf32>
    %c2_99 = arith.constant 2 : index
    %c96_100 = arith.constant 96 : index
    %130 = vector.load %arg8[%c2_99, %c96_100] : memref<4x256xf32, #tpu.memory_space<vmem>>, vector<1x16xf32>
    tpu.vector_store %arg8[%c2_99, %c96_100], %129 {strides = array<i32>} : memref<4x256xf32, #tpu.memory_space<vmem>>, vector<1x16xf32>,
    %131 = vector.extract_strided_slice %104 {offsets = [6, 0], sizes = [1, 16], strides = [1, 1]} : vector<16x16xf32> to vector<1x16xf32>
    %c3_101 = arith.constant 3 : index
    %c96_102 = arith.constant 96 : index
    %132 = vector.load %arg8[%c3_101, %c96_102] : memref<4x256xf32, #tpu.memory_space<vmem>>, vector<1x16xf32>
    tpu.vector_store %arg8[%c3_101, %c96_102], %131 {strides = array<i32>} : memref<4x256xf32, #tpu.memory_space<vmem>>, vector<1x16xf32>,
    %133 = vector.extract_strided_slice %103 {offsets = [7, 0], sizes = [1, 16], strides = [1, 1]} : vector<16x16xf32> to vector<1x16xf32>
    %c2_103 = arith.constant 2 : index
    %c112_104 = arith.constant 112 : index
    %134 = vector.load %arg8[%c2_103, %c112_104] : memref<4x256xf32, #tpu.memory_space<vmem>>, vector<1x16xf32>
    tpu.vector_store %arg8[%c2_103, %c112_104], %133 {strides = array<i32>} : memref<4x256xf32, #tpu.memory_space<vmem>>, vector<1x16xf32>,
    %135 = vector.extract_strided_slice %104 {offsets = [7, 0], sizes = [1, 16], strides = [1, 1]} : vector<16x16xf32> to vector<1x16xf32>
    %c3_105 = arith.constant 3 : index
    %c112_106 = arith.constant 112 : index
    %136 = vector.load %arg8[%c3_105, %c112_106] : memref<4x256xf32, #tpu.memory_space<vmem>>, vector<1x16xf32>
    tpu.vector_store %arg8[%c3_105, %c112_106], %135 {strides = array<i32>} : memref<4x256xf32, #tpu.memory_space<vmem>>, vector<1x16xf32>,
    %137 = vector.extract_strided_slice %103 {offsets = [8, 0], sizes = [1, 16], strides = [1, 1]} : vector<16x16xf32> to vector<1x16xf32>
    %c2_107 = arith.constant 2 : index
    %c128_108 = arith.constant 128 : index
    %138 = vector.load %arg8[%c2_107, %c128_108] : memref<4x256xf32, #tpu.memory_space<vmem>>, vector<1x16xf32>
    tpu.vector_store %arg8[%c2_107, %c128_108], %137 {strides = array<i32>} : memref<4x256xf32, #tpu.memory_space<vmem>>, vector<1x16xf32>,
    %139 = vector.extract_strided_slice %104 {offsets = [8, 0], sizes = [1, 16], strides = [1, 1]} : vector<16x16xf32> to vector<1x16xf32>
    %c3_109 = arith.constant 3 : index
    %c128_110 = arith.constant 128 : index
    %140 = vector.load %arg8[%c3_109, %c128_110] : memref<4x256xf32, #tpu.memory_space<vmem>>, vector<1x16xf32>
    tpu.vector_store %arg8[%c3_109, %c128_110], %139 {strides = array<i32>} : memref<4x256xf32, #tpu.memory_space<vmem>>, vector<1x16xf32>,
    %141 = vector.extract_strided_slice %103 {offsets = [9, 0], sizes = [1, 16], strides = [1, 1]} : vector<16x16xf32> to vector<1x16xf32>
    %c2_111 = arith.constant 2 : index
    %c144_112 = arith.constant 144 : index
    %142 = vector.load %arg8[%c2_111, %c144_112] : memref<4x256xf32, #tpu.memory_space<vmem>>, vector<1x16xf32>
    tpu.vector_store %arg8[%c2_111, %c144_112], %141 {strides = array<i32>} : memref<4x256xf32, #tpu.memory_space<vmem>>, vector<1x16xf32>,
    %143 = vector.extract_strided_slice %104 {offsets = [9, 0], sizes = [1, 16], strides = [1, 1]} : vector<16x16xf32> to vector<1x16xf32>
    %c3_113 = arith.constant 3 : index
    %c144_114 = arith.constant 144 : index
    %144 = vector.load %arg8[%c3_113, %c144_114] : memref<4x256xf32, #tpu.memory_space<vmem>>, vector<1x16xf32>
    tpu.vector_store %arg8[%c3_113, %c144_114], %143 {strides = array<i32>} : memref<4x256xf32, #tpu.memory_space<vmem>>, vector<1x16xf32>,
    %145 = vector.extract_strided_slice %103 {offsets = [10, 0], sizes = [1, 16], strides = [1, 1]} : vector<16x16xf32> to vector<1x16xf32>
    %c2_115 = arith.constant 2 : index
    %c160_116 = arith.constant 160 : index
    %146 = vector.load %arg8[%c2_115, %c160_116] : memref<4x256xf32, #tpu.memory_space<vmem>>, vector<1x16xf32>
    tpu.vector_store %arg8[%c2_115, %c160_116], %145 {strides = array<i32>} : memref<4x256xf32, #tpu.memory_space<vmem>>, vector<1x16xf32>,
    %147 = vector.extract_strided_slice %104 {offsets = [10, 0], sizes = [1, 16], strides = [1, 1]} : vector<16x16xf32> to vector<1x16xf32>
    %c3_117 = arith.constant 3 : index
    %c160_118 = arith.constant 160 : index
    %148 = vector.load %arg8[%c3_117, %c160_118] : memref<4x256xf32, #tpu.memory_space<vmem>>, vector<1x16xf32>
    tpu.vector_store %arg8[%c3_117, %c160_118], %147 {strides = array<i32>} : memref<4x256xf32, #tpu.memory_space<vmem>>, vector<1x16xf32>,
    %149 = vector.extract_strided_slice %103 {offsets = [11, 0], sizes = [1, 16], strides = [1, 1]} : vector<16x16xf32> to vector<1x16xf32>
    %c2_119 = arith.constant 2 : index
    %c176_120 = arith.constant 176 : index
    %150 = vector.load %arg8[%c2_119, %c176_120] : memref<4x256xf32, #tpu.memory_space<vmem>>, vector<1x16xf32>
    tpu.vector_store %arg8[%c2_119, %c176_120], %149 {strides = array<i32>} : memref<4x256xf32, #tpu.memory_space<vmem>>, vector<1x16xf32>,
    %151 = vector.extract_strided_slice %104 {offsets = [11, 0], sizes = [1, 16], strides = [1, 1]} : vector<16x16xf32> to vector<1x16xf32>
    %c3_121 = arith.constant 3 : index
    %c176_122 = arith.constant 176 : index
    %152 = vector.load %arg8[%c3_121, %c176_122] : memref<4x256xf32, #tpu.memory_space<vmem>>, vector<1x16xf32>
    tpu.vector_store %arg8[%c3_121, %c176_122], %151 {strides = array<i32>} : memref<4x256xf32, #tpu.memory_space<vmem>>, vector<1x16xf32>,
    %153 = vector.extract_strided_slice %103 {offsets = [12, 0], sizes = [1, 16], strides = [1, 1]} : vector<16x16xf32> to vector<1x16xf32>
    %c2_123 = arith.constant 2 : index
    %c192_124 = arith.constant 192 : index
    %154 = vector.load %arg8[%c2_123, %c192_124] : memref<4x256xf32, #tpu.memory_space<vmem>>, vector<1x16xf32>
    tpu.vector_store %arg8[%c2_123, %c192_124], %153 {strides = array<i32>} : memref<4x256xf32, #tpu.memory_space<vmem>>, vector<1x16xf32>,
    %155 = vector.extract_strided_slice %104 {offsets = [12, 0], sizes = [1, 16], strides = [1, 1]} : vector<16x16xf32> to vector<1x16xf32>
    %c3_125 = arith.constant 3 : index
    %c192_126 = arith.constant 192 : index
    %156 = vector.load %arg8[%c3_125, %c192_126] : memref<4x256xf32, #tpu.memory_space<vmem>>, vector<1x16xf32>
    tpu.vector_store %arg8[%c3_125, %c192_126], %155 {strides = array<i32>} : memref<4x256xf32, #tpu.memory_space<vmem>>, vector<1x16xf32>,
    %157 = vector.extract_strided_slice %103 {offsets = [13, 0], sizes = [1, 16], strides = [1, 1]} : vector<16x16xf32> to vector<1x16xf32>
    %c2_127 = arith.constant 2 : index
    %c208_128 = arith.constant 208 : index
    %158 = vector.load %arg8[%c2_127, %c208_128] : memref<4x256xf32, #tpu.memory_space<vmem>>, vector<1x16xf32>
    tpu.vector_store %arg8[%c2_127, %c208_128], %157 {strides = array<i32>} : memref<4x256xf32, #tpu.memory_space<vmem>>, vector<1x16xf32>,
    %159 = vector.extract_strided_slice %104 {offsets = [13, 0], sizes = [1, 16], strides = [1, 1]} : vector<16x16xf32> to vector<1x16xf32>
    %c3_129 = arith.constant 3 : index
    %c208_130 = arith.constant 208 : index
    %160 = vector.load %arg8[%c3_129, %c208_130] : memref<4x256xf32, #tpu.memory_space<vmem>>, vector<1x16xf32>
    tpu.vector_store %arg8[%c3_129, %c208_130], %159 {strides = array<i32>} : memref<4x256xf32, #tpu.memory_space<vmem>>, vector<1x16xf32>,
    %161 = vector.extract_strided_slice %103 {offsets = [14, 0], sizes = [1, 16], strides = [1, 1]} : vector<16x16xf32> to vector<1x16xf32>
    %c2_131 = arith.constant 2 : index
    %c224_132 = arith.constant 224 : index
    %162 = vector.load %arg8[%c2_131, %c224_132] : memref<4x256xf32, #tpu.memory_space<vmem>>, vector<1x16xf32>
    tpu.vector_store %arg8[%c2_131, %c224_132], %161 {strides = array<i32>} : memref<4x256xf32, #tpu.memory_space<vmem>>, vector<1x16xf32>,
    %163 = vector.extract_strided_slice %104 {offsets = [14, 0], sizes = [1, 16], strides = [1, 1]} : vector<16x16xf32> to vector<1x16xf32>
    %c3_133 = arith.constant 3 : index
    %c224_134 = arith.constant 224 : index
    %164 = vector.load %arg8[%c3_133, %c224_134] : memref<4x256xf32, #tpu.memory_space<vmem>>, vector<1x16xf32>
    tpu.vector_store %arg8[%c3_133, %c224_134], %163 {strides = array<i32>} : memref<4x256xf32, #tpu.memory_space<vmem>>, vector<1x16xf32>,
    %165 = vector.extract_strided_slice %103 {offsets = [15, 0], sizes = [1, 16], strides = [1, 1]} : vector<16x16xf32> to vector<1x16xf32>
    %c2_135 = arith.constant 2 : index
    %c240_136 = arith.constant 240 : index
    %166 = vector.load %arg8[%c2_135, %c240_136] : memref<4x256xf32, #tpu.memory_space<vmem>>, vector<1x16xf32>
    tpu.vector_store %arg8[%c2_135, %c240_136], %165 {strides = array<i32>} : memref<4x256xf32, #tpu.memory_space<vmem>>, vector<1x16xf32>,
    %167 = vector.extract_strided_slice %104 {offsets = [15, 0], sizes = [1, 16], strides = [1, 1]} : vector<16x16xf32> to vector<1x16xf32>
    %c3_137 = arith.constant 3 : index
    %c240_138 = arith.constant 240 : index
    %168 = vector.load %arg8[%c3_137, %c240_138] : memref<4x256xf32, #tpu.memory_space<vmem>>, vector<1x16xf32>
    tpu.vector_store %arg8[%c3_137, %c240_138], %167 {strides = array<i32>} : memref<4x256xf32, #tpu.memory_space<vmem>>, vector<1x16xf32>,
    %c2_139 = arith.constant 2 : index
    %c0_140 = arith.constant 0 : index
    %169 = vector.load %arg8[%c2_139, %c0_140] : memref<4x256xf32, #tpu.memory_space<vmem>>, vector<1x256xf32>
    %c3_141 = arith.constant 3 : index
    %c0_142 = arith.constant 0 : index
    %170 = vector.load %arg8[%c3_141, %c0_142] : memref<4x256xf32, #tpu.memory_space<vmem>>, vector<1x256xf32>
    %171 = vector.broadcast %169 : vector<1x256xf32> to vector<64x256xf32>
    %172 = arith.mulf %171, %7 : vector<64x256xf32>
    %173 = arith.addf %172, %10 : vector<64x256xf32>
    %174 = math.sin %173 : vector<64x256xf32>
    %c1_143 = arith.constant 1 : index
    %c0_144 = arith.constant 0 : index
    %c0_145 = arith.constant 0 : index
    %175 = vector.load %arg7[%c1_143, %c0_144, %c0_145] : memref<2x128x256xf32, #tpu.memory_space<vmem>>, vector<1x64x256xf32>
    %176 = vector.shape_cast %175 : vector<1x64x256xf32> to vector<64x256xf32>
    %177 = vector.shape_cast %174 : vector<64x256xf32> to vector<1x64x256xf32>
    tpu.vector_store %arg7[%c1_143, %c0_144, %c0_145], %177 {strides = array<i32>} : memref<2x128x256xf32, #tpu.memory_space<vmem>>, vector<1x64x256xf32>,
    %178 = vector.broadcast %170 : vector<1x256xf32> to vector<64x256xf32>
    %179 = arith.mulf %178, %7 : vector<64x256xf32>
    %180 = arith.addf %179, %10 : vector<64x256xf32>
    %181 = math.sin %180 : vector<64x256xf32>
    %c1_146 = arith.constant 1 : index
    %c64_147 = arith.constant 64 : index
    %c0_148 = arith.constant 0 : index
    %182 = vector.load %arg7[%c1_146, %c64_147, %c0_148] : memref<2x128x256xf32, #tpu.memory_space<vmem>>, vector<1x64x256xf32>
    %183 = vector.shape_cast %182 : vector<1x64x256xf32> to vector<64x256xf32>
    %184 = vector.shape_cast %181 : vector<64x256xf32> to vector<1x64x256xf32>
    tpu.vector_store %arg7[%c1_146, %c64_147, %c0_148], %184 {strides = array<i32>} : memref<2x128x256xf32, #tpu.memory_space<vmem>>, vector<1x64x256xf32>,
    return
  }
  func.func @transform_0(%arg0: i32, %arg1: i32) -> (i32, i32, i32) {
    %c0_i32 = arith.constant 0 : i32
    %c0_i32_0 = arith.constant 0 : i32
    %c0_i32_1 = arith.constant 0 : i32
    return %arg0, %c0_i32, %c0_i32_0 : i32, i32, i32
  }
  func.func @transform_1(%arg0: i32, %arg1: i32) -> (i32, i32) {
    %c0_i32 = arith.constant 0 : i32
    %c0_i32_0 = arith.constant 0 : i32
    %c0_i32_1 = arith.constant 0 : i32
    return %c0_i32, %c0_i32_0 : i32, i32
  }
  func.func @transform_2(%arg0: i32, %arg1: i32) -> (i32, i32) {
    %c0_i32 = arith.constant 0 : i32
    %c0_i32_0 = arith.constant 0 : i32
    %c0_i32_1 = arith.constant 0 : i32
    return %c0_i32, %c0_i32_0 : i32, i32
  }
  func.func @transform_3(%arg0: i32, %arg1: i32) -> (i32, i32) {
    %c0_i32 = arith.constant 0 : i32
    %c0_i32_0 = arith.constant 0 : i32
    %c0_i32_1 = arith.constant 0 : i32
    return %c0_i32, %c0_i32_0 : i32, i32
  }
  func.func @transform_4(%arg0: i32, %arg1: i32) -> (i32, i32) {
    %c0_i32 = arith.constant 0 : i32
    %c0_i32_0 = arith.constant 0 : i32
    %c0_i32_1 = arith.constant 0 : i32
    return %c0_i32, %c0_i32_0 : i32, i32
  }
  func.func @transform_5(%arg0: i32, %arg1: i32) -> (i32, i32, i32) {
    %c0_i32 = arith.constant 0 : i32
    %c0_i32_0 = arith.constant 0 : i32
    return %arg0, %c0_i32, %arg1 : i32, i32, i32
  }
}

</mosaic_0001>

<llo_original>
// kernel: tpu_custom_call.1
$region0: #{tpu_custom_call.1}
  #allocation0 [shape = 'u32[]', space=smem, size = 0x4, offset = 0x4, fixed_abs, tag = 'smem constant byte address 0x4 - core index']
  #allocation1 [shape = 'u32[144,128]{1,0:T(1,128)}', space=vmem, size = 0x12000, scoped, tag = 'internal scratch']
  #allocation2 [shape = 'f32[4,256]{1,0:T(4,128)}', space=vmem, size = 0x1000, scoped, tag = 'scratch operand']
  %s0 = inlined_call_operand.vmem [shape: bf16[2,16,16], index: 0, kind: input, shape index: {}]
  %s1 = inlined_call_operand.vmem [shape: bf16[16,16], index: 1, kind: input, shape index: {}]
  %s2 = inlined_call_operand.vmem [shape: bf16[16,16], index: 2, kind: input, shape index: {}]
  %s3 = inlined_call_operand.vmem [shape: f32[64,1], index: 3, kind: input, shape index: {}]
  %s4 = inlined_call_operand.vmem [shape: f32[64,1], index: 4, kind: input, shape index: {}]
  %s5 = inlined_call_operand.hbm [shape: f32[2,128,256], index: 5, kind: output, shape index: {}]
  %s6 = sld [smem:[#allocation0]]
  $region30: #{tpu_custom_call.1} parent=0
    _
  %s8 = ssub.s32 1, %s6
  %s9 = scalar_select 0, %s8, %s6
  $region1: #{tpu_custom_call.1} parent=0
    #allocation3 [shape = 'u8[262144]{0}', space=vmem, size = 0x40000, scoped, tag = 'output window, operand 0, single buffered']
    #allocation4 [shape = 's32[1]{0}', space=sflag, size = 0x4, scoped, tag = 'scoped memory for tpu_custom_call.1']
    %10 = vsyncpa [#allocation4], 0
    // Predicated region
    $region2: #{tpu_custom_call.1} parent=1 // pred_check
      _
    $region3: #{tpu_custom_call.1} parent=1 // pred_check_branch
      %12 = sbr.rel (0) target = $region5
    $region4: #{tpu_custom_call.1} parent=1 // pred_region
      _
    $region5: #{tpu_custom_call.1} parent=1 // pred_fallthru
      _
    // Predicated region
    $region6: #{tpu_custom_call.1} parent=1 // pred_check
      _
    $region7: #{tpu_custom_call.1} parent=1 // pred_check_branch
      %14 = sbr.rel (0) target = $region9
    $region8: #{tpu_custom_call.1} parent=1 // pred_region
      _
    $region9: #{tpu_custom_call.1} parent=1 // pred_fallthru
      _
    // Predicated region
    $region10: #{tpu_custom_call.1} parent=1 // pred_check
      _
    $region11: #{tpu_custom_call.1} parent=1 // pred_check_branch
      %16 = sbr.rel (0) target = $region13
    $region12: #{tpu_custom_call.1} parent=1 // pred_region
      _
    $region13: #{tpu_custom_call.1} parent=1 // pred_fallthru
      _
    // Predicated region
    $region14: #{tpu_custom_call.1} parent=1 // pred_check
      _
    $region15: #{tpu_custom_call.1} parent=1 // pred_check_branch
      %18 = sbr.rel (0) target = $region17
    $region16: #{tpu_custom_call.1} parent=1 // pred_region
      _
    $region17: #{tpu_custom_call.1} parent=1 // pred_fallthru
      _
    // Predicated region
    $region18: #{tpu_custom_call.1} parent=1 // pred_check
      _
    $region19: #{tpu_custom_call.1} parent=1 // pred_check_branch
      %20 = sbr.rel (0) target = $region21
    $region20: #{tpu_custom_call.1} parent=1 // pred_region
      _
    $region21: #{tpu_custom_call.1} parent=1 // pred_fallthru
      _
    %s22 = smul.u32 0, 16
    %v23 = vld [vmem:[%s2] sm:$0xf]
    %v24 = vld [vmem:[%s2 + $0x4] sm:$0xf]
    %s25 = sshra.s32 %s22, 3
    %s26 = sand.u32 %s22, 7
    %s27 = smul.addr %s25, 4
    %s28 = scalar_lea.vmem %s1, %s27
    %v29 = vld [vmem:[%s28] sm:$0xf]
    %v30 = vld [vmem:[%s28 + $0x4] sm:$0xf]
    %v31 = vld [vmem:[%s3] sm:$0xff]
    %v32 = vld [vmem:[%s3 + $0x8] sm:$0xff]
    %v33 = vld [vmem:[%s3 + $0x10] sm:$0xff]
    %v34 = vld [vmem:[%s3 + $0x18] sm:$0xff]
    %v35 = vld [vmem:[%s3 + $0x20] sm:$0xff]
    %v36 = vld [vmem:[%s3 + $0x28] sm:$0xff]
    %v37 = vld [vmem:[%s3 + $0x30] sm:$0xff]
    %v38 = vld [vmem:[%s3 + $0x38] sm:$0xff]
    %40 = vset.pattern.permute.xlu0 0
    %41 = vperm.xlu0 %40, %v31
    %v42 = vpop.permute.xlu0 %41
    %45 = vset.pattern.permute.xlu0 0
    %46 = vperm.xlu0 %45, %v32
    %v47 = vpop.permute.xlu0 %46
    %50 = vset.pattern.permute.xlu0 0
    %51 = vperm.xlu0 %50, %v33
    %v52 = vpop.permute.xlu0 %51
    %55 = vset.pattern.permute.xlu0 0
    %56 = vperm.xlu0 %55, %v34
    %v57 = vpop.permute.xlu0 %56
    %60 = vset.pattern.permute.xlu0 0
    %61 = vperm.xlu0 %60, %v35
    %v62 = vpop.permute.xlu0 %61
    %65 = vset.pattern.permute.xlu0 0
    %66 = vperm.xlu0 %65, %v36
    %v67 = vpop.permute.xlu0 %66
    %70 = vset.pattern.permute.xlu0 0
    %71 = vperm.xlu0 %70, %v37
    %v72 = vpop.permute.xlu0 %71
    %75 = vset.pattern.permute.xlu0 0
    %76 = vperm.xlu0 %75, %v38
    %v77 = vpop.permute.xlu0 %76
    %v79 = vld [vmem:[%s4] sm:$0xff]
    %v80 = vld [vmem:[%s4 + $0x8] sm:$0xff]
    %v81 = vld [vmem:[%s4 + $0x10] sm:$0xff]
    %v82 = vld [vmem:[%s4 + $0x18] sm:$0xff]
    %v83 = vld [vmem:[%s4 + $0x20] sm:$0xff]
    %v84 = vld [vmem:[%s4 + $0x28] sm:$0xff]
    %v85 = vld [vmem:[%s4 + $0x30] sm:$0xff]
    %v86 = vld [vmem:[%s4 + $0x38] sm:$0xff]
    %88 = vset.pattern.permute.xlu0 0
    %89 = vperm.xlu0 %88, %v79
    %v90 = vpop.permute.xlu0 %89
    %93 = vset.pattern.permute.xlu0 0
    %94 = vperm.xlu0 %93, %v80
    %v95 = vpop.permute.xlu0 %94
    %98 = vset.pattern.permute.xlu0 0
    %99 = vperm.xlu0 %98, %v81
    %v100 = vpop.permute.xlu0 %99
    %103 = vset.pattern.permute.xlu0 0
    %104 = vperm.xlu0 %103, %v82
    %v105 = vpop.permute.xlu0 %104
    %108 = vset.pattern.permute.xlu0 0
    %109 = vperm.xlu0 %108, %v83
    %v110 = vpop.permute.xlu0 %109
    %113 = vset.pattern.permute.xlu0 0
    %114 = vperm.xlu0 %113, %v84
    %v115 = vpop.permute.xlu0 %114
    %118 = vset.pattern.permute.xlu0 0
    %119 = vperm.xlu0 %118, %v85
    %v120 = vpop.permute.xlu0 %119
    %123 = vset.pattern.permute.xlu0 0
    %124 = vperm.xlu0 %123, %v86
    %v125 = vpop.permute.xlu0 %124
    %v127 = vld [vmem:[%s0] sm:$0xf]
    %v128 = vld [vmem:[%s0 + $0x4] sm:$0xf]
    %s129 = smul.addr %s25, 4
    %s130 = scalar_lea.vmem %s0, %s129
    %v131 = vld [vmem:[%s130] sm:$0xf]
    %v132 = vld [vmem:[%s130 + $0x4] sm:$0xf]
    %v135 = vunpack.c.l.b16 %v29
    %v136 = vunpack.c.l.b16 %v30
    %v137 = vpack.c.b16 %v136, %v135
    %v140 = vunpack.c.l.b16 %v127
    %v141 = vunpack.c.l.b16 %v128
    %v142 = vpack.c.b16 %v141, %v140
    %vm144 = vcmask 130048
    %v146 = vsel %vm144, %v137, 0
    %148 = vmatprep.subr.bf16.mxu0 0
    %149 = vmatpush1.bf16.msra.mxu0 %v142
    %150 = vmatprep.subr.bf16.mxu0 0
    %151 = vmatpush1.bf16.msra.mxu0 0
    %152 = vmatprep.subr.bf16.mxu0 0
    %153 = vmatpush1.bf16.msra.mxu0 0
    %154 = vmatprep.subr.bf16.mxu0 0
    %155 = vmatpush1.bf16.msra.mxu0 0
    %156 = vmatprep.subr.bf16.mxu0 0
    %157 = vmatpush1.bf16.msra.mxu0 0
    %158 = vmatprep.subr.bf16.mxu0 0
    %159 = vmatpush1.bf16.msra.mxu0 0
    %160 = vmatprep.subr.bf16.mxu0 0
    %161 = vmatpush1.bf16.msra.mxu0 0
    %162 = vmatprep.subr.bf16.mxu0 0
    %163 = vmatpush1.bf16.msra.mxu0 0
    %164 = vmatprep.subr.bf16.mxu0 0
    %165 = vmatpush1.bf16.msra.mxu0 0
    %166 = vmatprep.subr.bf16.mxu0 0
    %167 = vmatpush1.bf16.msra.mxu0 0
    %168 = vmatprep.subr.bf16.mxu0 0
    %169 = vmatpush1.bf16.msra.mxu0 0
    %170 = vmatprep.subr.bf16.mxu0 0
    %171 = vmatpush1.bf16.msra.mxu0 0
    %172 = vmatprep.subr.bf16.mxu0 0
    %173 = vmatpush1.bf16.msra.mxu0 0
    %174 = vmatprep.subr.bf16.mxu0 0
    %175 = vmatpush1.bf16.msra.mxu0 0
    %176 = vmatprep.subr.bf16.mxu0 0
    %177 = vmatpush1.bf16.msra.mxu0 0
    %178 = vmatprep.subr.bf16.mxu0 0
    %179 = vmatpush1.bf16.msra.mxu0 0
    %180 = vmatprep.mubr.bf16.mxu0 0
    %181 = vmatmul.mubr.bf16.gmra.mrb[0].mxu0 %v146
    %v182 = vpop.f32.mrb[0].mxu0
    %v183 = vadd.f32 0.0, %v182
    %v184 = vpop.f32.mrb[0].mxu0
    %v185 = vpop.f32.mrb[0].mxu0
    %v186 = vadd.f32 0.0, %v185
    %v187 = vpop.f32.mrb[0].mxu0
    %188 = vdwg.mxu0
    %v191 = vunpack.c.l.b16 %v131
    %v192 = vunpack.c.l.b16 %v132
    %v193 = vpack.c.b16 %v192, %v191
    %v196 = vunpack.c.l.b16 %v23
    %v197 = vunpack.c.l.b16 %v24
    %v198 = vpack.c.b16 %v197, %v196
    %v201 = vsel %vm144, %v193, 0
    %203 = vmatprep.subr.bf16.mxu0 0
    %204 = vmatpush1.bf16.msra.mxu0 %v198
    %205 = vmatprep.subr.bf16.mxu0 0
    %206 = vmatpush1.bf16.msra.mxu0 0
    %207 = vmatprep.subr.bf16.mxu0 0
    %208 = vmatpush1.bf16.msra.mxu0 0
    %209 = vmatprep.subr.bf16.mxu0 0
    %210 = vmatpush1.bf16.msra.mxu0 0
    %211 = vmatprep.subr.bf16.mxu0 0
    %212 = vmatpush1.bf16.msra.mxu0 0
    %213 = vmatprep.subr.bf16.mxu0 0
    %214 = vmatpush1.bf16.msra.mxu0 0
    %215 = vmatprep.subr.bf16.mxu0 0
    %216 = vmatpush1.bf16.msra.mxu0 0
    %217 = vmatprep.subr.bf16.mxu0 0
    %218 = vmatpush1.bf16.msra.mxu0 0
    %219 = vmatprep.subr.bf16.mxu0 0
    %220 = vmatpush1.bf16.msra.mxu0 0
    %221 = vmatprep.subr.bf16.mxu0 0
    %222 = vmatpush1.bf16.msra.mxu0 0
    %223 = vmatprep.subr.bf16.mxu0 0
    %224 = vmatpush1.bf16.msra.mxu0 0
    %225 = vmatprep.subr.bf16.mxu0 0
    %226 = vmatpush1.bf16.msra.mxu0 0
    %227 = vmatprep.subr.bf16.mxu0 0
    %228 = vmatpush1.bf16.msra.mxu0 0
    %229 = vmatprep.subr.bf16.mxu0 0
    %230 = vmatpush1.bf16.msra.mxu0 0
    %231 = vmatprep.subr.bf16.mxu0 0
    %232 = vmatpush1.bf16.msra.mxu0 0
    %233 = vmatprep.subr.bf16.mxu0 0
    %234 = vmatpush1.bf16.msra.mxu0 0
    %235 = vmatprep.mubr.bf16.mxu0 0
    %236 = vmatmul.mubr.bf16.gmra.mrb[0].mxu0 %v201
    %v237 = vpop.f32.mrb[0].mxu0
    %v238 = vadd.f32 0.0, %v237
    %v239 = vpop.f32.mrb[0].mxu0
    %v240 = vpop.f32.mrb[0].mxu0
    %v241 = vadd.f32 0.0, %v240
    %v242 = vpop.f32.mrb[0].mxu0
    %243 = vdwg.mxu0
    %vm244 = vcmask 122880
    %245 = vst.msk [vmem:[#allocation2] sm:$0x1] %vm244, %v183
    %246 = vst.msk [vmem:[#allocation2 + $0x1] sm:$0x1] %vm244, %v238
    %v248 = vrot.slane %v183, 5
    %v249 = vrot.slane %v248, 4
    %250 = vrot.lane.b32.xlu0 %v249, 16
    %v251 = vpop.permute.xlu0 %250
    %vm253 = vcmask 254080
    %254 = vst.msk [vmem:[#allocation2] sm:$0x1] %vm253, %v251
    %v256 = vrot.slane %v238, 5
    %v257 = vrot.slane %v256, 4
    %258 = vrot.lane.b32.xlu0 %v257, 16
    %v259 = vpop.permute.xlu0 %258
    %261 = vst.msk [vmem:[#allocation2 + $0x1] sm:$0x1] %vm253, %v259
    %v262 = vrot.slane %v183, 6
    %v263 = vrot.slane %v262, 4
    %264 = vrot.lane.b32.xlu0 %v263, 32
    %v265 = vpop.permute.xlu0 %264
    %vm267 = vcmask 385280
    %268 = vst.msk [vmem:[#allocation2] sm:$0x1] %vm267, %v265
    %v269 = vrot.slane %v238, 6
    %v270 = vrot.slane %v269, 4
    %271 = vrot.lane.b32.xlu0 %v270, 32
    %v272 = vpop.permute.xlu0 %271
    %274 = vst.msk [vmem:[#allocation2 + $0x1] sm:$0x1] %vm267, %v272
    %v275 = vrot.slane %v183, 7
    %v276 = vrot.slane %v275, 4
    %277 = vrot.lane.b32.xlu0 %v276, 48
    %v278 = vpop.permute.xlu0 %277
    %vm280 = vcmask 516480
    %281 = vst.msk [vmem:[#allocation2] sm:$0x1] %vm280, %v278
    %v282 = vrot.slane %v238, 7
    %v283 = vrot.slane %v282, 4
    %284 = vrot.lane.b32.xlu0 %v283, 48
    %v285 = vpop.permute.xlu0 %284
    %287 = vst.msk [vmem:[#allocation2 + $0x1] sm:$0x1] %vm280, %v285
    %v288 = vcombine.high %v183, %v183
    %289 = vrot.lane.b32.xlu0 %v288, 64
    %v290 = vpop.permute.xlu0 %289
    %vm292 = vcmask 647680
    %293 = vst.msk [vmem:[#allocation2] sm:$0x1] %vm292, %v290
    %v294 = vcombine.high %v238, %v238
    %295 = vrot.lane.b32.xlu0 %v294, 64
    %v296 = vpop.permute.xlu0 %295
    %298 = vst.msk [vmem:[#allocation2 + $0x1] sm:$0x1] %vm292, %v296
    %v299 = vrot.slane %v288, 5
    %v300 = vrot.slane %v299, 4
    %301 = vrot.lane.b32.xlu0 %v300, 80
    %v302 = vpop.permute.xlu0 %301
    %vm304 = vcmask 778880
    %305 = vst.msk [vmem:[#allocation2] sm:$0x1] %vm304, %v302
    %v306 = vrot.slane %v294, 5
    %v307 = vrot.slane %v306, 4
    %308 = vrot.lane.b32.xlu0 %v307, 80
    %v309 = vpop.permute.xlu0 %308
    %311 = vst.msk [vmem:[#allocation2 + $0x1] sm:$0x1] %vm304, %v309
    %v312 = vrot.slane %v288, 6
    %v313 = vrot.slane %v312, 4
    %314 = vrot.lane.b32.xlu0 %v313, 96
    %v315 = vpop.permute.xlu0 %314
    %vm317 = vcmask 910080
    %318 = vst.msk [vmem:[#allocation2] sm:$0x1] %vm317, %v315
    %v319 = vrot.slane %v294, 6
    %v320 = vrot.slane %v319, 4
    %321 = vrot.lane.b32.xlu0 %v320, 96
    %v322 = vpop.permute.xlu0 %321
    %324 = vst.msk [vmem:[#allocation2 + $0x1] sm:$0x1] %vm317, %v322
    %v325 = vrot.slane %v288, 7
    %v326 = vrot.slane %v325, 4
    %327 = vrot.lane.b32.xlu0 %v326, 112
    %v328 = vpop.permute.xlu0 %327
    %vm330 = vcmask 1041280
    %331 = vst.msk [vmem:[#allocation2] sm:$0x1] %vm330, %v328
    %v332 = vrot.slane %v294, 7
    %v333 = vrot.slane %v332, 4
    %334 = vrot.lane.b32.xlu0 %v333, 112
    %v335 = vpop.permute.xlu0 %334
    %337 = vst.msk [vmem:[#allocation2 + $0x1] sm:$0x1] %vm330, %v335
    %338 = vst.msk [vmem:[#allocation2 + $0x4] sm:$0x1] %vm244, %v186
    %339 = vst.msk [vmem:[#allocation2 + $0x5] sm:$0x1] %vm244, %v241
    %v341 = vrot.slane %v186, 5
    %v342 = vrot.slane %v341, 4
    %343 = vrot.lane.b32.xlu0 %v342, 16
    %v344 = vpop.permute.xlu0 %343
    %346 = vst.msk [vmem:[#allocation2 + $0x4] sm:$0x1] %vm253, %v344
    %v348 = vrot.slane %v241, 5
    %v349 = vrot.slane %v348, 4
    %350 = vrot.lane.b32.xlu0 %v349, 16
    %v351 = vpop.permute.xlu0 %350
    %353 = vst.msk [vmem:[#allocation2 + $0x5] sm:$0x1] %vm253, %v351
    %v354 = vrot.slane %v186, 6
    %v355 = vrot.slane %v354, 4
    %356 = vrot.lane.b32.xlu0 %v355, 32
    %v357 = vpop.permute.xlu0 %356
    %359 = vst.msk [vmem:[#allocation2 + $0x4] sm:$0x1] %vm267, %v357
    %v360 = vrot.slane %v241, 6
    %v361 = vrot.slane %v360, 4
    %362 = vrot.lane.b32.xlu0 %v361, 32
    %v363 = vpop.permute.xlu0 %362
    %365 = vst.msk [vmem:[#allocation2 + $0x5] sm:$0x1] %vm267, %v363
    %v366 = vrot.slane %v186, 7
    %v367 = vrot.slane %v366, 4
    %368 = vrot.lane.b32.xlu0 %v367, 48
    %v369 = vpop.permute.xlu0 %368
    %371 = vst.msk [vmem:[#allocation2 + $0x4] sm:$0x1] %vm280, %v369
    %v372 = vrot.slane %v241, 7
    %v373 = vrot.slane %v372, 4
    %374 = vrot.lane.b32.xlu0 %v373, 48
    %v375 = vpop.permute.xlu0 %374
    %377 = vst.msk [vmem:[#allocation2 + $0x5] sm:$0x1] %vm280, %v375
    %v378 = vcombine.high %v186, %v186
    %379 = vrot.lane.b32.xlu0 %v378, 64
    %v380 = vpop.permute.xlu0 %379
    %382 = vst.msk [vmem:[#allocation2 + $0x4] sm:$0x1] %vm292, %v380
    %v383 = vcombine.high %v241, %v241
    %384 = vrot.lane.b32.xlu0 %v383, 64
    %v385 = vpop.permute.xlu0 %384
    %387 = vst.msk [vmem:[#allocation2 + $0x5] sm:$0x1] %vm292, %v385
    %v388 = vrot.slane %v378, 5
    %v389 = vrot.slane %v388, 4
    %390 = vrot.lane.b32.xlu0 %v389, 80
    %v391 = vpop.permute.xlu0 %390
    %393 = vst.msk [vmem:[#allocation2 + $0x4] sm:$0x1] %vm304, %v391
    %v394 = vrot.slane %v383, 5
    %v395 = vrot.slane %v394, 4
    %396 = vrot.lane.b32.xlu0 %v395, 80
    %v397 = vpop.permute.xlu0 %396
    %399 = vst.msk [vmem:[#allocation2 + $0x5] sm:$0x1] %vm304, %v397
    %v400 = vrot.slane %v378, 6
    %v401 = vrot.slane %v400, 4
    %402 = vrot.lane.b32.xlu0 %v401, 96
    %v403 = vpop.permute.xlu0 %402
    %405 = vst.msk [vmem:[#allocation2 + $0x4] sm:$0x1] %vm317, %v403
    %v406 = vrot.slane %v383, 6
    %v407 = vrot.slane %v406, 4
    %408 = vrot.lane.b32.xlu0 %v407, 96
    %v409 = vpop.permute.xlu0 %408
    %411 = vst.msk [vmem:[#allocation2 + $0x5] sm:$0x1] %vm317, %v409
    %v412 = vrot.slane %v378, 7
    %v413 = vrot.slane %v412, 4
    %414 = vrot.lane.b32.xlu0 %v413, 112
    %v415 = vpop.permute.xlu0 %414
    %417 = vst.msk [vmem:[#allocation2 + $0x4] sm:$0x1] %vm330, %v415
    %v418 = vrot.slane %v383, 7
    %v419 = vrot.slane %v418, 4
    %420 = vrot.lane.b32.xlu0 %v419, 112
    %v421 = vpop.permute.xlu0 %420
    %423 = vst.msk [vmem:[#allocation2 + $0x5] sm:$0x1] %vm330, %v421
    %v424 = vld [vmem:[#allocation2] ss:$4 sm:$0x3]
    %s425 = scalar_lea.vmem [#allocation2], 1
    %v426 = vld [vmem:[%s425] ss:$4 sm:$0x3]
    %v428 = vlaneseq
    %v429 = vshrl.u32 %v428, 7
    %v430 = vsub.s32 0, %v429
    %v431 = vrot.slane %v424, %v430
    %v432 = vlaneseq
    %v433 = vshrl.u32 %v432, 7
    %v434 = vsub.s32 1, %v433
    %v435 = vrot.slane %v424, %v434
    %v438 = vmul.f32 %v431, %v42
    %v439 = vmul.f32 %v435, %v42
    %v440 = vmul.f32 %v431, %v47
    %v441 = vmul.f32 %v435, %v47
    %v442 = vmul.f32 %v431, %v52
    %v443 = vmul.f32 %v435, %v52
    %v444 = vmul.f32 %v431, %v57
    %v445 = vmul.f32 %v435, %v57
    %v446 = vmul.f32 %v431, %v62
    %v447 = vmul.f32 %v435, %v62
    %v448 = vmul.f32 %v431, %v67
    %v449 = vmul.f32 %v435, %v67
    %v450 = vmul.f32 %v431, %v72
    %v451 = vmul.f32 %v435, %v72
    %v452 = vmul.f32 %v431, %v77
    %v453 = vmul.f32 %v435, %v77
    %v454 = vadd.f32 %v438, %v90
    %v455 = vadd.f32 %v439, %v90
    %v456 = vadd.f32 %v440, %v95
    %v457 = vadd.f32 %v441, %v95
    %v458 = vadd.f32 %v442, %v100
    %v459 = vadd.f32 %v443, %v100
    %v460 = vadd.f32 %v444, %v105
    %v461 = vadd.f32 %v445, %v105
    %v462 = vadd.f32 %v446, %v110
    %v463 = vadd.f32 %v447, %v110
    %v464 = vadd.f32 %v448, %v115
    %v465 = vadd.f32 %v449, %v115
    %v466 = vadd.f32 %v450, %v120
    %v467 = vadd.f32 %v451, %v120
    %v468 = vadd.f32 %v452, %v125
    %v469 = vadd.f32 %v453, %v125
    %v470 = vand.u32 2147483647, %v454
    %vm471 = vcmp.le.f32.partialorder %v470, 0.7853982
    %vm472 = vcmp.lt.s32.totalorder %v454, 0
    %v473 = vand.u32 %v454, 2139095040
    %v474 = vshrl.u32 %v473, 23
    %v475 = vsub.s32 %v474, 127
    %v476 = vand.u32 2147483647, %v454
    %v477 = vand.u32 %v476, 8388607
    %v478 = vor.u32 %v477, 8388608
    %v479 = vsub.s32 0, %v478
    %v480 = vadd.s32 %v475, 1
    %vm481 = vcmp.gt.s32.totalorder %v480, 0
    %v482 = vsel %vm481, %v480, 0
    %v483 = vshrl.u32 %v482, 5
    %v484 = vand.u32 %v482, 31
    %v485 = vsub.s32 32, %v484
    %v486 = vshrl.u32 683565275, %v485
    %v487 = vshll.u32 683565275, %v484
    %v488 = vshrl.u32 2475754826, %v485
    %v489 = vor.u32 %v487, %v488
    %v490 = vshll.u32 2475754826, %v484
    %v491 = vshrl.u32 2131351028, %v485
    %v492 = vor.u32 %v490, %v491
    %v493 = vshll.u32 2131351028, %v484
    %v494 = vshrl.u32 2102212464, %v485
    %v495 = vor.u32 %v493, %v494
    %v496 = vshll.u32 2102212464, %v484
    %v497 = vshrl.u32 920167782, %v485
    %v498 = vor.u32 %v496, %v497
    %v499 = vshll.u32 920167782, %v484
    %v500 = vshrl.u32 1326507024, %v485
    %v501 = vor.u32 %v499, %v500
    %vm502 = vcmp.lt.s32.totalorder %v483, 1
    %vm503 = vcmp.lt.s32.totalorder %v483, 2
    %vm504 = vcmp.lt.s32.totalorder %v483, 3
    %vm505 = vcmp.lt.s32.totalorder %v483, 4
    %v506 = vsel %vm502, %v486, %v489
    %v507 = vsel %vm505, %v495, 2102212464
    %v508 = vsel %vm504, %v492, %v507
    %v509 = vsel %vm503, %v506, %v508
    %v510 = vsel %vm502, %v489, %v492
    %v511 = vsel %vm505, %v498, 920167782
    %v512 = vsel %vm504, %v495, %v511
    %v513 = vsel %vm503, %v510, %v512
    %v514 = vsel %vm502, %v492, %v495
    %v515 = vsel %vm505, %v501, 1326507024
    %v516 = vsel %vm504, %v498, %v515
    %v517 = vsel %vm503, %v514, %v516
    %v518 = vshll.u32 %v478, 8
    %v519 = vmul.u32.u64.compose %v518, %v517
    %v520 = vextract.low.u32 %v519
    %v521 = vextract.high.u32 %v519
    %v522 = vmul.u32.u64.compose %v518, %v513
    %v523 = vextract.low.u32 %v522
    %v524 = vextract.high.u32 %v522
    %v525 = vmul.u32 %v518, %v509
    %v526 = vadd.s32 %v521, %v523
    %vm527 = vc.u32 %v521, %v523
    %v528 = vadd.s32 %v524, 1
    %v529 = vsel %vm527, %v528, %v524
    %v530 = vadd.s32 %v525, %v529
    %v531 = vadd.s32 %v530, 536870912
    %v532 = vshrl.u32 %v531, 30
    %v533 = vshll.u32 %v532, 30
    %v534 = vsub.s32 %v530, %v533
    %vm535 = vcmp.lt.s32.totalorder %v534, 0
    %v536 = vsub.s32 0, %v534
    %v537 = vsel %vm535, %v536, %v534
    %v538 = vclz %v537
    %v539 = vsub.s32 %v538, 2
    %vm540 = vcmp.gt.s32.totalorder 0, %v539
    %v541 = vsel %vm540, 0, %v539
    %v542 = vsub.s32 32, %v541
    %v543 = vshll.u32 %v534, %v541
    %v544 = vshrl.u32 %v526, %v542
    %v545 = vor.u32 %v543, %v544
    %v546 = vsub.s32 4294967266, %v541
    %v547 = vadd.s32 %v546, 127
    %v548 = vshll.u32 %v547, 23
    %v549 = vor.u32 4788187, %v548
    %v550 = vand.u32 2147483647, %v549
    %v552 = vcvt.s32.f32 %v545
    %v553 = vmul.f32 %v552, %v550
    %v554 = vxor.u32 %v553, 2147483648
    %v555 = vsel %vm472, %v554, %v553
    %v556 = vsub.s32 4, %v532
    %v557 = vsel %vm472, %v556, %v532
    %v558 = vsel %vm471, %v454, %v555
    %v559 = vsel %vm471, 0, %v557
    %v560 = vcosq.f32.pop %v558
    %v561 = vsinq.f32.pop %v558
    %vm562 = vweird.f32 %v454
    %v563 = vadd.s32 %v559, 3
    %v564 = vand.u32 %v563, 3
    %vm565 = vcmp.lt.s32.totalorder %v564, 2
    %vm566 = vcmp.eq.s32.totalorder %v564, 0
    %v567 = vxor.u32 %v561, 2147483648
    %v568 = vsel %vm566, %v560, %v567
    %vm569 = vcmp.eq.s32.totalorder %v564, 2
    %v570 = vxor.u32 %v560, 2147483648
    %v571 = vsel %vm569, %v570, %v561
    %v572 = vsel %vm565, %v568, %v571
    %v573 = vsel %vm562, nan, %v572
    %v574 = vand.u32 2147483647, %v455
    %vm575 = vcmp.le.f32.partialorder %v574, 0.7853982
    %vm576 = vcmp.lt.s32.totalorder %v455, 0
    %v577 = vand.u32 %v455, 2139095040
    %v578 = vshrl.u32 %v577, 23
    %v579 = vsub.s32 %v578, 127
    %v580 = vand.u32 2147483647, %v455
    %v581 = vand.u32 %v580, 8388607
    %v582 = vor.u32 %v581, 8388608
    %v583 = vsub.s32 0, %v582
    %v584 = vadd.s32 %v579, 1
    %vm585 = vcmp.gt.s32.totalorder %v584, 0
    %v586 = vsel %vm585, %v584, 0
    %v587 = vshrl.u32 %v586, 5
    %v588 = vand.u32 %v586, 31
    %v589 = vsub.s32 32, %v588
    %v590 = vshrl.u32 683565275, %v589
    %v591 = vshll.u32 683565275, %v588
    %v592 = vshrl.u32 2475754826, %v589
    %v593 = vor.u32 %v591, %v592
    %v594 = vshll.u32 2475754826, %v588
    %v595 = vshrl.u32 2131351028, %v589
    %v596 = vor.u32 %v594, %v595
    %v597 = vshll.u32 2131351028, %v588
    %v598 = vshrl.u32 2102212464, %v589
    %v599 = vor.u32 %v597, %v598
    %v600 = vshll.u32 2102212464, %v588
    %v601 = vshrl.u32 920167782, %v589
    %v602 = vor.u32 %v600, %v601
    %v603 = vshll.u32 920167782, %v588
    %v604 = vshrl.u32 1326507024, %v589
    %v605 = vor.u32 %v603, %v604
    %vm606 = vcmp.lt.s32.totalorder %v587, 1
    %vm607 = vcmp.lt.s32.totalorder %v587, 2
    %vm608 = vcmp.lt.s32.totalorder %v587, 3
    %vm609 = vcmp.lt.s32.totalorder %v587, 4
    %v610 = vsel %vm606, %v590, %v593
    %v611 = vsel %vm609, %v599, 2102212464
    %v612 = vsel %vm608, %v596, %v611
    %v613 = vsel %vm607, %v610, %v612
    %v614 = vsel %vm606, %v593, %v596
    %v615 = vsel %vm609, %v602, 920167782
    %v616 = vsel %vm608, %v599, %v615
    %v617 = vsel %vm607, %v614, %v616
    %v618 = vsel %vm606, %v596, %v599
    %v619 = vsel %vm609, %v605, 1326507024
    %v620 = vsel %vm608, %v602, %v619
    %v621 = vsel %vm607, %v618, %v620
    %v622 = vshll.u32 %v582, 8
    %v623 = vmul.u32.u64.compose %v622, %v621
    %v624 = vextract.low.u32 %v623
    %v625 = vextract.high.u32 %v623
    %v626 = vmul.u32.u64.compose %v622, %v617
    %v627 = vextract.low.u32 %v626
    %v628 = vextract.high.u32 %v626
    %v629 = vmul.u32 %v622, %v613
    %v630 = vadd.s32 %v625, %v627
    %vm631 = vc.u32 %v625, %v627
    %v632 = vadd.s32 %v628, 1
    %v633 = vsel %vm631, %v632, %v628
    %v634 = vadd.s32 %v629, %v633
    %v635 = vadd.s32 %v634, 536870912
    %v636 = vshrl.u32 %v635, 30
    %v637 = vshll.u32 %v636, 30
    %v638 = vsub.s32 %v634, %v637
    %vm639 = vcmp.lt.s32.totalorder %v638, 0
    %v640 = vsub.s32 0, %v638
    %v641 = vsel %vm639, %v640, %v638
    %v642 = vclz %v641
    %v643 = vsub.s32 %v642, 2
    %vm644 = vcmp.gt.s32.totalorder 0, %v643
    %v645 = vsel %vm644, 0, %v643
    %v646 = vsub.s32 32, %v645
    %v647 = vshll.u32 %v638, %v645
    %v648 = vshrl.u32 %v630, %v646
    %v649 = vor.u32 %v647, %v648
    %v650 = vsub.s32 4294967266, %v645
    %v651 = vadd.s32 %v650, 127
    %v652 = vshll.u32 %v651, 23
    %v653 = vor.u32 4788187, %v652
    %v654 = vand.u32 2147483647, %v653
    %v656 = vcvt.s32.f32 %v649
    %v657 = vmul.f32 %v656, %v654
    %v658 = vxor.u32 %v657, 2147483648
    %v659 = vsel %vm576, %v658, %v657
    %v660 = vsub.s32 4, %v636
    %v661 = vsel %vm576, %v660, %v636
    %v662 = vsel %vm575, %v455, %v659
    %v663 = vsel %vm575, 0, %v661
    %v664 = vcosq.f32.pop %v662
    %v665 = vsinq.f32.pop %v662
    %vm666 = vweird.f32 %v455
    %v667 = vadd.s32 %v663, 3
    %v668 = vand.u32 %v667, 3
    %vm669 = vcmp.lt.s32.totalorder %v668, 2
    %vm670 = vcmp.eq.s32.totalorder %v668, 0
    %v671 = vxor.u32 %v665, 2147483648
    %v672 = vsel %vm670, %v664, %v671
    %vm673 = vcmp.eq.s32.totalorder %v668, 2
    %v674 = vxor.u32 %v664, 2147483648
    %v675 = vsel %vm673, %v674, %v665
    %v676 = vsel %vm669, %v672, %v675
    %v677 = vsel %vm666, nan, %v676
    %v678 = vand.u32 2147483647, %v456
    %vm679 = vcmp.le.f32.partialorder %v678, 0.7853982
    %vm680 = vcmp.lt.s32.totalorder %v456, 0
    %v681 = vand.u32 %v456, 2139095040
    %v682 = vshrl.u32 %v681, 23
    %v683 = vsub.s32 %v682, 127
    %v684 = vand.u32 2147483647, %v456
    %v685 = vand.u32 %v684, 8388607
    %v686 = vor.u32 %v685, 8388608
    %v687 = vsub.s32 0, %v686
    %v688 = vadd.s32 %v683, 1
    %vm689 = vcmp.gt.s32.totalorder %v688, 0
    %v690 = vsel %vm689, %v688, 0
    %v691 = vshrl.u32 %v690, 5
    %v692 = vand.u32 %v690, 31
    %v693 = vsub.s32 32, %v692
    %v694 = vshrl.u32 683565275, %v693
    %v695 = vshll.u32 683565275, %v692
    %v696 = vshrl.u32 2475754826, %v693
    %v697 = vor.u32 %v695, %v696
    %v698 = vshll.u32 2475754826, %v692
    %v699 = vshrl.u32 2131351028, %v693
    %v700 = vor.u32 %v698, %v699
    %v701 = vshll.u32 2131351028, %v692
    %v702 = vshrl.u32 2102212464, %v693
    %v703 = vor.u32 %v701, %v702
    %v704 = vshll.u32 2102212464, %v692
    %v705 = vshrl.u32 920167782, %v693
    %v706 = vor.u32 %v704, %v705
    %v707 = vshll.u32 920167782, %v692
    %v708 = vshrl.u32 1326507024, %v693
    %v709 = vor.u32 %v707, %v708
    %vm710 = vcmp.lt.s32.totalorder %v691, 1
    %vm711 = vcmp.lt.s32.totalorder %v691, 2
    %vm712 = vcmp.lt.s32.totalorder %v691, 3
    %vm713 = vcmp.lt.s32.totalorder %v691, 4
    %v714 = vsel %vm710, %v694, %v697
    %v715 = vsel %vm713, %v703, 2102212464
    %v716 = vsel %vm712, %v700, %v715
    %v717 = vsel %vm711, %v714, %v716
    %v718 = vsel %vm710, %v697, %v700
    %v719 = vsel %vm713, %v706, 920167782
    %v720 = vsel %vm712, %v703, %v719
    %v721 = vsel %vm711, %v718, %v720
    %v722 = vsel %vm710, %v700, %v703
    %v723 = vsel %vm713, %v709, 1326507024
    %v724 = vsel %vm712, %v706, %v723
    %v725 = vsel %vm711, %v722, %v724
    %v726 = vshll.u32 %v686, 8
    %v727 = vmul.u32.u64.compose %v726, %v725
    %v728 = vextract.low.u32 %v727
    %v729 = vextract.high.u32 %v727
    %v730 = vmul.u32.u64.compose %v726, %v721
    %v731 = vextract.low.u32 %v730
    %v732 = vextract.high.u32 %v730
    %v733 = vmul.u32 %v726, %v717
    %v734 = vadd.s32 %v729, %v731
    %vm735 = vc.u32 %v729, %v731
    %v736 = vadd.s32 %v732, 1
    %v737 = vsel %vm735, %v736, %v732
    %v738 = vadd.s32 %v733, %v737
    %v739 = vadd.s32 %v738, 536870912
    %v740 = vshrl.u32 %v739, 30
    %v741 = vshll.u32 %v740, 30
    %v742 = vsub.s32 %v738, %v741
    %vm743 = vcmp.lt.s32.totalorder %v742, 0
    %v744 = vsub.s32 0, %v742
    %v745 = vsel %vm743, %v744, %v742
    %v746 = vclz %v745
    %v747 = vsub.s32 %v746, 2
    %vm748 = vcmp.gt.s32.totalorder 0, %v747
    %v749 = vsel %vm748, 0, %v747
    %v750 = vsub.s32 32, %v749
    %v751 = vshll.u32 %v742, %v749
    %v752 = vshrl.u32 %v734, %v750
    %v753 = vor.u32 %v751, %v752
    %v754 = vsub.s32 4294967266, %v749
    %v755 = vadd.s32 %v754, 127
    %v756 = vshll.u32 %v755, 23
    %v757 = vor.u32 4788187, %v756
    %v758 = vand.u32 2147483647, %v757
    %v760 = vcvt.s32.f32 %v753
    %v761 = vmul.f32 %v760, %v758
    %v762 = vxor.u32 %v761, 2147483648
    %v763 = vsel %vm680, %v762, %v761
    %v764 = vsub.s32 4, %v740
    %v765 = vsel %vm680, %v764, %v740
    %v766 = vsel %vm679, %v456, %v763
    %v767 = vsel %vm679, 0, %v765
    %v768 = vcosq.f32.pop %v766
    %v769 = vsinq.f32.pop %v766
    %vm770 = vweird.f32 %v456
    %v771 = vadd.s32 %v767, 3
    %v772 = vand.u32 %v771, 3
    %vm773 = vcmp.lt.s32.totalorder %v772, 2
    %vm774 = vcmp.eq.s32.totalorder %v772, 0
    %v775 = vxor.u32 %v769, 2147483648
    %v776 = vsel %vm774, %v768, %v775
    %vm777 = vcmp.eq.s32.totalorder %v772, 2
    %v778 = vxor.u32 %v768, 2147483648
    %v779 = vsel %vm777, %v778, %v769
    %v780 = vsel %vm773, %v776, %v779
    %v781 = vsel %vm770, nan, %v780
    %v782 = vand.u32 2147483647, %v457
    %vm783 = vcmp.le.f32.partialorder %v782, 0.7853982
    %vm784 = vcmp.lt.s32.totalorder %v457, 0
    %v785 = vand.u32 %v457, 2139095040
    %v786 = vshrl.u32 %v785, 23
    %v787 = vsub.s32 %v786, 127
    %v788 = vand.u32 2147483647, %v457
    %v789 = vand.u32 %v788, 8388607
    %v790 = vor.u32 %v789, 8388608
    %v791 = vsub.s32 0, %v790
    %v792 = vadd.s32 %v787, 1
    %vm793 = vcmp.gt.s32.totalorder %v792, 0
    %v794 = vsel %vm793, %v792, 0
    %v795 = vshrl.u32 %v794, 5
    %v796 = vand.u32 %v794, 31
    %v797 = vsub.s32 32, %v796
    %v798 = vshrl.u32 683565275, %v797
    %v799 = vshll.u32 683565275, %v796
    %v800 = vshrl.u32 2475754826, %v797
    %v801 = vor.u32 %v799, %v800
    %v802 = vshll.u32 2475754826, %v796
    %v803 = vshrl.u32 2131351028, %v797
    %v804 = vor.u32 %v802, %v803
    %v805 = vshll.u32 2131351028, %v796
    %v806 = vshrl.u32 2102212464, %v797
    %v807 = vor.u32 %v805, %v806
    %v808 = vshll.u32 2102212464, %v796
    %v809 = vshrl.u32 920167782, %v797
    %v810 = vor.u32 %v808, %v809
    %v811 = vshll.u32 920167782, %v796
    %v812 = vshrl.u32 1326507024, %v797
    %v813 = vor.u32 %v811, %v812
    %vm814 = vcmp.lt.s32.totalorder %v795, 1
    %vm815 = vcmp.lt.s32.totalorder %v795, 2
    %vm816 = vcmp.lt.s32.totalorder %v795, 3
    %vm817 = vcmp.lt.s32.totalorder %v795, 4
    %v818 = vsel %vm814, %v798, %v801
    %v819 = vsel %vm817, %v807, 2102212464
    %v820 = vsel %vm816, %v804, %v819
    %v821 = vsel %vm815, %v818, %v820
    %v822 = vsel %vm814, %v801, %v804
    %v823 = vsel %vm817, %v810, 920167782
    %v824 = vsel %vm816, %v807, %v823
    %v825 = vsel %vm815, %v822, %v824
    %v826 = vsel %vm814, %v804, %v807
    %v827 = vsel %vm817, %v813, 1326507024
    %v828 = vsel %vm816, %v810, %v827
    %v829 = vsel %vm815, %v826, %v828
    %v830 = vshll.u32 %v790, 8
    %v831 = vmul.u32.u64.compose %v830, %v829
    %v832 = vextract.low.u32 %v831
    %v833 = vextract.high.u32 %v831
    %v834 = vmul.u32.u64.compose %v830, %v825
    %v835 = vextract.low.u32 %v834
    %v836 = vextract.high.u32 %v834
    %v837 = vmul.u32 %v830, %v821
    %v838 = vadd.s32 %v833, %v835
    %vm839 = vc.u32 %v833, %v835
    %v840 = vadd.s32 %v836, 1
    %v841 = vsel %vm839, %v840, %v836
    %v842 = vadd.s32 %v837, %v841
    %v843 = vadd.s32 %v842, 536870912
    %v844 = vshrl.u32 %v843, 30
    %v845 = vshll.u32 %v844, 30
    %v846 = vsub.s32 %v842, %v845
    %vm847 = vcmp.lt.s32.totalorder %v846, 0
    %v848 = vsub.s32 0, %v846
    %v849 = vsel %vm847, %v848, %v846
    %v850 = vclz %v849
    %v851 = vsub.s32 %v850, 2
    %vm852 = vcmp.gt.s32.totalorder 0, %v851
    %v853 = vsel %vm852, 0, %v851
    %v854 = vsub.s32 32, %v853
    %v855 = vshll.u32 %v846, %v853
    %v856 = vshrl.u32 %v838, %v854
    %v857 = vor.u32 %v855, %v856
    %v858 = vsub.s32 4294967266, %v853
    %v859 = vadd.s32 %v858, 127
    %v860 = vshll.u32 %v859, 23
    %v861 = vor.u32 4788187, %v860
    %v862 = vand.u32 2147483647, %v861
    %v864 = vcvt.s32.f32 %v857
    %v865 = vmul.f32 %v864, %v862
    %v866 = vxor.u32 %v865, 2147483648
    %v867 = vsel %vm784, %v866, %v865
    %v868 = vsub.s32 4, %v844
    %v869 = vsel %vm784, %v868, %v844
    %v870 = vsel %vm783, %v457, %v867
    %v871 = vsel %vm783, 0, %v869
    %v872 = vcosq.f32.pop %v870
    %v873 = vsinq.f32.pop %v870
    %vm874 = vweird.f32 %v457
    %v875 = vadd.s32 %v871, 3
    %v876 = vand.u32 %v875, 3
    %vm877 = vcmp.lt.s32.totalorder %v876, 2
    %vm878 = vcmp.eq.s32.totalorder %v876, 0
    %v879 = vxor.u32 %v873, 2147483648
    %v880 = vsel %vm878, %v872, %v879
    %vm881 = vcmp.eq.s32.totalorder %v876, 2
    %v882 = vxor.u32 %v872, 2147483648
    %v883 = vsel %vm881, %v882, %v873
    %v884 = vsel %vm877, %v880, %v883
    %v885 = vsel %vm874, nan, %v884
    %v886 = vand.u32 2147483647, %v458
    %vm887 = vcmp.le.f32.partialorder %v886, 0.7853982
    %vm888 = vcmp.lt.s32.totalorder %v458, 0
    %v889 = vand.u32 %v458, 2139095040
    %v890 = vshrl.u32 %v889, 23
    %v891 = vsub.s32 %v890, 127
    %v892 = vand.u32 2147483647, %v458
    %v893 = vand.u32 %v892, 8388607
    %v894 = vor.u32 %v893, 8388608
    %v895 = vsub.s32 0, %v894
    %v896 = vadd.s32 %v891, 1
    %vm897 = vcmp.gt.s32.totalorder %v896, 0
    %v898 = vsel %vm897, %v896, 0
    %v899 = vshrl.u32 %v898, 5
    %v900 = vand.u32 %v898, 31
    %v901 = vsub.s32 32, %v900
    %v902 = vshrl.u32 683565275, %v901
    %v903 = vshll.u32 683565275, %v900
    %v904 = vshrl.u32 2475754826, %v901
    %v905 = vor.u32 %v903, %v904
    %v906 = vshll.u32 2475754826, %v900
    %v907 = vshrl.u32 2131351028, %v901
    %v908 = vor.u32 %v906, %v907
    %v909 = vshll.u32 2131351028, %v900
    %v910 = vshrl.u32 2102212464, %v901
    %v911 = vor.u32 %v909, %v910
    %v912 = vshll.u32 2102212464, %v900
    %v913 = vshrl.u32 920167782, %v901
    %v914 = vor.u32 %v912, %v913
    %v915 = vshll.u32 920167782, %v900
    %v916 = vshrl.u32 1326507024, %v901
    %v917 = vor.u32 %v915, %v916
    %vm918 = vcmp.lt.s32.totalorder %v899, 1
    %vm919 = vcmp.lt.s32.totalorder %v899, 2
    %vm920 = vcmp.lt.s32.totalorder %v899, 3
    %vm921 = vcmp.lt.s32.totalorder %v899, 4
    %v922 = vsel %vm918, %v902, %v905
    %v923 = vsel %vm921, %v911, 2102212464
    %v924 = vsel %vm920, %v908, %v923
    %v925 = vsel %vm919, %v922, %v924
    %v926 = vsel %vm918, %v905, %v908
    %v927 = vsel %vm921, %v914, 920167782
    %v928 = vsel %vm920, %v911, %v927
    %v929 = vsel %vm919, %v926, %v928
    %v930 = vsel %vm918, %v908, %v911
    %v931 = vsel %vm921, %v917, 1326507024
    %v932 = vsel %vm920, %v914, %v931
    %v933 = vsel %vm919, %v930, %v932
    %v934 = vshll.u32 %v894, 8
    %v935 = vmul.u32.u64.compose %v934, %v933
    %v936 = vextract.low.u32 %v935
    %v937 = vextract.high.u32 %v935
    %v938 = vmul.u32.u64.compose %v934, %v929
    %v939 = vextract.low.u32 %v938
    %v940 = vextract.high.u32 %v938
    %v941 = vmul.u32 %v934, %v925
    %v942 = vadd.s32 %v937, %v939
    %vm943 = vc.u32 %v937, %v939
    %v944 = vadd.s32 %v940, 1
    %v945 = vsel %vm943, %v944, %v940
    %v946 = vadd.s32 %v941, %v945
    %v947 = vadd.s32 %v946, 536870912
    %v948 = vshrl.u32 %v947, 30
    %v949 = vshll.u32 %v948, 30
    %v950 = vsub.s32 %v946, %v949
    %vm951 = vcmp.lt.s32.totalorder %v950, 0
    %v952 = vsub.s32 0, %v950
    %v953 = vsel %vm951, %v952, %v950
    %v954 = vclz %v953
    %v955 = vsub.s32 %v954, 2
    %vm956 = vcmp.gt.s32.totalorder 0, %v955
    %v957 = vsel %vm956, 0, %v955
    %v958 = vsub.s32 32, %v957
    %v959 = vshll.u32 %v950, %v957
    %v960 = vshrl.u32 %v942, %v958
    %v961 = vor.u32 %v959, %v960
    %v962 = vsub.s32 4294967266, %v957
    %v963 = vadd.s32 %v962, 127
    %v964 = vshll.u32 %v963, 23
    %v965 = vor.u32 4788187, %v964
    %v966 = vand.u32 2147483647, %v965
    %v968 = vcvt.s32.f32 %v961
    %v969 = vmul.f32 %v968, %v966
    %v970 = vxor.u32 %v969, 2147483648
    %v971 = vsel %vm888, %v970, %v969
    %v972 = vsub.s32 4, %v948
    %v973 = vsel %vm888, %v972, %v948
    %v974 = vsel %vm887, %v458, %v971
    %v975 = vsel %vm887, 0, %v973
    %v976 = vcosq.f32.pop %v974
    %v977 = vsinq.f32.pop %v974
    %vm978 = vweird.f32 %v458
    %v979 = vadd.s32 %v975, 3
    %v980 = vand.u32 %v979, 3
    %vm981 = vcmp.lt.s32.totalorder %v980, 2
    %vm982 = vcmp.eq.s32.totalorder %v980, 0
    %v983 = vxor.u32 %v977, 2147483648
    %v984 = vsel %vm982, %v976, %v983
    %vm985 = vcmp.eq.s32.totalorder %v980, 2
    %v986 = vxor.u32 %v976, 2147483648
    %v987 = vsel %vm985, %v986, %v977
    %v988 = vsel %vm981, %v984, %v987
    %v989 = vsel %vm978, nan, %v988
    %v990 = vand.u32 2147483647, %v459
    %vm991 = vcmp.le.f32.partialorder %v990, 0.7853982
    %vm992 = vcmp.lt.s32.totalorder %v459, 0
    %v993 = vand.u32 %v459, 2139095040
    %v994 = vshrl.u32 %v993, 23
    %v995 = vsub.s32 %v994, 127
    %v996 = vand.u32 2147483647, %v459
    %v997 = vand.u32 %v996, 8388607
    %v998 = vor.u32 %v997, 8388608
    %v999 = vsub.s32 0, %v998
    %v1000 = vadd.s32 %v995, 1
    %vm1001 = vcmp.gt.s32.totalorder %v1000, 0
    %v1002 = vsel %vm1001, %v1000, 0
    %v1003 = vshrl.u32 %v1002, 5
    %v1004 = vand.u32 %v1002, 31
    %v1005 = vsub.s32 32, %v1004
    %v1006 = vshrl.u32 683565275, %v1005
    %v1007 = vshll.u32 683565275, %v1004
    %v1008 = vshrl.u32 2475754826, %v1005
    %v1009 = vor.u32 %v1007, %v1008
    %v1010 = vshll.u32 2475754826, %v1004
    %v1011 = vshrl.u32 2131351028, %v1005
    %v1012 = vor.u32 %v1010, %v1011
    %v1013 = vshll.u32 2131351028, %v1004
    %v1014 = vshrl.u32 2102212464, %v1005
    %v1015 = vor.u32 %v1013, %v1014
    %v1016 = vshll.u32 2102212464, %v1004
    %v1017 = vshrl.u32 920167782, %v1005
    %v1018 = vor.u32 %v1016, %v1017
    %v1019 = vshll.u32 920167782, %v1004
    %v1020 = vshrl.u32 1326507024, %v1005
    %v1021 = vor.u32 %v1019, %v1020
    %vm1022 = vcmp.lt.s32.totalorder %v1003, 1
    %vm1023 = vcmp.lt.s32.totalorder %v1003, 2
    %vm1024 = vcmp.lt.s32.totalorder %v1003, 3
    %vm1025 = vcmp.lt.s32.totalorder %v1003, 4
    %v1026 = vsel %vm1022, %v1006, %v1009
    %v1027 = vsel %vm1025, %v1015, 2102212464
    %v1028 = vsel %vm1024, %v1012, %v1027
    %v1029 = vsel %vm1023, %v1026, %v1028
    %v1030 = vsel %vm1022, %v1009, %v1012
    %v1031 = vsel %vm1025, %v1018, 920167782
    %v1032 = vsel %vm1024, %v1015, %v1031
    %v1033 = vsel %vm1023, %v1030, %v1032
    %v1034 = vsel %vm1022, %v1012, %v1015
    %v1035 = vsel %vm1025, %v1021, 1326507024
    %v1036 = vsel %vm1024, %v1018, %v1035
    %v1037 = vsel %vm1023, %v1034, %v1036
    %v1038 = vshll.u32 %v998, 8
    %v1039 = vmul.u32.u64.compose %v1038, %v1037
    %v1040 = vextract.low.u32 %v1039
    %v1041 = vextract.high.u32 %v1039
    %v1042 = vmul.u32.u64.compose %v1038, %v1033
    %v1043 = vextract.low.u32 %v1042
    %v1044 = vextract.high.u32 %v1042
    %v1045 = vmul.u32 %v1038, %v1029
    %v1046 = vadd.s32 %v1041, %v1043
    %vm1047 = vc.u32 %v1041, %v1043
    %v1048 = vadd.s32 %v1044, 1
    %v1049 = vsel %vm1047, %v1048, %v1044
    %v1050 = vadd.s32 %v1045, %v1049
    %v1051 = vadd.s32 %v1050, 536870912
    %v1052 = vshrl.u32 %v1051, 30
    %v1053 = vshll.u32 %v1052, 30
    %v1054 = vsub.s32 %v1050, %v1053
    %vm1055 = vcmp.lt.s32.totalorder %v1054, 0
    %v1056 = vsub.s32 0, %v1054
    %v1057 = vsel %vm1055, %v1056, %v1054
    %v1058 = vclz %v1057
    %v1059 = vsub.s32 %v1058, 2
    %vm1060 = vcmp.gt.s32.totalorder 0, %v1059
    %v1061 = vsel %vm1060, 0, %v1059
    %v1062 = vsub.s32 32, %v1061
    %v1063 = vshll.u32 %v1054, %v1061
    %v1064 = vshrl.u32 %v1046, %v1062
    %v1065 = vor.u32 %v1063, %v1064
    %v1066 = vsub.s32 4294967266, %v1061
    %v1067 = vadd.s32 %v1066, 127
    %v1068 = vshll.u32 %v1067, 23
    %v1069 = vor.u32 4788187, %v1068
    %v1070 = vand.u32 2147483647, %v1069
    %v1072 = vcvt.s32.f32 %v1065
    %v1073 = vmul.f32 %v1072, %v1070
    %v1074 = vxor.u32 %v1073, 2147483648
    %v1075 = vsel %vm992, %v1074, %v1073
    %v1076 = vsub.s32 4, %v1052
    %v1077 = vsel %vm992, %v1076, %v1052
    %v1078 = vsel %vm991, %v459, %v1075
    %v1079 = vsel %vm991, 0, %v1077
    %v1080 = vcosq.f32.pop %v1078
    %v1081 = vsinq.f32.pop %v1078
    %vm1082 = vweird.f32 %v459
    %v1083 = vadd.s32 %v1079, 3
    %v1084 = vand.u32 %v1083, 3
    %vm1085 = vcmp.lt.s32.totalorder %v1084, 2
    %vm1086 = vcmp.eq.s32.totalorder %v1084, 0
    %v1087 = vxor.u32 %v1081, 2147483648
    %v1088 = vsel %vm1086, %v1080, %v1087
    %vm1089 = vcmp.eq.s32.totalorder %v1084, 2
    %v1090 = vxor.u32 %v1080, 2147483648
    %v1091 = vsel %vm1089, %v1090, %v1081
    %v1092 = vsel %vm1085, %v1088, %v1091
    %v1093 = vsel %vm1082, nan, %v1092
    %v1094 = vand.u32 2147483647, %v460
    %vm1095 = vcmp.le.f32.partialorder %v1094, 0.7853982
    %vm1096 = vcmp.lt.s32.totalorder %v460, 0
    %v1097 = vand.u32 %v460, 2139095040
    %v1098 = vshrl.u32 %v1097, 23
    %v1099 = vsub.s32 %v1098, 127
    %v1100 = vand.u32 2147483647, %v460
    %v1101 = vand.u32 %v1100, 8388607
    %v1102 = vor.u32 %v1101, 8388608
    %v1103 = vsub.s32 0, %v1102
    %v1104 = vadd.s32 %v1099, 1
    %vm1105 = vcmp.gt.s32.totalorder %v1104, 0
    %v1106 = vsel %vm1105, %v1104, 0
    %v1107 = vshrl.u32 %v1106, 5
    %v1108 = vand.u32 %v1106, 31
    %v1109 = vsub.s32 32, %v1108
    %v1110 = vshrl.u32 683565275, %v1109
    %v1111 = vshll.u32 683565275, %v1108
    %v1112 = vshrl.u32 2475754826, %v1109
    %v1113 = vor.u32 %v1111, %v1112
    %v1114 = vshll.u32 2475754826, %v1108
    %v1115 = vshrl.u32 2131351028, %v1109
    %v1116 = vor.u32 %v1114, %v1115
    %v1117 = vshll.u32 2131351028, %v1108
    %v1118 = vshrl.u32 2102212464, %v1109
    %v1119 = vor.u32 %v1117, %v1118
    %v1120 = vshll.u32 2102212464, %v1108
    %v1121 = vshrl.u32 920167782, %v1109
    %v1122 = vor.u32 %v1120, %v1121
    %v1123 = vshll.u32 920167782, %v1108
    %v1124 = vshrl.u32 1326507024, %v1109
    %v1125 = vor.u32 %v1123, %v1124
    %vm1126 = vcmp.lt.s32.totalorder %v1107, 1
    %vm1127 = vcmp.lt.s32.totalorder %v1107, 2
    %vm1128 = vcmp.lt.s32.totalorder %v1107, 3
    %vm1129 = vcmp.lt.s32.totalorder %v1107, 4
    %v1130 = vsel %vm1126, %v1110, %v1113
    %v1131 = vsel %vm1129, %v1119, 2102212464
    %v1132 = vsel %vm1128, %v1116, %v1131
    %v1133 = vsel %vm1127, %v1130, %v1132
    %v1134 = vsel %vm1126, %v1113, %v1116
    %v1135 = vsel %vm1129, %v1122, 920167782
    %v1136 = vsel %vm1128, %v1119, %v1135
    %v1137 = vsel %vm1127, %v1134, %v1136
    %v1138 = vsel %vm1126, %v1116, %v1119
    %v1139 = vsel %vm1129, %v1125, 1326507024
    %v1140 = vsel %vm1128, %v1122, %v1139
    %v1141 = vsel %vm1127, %v1138, %v1140
    %v1142 = vshll.u32 %v1102, 8
    %v1143 = vmul.u32.u64.compose %v1142, %v1141
    %v1144 = vextract.low.u32 %v1143
    %v1145 = vextract.high.u32 %v1143
    %v1146 = vmul.u32.u64.compose %v1142, %v1137
    %v1147 = vextract.low.u32 %v1146
    %v1148 = vextract.high.u32 %v1146
    %v1149 = vmul.u32 %v1142, %v1133
    %v1150 = vadd.s32 %v1145, %v1147
    %vm1151 = vc.u32 %v1145, %v1147
    %v1152 = vadd.s32 %v1148, 1
    %v1153 = vsel %vm1151, %v1152, %v1148
    %v1154 = vadd.s32 %v1149, %v1153
    %v1155 = vadd.s32 %v1154, 536870912
    %v1156 = vshrl.u32 %v1155, 30
    %v1157 = vshll.u32 %v1156, 30
    %v1158 = vsub.s32 %v1154, %v1157
    %vm1159 = vcmp.lt.s32.totalorder %v1158, 0
    %v1160 = vsub.s32 0, %v1158
    %v1161 = vsel %vm1159, %v1160, %v1158
    %v1162 = vclz %v1161
    %v1163 = vsub.s32 %v1162, 2
    %vm1164 = vcmp.gt.s32.totalorder 0, %v1163
    %v1165 = vsel %vm1164, 0, %v1163
    %v1166 = vsub.s32 32, %v1165
    %v1167 = vshll.u32 %v1158, %v1165
    %v1168 = vshrl.u32 %v1150, %v1166
    %v1169 = vor.u32 %v1167, %v1168
    %v1170 = vsub.s32 4294967266, %v1165
    %v1171 = vadd.s32 %v1170, 127
    %v1172 = vshll.u32 %v1171, 23
    %v1173 = vor.u32 4788187, %v1172
    %v1174 = vand.u32 2147483647, %v1173
    %v1176 = vcvt.s32.f32 %v1169
    %v1177 = vmul.f32 %v1176, %v1174
    %v1178 = vxor.u32 %v1177, 2147483648
    %v1179 = vsel %vm1096, %v1178, %v1177
    %v1180 = vsub.s32 4, %v1156
    %v1181 = vsel %vm1096, %v1180, %v1156
    %v1182 = vsel %vm1095, %v460, %v1179
    %v1183 = vsel %vm1095, 0, %v1181
    %v1184 = vcosq.f32.pop %v1182
    %v1185 = vsinq.f32.pop %v1182
    %vm1186 = vweird.f32 %v460
    %v1187 = vadd.s32 %v1183, 3
    %v1188 = vand.u32 %v1187, 3
    %vm1189 = vcmp.lt.s32.totalorder %v1188, 2
    %vm1190 = vcmp.eq.s32.totalorder %v1188, 0
    %v1191 = vxor.u32 %v1185, 2147483648
    %v1192 = vsel %vm1190, %v1184, %v1191
    %vm1193 = vcmp.eq.s32.totalorder %v1188, 2
    %v1194 = vxor.u32 %v1184, 2147483648
    %v1195 = vsel %vm1193, %v1194, %v1185
    %v1196 = vsel %vm1189, %v1192, %v1195
    %v1197 = vsel %vm1186, nan, %v1196
    %v1198 = vand.u32 2147483647, %v461
    %vm1199 = vcmp.le.f32.partialorder %v1198, 0.7853982
    %vm1200 = vcmp.lt.s32.totalorder %v461, 0
    %v1201 = vand.u32 %v461, 2139095040
    %v1202 = vshrl.u32 %v1201, 23
    %v1203 = vsub.s32 %v1202, 127
    %v1204 = vand.u32 2147483647, %v461
    %v1205 = vand.u32 %v1204, 8388607
    %v1206 = vor.u32 %v1205, 8388608
    %v1207 = vsub.s32 0, %v1206
    %v1208 = vadd.s32 %v1203, 1
    %vm1209 = vcmp.gt.s32.totalorder %v1208, 0
    %v1210 = vsel %vm1209, %v1208, 0
    %v1211 = vshrl.u32 %v1210, 5
    %v1212 = vand.u32 %v1210, 31
    %v1213 = vsub.s32 32, %v1212
    %v1214 = vshrl.u32 683565275, %v1213
    %v1215 = vshll.u32 683565275, %v1212
    %v1216 = vshrl.u32 2475754826, %v1213
    %v1217 = vor.u32 %v1215, %v1216
    %v1218 = vshll.u32 2475754826, %v1212
    %v1219 = vshrl.u32 2131351028, %v1213
    %v1220 = vor.u32 %v1218, %v1219
    %v1221 = vshll.u32 2131351028, %v1212
    %v1222 = vshrl.u32 2102212464, %v1213
    %v1223 = vor.u32 %v1221, %v1222
    %v1224 = vshll.u32 2102212464, %v1212
    %v1225 = vshrl.u32 920167782, %v1213
    %v1226 = vor.u32 %v1224, %v1225
    %v1227 = vshll.u32 920167782, %v1212
    %v1228 = vshrl.u32 1326507024, %v1213
    %v1229 = vor.u32 %v1227, %v1228
    %vm1230 = vcmp.lt.s32.totalorder %v1211, 1
    %vm1231 = vcmp.lt.s32.totalorder %v1211, 2
    %vm1232 = vcmp.lt.s32.totalorder %v1211, 3
    %vm1233 = vcmp.lt.s32.totalorder %v1211, 4
    %v1234 = vsel %vm1230, %v1214, %v1217
    %v1235 = vsel %vm1233, %v1223, 2102212464
    %v1236 = vsel %vm1232, %v1220, %v1235
    %v1237 = vsel %vm1231, %v1234, %v1236
    %v1238 = vsel %vm1230, %v1217, %v1220
    %v1239 = vsel %vm1233, %v1226, 920167782
    %v1240 = vsel %vm1232, %v1223, %v1239
    %v1241 = vsel %vm1231, %v1238, %v1240
    %v1242 = vsel %vm1230, %v1220, %v1223
    %v1243 = vsel %vm1233, %v1229, 1326507024
    %v1244 = vsel %vm1232, %v1226, %v1243
    %v1245 = vsel %vm1231, %v1242, %v1244
    %v1246 = vshll.u32 %v1206, 8
    %v1247 = vmul.u32.u64.compose %v1246, %v1245
    %v1248 = vextract.low.u32 %v1247
    %v1249 = vextract.high.u32 %v1247
    %v1250 = vmul.u32.u64.compose %v1246, %v1241
    %v1251 = vextract.low.u32 %v1250
    %v1252 = vextract.high.u32 %v1250
    %v1253 = vmul.u32 %v1246, %v1237
    %v1254 = vadd.s32 %v1249, %v1251
    %vm1255 = vc.u32 %v1249, %v1251
    %v1256 = vadd.s32 %v1252, 1
    %v1257 = vsel %vm1255, %v1256, %v1252
    %v1258 = vadd.s32 %v1253, %v1257
    %v1259 = vadd.s32 %v1258, 536870912
    %v1260 = vshrl.u32 %v1259, 30
    %v1261 = vshll.u32 %v1260, 30
    %v1262 = vsub.s32 %v1258, %v1261
    %vm1263 = vcmp.lt.s32.totalorder %v1262, 0
    %v1264 = vsub.s32 0, %v1262
    %v1265 = vsel %vm1263, %v1264, %v1262
    %v1266 = vclz %v1265
    %v1267 = vsub.s32 %v1266, 2
    %vm1268 = vcmp.gt.s32.totalorder 0, %v1267
    %v1269 = vsel %vm1268, 0, %v1267
    %v1270 = vsub.s32 32, %v1269
    %v1271 = vshll.u32 %v1262, %v1269
    %v1272 = vshrl.u32 %v1254, %v1270
    %v1273 = vor.u32 %v1271, %v1272
    %v1274 = vsub.s32 4294967266, %v1269
    %v1275 = vadd.s32 %v1274, 127
    %v1276 = vshll.u32 %v1275, 23
    %v1277 = vor.u32 4788187, %v1276
    %v1278 = vand.u32 2147483647, %v1277
    %v1280 = vcvt.s32.f32 %v1273
    %v1281 = vmul.f32 %v1280, %v1278
    %v1282 = vxor.u32 %v1281, 2147483648
    %v1283 = vsel %vm1200, %v1282, %v1281
    %v1284 = vsub.s32 4, %v1260
    %v1285 = vsel %vm1200, %v1284, %v1260
    %v1286 = vsel %vm1199, %v461, %v1283
    %v1287 = vsel %vm1199, 0, %v1285
    %v1288 = vcosq.f32.pop %v1286
    %v1289 = vsinq.f32.pop %v1286
    %vm1290 = vweird.f32 %v461
    %v1291 = vadd.s32 %v1287, 3
    %v1292 = vand.u32 %v1291, 3
    %vm1293 = vcmp.lt.s32.totalorder %v1292, 2
    %vm1294 = vcmp.eq.s32.totalorder %v1292, 0
    %v1295 = vxor.u32 %v1289, 2147483648
    %v1296 = vsel %vm1294, %v1288, %v1295
    %vm1297 = vcmp.eq.s32.totalorder %v1292, 2
    %v1298 = vxor.u32 %v1288, 2147483648
    %v1299 = vsel %vm1297, %v1298, %v1289
    %v1300 = vsel %vm1293, %v1296, %v1299
    %v1301 = vsel %vm1290, nan, %v1300
    %v1302 = vand.u32 2147483647, %v462
    %vm1303 = vcmp.le.f32.partialorder %v1302, 0.7853982
    %vm1304 = vcmp.lt.s32.totalorder %v462, 0
    %v1305 = vand.u32 %v462, 2139095040
    %v1306 = vshrl.u32 %v1305, 23
    %v1307 = vsub.s32 %v1306, 127
    %v1308 = vand.u32 2147483647, %v462
    %v1309 = vand.u32 %v1308, 8388607
    %v1310 = vor.u32 %v1309, 8388608
    %v1311 = vsub.s32 0, %v1310
    %v1312 = vadd.s32 %v1307, 1
    %vm1313 = vcmp.gt.s32.totalorder %v1312, 0
    %v1314 = vsel %vm1313, %v1312, 0
    %v1315 = vshrl.u32 %v1314, 5
    %v1316 = vand.u32 %v1314, 31
    %v1317 = vsub.s32 32, %v1316
    %v1318 = vshrl.u32 683565275, %v1317
    %v1319 = vshll.u32 683565275, %v1316
    %v1320 = vshrl.u32 2475754826, %v1317
    %v1321 = vor.u32 %v1319, %v1320
    %v1322 = vshll.u32 2475754826, %v1316
    %v1323 = vshrl.u32 2131351028, %v1317
    %v1324 = vor.u32 %v1322, %v1323
    %v1325 = vshll.u32 2131351028, %v1316
    %v1326 = vshrl.u32 2102212464, %v1317
    %v1327 = vor.u32 %v1325, %v1326
    %v1328 = vshll.u32 2102212464, %v1316
    %v1329 = vshrl.u32 920167782, %v1317
    %v1330 = vor.u32 %v1328, %v1329
    %v1331 = vshll.u32 920167782, %v1316
    %v1332 = vshrl.u32 1326507024, %v1317
    %v1333 = vor.u32 %v1331, %v1332
    %vm1334 = vcmp.lt.s32.totalorder %v1315, 1
    %vm1335 = vcmp.lt.s32.totalorder %v1315, 2
    %vm1336 = vcmp.lt.s32.totalorder %v1315, 3
    %vm1337 = vcmp.lt.s32.totalorder %v1315, 4
    %v1338 = vsel %vm1334, %v1318, %v1321
    %v1339 = vsel %vm1337, %v1327, 2102212464
    %v1340 = vsel %vm1336, %v1324, %v1339
    %v1341 = vsel %vm1335, %v1338, %v1340
    %v1342 = vsel %vm1334, %v1321, %v1324
    %v1343 = vsel %vm1337, %v1330, 920167782
    %v1344 = vsel %vm1336, %v1327, %v1343
    %v1345 = vsel %vm1335, %v1342, %v1344
    %v1346 = vsel %vm1334, %v1324, %v1327
    %v1347 = vsel %vm1337, %v1333, 1326507024
    %v1348 = vsel %vm1336, %v1330, %v1347
    %v1349 = vsel %vm1335, %v1346, %v1348
    %v1350 = vshll.u32 %v1310, 8
    %v1351 = vmul.u32.u64.compose %v1350, %v1349
    %v1352 = vextract.low.u32 %v1351
    %v1353 = vextract.high.u32 %v1351
    %v1354 = vmul.u32.u64.compose %v1350, %v1345
    %v1355 = vextract.low.u32 %v1354
    %v1356 = vextract.high.u32 %v1354
    %v1357 = vmul.u32 %v1350, %v1341
    %v1358 = vadd.s32 %v1353, %v1355
    %vm1359 = vc.u32 %v1353, %v1355
    %v1360 = vadd.s32 %v1356, 1
    %v1361 = vsel %vm1359, %v1360, %v1356
    %v1362 = vadd.s32 %v1357, %v1361
    %v1363 = vadd.s32 %v1362, 536870912
    %v1364 = vshrl.u32 %v1363, 30
    %v1365 = vshll.u32 %v1364, 30
    %v1366 = vsub.s32 %v1362, %v1365
    %vm1367 = vcmp.lt.s32.totalorder %v1366, 0
    %v1368 = vsub.s32 0, %v1366
    %v1369 = vsel %vm1367, %v1368, %v1366
    %v1370 = vclz %v1369
    %v1371 = vsub.s32 %v1370, 2
    %vm1372 = vcmp.gt.s32.totalorder 0, %v1371
    %v1373 = vsel %vm1372, 0, %v1371
    %v1374 = vsub.s32 32, %v1373
    %v1375 = vshll.u32 %v1366, %v1373
    %v1376 = vshrl.u32 %v1358, %v1374
    %v1377 = vor.u32 %v1375, %v1376
    %v1378 = vsub.s32 4294967266, %v1373
    %v1379 = vadd.s32 %v1378, 127
    %v1380 = vshll.u32 %v1379, 23
    %v1381 = vor.u32 4788187, %v1380
    %v1382 = vand.u32 2147483647, %v1381
    %v1384 = vcvt.s32.f32 %v1377
    %v1385 = vmul.f32 %v1384, %v1382
    %v1386 = vxor.u32 %v1385, 2147483648
    %v1387 = vsel %vm1304, %v1386, %v1385
    %v1388 = vsub.s32 4, %v1364
    %v1389 = vsel %vm1304, %v1388, %v1364
    %v1390 = vsel %vm1303, %v462, %v1387
    %v1391 = vsel %vm1303, 0, %v1389
    %v1392 = vcosq.f32.pop %v1390
    %v1393 = vsinq.f32.pop %v1390
    %vm1394 = vweird.f32 %v462
    %v1395 = vadd.s32 %v1391, 3
    %v1396 = vand.u32 %v1395, 3
    %vm1397 = vcmp.lt.s32.totalorder %v1396, 2
    %vm1398 = vcmp.eq.s32.totalorder %v1396, 0
    %v1399 = vxor.u32 %v1393, 2147483648
    %v1400 = vsel %vm1398, %v1392, %v1399
    %vm1401 = vcmp.eq.s32.totalorder %v1396, 2
    %v1402 = vxor.u32 %v1392, 2147483648
    %v1403 = vsel %vm1401, %v1402, %v1393
    %v1404 = vsel %vm1397, %v1400, %v1403
    %v1405 = vsel %vm1394, nan, %v1404
    %v1406 = vand.u32 2147483647, %v463
    %vm1407 = vcmp.le.f32.partialorder %v1406, 0.7853982
    %vm1408 = vcmp.lt.s32.totalorder %v463, 0
    %v1409 = vand.u32 %v463, 2139095040
    %v1410 = vshrl.u32 %v1409, 23
    %v1411 = vsub.s32 %v1410, 127
    %v1412 = vand.u32 2147483647, %v463
    %v1413 = vand.u32 %v1412, 8388607
    %v1414 = vor.u32 %v1413, 8388608
    %v1415 = vsub.s32 0, %v1414
    %v1416 = vadd.s32 %v1411, 1
    %vm1417 = vcmp.gt.s32.totalorder %v1416, 0
    %v1418 = vsel %vm1417, %v1416, 0
    %v1419 = vshrl.u32 %v1418, 5
    %v1420 = vand.u32 %v1418, 31
    %v1421 = vsub.s32 32, %v1420
    %v1422 = vshrl.u32 683565275, %v1421
    %v1423 = vshll.u32 683565275, %v1420
    %v1424 = vshrl.u32 2475754826, %v1421
    %v1425 = vor.u32 %v1423, %v1424
    %v1426 = vshll.u32 2475754826, %v1420
    %v1427 = vshrl.u32 2131351028, %v1421
    %v1428 = vor.u32 %v1426, %v1427
    %v1429 = vshll.u32 2131351028, %v1420
    %v1430 = vshrl.u32 2102212464, %v1421
    %v1431 = vor.u32 %v1429, %v1430
    %v1432 = vshll.u32 2102212464, %v1420
    %v1433 = vshrl.u32 920167782, %v1421
    %v1434 = vor.u32 %v1432, %v1433
    %v1435 = vshll.u32 920167782, %v1420
    %v1436 = vshrl.u32 1326507024, %v1421
    %v1437 = vor.u32 %v1435, %v1436
    %vm1438 = vcmp.lt.s32.totalorder %v1419, 1
    %vm1439 = vcmp.lt.s32.totalorder %v1419, 2
    %vm1440 = vcmp.lt.s32.totalorder %v1419, 3
    %vm1441 = vcmp.lt.s32.totalorder %v1419, 4
    %v1442 = vsel %vm1438, %v1422, %v1425
    %v1443 = vsel %vm1441, %v1431, 2102212464
    %v1444 = vsel %vm1440, %v1428, %v1443
    %v1445 = vsel %vm1439, %v1442, %v1444
    %v1446 = vsel %vm1438, %v1425, %v1428
    %v1447 = vsel %vm1441, %v1434, 920167782
    %v1448 = vsel %vm1440, %v1431, %v1447
    %v1449 = vsel %vm1439, %v1446, %v1448
    %v1450 = vsel %vm1438, %v1428, %v1431
    %v1451 = vsel %vm1441, %v1437, 1326507024
    %v1452 = vsel %vm1440, %v1434, %v1451
    %v1453 = vsel %vm1439, %v1450, %v1452
    %v1454 = vshll.u32 %v1414, 8
    %v1455 = vmul.u32.u64.compose %v1454, %v1453
    %v1456 = vextract.low.u32 %v1455
    %v1457 = vextract.high.u32 %v1455
    %v1458 = vmul.u32.u64.compose %v1454, %v1449
    %v1459 = vextract.low.u32 %v1458
    %v1460 = vextract.high.u32 %v1458
    %v1461 = vmul.u32 %v1454, %v1445
    %v1462 = vadd.s32 %v1457, %v1459
    %vm1463 = vc.u32 %v1457, %v1459
    %v1464 = vadd.s32 %v1460, 1
    %v1465 = vsel %vm1463, %v1464, %v1460
    %v1466 = vadd.s32 %v1461, %v1465
    %v1467 = vadd.s32 %v1466, 536870912
    %v1468 = vshrl.u32 %v1467, 30
    %v1469 = vshll.u32 %v1468, 30
    %v1470 = vsub.s32 %v1466, %v1469
    %vm1471 = vcmp.lt.s32.totalorder %v1470, 0
    %v1472 = vsub.s32 0, %v1470
    %v1473 = vsel %vm1471, %v1472, %v1470
    %v1474 = vclz %v1473
    %v1475 = vsub.s32 %v1474, 2
    %vm1476 = vcmp.gt.s32.totalorder 0, %v1475
    %v1477 = vsel %vm1476, 0, %v1475
    %v1478 = vsub.s32 32, %v1477
    %v1479 = vshll.u32 %v1470, %v1477
    %v1480 = vshrl.u32 %v1462, %v1478
    %v1481 = vor.u32 %v1479, %v1480
    %v1482 = vsub.s32 4294967266, %v1477
    %v1483 = vadd.s32 %v1482, 127
    %v1484 = vshll.u32 %v1483, 23
    %v1485 = vor.u32 4788187, %v1484
    %v1486 = vand.u32 2147483647, %v1485
    %v1488 = vcvt.s32.f32 %v1481
    %v1489 = vmul.f32 %v1488, %v1486
    %v1490 = vxor.u32 %v1489, 2147483648
    %v1491 = vsel %vm1408, %v1490, %v1489
    %v1492 = vsub.s32 4, %v1468
    %v1493 = vsel %vm1408, %v1492, %v1468
    %v1494 = vsel %vm1407, %v463, %v1491
    %v1495 = vsel %vm1407, 0, %v1493
    %v1496 = vcosq.f32.pop %v1494
    %v1497 = vsinq.f32.pop %v1494
    %vm1498 = vweird.f32 %v463
    %v1499 = vadd.s32 %v1495, 3
    %v1500 = vand.u32 %v1499, 3
    %vm1501 = vcmp.lt.s32.totalorder %v1500, 2
    %vm1502 = vcmp.eq.s32.totalorder %v1500, 0
    %v1503 = vxor.u32 %v1497, 2147483648
    %v1504 = vsel %vm1502, %v1496, %v1503
    %vm1505 = vcmp.eq.s32.totalorder %v1500, 2
    %v1506 = vxor.u32 %v1496, 2147483648
    %v1507 = vsel %vm1505, %v1506, %v1497
    %v1508 = vsel %vm1501, %v1504, %v1507
    %v1509 = vsel %vm1498, nan, %v1508
    %v1510 = vand.u32 2147483647, %v464
    %vm1511 = vcmp.le.f32.partialorder %v1510, 0.7853982
    %vm1512 = vcmp.lt.s32.totalorder %v464, 0
    %v1513 = vand.u32 %v464, 2139095040
    %v1514 = vshrl.u32 %v1513, 23
    %v1515 = vsub.s32 %v1514, 127
    %v1516 = vand.u32 2147483647, %v464
    %v1517 = vand.u32 %v1516, 8388607
    %v1518 = vor.u32 %v1517, 8388608
    %v1519 = vsub.s32 0, %v1518
    %v1520 = vadd.s32 %v1515, 1
    %vm1521 = vcmp.gt.s32.totalorder %v1520, 0
    %v1522 = vsel %vm1521, %v1520, 0
    %v1523 = vshrl.u32 %v1522, 5
    %v1524 = vand.u32 %v1522, 31
    %v1525 = vsub.s32 32, %v1524
    %v1526 = vshrl.u32 683565275, %v1525
    %v1527 = vshll.u32 683565275, %v1524
    %v1528 = vshrl.u32 2475754826, %v1525
    %v1529 = vor.u32 %v1527, %v1528
    %v1530 = vshll.u32 2475754826, %v1524
    %v1531 = vshrl.u32 2131351028, %v1525
    %v1532 = vor.u32 %v1530, %v1531
    %v1533 = vshll.u32 2131351028, %v1524
    %v1534 = vshrl.u32 2102212464, %v1525
    %v1535 = vor.u32 %v1533, %v1534
    %v1536 = vshll.u32 2102212464, %v1524
    %v1537 = vshrl.u32 920167782, %v1525
    %v1538 = vor.u32 %v1536, %v1537
    %v1539 = vshll.u32 920167782, %v1524
    %v1540 = vshrl.u32 1326507024, %v1525
    %v1541 = vor.u32 %v1539, %v1540
    %vm1542 = vcmp.lt.s32.totalorder %v1523, 1
    %vm1543 = vcmp.lt.s32.totalorder %v1523, 2
    %vm1544 = vcmp.lt.s32.totalorder %v1523, 3
    %vm1545 = vcmp.lt.s32.totalorder %v1523, 4
    %v1546 = vsel %vm1542, %v1526, %v1529
    %v1547 = vsel %vm1545, %v1535, 2102212464
    %v1548 = vsel %vm1544, %v1532, %v1547
    %v1549 = vsel %vm1543, %v1546, %v1548
    %v1550 = vsel %vm1542, %v1529, %v1532
    %v1551 = vsel %vm1545, %v1538, 920167782
    %v1552 = vsel %vm1544, %v1535, %v1551
    %v1553 = vsel %vm1543, %v1550, %v1552
    %v1554 = vsel %vm1542, %v1532, %v1535
    %v1555 = vsel %vm1545, %v1541, 1326507024
    %v1556 = vsel %vm1544, %v1538, %v1555
    %v1557 = vsel %vm1543, %v1554, %v1556
    %v1558 = vshll.u32 %v1518, 8
    %v1559 = vmul.u32.u64.compose %v1558, %v1557
    %v1560 = vextract.low.u32 %v1559
    %v1561 = vextract.high.u32 %v1559
    %v1562 = vmul.u32.u64.compose %v1558, %v1553
    %v1563 = vextract.low.u32 %v1562
    %v1564 = vextract.high.u32 %v1562
    %v1565 = vmul.u32 %v1558, %v1549
    %v1566 = vadd.s32 %v1561, %v1563
    %vm1567 = vc.u32 %v1561, %v1563
    %v1568 = vadd.s32 %v1564, 1
    %v1569 = vsel %vm1567, %v1568, %v1564
    %v1570 = vadd.s32 %v1565, %v1569
    %v1571 = vadd.s32 %v1570, 536870912
    %v1572 = vshrl.u32 %v1571, 30
    %v1573 = vshll.u32 %v1572, 30
    %v1574 = vsub.s32 %v1570, %v1573
    %vm1575 = vcmp.lt.s32.totalorder %v1574, 0
    %v1576 = vsub.s32 0, %v1574
    %v1577 = vsel %vm1575, %v1576, %v1574
    %v1578 = vclz %v1577
    %v1579 = vsub.s32 %v1578, 2
    %vm1580 = vcmp.gt.s32.totalorder 0, %v1579
    %v1581 = vsel %vm1580, 0, %v1579
    %v1582 = vsub.s32 32, %v1581
    %v1583 = vshll.u32 %v1574, %v1581
    %v1584 = vshrl.u32 %v1566, %v1582
    %v1585 = vor.u32 %v1583, %v1584
    %v1586 = vsub.s32 4294967266, %v1581
    %v1587 = vadd.s32 %v1586, 127
    %v1588 = vshll.u32 %v1587, 23
    %v1589 = vor.u32 4788187, %v1588
    %v1590 = vand.u32 2147483647, %v1589
    %v1592 = vcvt.s32.f32 %v1585
    %v1593 = vmul.f32 %v1592, %v1590
    %v1594 = vxor.u32 %v1593, 2147483648
    %v1595 = vsel %vm1512, %v1594, %v1593
    %v1596 = vsub.s32 4, %v1572
    %v1597 = vsel %vm1512, %v1596, %v1572
    %v1598 = vsel %vm1511, %v464, %v1595
    %v1599 = vsel %vm1511, 0, %v1597
    %v1600 = vcosq.f32.pop %v1598
    %v1601 = vsinq.f32.pop %v1598
    %vm1602 = vweird.f32 %v464
    %v1603 = vadd.s32 %v1599, 3
    %v1604 = vand.u32 %v1603, 3
    %vm1605 = vcmp.lt.s32.totalorder %v1604, 2
    %vm1606 = vcmp.eq.s32.totalorder %v1604, 0
    %v1607 = vxor.u32 %v1601, 2147483648
    %v1608 = vsel %vm1606, %v1600, %v1607
    %vm1609 = vcmp.eq.s32.totalorder %v1604, 2
    %v1610 = vxor.u32 %v1600, 2147483648
    %v1611 = vsel %vm1609, %v1610, %v1601
    %v1612 = vsel %vm1605, %v1608, %v1611
    %v1613 = vsel %vm1602, nan, %v1612
    %v1614 = vand.u32 2147483647, %v465
    %vm1615 = vcmp.le.f32.partialorder %v1614, 0.7853982
    %vm1616 = vcmp.lt.s32.totalorder %v465, 0
    %v1617 = vand.u32 %v465, 2139095040
    %v1618 = vshrl.u32 %v1617, 23
    %v1619 = vsub.s32 %v1618, 127
    %v1620 = vand.u32 2147483647, %v465
    %v1621 = vand.u32 %v1620, 8388607
    %v1622 = vor.u32 %v1621, 8388608
    %v1623 = vsub.s32 0, %v1622
    %v1624 = vadd.s32 %v1619, 1
    %vm1625 = vcmp.gt.s32.totalorder %v1624, 0
    %v1626 = vsel %vm1625, %v1624, 0
    %v1627 = vshrl.u32 %v1626, 5
    %v1628 = vand.u32 %v1626, 31
    %v1629 = vsub.s32 32, %v1628
    %v1630 = vshrl.u32 683565275, %v1629
    %v1631 = vshll.u32 683565275, %v1628
    %v1632 = vshrl.u32 2475754826, %v1629
    %v1633 = vor.u32 %v1631, %v1632
    %v1634 = vshll.u32 2475754826, %v1628
    %v1635 = vshrl.u32 2131351028, %v1629
    %v1636 = vor.u32 %v1634, %v1635
    %v1637 = vshll.u32 2131351028, %v1628
    %v1638 = vshrl.u32 2102212464, %v1629
    %v1639 = vor.u32 %v1637, %v1638
    %v1640 = vshll.u32 2102212464, %v1628
    %v1641 = vshrl.u32 920167782, %v1629
    %v1642 = vor.u32 %v1640, %v1641
    %v1643 = vshll.u32 920167782, %v1628
    %v1644 = vshrl.u32 1326507024, %v1629
    %v1645 = vor.u32 %v1643, %v1644
    %vm1646 = vcmp.lt.s32.totalorder %v1627, 1
    %vm1647 = vcmp.lt.s32.totalorder %v1627, 2
    %vm1648 = vcmp.lt.s32.totalorder %v1627, 3
    %vm1649 = vcmp.lt.s32.totalorder %v1627, 4
    %v1650 = vsel %vm1646, %v1630, %v1633
    %v1651 = vsel %vm1649, %v1639, 2102212464
    %v1652 = vsel %vm1648, %v1636, %v1651
    %v1653 = vsel %vm1647, %v1650, %v1652
    %v1654 = vsel %vm1646, %v1633, %v1636
    %v1655 = vsel %vm1649, %v1642, 920167782
    %v1656 = vsel %vm1648, %v1639, %v1655
    %v1657 = vsel %vm1647, %v1654, %v1656
    %v1658 = vsel %vm1646, %v1636, %v1639
    %v1659 = vsel %vm1649, %v1645, 1326507024
    %v1660 = vsel %vm1648, %v1642, %v1659
    %v1661 = vsel %vm1647, %v1658, %v1660
    %v1662 = vshll.u32 %v1622, 8
    %v1663 = vmul.u32.u64.compose %v1662, %v1661
    %v1664 = vextract.low.u32 %v1663
    %v1665 = vextract.high.u32 %v1663
    %v1666 = vmul.u32.u64.compose %v1662, %v1657
    %v1667 = vextract.low.u32 %v1666
    %v1668 = vextract.high.u32 %v1666
    %v1669 = vmul.u32 %v1662, %v1653
    %v1670 = vadd.s32 %v1665, %v1667
    %vm1671 = vc.u32 %v1665, %v1667
    %v1672 = vadd.s32 %v1668, 1
    %v1673 = vsel %vm1671, %v1672, %v1668
    %v1674 = vadd.s32 %v1669, %v1673
    %v1675 = vadd.s32 %v1674, 536870912
    %v1676 = vshrl.u32 %v1675, 30
    %v1677 = vshll.u32 %v1676, 30
    %v1678 = vsub.s32 %v1674, %v1677
    %vm1679 = vcmp.lt.s32.totalorder %v1678, 0
    %v1680 = vsub.s32 0, %v1678
    %v1681 = vsel %vm1679, %v1680, %v1678
    %v1682 = vclz %v1681
    %v1683 = vsub.s32 %v1682, 2
    %vm1684 = vcmp.gt.s32.totalorder 0, %v1683
    %v1685 = vsel %vm1684, 0, %v1683
    %v1686 = vsub.s32 32, %v1685
    %v1687 = vshll.u32 %v1678, %v1685
    %v1688 = vshrl.u32 %v1670, %v1686
    %v1689 = vor.u32 %v1687, %v1688
    %v1690 = vsub.s32 4294967266, %v1685
    %v1691 = vadd.s32 %v1690, 127
    %v1692 = vshll.u32 %v1691, 23
    %v1693 = vor.u32 4788187, %v1692
    %v1694 = vand.u32 2147483647, %v1693
    %v1696 = vcvt.s32.f32 %v1689
    %v1697 = vmul.f32 %v1696, %v1694
    %v1698 = vxor.u32 %v1697, 2147483648
    %v1699 = vsel %vm1616, %v1698, %v1697
    %v1700 = vsub.s32 4, %v1676
    %v1701 = vsel %vm1616, %v1700, %v1676
    %v1702 = vsel %vm1615, %v465, %v1699
    %v1703 = vsel %vm1615, 0, %v1701
    %v1704 = vcosq.f32.pop %v1702
    %v1705 = vsinq.f32.pop %v1702
    %vm1706 = vweird.f32 %v465
    %v1707 = vadd.s32 %v1703, 3
    %v1708 = vand.u32 %v1707, 3
    %vm1709 = vcmp.lt.s32.totalorder %v1708, 2
    %vm1710 = vcmp.eq.s32.totalorder %v1708, 0
    %v1711 = vxor.u32 %v1705, 2147483648
    %v1712 = vsel %vm1710, %v1704, %v1711
    %vm1713 = vcmp.eq.s32.totalorder %v1708, 2
    %v1714 = vxor.u32 %v1704, 2147483648
    %v1715 = vsel %vm1713, %v1714, %v1705
    %v1716 = vsel %vm1709, %v1712, %v1715
    %v1717 = vsel %vm1706, nan, %v1716
    %v1718 = vand.u32 2147483647, %v466
    %vm1719 = vcmp.le.f32.partialorder %v1718, 0.7853982
    %vm1720 = vcmp.lt.s32.totalorder %v466, 0
    %v1721 = vand.u32 %v466, 2139095040
    %v1722 = vshrl.u32 %v1721, 23
    %v1723 = vsub.s32 %v1722, 127
    %v1724 = vand.u32 2147483647, %v466
    %v1725 = vand.u32 %v1724, 8388607
    %v1726 = vor.u32 %v1725, 8388608
    %v1727 = vsub.s32 0, %v1726
    %v1728 = vadd.s32 %v1723, 1
    %vm1729 = vcmp.gt.s32.totalorder %v1728, 0
    %v1730 = vsel %vm1729, %v1728, 0
    %v1731 = vshrl.u32 %v1730, 5
    %v1732 = vand.u32 %v1730, 31
    %v1733 = vsub.s32 32, %v1732
    %v1734 = vshrl.u32 683565275, %v1733
    %v1735 = vshll.u32 683565275, %v1732
    %v1736 = vshrl.u32 2475754826, %v1733
    %v1737 = vor.u32 %v1735, %v1736
    %v1738 = vshll.u32 2475754826, %v1732
    %v1739 = vshrl.u32 2131351028, %v1733
    %v1740 = vor.u32 %v1738, %v1739
    %v1741 = vshll.u32 2131351028, %v1732
    %v1742 = vshrl.u32 2102212464, %v1733
    %v1743 = vor.u32 %v1741, %v1742
    %v1744 = vshll.u32 2102212464, %v1732
    %v1745 = vshrl.u32 920167782, %v1733
    %v1746 = vor.u32 %v1744, %v1745
    %v1747 = vshll.u32 920167782, %v1732
    %v1748 = vshrl.u32 1326507024, %v1733
    %v1749 = vor.u32 %v1747, %v1748
    %vm1750 = vcmp.lt.s32.totalorder %v1731, 1
    %vm1751 = vcmp.lt.s32.totalorder %v1731, 2
    %vm1752 = vcmp.lt.s32.totalorder %v1731, 3
    %vm1753 = vcmp.lt.s32.totalorder %v1731, 4
    %v1754 = vsel %vm1750, %v1734, %v1737
    %v1755 = vsel %vm1753, %v1743, 2102212464
    %v1756 = vsel %vm1752, %v1740, %v1755
    %v1757 = vsel %vm1751, %v1754, %v1756
    %v1758 = vsel %vm1750, %v1737, %v1740
    %v1759 = vsel %vm1753, %v1746, 920167782
    %v1760 = vsel %vm1752, %v1743, %v1759
    %v1761 = vsel %vm1751, %v1758, %v1760
    %v1762 = vsel %vm1750, %v1740, %v1743
    %v1763 = vsel %vm1753, %v1749, 1326507024
    %v1764 = vsel %vm1752, %v1746, %v1763
    %v1765 = vsel %vm1751, %v1762, %v1764
    %v1766 = vshll.u32 %v1726, 8
    %v1767 = vmul.u32.u64.compose %v1766, %v1765
    %v1768 = vextract.low.u32 %v1767
    %v1769 = vextract.high.u32 %v1767
    %v1770 = vmul.u32.u64.compose %v1766, %v1761
    %v1771 = vextract.low.u32 %v1770
    %v1772 = vextract.high.u32 %v1770
    %v1773 = vmul.u32 %v1766, %v1757
    %v1774 = vadd.s32 %v1769, %v1771
    %vm1775 = vc.u32 %v1769, %v1771
    %v1776 = vadd.s32 %v1772, 1
    %v1777 = vsel %vm1775, %v1776, %v1772
    %v1778 = vadd.s32 %v1773, %v1777
    %v1779 = vadd.s32 %v1778, 536870912
    %v1780 = vshrl.u32 %v1779, 30
    %v1781 = vshll.u32 %v1780, 30
    %v1782 = vsub.s32 %v1778, %v1781
    %vm1783 = vcmp.lt.s32.totalorder %v1782, 0
    %v1784 = vsub.s32 0, %v1782
    %v1785 = vsel %vm1783, %v1784, %v1782
    %v1786 = vclz %v1785
    %v1787 = vsub.s32 %v1786, 2
    %vm1788 = vcmp.gt.s32.totalorder 0, %v1787
    %v1789 = vsel %vm1788, 0, %v1787
    %v1790 = vsub.s32 32, %v1789
    %v1791 = vshll.u32 %v1782, %v1789
    %v1792 = vshrl.u32 %v1774, %v1790
    %v1793 = vor.u32 %v1791, %v1792
    %v1794 = vsub.s32 4294967266, %v1789
    %v1795 = vadd.s32 %v1794, 127
    %v1796 = vshll.u32 %v1795, 23
    %v1797 = vor.u32 4788187, %v1796
    %v1798 = vand.u32 2147483647, %v1797
    %v1800 = vcvt.s32.f32 %v1793
    %v1801 = vmul.f32 %v1800, %v1798
    %v1802 = vxor.u32 %v1801, 2147483648
    %v1803 = vsel %vm1720, %v1802, %v1801
    %v1804 = vsub.s32 4, %v1780
    %v1805 = vsel %vm1720, %v1804, %v1780
    %v1806 = vsel %vm1719, %v466, %v1803
    %v1807 = vsel %vm1719, 0, %v1805
    %v1808 = vcosq.f32.pop %v1806
    %v1809 = vsinq.f32.pop %v1806
    %vm1810 = vweird.f32 %v466
    %v1811 = vadd.s32 %v1807, 3
    %v1812 = vand.u32 %v1811, 3
    %vm1813 = vcmp.lt.s32.totalorder %v1812, 2
    %vm1814 = vcmp.eq.s32.totalorder %v1812, 0
    %v1815 = vxor.u32 %v1809, 2147483648
    %v1816 = vsel %vm1814, %v1808, %v1815
    %vm1817 = vcmp.eq.s32.totalorder %v1812, 2
    %v1818 = vxor.u32 %v1808, 2147483648
    %v1819 = vsel %vm1817, %v1818, %v1809
    %v1820 = vsel %vm1813, %v1816, %v1819
    %v1821 = vsel %vm1810, nan, %v1820
    %v1822 = vand.u32 2147483647, %v467
    %vm1823 = vcmp.le.f32.partialorder %v1822, 0.7853982
    %vm1824 = vcmp.lt.s32.totalorder %v467, 0
    %v1825 = vand.u32 %v467, 2139095040
    %v1826 = vshrl.u32 %v1825, 23
    %v1827 = vsub.s32 %v1826, 127
    %v1828 = vand.u32 2147483647, %v467
    %v1829 = vand.u32 %v1828, 8388607
    %v1830 = vor.u32 %v1829, 8388608
    %v1831 = vsub.s32 0, %v1830
    %v1832 = vadd.s32 %v1827, 1
    %vm1833 = vcmp.gt.s32.totalorder %v1832, 0
    %v1834 = vsel %vm1833, %v1832, 0
    %v1835 = vshrl.u32 %v1834, 5
    %v1836 = vand.u32 %v1834, 31
    %v1837 = vsub.s32 32, %v1836
    %v1838 = vshrl.u32 683565275, %v1837
    %v1839 = vshll.u32 683565275, %v1836
    %v1840 = vshrl.u32 2475754826, %v1837
    %v1841 = vor.u32 %v1839, %v1840
    %v1842 = vshll.u32 2475754826, %v1836
    %v1843 = vshrl.u32 2131351028, %v1837
    %v1844 = vor.u32 %v1842, %v1843
    %v1845 = vshll.u32 2131351028, %v1836
    %v1846 = vshrl.u32 2102212464, %v1837
    %v1847 = vor.u32 %v1845, %v1846
    %v1848 = vshll.u32 2102212464, %v1836
    %v1849 = vshrl.u32 920167782, %v1837
    %v1850 = vor.u32 %v1848, %v1849
    %v1851 = vshll.u32 920167782, %v1836
    %v1852 = vshrl.u32 1326507024, %v1837
    %v1853 = vor.u32 %v1851, %v1852
    %vm1854 = vcmp.lt.s32.totalorder %v1835, 1
    %vm1855 = vcmp.lt.s32.totalorder %v1835, 2
    %vm1856 = vcmp.lt.s32.totalorder %v1835, 3
    %vm1857 = vcmp.lt.s32.totalorder %v1835, 4
    %v1858 = vsel %vm1854, %v1838, %v1841
    %v1859 = vsel %vm1857, %v1847, 2102212464
    %v1860 = vsel %vm1856, %v1844, %v1859
    %v1861 = vsel %vm1855, %v1858, %v1860
    %v1862 = vsel %vm1854, %v1841, %v1844
    %v1863 = vsel %vm1857, %v1850, 920167782
    %v1864 = vsel %vm1856, %v1847, %v1863
    %v1865 = vsel %vm1855, %v1862, %v1864
    %v1866 = vsel %vm1854, %v1844, %v1847
    %v1867 = vsel %vm1857, %v1853, 1326507024
    %v1868 = vsel %vm1856, %v1850, %v1867
    %v1869 = vsel %vm1855, %v1866, %v1868
    %v1870 = vshll.u32 %v1830, 8
    %v1871 = vmul.u32.u64.compose %v1870, %v1869
    %v1872 = vextract.low.u32 %v1871
    %v1873 = vextract.high.u32 %v1871
    %v1874 = vmul.u32.u64.compose %v1870, %v1865
    %v1875 = vextract.low.u32 %v1874
    %v1876 = vextract.high.u32 %v1874
    %v1877 = vmul.u32 %v1870, %v1861
    %v1878 = vadd.s32 %v1873, %v1875
    %vm1879 = vc.u32 %v1873, %v1875
    %v1880 = vadd.s32 %v1876, 1
    %v1881 = vsel %vm1879, %v1880, %v1876
    %v1882 = vadd.s32 %v1877, %v1881
    %v1883 = vadd.s32 %v1882, 536870912
    %v1884 = vshrl.u32 %v1883, 30
    %v1885 = vshll.u32 %v1884, 30
    %v1886 = vsub.s32 %v1882, %v1885
    %vm1887 = vcmp.lt.s32.totalorder %v1886, 0
    %v1888 = vsub.s32 0, %v1886
    %v1889 = vsel %vm1887, %v1888, %v1886
    %v1890 = vclz %v1889
    %v1891 = vsub.s32 %v1890, 2
    %vm1892 = vcmp.gt.s32.totalorder 0, %v1891
    %v1893 = vsel %vm1892, 0, %v1891
    %v1894 = vsub.s32 32, %v1893
    %v1895 = vshll.u32 %v1886, %v1893
    %v1896 = vshrl.u32 %v1878, %v1894
    %v1897 = vor.u32 %v1895, %v1896
    %v1898 = vsub.s32 4294967266, %v1893
    %v1899 = vadd.s32 %v1898, 127
    %v1900 = vshll.u32 %v1899, 23
    %v1901 = vor.u32 4788187, %v1900
    %v1902 = vand.u32 2147483647, %v1901
    %v1904 = vcvt.s32.f32 %v1897
    %v1905 = vmul.f32 %v1904, %v1902
    %v1906 = vxor.u32 %v1905, 2147483648
    %v1907 = vsel %vm1824, %v1906, %v1905
    %v1908 = vsub.s32 4, %v1884
    %v1909 = vsel %vm1824, %v1908, %v1884
    %v1910 = vsel %vm1823, %v467, %v1907
    %v1911 = vsel %vm1823, 0, %v1909
    %v1912 = vcosq.f32.pop %v1910
    %v1913 = vsinq.f32.pop %v1910
    %vm1914 = vweird.f32 %v467
    %v1915 = vadd.s32 %v1911, 3
    %v1916 = vand.u32 %v1915, 3
    %vm1917 = vcmp.lt.s32.totalorder %v1916, 2
    %vm1918 = vcmp.eq.s32.totalorder %v1916, 0
    %v1919 = vxor.u32 %v1913, 2147483648
    %v1920 = vsel %vm1918, %v1912, %v1919
    %vm1921 = vcmp.eq.s32.totalorder %v1916, 2
    %v1922 = vxor.u32 %v1912, 2147483648
    %v1923 = vsel %vm1921, %v1922, %v1913
    %v1924 = vsel %vm1917, %v1920, %v1923
    %v1925 = vsel %vm1914, nan, %v1924
    %v1926 = vand.u32 2147483647, %v468
    %vm1927 = vcmp.le.f32.partialorder %v1926, 0.7853982
    %vm1928 = vcmp.lt.s32.totalorder %v468, 0
    %v1929 = vand.u32 %v468, 2139095040
    %v1930 = vshrl.u32 %v1929, 23
    %v1931 = vsub.s32 %v1930, 127
    %v1932 = vand.u32 2147483647, %v468
    %v1933 = vand.u32 %v1932, 8388607
    %v1934 = vor.u32 %v1933, 8388608
    %v1935 = vsub.s32 0, %v1934
    %v1936 = vadd.s32 %v1931, 1
    %vm1937 = vcmp.gt.s32.totalorder %v1936, 0
    %v1938 = vsel %vm1937, %v1936, 0
    %v1939 = vshrl.u32 %v1938, 5
    %v1940 = vand.u32 %v1938, 31
    %v1941 = vsub.s32 32, %v1940
    %v1942 = vshrl.u32 683565275, %v1941
    %v1943 = vshll.u32 683565275, %v1940
    %v1944 = vshrl.u32 2475754826, %v1941
    %v1945 = vor.u32 %v1943, %v1944
    %v1946 = vshll.u32 2475754826, %v1940
    %v1947 = vshrl.u32 2131351028, %v1941
    %v1948 = vor.u32 %v1946, %v1947
    %v1949 = vshll.u32 2131351028, %v1940
    %v1950 = vshrl.u32 2102212464, %v1941
    %v1951 = vor.u32 %v1949, %v1950
    %v1952 = vshll.u32 2102212464, %v1940
    %v1953 = vshrl.u32 920167782, %v1941
    %v1954 = vor.u32 %v1952, %v1953
    %v1955 = vshll.u32 920167782, %v1940
    %v1956 = vshrl.u32 1326507024, %v1941
    %v1957 = vor.u32 %v1955, %v1956
    %vm1958 = vcmp.lt.s32.totalorder %v1939, 1
    %vm1959 = vcmp.lt.s32.totalorder %v1939, 2
    %vm1960 = vcmp.lt.s32.totalorder %v1939, 3
    %vm1961 = vcmp.lt.s32.totalorder %v1939, 4
    %v1962 = vsel %vm1958, %v1942, %v1945
    %v1963 = vsel %vm1961, %v1951, 2102212464
    %v1964 = vsel %vm1960, %v1948, %v1963
    %v1965 = vsel %vm1959, %v1962, %v1964
    %v1966 = vsel %vm1958, %v1945, %v1948
    %v1967 = vsel %vm1961, %v1954, 920167782
    %v1968 = vsel %vm1960, %v1951, %v1967
    %v1969 = vsel %vm1959, %v1966, %v1968
    %v1970 = vsel %vm1958, %v1948, %v1951
    %v1971 = vsel %vm1961, %v1957, 1326507024
    %v1972 = vsel %vm1960, %v1954, %v1971
    %v1973 = vsel %vm1959, %v1970, %v1972
    %v1974 = vshll.u32 %v1934, 8
    %v1975 = vmul.u32.u64.compose %v1974, %v1973
    %v1976 = vextract.low.u32 %v1975
    %v1977 = vextract.high.u32 %v1975
    %v1978 = vmul.u32.u64.compose %v1974, %v1969
    %v1979 = vextract.low.u32 %v1978
    %v1980 = vextract.high.u32 %v1978
    %v1981 = vmul.u32 %v1974, %v1965
    %v1982 = vadd.s32 %v1977, %v1979
    %vm1983 = vc.u32 %v1977, %v1979
    %v1984 = vadd.s32 %v1980, 1
    %v1985 = vsel %vm1983, %v1984, %v1980
    %v1986 = vadd.s32 %v1981, %v1985
    %v1987 = vadd.s32 %v1986, 536870912
    %v1988 = vshrl.u32 %v1987, 30
    %v1989 = vshll.u32 %v1988, 30
    %v1990 = vsub.s32 %v1986, %v1989
    %vm1991 = vcmp.lt.s32.totalorder %v1990, 0
    %v1992 = vsub.s32 0, %v1990
    %v1993 = vsel %vm1991, %v1992, %v1990
    %v1994 = vclz %v1993
    %v1995 = vsub.s32 %v1994, 2
    %vm1996 = vcmp.gt.s32.totalorder 0, %v1995
    %v1997 = vsel %vm1996, 0, %v1995
    %v1998 = vsub.s32 32, %v1997
    %v1999 = vshll.u32 %v1990, %v1997
    %v2000 = vshrl.u32 %v1982, %v1998
    %v2001 = vor.u32 %v1999, %v2000
    %v2002 = vsub.s32 4294967266, %v1997
    %v2003 = vadd.s32 %v2002, 127
    %v2004 = vshll.u32 %v2003, 23
    %v2005 = vor.u32 4788187, %v2004
    %v2006 = vand.u32 2147483647, %v2005
    %v2008 = vcvt.s32.f32 %v2001
    %v2009 = vmul.f32 %v2008, %v2006
    %v2010 = vxor.u32 %v2009, 2147483648
    %v2011 = vsel %vm1928, %v2010, %v2009
    %v2012 = vsub.s32 4, %v1988
    %v2013 = vsel %vm1928, %v2012, %v1988
    %v2014 = vsel %vm1927, %v468, %v2011
    %v2015 = vsel %vm1927, 0, %v2013
    %v2016 = vcosq.f32.pop %v2014
    %v2017 = vsinq.f32.pop %v2014
    %vm2018 = vweird.f32 %v468
    %v2019 = vadd.s32 %v2015, 3
    %v2020 = vand.u32 %v2019, 3
    %vm2021 = vcmp.lt.s32.totalorder %v2020, 2
    %vm2022 = vcmp.eq.s32.totalorder %v2020, 0
    %v2023 = vxor.u32 %v2017, 2147483648
    %v2024 = vsel %vm2022, %v2016, %v2023
    %vm2025 = vcmp.eq.s32.totalorder %v2020, 2
    %v2026 = vxor.u32 %v2016, 2147483648
    %v2027 = vsel %vm2025, %v2026, %v2017
    %v2028 = vsel %vm2021, %v2024, %v2027
    %v2029 = vsel %vm2018, nan, %v2028
    %v2030 = vand.u32 2147483647, %v469
    %vm2031 = vcmp.le.f32.partialorder %v2030, 0.7853982
    %vm2032 = vcmp.lt.s32.totalorder %v469, 0
    %v2033 = vand.u32 %v469, 2139095040
    %v2034 = vshrl.u32 %v2033, 23
    %v2035 = vsub.s32 %v2034, 127
    %v2036 = vand.u32 2147483647, %v469
    %v2037 = vand.u32 %v2036, 8388607
    %v2038 = vor.u32 %v2037, 8388608
    %v2039 = vsub.s32 0, %v2038
    %v2040 = vadd.s32 %v2035, 1
    %vm2041 = vcmp.gt.s32.totalorder %v2040, 0
    %v2042 = vsel %vm2041, %v2040, 0
    %v2043 = vshrl.u32 %v2042, 5
    %v2044 = vand.u32 %v2042, 31
    %v2045 = vsub.s32 32, %v2044
    %v2046 = vshrl.u32 683565275, %v2045
    %v2047 = vshll.u32 683565275, %v2044
    %v2048 = vshrl.u32 2475754826, %v2045
    %v2049 = vor.u32 %v2047, %v2048
    %v2050 = vshll.u32 2475754826, %v2044
    %v2051 = vshrl.u32 2131351028, %v2045
    %v2052 = vor.u32 %v2050, %v2051
    %v2053 = vshll.u32 2131351028, %v2044
    %v2054 = vshrl.u32 2102212464, %v2045
    %v2055 = vor.u32 %v2053, %v2054
    %v2056 = vshll.u32 2102212464, %v2044
    %v2057 = vshrl.u32 920167782, %v2045
    %v2058 = vor.u32 %v2056, %v2057
    %v2059 = vshll.u32 920167782, %v2044
    %v2060 = vshrl.u32 1326507024, %v2045
    %v2061 = vor.u32 %v2059, %v2060
    %vm2062 = vcmp.lt.s32.totalorder %v2043, 1
    %vm2063 = vcmp.lt.s32.totalorder %v2043, 2
    %vm2064 = vcmp.lt.s32.totalorder %v2043, 3
    %vm2065 = vcmp.lt.s32.totalorder %v2043, 4
    %v2066 = vsel %vm2062, %v2046, %v2049
    %v2067 = vsel %vm2065, %v2055, 2102212464
    %v2068 = vsel %vm2064, %v2052, %v2067
    %v2069 = vsel %vm2063, %v2066, %v2068
    %v2070 = vsel %vm2062, %v2049, %v2052
    %v2071 = vsel %vm2065, %v2058, 920167782
    %v2072 = vsel %vm2064, %v2055, %v2071
    %v2073 = vsel %vm2063, %v2070, %v2072
    %v2074 = vsel %vm2062, %v2052, %v2055
    %v2075 = vsel %vm2065, %v2061, 1326507024
    %v2076 = vsel %vm2064, %v2058, %v2075
    %v2077 = vsel %vm2063, %v2074, %v2076
    %v2078 = vshll.u32 %v2038, 8
    %v2079 = vmul.u32.u64.compose %v2078, %v2077
    %v2080 = vextract.low.u32 %v2079
    %v2081 = vextract.high.u32 %v2079
    %v2082 = vmul.u32.u64.compose %v2078, %v2073
    %v2083 = vextract.low.u32 %v2082
    %v2084 = vextract.high.u32 %v2082
    %v2085 = vmul.u32 %v2078, %v2069
    %v2086 = vadd.s32 %v2081, %v2083
    %vm2087 = vc.u32 %v2081, %v2083
    %v2088 = vadd.s32 %v2084, 1
    %v2089 = vsel %vm2087, %v2088, %v2084
    %v2090 = vadd.s32 %v2085, %v2089
    %v2091 = vadd.s32 %v2090, 536870912
    %v2092 = vshrl.u32 %v2091, 30
    %v2093 = vshll.u32 %v2092, 30
    %v2094 = vsub.s32 %v2090, %v2093
    %vm2095 = vcmp.lt.s32.totalorder %v2094, 0
    %v2096 = vsub.s32 0, %v2094
    %v2097 = vsel %vm2095, %v2096, %v2094
    %v2098 = vclz %v2097
    %v2099 = vsub.s32 %v2098, 2
    %vm2100 = vcmp.gt.s32.totalorder 0, %v2099
    %v2101 = vsel %vm2100, 0, %v2099
    %v2102 = vsub.s32 32, %v2101
    %v2103 = vshll.u32 %v2094, %v2101
    %v2104 = vshrl.u32 %v2086, %v2102
    %v2105 = vor.u32 %v2103, %v2104
    %v2106 = vsub.s32 4294967266, %v2101
    %v2107 = vadd.s32 %v2106, 127
    %v2108 = vshll.u32 %v2107, 23
    %v2109 = vor.u32 4788187, %v2108
    %v2110 = vand.u32 2147483647, %v2109
    %v2112 = vcvt.s32.f32 %v2105
    %v2113 = vmul.f32 %v2112, %v2110
    %v2114 = vxor.u32 %v2113, 2147483648
    %v2115 = vsel %vm2032, %v2114, %v2113
    %v2116 = vsub.s32 4, %v2092
    %v2117 = vsel %vm2032, %v2116, %v2092
    %v2118 = vsel %vm2031, %v469, %v2115
    %v2119 = vsel %vm2031, 0, %v2117
    %v2120 = vcosq.f32.pop %v2118
    %v2121 = vsinq.f32.pop %v2118
    %vm2122 = vweird.f32 %v469
    %v2123 = vadd.s32 %v2119, 3
    %v2124 = vand.u32 %v2123, 3
    %vm2125 = vcmp.lt.s32.totalorder %v2124, 2
    %vm2126 = vcmp.eq.s32.totalorder %v2124, 0
    %v2127 = vxor.u32 %v2121, 2147483648
    %v2128 = vsel %vm2126, %v2120, %v2127
    %vm2129 = vcmp.eq.s32.totalorder %v2124, 2
    %v2130 = vxor.u32 %v2120, 2147483648
    %v2131 = vsel %vm2129, %v2130, %v2121
    %v2132 = vsel %vm2125, %v2128, %v2131
    %v2133 = vsel %vm2122, nan, %v2132
    %2134 = vst [vmem:[#allocation3] sm:$0xff] %v573
    %2135 = vst [vmem:[#allocation3 + $0x8] sm:$0xff] %v677
    %2136 = vst [vmem:[#allocation3 + $0x10] sm:$0xff] %v781
    %2137 = vst [vmem:[#allocation3 + $0x18] sm:$0xff] %v885
    %2138 = vst [vmem:[#allocation3 + $0x20] sm:$0xff] %v989
    %2139 = vst [vmem:[#allocation3 + $0x28] sm:$0xff] %v1093
    %2140 = vst [vmem:[#allocation3 + $0x30] sm:$0xff] %v1197
    %2141 = vst [vmem:[#allocation3 + $0x38] sm:$0xff] %v1301
    %2142 = vst [vmem:[#allocation3 + $0x40] sm:$0xff] %v1405
    %2143 = vst [vmem:[#allocation3 + $0x48] sm:$0xff] %v1509
    %2144 = vst [vmem:[#allocation3 + $0x50] sm:$0xff] %v1613
    %2145 = vst [vmem:[#allocation3 + $0x58] sm:$0xff] %v1717
    %2146 = vst [vmem:[#allocation3 + $0x60] sm:$0xff] %v1821
    %2147 = vst [vmem:[#allocation3 + $0x68] sm:$0xff] %v1925
    %2148 = vst [vmem:[#allocation3 + $0x70] sm:$0xff] %v2029
    %2149 = vst [vmem:[#allocation3 + $0x78] sm:$0xff] %v2133
    %v2151 = vlaneseq
    %v2152 = vshrl.u32 %v2151, 7
    %v2153 = vsub.s32 0, %v2152
    %v2154 = vrot.slane %v426, %v2153
    %v2155 = vlaneseq
    %v2156 = vshrl.u32 %v2155, 7
    %v2157 = vsub.s32 1, %v2156
    %v2158 = vrot.slane %v426, %v2157
    %v2161 = vmul.f32 %v2154, %v42
    %v2162 = vmul.f32 %v2158, %v42
    %v2163 = vmul.f32 %v2154, %v47
    %v2164 = vmul.f32 %v2158, %v47
    %v2165 = vmul.f32 %v2154, %v52
    %v2166 = vmul.f32 %v2158, %v52
    %v2167 = vmul.f32 %v2154, %v57
    %v2168 = vmul.f32 %v2158, %v57
    %v2169 = vmul.f32 %v2154, %v62
    %v2170 = vmul.f32 %v2158, %v62
    %v2171 = vmul.f32 %v2154, %v67
    %v2172 = vmul.f32 %v2158, %v67
    %v2173 = vmul.f32 %v2154, %v72
    %v2174 = vmul.f32 %v2158, %v72
    %v2175 = vmul.f32 %v2154, %v77
    %v2176 = vmul.f32 %v2158, %v77
    %v2177 = vadd.f32 %v2161, %v90
    %v2178 = vadd.f32 %v2162, %v90
    %v2179 = vadd.f32 %v2163, %v95
    %v2180 = vadd.f32 %v2164, %v95
    %v2181 = vadd.f32 %v2165, %v100
    %v2182 = vadd.f32 %v2166, %v100
    %v2183 = vadd.f32 %v2167, %v105
    %v2184 = vadd.f32 %v2168, %v105
    %v2185 = vadd.f32 %v2169, %v110
    %v2186 = vadd.f32 %v2170, %v110
    %v2187 = vadd.f32 %v2171, %v115
    %v2188 = vadd.f32 %v2172, %v115
    %v2189 = vadd.f32 %v2173, %v120
    %v2190 = vadd.f32 %v2174, %v120
    %v2191 = vadd.f32 %v2175, %v125
    %v2192 = vadd.f32 %v2176, %v125
    %v2193 = vand.u32 2147483647, %v2177
    %vm2194 = vcmp.le.f32.partialorder %v2193, 0.7853982
    %vm2195 = vcmp.lt.s32.totalorder %v2177, 0
    %v2196 = vand.u32 %v2177, 2139095040
    %v2197 = vshrl.u32 %v2196, 23
    %v2198 = vsub.s32 %v2197, 127
    %v2199 = vand.u32 2147483647, %v2177
    %v2200 = vand.u32 %v2199, 8388607
    %v2201 = vor.u32 %v2200, 8388608
    %v2202 = vsub.s32 0, %v2201
    %v2203 = vadd.s32 %v2198, 1
    %vm2204 = vcmp.gt.s32.totalorder %v2203, 0
    %v2205 = vsel %vm2204, %v2203, 0
    %v2206 = vshrl.u32 %v2205, 5
    %v2207 = vand.u32 %v2205, 31
    %v2208 = vsub.s32 32, %v2207
    %v2209 = vshrl.u32 683565275, %v2208
    %v2210 = vshll.u32 683565275, %v2207
    %v2211 = vshrl.u32 2475754826, %v2208
    %v2212 = vor.u32 %v2210, %v2211
    %v2213 = vshll.u32 2475754826, %v2207
    %v2214 = vshrl.u32 2131351028, %v2208
    %v2215 = vor.u32 %v2213, %v2214
    %v2216 = vshll.u32 2131351028, %v2207
    %v2217 = vshrl.u32 2102212464, %v2208
    %v2218 = vor.u32 %v2216, %v2217
    %v2219 = vshll.u32 2102212464, %v2207
    %v2220 = vshrl.u32 920167782, %v2208
    %v2221 = vor.u32 %v2219, %v2220
    %v2222 = vshll.u32 920167782, %v2207
    %v2223 = vshrl.u32 1326507024, %v2208
    %v2224 = vor.u32 %v2222, %v2223
    %vm2225 = vcmp.lt.s32.totalorder %v2206, 1
    %vm2226 = vcmp.lt.s32.totalorder %v2206, 2
    %vm2227 = vcmp.lt.s32.totalorder %v2206, 3
    %vm2228 = vcmp.lt.s32.totalorder %v2206, 4
    %v2229 = vsel %vm2225, %v2209, %v2212
    %v2230 = vsel %vm2228, %v2218, 2102212464
    %v2231 = vsel %vm2227, %v2215, %v2230
    %v2232 = vsel %vm2226, %v2229, %v2231
    %v2233 = vsel %vm2225, %v2212, %v2215
    %v2234 = vsel %vm2228, %v2221, 920167782
    %v2235 = vsel %vm2227, %v2218, %v2234
    %v2236 = vsel %vm2226, %v2233, %v2235
    %v2237 = vsel %vm2225, %v2215, %v2218
    %v2238 = vsel %vm2228, %v2224, 1326507024
    %v2239 = vsel %vm2227, %v2221, %v2238
    %v2240 = vsel %vm2226, %v2237, %v2239
    %v2241 = vshll.u32 %v2201, 8
    %v2242 = vmul.u32.u64.compose %v2241, %v2240
    %v2243 = vextract.low.u32 %v2242
    %v2244 = vextract.high.u32 %v2242
    %v2245 = vmul.u32.u64.compose %v2241, %v2236
    %v2246 = vextract.low.u32 %v2245
    %v2247 = vextract.high.u32 %v2245
    %v2248 = vmul.u32 %v2241, %v2232
    %v2249 = vadd.s32 %v2244, %v2246
    %vm2250 = vc.u32 %v2244, %v2246
    %v2251 = vadd.s32 %v2247, 1
    %v2252 = vsel %vm2250, %v2251, %v2247
    %v2253 = vadd.s32 %v2248, %v2252
    %v2254 = vadd.s32 %v2253, 536870912
    %v2255 = vshrl.u32 %v2254, 30
    %v2256 = vshll.u32 %v2255, 30
    %v2257 = vsub.s32 %v2253, %v2256
    %vm2258 = vcmp.lt.s32.totalorder %v2257, 0
    %v2259 = vsub.s32 0, %v2257
    %v2260 = vsel %vm2258, %v2259, %v2257
    %v2261 = vclz %v2260
    %v2262 = vsub.s32 %v2261, 2
    %vm2263 = vcmp.gt.s32.totalorder 0, %v2262
    %v2264 = vsel %vm2263, 0, %v2262
    %v2265 = vsub.s32 32, %v2264
    %v2266 = vshll.u32 %v2257, %v2264
    %v2267 = vshrl.u32 %v2249, %v2265
    %v2268 = vor.u32 %v2266, %v2267
    %v2269 = vsub.s32 4294967266, %v2264
    %v2270 = vadd.s32 %v2269, 127
    %v2271 = vshll.u32 %v2270, 23
    %v2272 = vor.u32 4788187, %v2271
    %v2273 = vand.u32 2147483647, %v2272
    %v2275 = vcvt.s32.f32 %v2268
    %v2276 = vmul.f32 %v2275, %v2273
    %v2277 = vxor.u32 %v2276, 2147483648
    %v2278 = vsel %vm2195, %v2277, %v2276
    %v2279 = vsub.s32 4, %v2255
    %v2280 = vsel %vm2195, %v2279, %v2255
    %v2281 = vsel %vm2194, %v2177, %v2278
    %v2282 = vsel %vm2194, 0, %v2280
    %v2283 = vcosq.f32.pop %v2281
    %v2284 = vsinq.f32.pop %v2281
    %vm2285 = vweird.f32 %v2177
    %v2286 = vadd.s32 %v2282, 3
    %v2287 = vand.u32 %v2286, 3
    %vm2288 = vcmp.lt.s32.totalorder %v2287, 2
    %vm2289 = vcmp.eq.s32.totalorder %v2287, 0
    %v2290 = vxor.u32 %v2284, 2147483648
    %v2291 = vsel %vm2289, %v2283, %v2290
    %vm2292 = vcmp.eq.s32.totalorder %v2287, 2
    %v2293 = vxor.u32 %v2283, 2147483648
    %v2294 = vsel %vm2292, %v2293, %v2284
    %v2295 = vsel %vm2288, %v2291, %v2294
    %v2296 = vsel %vm2285, nan, %v2295
    %v2297 = vand.u32 2147483647, %v2178
    %vm2298 = vcmp.le.f32.partialorder %v2297, 0.7853982
    %vm2299 = vcmp.lt.s32.totalorder %v2178, 0
    %v2300 = vand.u32 %v2178, 2139095040
    %v2301 = vshrl.u32 %v2300, 23
    %v2302 = vsub.s32 %v2301, 127
    %v2303 = vand.u32 2147483647, %v2178
    %v2304 = vand.u32 %v2303, 8388607
    %v2305 = vor.u32 %v2304, 8388608
    %v2306 = vsub.s32 0, %v2305
    %v2307 = vadd.s32 %v2302, 1
    %vm2308 = vcmp.gt.s32.totalorder %v2307, 0
    %v2309 = vsel %vm2308, %v2307, 0
    %v2310 = vshrl.u32 %v2309, 5
    %v2311 = vand.u32 %v2309, 31
    %v2312 = vsub.s32 32, %v2311
    %v2313 = vshrl.u32 683565275, %v2312
    %v2314 = vshll.u32 683565275, %v2311
    %v2315 = vshrl.u32 2475754826, %v2312
    %v2316 = vor.u32 %v2314, %v2315
    %v2317 = vshll.u32 2475754826, %v2311
    %v2318 = vshrl.u32 2131351028, %v2312
    %v2319 = vor.u32 %v2317, %v2318
    %v2320 = vshll.u32 2131351028, %v2311
    %v2321 = vshrl.u32 2102212464, %v2312
    %v2322 = vor.u32 %v2320, %v2321
    %v2323 = vshll.u32 2102212464, %v2311
    %v2324 = vshrl.u32 920167782, %v2312
    %v2325 = vor.u32 %v2323, %v2324
    %v2326 = vshll.u32 920167782, %v2311
    %v2327 = vshrl.u32 1326507024, %v2312
    %v2328 = vor.u32 %v2326, %v2327
    %vm2329 = vcmp.lt.s32.totalorder %v2310, 1
    %vm2330 = vcmp.lt.s32.totalorder %v2310, 2
    %vm2331 = vcmp.lt.s32.totalorder %v2310, 3
    %vm2332 = vcmp.lt.s32.totalorder %v2310, 4
    %v2333 = vsel %vm2329, %v2313, %v2316
    %v2334 = vsel %vm2332, %v2322, 2102212464
    %v2335 = vsel %vm2331, %v2319, %v2334
    %v2336 = vsel %vm2330, %v2333, %v2335
    %v2337 = vsel %vm2329, %v2316, %v2319
    %v2338 = vsel %vm2332, %v2325, 920167782
    %v2339 = vsel %vm2331, %v2322, %v2338
    %v2340 = vsel %vm2330, %v2337, %v2339
    %v2341 = vsel %vm2329, %v2319, %v2322
    %v2342 = vsel %vm2332, %v2328, 1326507024
    %v2343 = vsel %vm2331, %v2325, %v2342
    %v2344 = vsel %vm2330, %v2341, %v2343
    %v2345 = vshll.u32 %v2305, 8
    %v2346 = vmul.u32.u64.compose %v2345, %v2344
    %v2347 = vextract.low.u32 %v2346
    %v2348 = vextract.high.u32 %v2346
    %v2349 = vmul.u32.u64.compose %v2345, %v2340
    %v2350 = vextract.low.u32 %v2349
    %v2351 = vextract.high.u32 %v2349
    %v2352 = vmul.u32 %v2345, %v2336
    %v2353 = vadd.s32 %v2348, %v2350
    %vm2354 = vc.u32 %v2348, %v2350
    %v2355 = vadd.s32 %v2351, 1
    %v2356 = vsel %vm2354, %v2355, %v2351
    %v2357 = vadd.s32 %v2352, %v2356
    %v2358 = vadd.s32 %v2357, 536870912
    %v2359 = vshrl.u32 %v2358, 30
    %v2360 = vshll.u32 %v2359, 30
    %v2361 = vsub.s32 %v2357, %v2360
    %vm2362 = vcmp.lt.s32.totalorder %v2361, 0
    %v2363 = vsub.s32 0, %v2361
    %v2364 = vsel %vm2362, %v2363, %v2361
    %v2365 = vclz %v2364
    %v2366 = vsub.s32 %v2365, 2
    %vm2367 = vcmp.gt.s32.totalorder 0, %v2366
    %v2368 = vsel %vm2367, 0, %v2366
    %v2369 = vsub.s32 32, %v2368
    %v2370 = vshll.u32 %v2361, %v2368
    %v2371 = vshrl.u32 %v2353, %v2369
    %v2372 = vor.u32 %v2370, %v2371
    %v2373 = vsub.s32 4294967266, %v2368
    %v2374 = vadd.s32 %v2373, 127
    %v2375 = vshll.u32 %v2374, 23
    %v2376 = vor.u32 4788187, %v2375
    %v2377 = vand.u32 2147483647, %v2376
    %v2379 = vcvt.s32.f32 %v2372
    %v2380 = vmul.f32 %v2379, %v2377
    %v2381 = vxor.u32 %v2380, 2147483648
    %v2382 = vsel %vm2299, %v2381, %v2380
    %v2383 = vsub.s32 4, %v2359
    %v2384 = vsel %vm2299, %v2383, %v2359
    %v2385 = vsel %vm2298, %v2178, %v2382
    %v2386 = vsel %vm2298, 0, %v2384
    %v2387 = vcosq.f32.pop %v2385
    %v2388 = vsinq.f32.pop %v2385
    %vm2389 = vweird.f32 %v2178
    %v2390 = vadd.s32 %v2386, 3
    %v2391 = vand.u32 %v2390, 3
    %vm2392 = vcmp.lt.s32.totalorder %v2391, 2
    %vm2393 = vcmp.eq.s32.totalorder %v2391, 0
    %v2394 = vxor.u32 %v2388, 2147483648
    %v2395 = vsel %vm2393, %v2387, %v2394
    %vm2396 = vcmp.eq.s32.totalorder %v2391, 2
    %v2397 = vxor.u32 %v2387, 2147483648
    %v2398 = vsel %vm2396, %v2397, %v2388
    %v2399 = vsel %vm2392, %v2395, %v2398
    %v2400 = vsel %vm2389, nan, %v2399
    %v2401 = vand.u32 2147483647, %v2179
    %vm2402 = vcmp.le.f32.partialorder %v2401, 0.7853982
    %vm2403 = vcmp.lt.s32.totalorder %v2179, 0
    %v2404 = vand.u32 %v2179, 2139095040
    %v2405 = vshrl.u32 %v2404, 23
    %v2406 = vsub.s32 %v2405, 127
    %v2407 = vand.u32 2147483647, %v2179
    %v2408 = vand.u32 %v2407, 8388607
    %v2409 = vor.u32 %v2408, 8388608
    %v2410 = vsub.s32 0, %v2409
    %v2411 = vadd.s32 %v2406, 1
    %vm2412 = vcmp.gt.s32.totalorder %v2411, 0
    %v2413 = vsel %vm2412, %v2411, 0
    %v2414 = vshrl.u32 %v2413, 5
    %v2415 = vand.u32 %v2413, 31
    %v2416 = vsub.s32 32, %v2415
    %v2417 = vshrl.u32 683565275, %v2416
    %v2418 = vshll.u32 683565275, %v2415
    %v2419 = vshrl.u32 2475754826, %v2416
    %v2420 = vor.u32 %v2418, %v2419
    %v2421 = vshll.u32 2475754826, %v2415
    %v2422 = vshrl.u32 2131351028, %v2416
    %v2423 = vor.u32 %v2421, %v2422
    %v2424 = vshll.u32 2131351028, %v2415
    %v2425 = vshrl.u32 2102212464, %v2416
    %v2426 = vor.u32 %v2424, %v2425
    %v2427 = vshll.u32 2102212464, %v2415
    %v2428 = vshrl.u32 920167782, %v2416
    %v2429 = vor.u32 %v2427, %v2428
    %v2430 = vshll.u32 920167782, %v2415
    %v2431 = vshrl.u32 1326507024, %v2416
    %v2432 = vor.u32 %v2430, %v2431
    %vm2433 = vcmp.lt.s32.totalorder %v2414, 1
    %vm2434 = vcmp.lt.s32.totalorder %v2414, 2
    %vm2435 = vcmp.lt.s32.totalorder %v2414, 3
    %vm2436 = vcmp.lt.s32.totalorder %v2414, 4
    %v2437 = vsel %vm2433, %v2417, %v2420
    %v2438 = vsel %vm2436, %v2426, 2102212464
    %v2439 = vsel %vm2435, %v2423, %v2438
    %v2440 = vsel %vm2434, %v2437, %v2439
    %v2441 = vsel %vm2433, %v2420, %v2423
    %v2442 = vsel %vm2436, %v2429, 920167782
    %v2443 = vsel %vm2435, %v2426, %v2442
    %v2444 = vsel %vm2434, %v2441, %v2443
    %v2445 = vsel %vm2433, %v2423, %v2426
    %v2446 = vsel %vm2436, %v2432, 1326507024
    %v2447 = vsel %vm2435, %v2429, %v2446
    %v2448 = vsel %vm2434, %v2445, %v2447
    %v2449 = vshll.u32 %v2409, 8
    %v2450 = vmul.u32.u64.compose %v2449, %v2448
    %v2451 = vextract.low.u32 %v2450
    %v2452 = vextract.high.u32 %v2450
    %v2453 = vmul.u32.u64.compose %v2449, %v2444
    %v2454 = vextract.low.u32 %v2453
    %v2455 = vextract.high.u32 %v2453
    %v2456 = vmul.u32 %v2449, %v2440
    %v2457 = vadd.s32 %v2452, %v2454
    %vm2458 = vc.u32 %v2452, %v2454
    %v2459 = vadd.s32 %v2455, 1
    %v2460 = vsel %vm2458, %v2459, %v2455
    %v2461 = vadd.s32 %v2456, %v2460
    %v2462 = vadd.s32 %v2461, 536870912
    %v2463 = vshrl.u32 %v2462, 30
    %v2464 = vshll.u32 %v2463, 30
    %v2465 = vsub.s32 %v2461, %v2464
    %vm2466 = vcmp.lt.s32.totalorder %v2465, 0
    %v2467 = vsub.s32 0, %v2465
    %v2468 = vsel %vm2466, %v2467, %v2465
    %v2469 = vclz %v2468
    %v2470 = vsub.s32 %v2469, 2
    %vm2471 = vcmp.gt.s32.totalorder 0, %v2470
    %v2472 = vsel %vm2471, 0, %v2470
    %v2473 = vsub.s32 32, %v2472
    %v2474 = vshll.u32 %v2465, %v2472
    %v2475 = vshrl.u32 %v2457, %v2473
    %v2476 = vor.u32 %v2474, %v2475
    %v2477 = vsub.s32 4294967266, %v2472
    %v2478 = vadd.s32 %v2477, 127
    %v2479 = vshll.u32 %v2478, 23
    %v2480 = vor.u32 4788187, %v2479
    %v2481 = vand.u32 2147483647, %v2480
    %v2483 = vcvt.s32.f32 %v2476
    %v2484 = vmul.f32 %v2483, %v2481
    %v2485 = vxor.u32 %v2484, 2147483648
    %v2486 = vsel %vm2403, %v2485, %v2484
    %v2487 = vsub.s32 4, %v2463
    %v2488 = vsel %vm2403, %v2487, %v2463
    %v2489 = vsel %vm2402, %v2179, %v2486
    %v2490 = vsel %vm2402, 0, %v2488
    %v2491 = vcosq.f32.pop %v2489
    %v2492 = vsinq.f32.pop %v2489
    %vm2493 = vweird.f32 %v2179
    %v2494 = vadd.s32 %v2490, 3
    %v2495 = vand.u32 %v2494, 3
    %vm2496 = vcmp.lt.s32.totalorder %v2495, 2
    %vm2497 = vcmp.eq.s32.totalorder %v2495, 0
    %v2498 = vxor.u32 %v2492, 2147483648
    %v2499 = vsel %vm2497, %v2491, %v2498
    %vm2500 = vcmp.eq.s32.totalorder %v2495, 2
    %v2501 = vxor.u32 %v2491, 2147483648
    %v2502 = vsel %vm2500, %v2501, %v2492
    %v2503 = vsel %vm2496, %v2499, %v2502
    %v2504 = vsel %vm2493, nan, %v2503
    %v2505 = vand.u32 2147483647, %v2180
    %vm2506 = vcmp.le.f32.partialorder %v2505, 0.7853982
    %vm2507 = vcmp.lt.s32.totalorder %v2180, 0
    %v2508 = vand.u32 %v2180, 2139095040
    %v2509 = vshrl.u32 %v2508, 23
    %v2510 = vsub.s32 %v2509, 127
    %v2511 = vand.u32 2147483647, %v2180
    %v2512 = vand.u32 %v2511, 8388607
    %v2513 = vor.u32 %v2512, 8388608
    %v2514 = vsub.s32 0, %v2513
    %v2515 = vadd.s32 %v2510, 1
    %vm2516 = vcmp.gt.s32.totalorder %v2515, 0
    %v2517 = vsel %vm2516, %v2515, 0
    %v2518 = vshrl.u32 %v2517, 5
    %v2519 = vand.u32 %v2517, 31
    %v2520 = vsub.s32 32, %v2519
    %v2521 = vshrl.u32 683565275, %v2520
    %v2522 = vshll.u32 683565275, %v2519
    %v2523 = vshrl.u32 2475754826, %v2520
    %v2524 = vor.u32 %v2522, %v2523
    %v2525 = vshll.u32 2475754826, %v2519
    %v2526 = vshrl.u32 2131351028, %v2520
    %v2527 = vor.u32 %v2525, %v2526
    %v2528 = vshll.u32 2131351028, %v2519
    %v2529 = vshrl.u32 2102212464, %v2520
    %v2530 = vor.u32 %v2528, %v2529
    %v2531 = vshll.u32 2102212464, %v2519
    %v2532 = vshrl.u32 920167782, %v2520
    %v2533 = vor.u32 %v2531, %v2532
    %v2534 = vshll.u32 920167782, %v2519
    %v2535 = vshrl.u32 1326507024, %v2520
    %v2536 = vor.u32 %v2534, %v2535
    %vm2537 = vcmp.lt.s32.totalorder %v2518, 1
    %vm2538 = vcmp.lt.s32.totalorder %v2518, 2
    %vm2539 = vcmp.lt.s32.totalorder %v2518, 3
    %vm2540 = vcmp.lt.s32.totalorder %v2518, 4
    %v2541 = vsel %vm2537, %v2521, %v2524
    %v2542 = vsel %vm2540, %v2530, 2102212464
    %v2543 = vsel %vm2539, %v2527, %v2542
    %v2544 = vsel %vm2538, %v2541, %v2543
    %v2545 = vsel %vm2537, %v2524, %v2527
    %v2546 = vsel %vm2540, %v2533, 920167782
    %v2547 = vsel %vm2539, %v2530, %v2546
    %v2548 = vsel %vm2538, %v2545, %v2547
    %v2549 = vsel %vm2537, %v2527, %v2530
    %v2550 = vsel %vm2540, %v2536, 1326507024
    %v2551 = vsel %vm2539, %v2533, %v2550
    %v2552 = vsel %vm2538, %v2549, %v2551
    %v2553 = vshll.u32 %v2513, 8
    %v2554 = vmul.u32.u64.compose %v2553, %v2552
    %v2555 = vextract.low.u32 %v2554
    %v2556 = vextract.high.u32 %v2554
    %v2557 = vmul.u32.u64.compose %v2553, %v2548
    %v2558 = vextract.low.u32 %v2557
    %v2559 = vextract.high.u32 %v2557
    %v2560 = vmul.u32 %v2553, %v2544
    %v2561 = vadd.s32 %v2556, %v2558
    %vm2562 = vc.u32 %v2556, %v2558
    %v2563 = vadd.s32 %v2559, 1
    %v2564 = vsel %vm2562, %v2563, %v2559
    %v2565 = vadd.s32 %v2560, %v2564
    %v2566 = vadd.s32 %v2565, 536870912
    %v2567 = vshrl.u32 %v2566, 30
    %v2568 = vshll.u32 %v2567, 30
    %v2569 = vsub.s32 %v2565, %v2568
    %vm2570 = vcmp.lt.s32.totalorder %v2569, 0
    %v2571 = vsub.s32 0, %v2569
    %v2572 = vsel %vm2570, %v2571, %v2569
    %v2573 = vclz %v2572
    %v2574 = vsub.s32 %v2573, 2
    %vm2575 = vcmp.gt.s32.totalorder 0, %v2574
    %v2576 = vsel %vm2575, 0, %v2574
    %v2577 = vsub.s32 32, %v2576
    %v2578 = vshll.u32 %v2569, %v2576
    %v2579 = vshrl.u32 %v2561, %v2577
    %v2580 = vor.u32 %v2578, %v2579
    %v2581 = vsub.s32 4294967266, %v2576
    %v2582 = vadd.s32 %v2581, 127
    %v2583 = vshll.u32 %v2582, 23
    %v2584 = vor.u32 4788187, %v2583
    %v2585 = vand.u32 2147483647, %v2584
    %v2587 = vcvt.s32.f32 %v2580
    %v2588 = vmul.f32 %v2587, %v2585
    %v2589 = vxor.u32 %v2588, 2147483648
    %v2590 = vsel %vm2507, %v2589, %v2588
    %v2591 = vsub.s32 4, %v2567
    %v2592 = vsel %vm2507, %v2591, %v2567
    %v2593 = vsel %vm2506, %v2180, %v2590
    %v2594 = vsel %vm2506, 0, %v2592
    %v2595 = vcosq.f32.pop %v2593
    %v2596 = vsinq.f32.pop %v2593
    %vm2597 = vweird.f32 %v2180
    %v2598 = vadd.s32 %v2594, 3
    %v2599 = vand.u32 %v2598, 3
    %vm2600 = vcmp.lt.s32.totalorder %v2599, 2
    %vm2601 = vcmp.eq.s32.totalorder %v2599, 0
    %v2602 = vxor.u32 %v2596, 2147483648
    %v2603 = vsel %vm2601, %v2595, %v2602
    %vm2604 = vcmp.eq.s32.totalorder %v2599, 2
    %v2605 = vxor.u32 %v2595, 2147483648
    %v2606 = vsel %vm2604, %v2605, %v2596
    %v2607 = vsel %vm2600, %v2603, %v2606
    %v2608 = vsel %vm2597, nan, %v2607
    %v2609 = vand.u32 2147483647, %v2181
    %vm2610 = vcmp.le.f32.partialorder %v2609, 0.7853982
    %vm2611 = vcmp.lt.s32.totalorder %v2181, 0
    %v2612 = vand.u32 %v2181, 2139095040
    %v2613 = vshrl.u32 %v2612, 23
    %v2614 = vsub.s32 %v2613, 127
    %v2615 = vand.u32 2147483647, %v2181
    %v2616 = vand.u32 %v2615, 8388607
    %v2617 = vor.u32 %v2616, 8388608
    %v2618 = vsub.s32 0, %v2617
    %v2619 = vadd.s32 %v2614, 1
    %vm2620 = vcmp.gt.s32.totalorder %v2619, 0
    %v2621 = vsel %vm2620, %v2619, 0
    %v2622 = vshrl.u32 %v2621, 5
    %v2623 = vand.u32 %v2621, 31
    %v2624 = vsub.s32 32, %v2623
    %v2625 = vshrl.u32 683565275, %v2624
    %v2626 = vshll.u32 683565275, %v2623
    %v2627 = vshrl.u32 2475754826, %v2624
    %v2628 = vor.u32 %v2626, %v2627
    %v2629 = vshll.u32 2475754826, %v2623
    %v2630 = vshrl.u32 2131351028, %v2624
    %v2631 = vor.u32 %v2629, %v2630
    %v2632 = vshll.u32 2131351028, %v2623
    %v2633 = vshrl.u32 2102212464, %v2624
    %v2634 = vor.u32 %v2632, %v2633
    %v2635 = vshll.u32 2102212464, %v2623
    %v2636 = vshrl.u32 920167782, %v2624
    %v2637 = vor.u32 %v2635, %v2636
    %v2638 = vshll.u32 920167782, %v2623
    %v2639 = vshrl.u32 1326507024, %v2624
    %v2640 = vor.u32 %v2638, %v2639
    %vm2641 = vcmp.lt.s32.totalorder %v2622, 1
    %vm2642 = vcmp.lt.s32.totalorder %v2622, 2
    %vm2643 = vcmp.lt.s32.totalorder %v2622, 3
    %vm2644 = vcmp.lt.s32.totalorder %v2622, 4
    %v2645 = vsel %vm2641, %v2625, %v2628
    %v2646 = vsel %vm2644, %v2634, 2102212464
    %v2647 = vsel %vm2643, %v2631, %v2646
    %v2648 = vsel %vm2642, %v2645, %v2647
    %v2649 = vsel %vm2641, %v2628, %v2631
    %v2650 = vsel %vm2644, %v2637, 920167782
    %v2651 = vsel %vm2643, %v2634, %v2650
    %v2652 = vsel %vm2642, %v2649, %v2651
    %v2653 = vsel %vm2641, %v2631, %v2634
    %v2654 = vsel %vm2644, %v2640, 1326507024
    %v2655 = vsel %vm2643, %v2637, %v2654
    %v2656 = vsel %vm2642, %v2653, %v2655
    %v2657 = vshll.u32 %v2617, 8
    %v2658 = vmul.u32.u64.compose %v2657, %v2656
    %v2659 = vextract.low.u32 %v2658
    %v2660 = vextract.high.u32 %v2658
    %v2661 = vmul.u32.u64.compose %v2657, %v2652
    %v2662 = vextract.low.u32 %v2661
    %v2663 = vextract.high.u32 %v2661
    %v2664 = vmul.u32 %v2657, %v2648
    %v2665 = vadd.s32 %v2660, %v2662
    %vm2666 = vc.u32 %v2660, %v2662
    %v2667 = vadd.s32 %v2663, 1
    %v2668 = vsel %vm2666, %v2667, %v2663
    %v2669 = vadd.s32 %v2664, %v2668
    %v2670 = vadd.s32 %v2669, 536870912
    %v2671 = vshrl.u32 %v2670, 30
    %v2672 = vshll.u32 %v2671, 30
    %v2673 = vsub.s32 %v2669, %v2672
    %vm2674 = vcmp.lt.s32.totalorder %v2673, 0
    %v2675 = vsub.s32 0, %v2673
    %v2676 = vsel %vm2674, %v2675, %v2673
    %v2677 = vclz %v2676
    %v2678 = vsub.s32 %v2677, 2
    %vm2679 = vcmp.gt.s32.totalorder 0, %v2678
    %v2680 = vsel %vm2679, 0, %v2678
    %v2681 = vsub.s32 32, %v2680
    %v2682 = vshll.u32 %v2673, %v2680
    %v2683 = vshrl.u32 %v2665, %v2681
    %v2684 = vor.u32 %v2682, %v2683
    %v2685 = vsub.s32 4294967266, %v2680
    %v2686 = vadd.s32 %v2685, 127
    %v2687 = vshll.u32 %v2686, 23
    %v2688 = vor.u32 4788187, %v2687
    %v2689 = vand.u32 2147483647, %v2688
    %v2691 = vcvt.s32.f32 %v2684
    %v2692 = vmul.f32 %v2691, %v2689
    %v2693 = vxor.u32 %v2692, 2147483648
    %v2694 = vsel %vm2611, %v2693, %v2692
    %v2695 = vsub.s32 4, %v2671
    %v2696 = vsel %vm2611, %v2695, %v2671
    %v2697 = vsel %vm2610, %v2181, %v2694
    %v2698 = vsel %vm2610, 0, %v2696
    %v2699 = vcosq.f32.pop %v2697
    %v2700 = vsinq.f32.pop %v2697
    %vm2701 = vweird.f32 %v2181
    %v2702 = vadd.s32 %v2698, 3
    %v2703 = vand.u32 %v2702, 3
    %vm2704 = vcmp.lt.s32.totalorder %v2703, 2
    %vm2705 = vcmp.eq.s32.totalorder %v2703, 0
    %v2706 = vxor.u32 %v2700, 2147483648
    %v2707 = vsel %vm2705, %v2699, %v2706
    %vm2708 = vcmp.eq.s32.totalorder %v2703, 2
    %v2709 = vxor.u32 %v2699, 2147483648
    %v2710 = vsel %vm2708, %v2709, %v2700
    %v2711 = vsel %vm2704, %v2707, %v2710
    %v2712 = vsel %vm2701, nan, %v2711
    %v2713 = vand.u32 2147483647, %v2182
    %vm2714 = vcmp.le.f32.partialorder %v2713, 0.7853982
    %vm2715 = vcmp.lt.s32.totalorder %v2182, 0
    %v2716 = vand.u32 %v2182, 2139095040
    %v2717 = vshrl.u32 %v2716, 23
    %v2718 = vsub.s32 %v2717, 127
    %v2719 = vand.u32 2147483647, %v2182
    %v2720 = vand.u32 %v2719, 8388607
    %v2721 = vor.u32 %v2720, 8388608
    %v2722 = vsub.s32 0, %v2721
    %v2723 = vadd.s32 %v2718, 1
    %vm2724 = vcmp.gt.s32.totalorder %v2723, 0
    %v2725 = vsel %vm2724, %v2723, 0
    %v2726 = vshrl.u32 %v2725, 5
    %v2727 = vand.u32 %v2725, 31
    %v2728 = vsub.s32 32, %v2727
    %v2729 = vshrl.u32 683565275, %v2728
    %v2730 = vshll.u32 683565275, %v2727
    %v2731 = vshrl.u32 2475754826, %v2728
    %v2732 = vor.u32 %v2730, %v2731
    %v2733 = vshll.u32 2475754826, %v2727
    %v2734 = vshrl.u32 2131351028, %v2728
    %v2735 = vor.u32 %v2733, %v2734
    %v2736 = vshll.u32 2131351028, %v2727
    %v2737 = vshrl.u32 2102212464, %v2728
    %v2738 = vor.u32 %v2736, %v2737
    %v2739 = vshll.u32 2102212464, %v2727
    %v2740 = vshrl.u32 920167782, %v2728
    %v2741 = vor.u32 %v2739, %v2740
    %v2742 = vshll.u32 920167782, %v2727
    %v2743 = vshrl.u32 1326507024, %v2728
    %v2744 = vor.u32 %v2742, %v2743
    %vm2745 = vcmp.lt.s32.totalorder %v2726, 1
    %vm2746 = vcmp.lt.s32.totalorder %v2726, 2
    %vm2747 = vcmp.lt.s32.totalorder %v2726, 3
    %vm2748 = vcmp.lt.s32.totalorder %v2726, 4
    %v2749 = vsel %vm2745, %v2729, %v2732
    %v2750 = vsel %vm2748, %v2738, 2102212464
    %v2751 = vsel %vm2747, %v2735, %v2750
    %v2752 = vsel %vm2746, %v2749, %v2751
    %v2753 = vsel %vm2745, %v2732, %v2735
    %v2754 = vsel %vm2748, %v2741, 920167782
    %v2755 = vsel %vm2747, %v2738, %v2754
    %v2756 = vsel %vm2746, %v2753, %v2755
    %v2757 = vsel %vm2745, %v2735, %v2738
    %v2758 = vsel %vm2748, %v2744, 1326507024
    %v2759 = vsel %vm2747, %v2741, %v2758
    %v2760 = vsel %vm2746, %v2757, %v2759
    %v2761 = vshll.u32 %v2721, 8
    %v2762 = vmul.u32.u64.compose %v2761, %v2760
    %v2763 = vextract.low.u32 %v2762
    %v2764 = vextract.high.u32 %v2762
    %v2765 = vmul.u32.u64.compose %v2761, %v2756
    %v2766 = vextract.low.u32 %v2765
    %v2767 = vextract.high.u32 %v2765
    %v2768 = vmul.u32 %v2761, %v2752
    %v2769 = vadd.s32 %v2764, %v2766
    %vm2770 = vc.u32 %v2764, %v2766
    %v2771 = vadd.s32 %v2767, 1
    %v2772 = vsel %vm2770, %v2771, %v2767
    %v2773 = vadd.s32 %v2768, %v2772
    %v2774 = vadd.s32 %v2773, 536870912
    %v2775 = vshrl.u32 %v2774, 30
    %v2776 = vshll.u32 %v2775, 30
    %v2777 = vsub.s32 %v2773, %v2776
    %vm2778 = vcmp.lt.s32.totalorder %v2777, 0
    %v2779 = vsub.s32 0, %v2777
    %v2780 = vsel %vm2778, %v2779, %v2777
    %v2781 = vclz %v2780
    %v2782 = vsub.s32 %v2781, 2
    %vm2783 = vcmp.gt.s32.totalorder 0, %v2782
    %v2784 = vsel %vm2783, 0, %v2782
    %v2785 = vsub.s32 32, %v2784
    %v2786 = vshll.u32 %v2777, %v2784
    %v2787 = vshrl.u32 %v2769, %v2785
    %v2788 = vor.u32 %v2786, %v2787
    %v2789 = vsub.s32 4294967266, %v2784
    %v2790 = vadd.s32 %v2789, 127
    %v2791 = vshll.u32 %v2790, 23
    %v2792 = vor.u32 4788187, %v2791
    %v2793 = vand.u32 2147483647, %v2792
    %v2795 = vcvt.s32.f32 %v2788
    %v2796 = vmul.f32 %v2795, %v2793
    %v2797 = vxor.u32 %v2796, 2147483648
    %v2798 = vsel %vm2715, %v2797, %v2796
    %v2799 = vsub.s32 4, %v2775
    %v2800 = vsel %vm2715, %v2799, %v2775
    %v2801 = vsel %vm2714, %v2182, %v2798
    %v2802 = vsel %vm2714, 0, %v2800
    %v2803 = vcosq.f32.pop %v2801
    %v2804 = vsinq.f32.pop %v2801
    %vm2805 = vweird.f32 %v2182
    %v2806 = vadd.s32 %v2802, 3
    %v2807 = vand.u32 %v2806, 3
    %vm2808 = vcmp.lt.s32.totalorder %v2807, 2
    %vm2809 = vcmp.eq.s32.totalorder %v2807, 0
    %v2810 = vxor.u32 %v2804, 2147483648
    %v2811 = vsel %vm2809, %v2803, %v2810
    %vm2812 = vcmp.eq.s32.totalorder %v2807, 2
    %v2813 = vxor.u32 %v2803, 2147483648
    %v2814 = vsel %vm2812, %v2813, %v2804
    %v2815 = vsel %vm2808, %v2811, %v2814
    %v2816 = vsel %vm2805, nan, %v2815
    %v2817 = vand.u32 2147483647, %v2183
    %vm2818 = vcmp.le.f32.partialorder %v2817, 0.7853982
    %vm2819 = vcmp.lt.s32.totalorder %v2183, 0
    %v2820 = vand.u32 %v2183, 2139095040
    %v2821 = vshrl.u32 %v2820, 23
    %v2822 = vsub.s32 %v2821, 127
    %v2823 = vand.u32 2147483647, %v2183
    %v2824 = vand.u32 %v2823, 8388607
    %v2825 = vor.u32 %v2824, 8388608
    %v2826 = vsub.s32 0, %v2825
    %v2827 = vadd.s32 %v2822, 1
    %vm2828 = vcmp.gt.s32.totalorder %v2827, 0
    %v2829 = vsel %vm2828, %v2827, 0
    %v2830 = vshrl.u32 %v2829, 5
    %v2831 = vand.u32 %v2829, 31
    %v2832 = vsub.s32 32, %v2831
    %v2833 = vshrl.u32 683565275, %v2832
    %v2834 = vshll.u32 683565275, %v2831
    %v2835 = vshrl.u32 2475754826, %v2832
    %v2836 = vor.u32 %v2834, %v2835
    %v2837 = vshll.u32 2475754826, %v2831
    %v2838 = vshrl.u32 2131351028, %v2832
    %v2839 = vor.u32 %v2837, %v2838
    %v2840 = vshll.u32 2131351028, %v2831
    %v2841 = vshrl.u32 2102212464, %v2832
    %v2842 = vor.u32 %v2840, %v2841
    %v2843 = vshll.u32 2102212464, %v2831
    %v2844 = vshrl.u32 920167782, %v2832
    %v2845 = vor.u32 %v2843, %v2844
    %v2846 = vshll.u32 920167782, %v2831
    %v2847 = vshrl.u32 1326507024, %v2832
    %v2848 = vor.u32 %v2846, %v2847
    %vm2849 = vcmp.lt.s32.totalorder %v2830, 1
    %vm2850 = vcmp.lt.s32.totalorder %v2830, 2
    %vm2851 = vcmp.lt.s32.totalorder %v2830, 3
    %vm2852 = vcmp.lt.s32.totalorder %v2830, 4
    %v2853 = vsel %vm2849, %v2833, %v2836
    %v2854 = vsel %vm2852, %v2842, 2102212464
    %v2855 = vsel %vm2851, %v2839, %v2854
    %v2856 = vsel %vm2850, %v2853, %v2855
    %v2857 = vsel %vm2849, %v2836, %v2839
    %v2858 = vsel %vm2852, %v2845, 920167782
    %v2859 = vsel %vm2851, %v2842, %v2858
    %v2860 = vsel %vm2850, %v2857, %v2859
    %v2861 = vsel %vm2849, %v2839, %v2842
    %v2862 = vsel %vm2852, %v2848, 1326507024
    %v2863 = vsel %vm2851, %v2845, %v2862
    %v2864 = vsel %vm2850, %v2861, %v2863
    %v2865 = vshll.u32 %v2825, 8
    %v2866 = vmul.u32.u64.compose %v2865, %v2864
    %v2867 = vextract.low.u32 %v2866
    %v2868 = vextract.high.u32 %v2866
    %v2869 = vmul.u32.u64.compose %v2865, %v2860
    %v2870 = vextract.low.u32 %v2869
    %v2871 = vextract.high.u32 %v2869
    %v2872 = vmul.u32 %v2865, %v2856
    %v2873 = vadd.s32 %v2868, %v2870
    %vm2874 = vc.u32 %v2868, %v2870
    %v2875 = vadd.s32 %v2871, 1
    %v2876 = vsel %vm2874, %v2875, %v2871
    %v2877 = vadd.s32 %v2872, %v2876
    %v2878 = vadd.s32 %v2877, 536870912
    %v2879 = vshrl.u32 %v2878, 30
    %v2880 = vshll.u32 %v2879, 30
    %v2881 = vsub.s32 %v2877, %v2880
    %vm2882 = vcmp.lt.s32.totalorder %v2881, 0
    %v2883 = vsub.s32 0, %v2881
    %v2884 = vsel %vm2882, %v2883, %v2881
    %v2885 = vclz %v2884
    %v2886 = vsub.s32 %v2885, 2
    %vm2887 = vcmp.gt.s32.totalorder 0, %v2886
    %v2888 = vsel %vm2887, 0, %v2886
    %v2889 = vsub.s32 32, %v2888
    %v2890 = vshll.u32 %v2881, %v2888
    %v2891 = vshrl.u32 %v2873, %v2889
    %v2892 = vor.u32 %v2890, %v2891
    %v2893 = vsub.s32 4294967266, %v2888
    %v2894 = vadd.s32 %v2893, 127
    %v2895 = vshll.u32 %v2894, 23
    %v2896 = vor.u32 4788187, %v2895
    %v2897 = vand.u32 2147483647, %v2896
    %v2899 = vcvt.s32.f32 %v2892
    %v2900 = vmul.f32 %v2899, %v2897
    %v2901 = vxor.u32 %v2900, 2147483648
    %v2902 = vsel %vm2819, %v2901, %v2900
    %v2903 = vsub.s32 4, %v2879
    %v2904 = vsel %vm2819, %v2903, %v2879
    %v2905 = vsel %vm2818, %v2183, %v2902
    %v2906 = vsel %vm2818, 0, %v2904
    %v2907 = vcosq.f32.pop %v2905
    %v2908 = vsinq.f32.pop %v2905
    %vm2909 = vweird.f32 %v2183
    %v2910 = vadd.s32 %v2906, 3
    %v2911 = vand.u32 %v2910, 3
    %vm2912 = vcmp.lt.s32.totalorder %v2911, 2
    %vm2913 = vcmp.eq.s32.totalorder %v2911, 0
    %v2914 = vxor.u32 %v2908, 2147483648
    %v2915 = vsel %vm2913, %v2907, %v2914
    %vm2916 = vcmp.eq.s32.totalorder %v2911, 2
    %v2917 = vxor.u32 %v2907, 2147483648
    %v2918 = vsel %vm2916, %v2917, %v2908
    %v2919 = vsel %vm2912, %v2915, %v2918
    %v2920 = vsel %vm2909, nan, %v2919
    %v2921 = vand.u32 2147483647, %v2184
    %vm2922 = vcmp.le.f32.partialorder %v2921, 0.7853982
    %vm2923 = vcmp.lt.s32.totalorder %v2184, 0
    %v2924 = vand.u32 %v2184, 2139095040
    %v2925 = vshrl.u32 %v2924, 23
    %v2926 = vsub.s32 %v2925, 127
    %v2927 = vand.u32 2147483647, %v2184
    %v2928 = vand.u32 %v2927, 8388607
    %v2929 = vor.u32 %v2928, 8388608
    %v2930 = vsub.s32 0, %v2929
    %v2931 = vadd.s32 %v2926, 1
    %vm2932 = vcmp.gt.s32.totalorder %v2931, 0
    %v2933 = vsel %vm2932, %v2931, 0
    %v2934 = vshrl.u32 %v2933, 5
    %v2935 = vand.u32 %v2933, 31
    %v2936 = vsub.s32 32, %v2935
    %v2937 = vshrl.u32 683565275, %v2936
    %v2938 = vshll.u32 683565275, %v2935
    %v2939 = vshrl.u32 2475754826, %v2936
    %v2940 = vor.u32 %v2938, %v2939
    %v2941 = vshll.u32 2475754826, %v2935
    %v2942 = vshrl.u32 2131351028, %v2936
    %v2943 = vor.u32 %v2941, %v2942
    %v2944 = vshll.u32 2131351028, %v2935
    %v2945 = vshrl.u32 2102212464, %v2936
    %v2946 = vor.u32 %v2944, %v2945
    %v2947 = vshll.u32 2102212464, %v2935
    %v2948 = vshrl.u32 920167782, %v2936
    %v2949 = vor.u32 %v2947, %v2948
    %v2950 = vshll.u32 920167782, %v2935
    %v2951 = vshrl.u32 1326507024, %v2936
    %v2952 = vor.u32 %v2950, %v2951
    %vm2953 = vcmp.lt.s32.totalorder %v2934, 1
    %vm2954 = vcmp.lt.s32.totalorder %v2934, 2
    %vm2955 = vcmp.lt.s32.totalorder %v2934, 3
    %vm2956 = vcmp.lt.s32.totalorder %v2934, 4
    %v2957 = vsel %vm2953, %v2937, %v2940
    %v2958 = vsel %vm2956, %v2946, 2102212464
    %v2959 = vsel %vm2955, %v2943, %v2958
    %v2960 = vsel %vm2954, %v2957, %v2959
    %v2961 = vsel %vm2953, %v2940, %v2943
    %v2962 = vsel %vm2956, %v2949, 920167782
    %v2963 = vsel %vm2955, %v2946, %v2962
    %v2964 = vsel %vm2954, %v2961, %v2963
    %v2965 = vsel %vm2953, %v2943, %v2946
    %v2966 = vsel %vm2956, %v2952, 1326507024
    %v2967 = vsel %vm2955, %v2949, %v2966
    %v2968 = vsel %vm2954, %v2965, %v2967
    %v2969 = vshll.u32 %v2929, 8
    %v2970 = vmul.u32.u64.compose %v2969, %v2968
    %v2971 = vextract.low.u32 %v2970
    %v2972 = vextract.high.u32 %v2970
    %v2973 = vmul.u32.u64.compose %v2969, %v2964
    %v2974 = vextract.low.u32 %v2973
    %v2975 = vextract.high.u32 %v2973
    %v2976 = vmul.u32 %v2969, %v2960
    %v2977 = vadd.s32 %v2972, %v2974
    %vm2978 = vc.u32 %v2972, %v2974
    %v2979 = vadd.s32 %v2975, 1
    %v2980 = vsel %vm2978, %v2979, %v2975
    %v2981 = vadd.s32 %v2976, %v2980
    %v2982 = vadd.s32 %v2981, 536870912
    %v2983 = vshrl.u32 %v2982, 30
    %v2984 = vshll.u32 %v2983, 30
    %v2985 = vsub.s32 %v2981, %v2984
    %vm2986 = vcmp.lt.s32.totalorder %v2985, 0
    %v2987 = vsub.s32 0, %v2985
    %v2988 = vsel %vm2986, %v2987, %v2985
    %v2989 = vclz %v2988
    %v2990 = vsub.s32 %v2989, 2
    %vm2991 = vcmp.gt.s32.totalorder 0, %v2990
    %v2992 = vsel %vm2991, 0, %v2990
    %v2993 = vsub.s32 32, %v2992
    %v2994 = vshll.u32 %v2985, %v2992
    %v2995 = vshrl.u32 %v2977, %v2993
    %v2996 = vor.u32 %v2994, %v2995
    %v2997 = vsub.s32 4294967266, %v2992
    %v2998 = vadd.s32 %v2997, 127
    %v2999 = vshll.u32 %v2998, 23
    %v3000 = vor.u32 4788187, %v2999
    %v3001 = vand.u32 2147483647, %v3000
    %v3003 = vcvt.s32.f32 %v2996
    %v3004 = vmul.f32 %v3003, %v3001
    %v3005 = vxor.u32 %v3004, 2147483648
    %v3006 = vsel %vm2923, %v3005, %v3004
    %v3007 = vsub.s32 4, %v2983
    %v3008 = vsel %vm2923, %v3007, %v2983
    %v3009 = vsel %vm2922, %v2184, %v3006
    %v3010 = vsel %vm2922, 0, %v3008
    %v3011 = vcosq.f32.pop %v3009
    %v3012 = vsinq.f32.pop %v3009
    %vm3013 = vweird.f32 %v2184
    %v3014 = vadd.s32 %v3010, 3
    %v3015 = vand.u32 %v3014, 3
    %vm3016 = vcmp.lt.s32.totalorder %v3015, 2
    %vm3017 = vcmp.eq.s32.totalorder %v3015, 0
    %v3018 = vxor.u32 %v3012, 2147483648
    %v3019 = vsel %vm3017, %v3011, %v3018
    %vm3020 = vcmp.eq.s32.totalorder %v3015, 2
    %v3021 = vxor.u32 %v3011, 2147483648
    %v3022 = vsel %vm3020, %v3021, %v3012
    %v3023 = vsel %vm3016, %v3019, %v3022
    %v3024 = vsel %vm3013, nan, %v3023
    %v3025 = vand.u32 2147483647, %v2185
    %vm3026 = vcmp.le.f32.partialorder %v3025, 0.7853982
    %vm3027 = vcmp.lt.s32.totalorder %v2185, 0
    %v3028 = vand.u32 %v2185, 2139095040
    %v3029 = vshrl.u32 %v3028, 23
    %v3030 = vsub.s32 %v3029, 127
    %v3031 = vand.u32 2147483647, %v2185
    %v3032 = vand.u32 %v3031, 8388607
    %v3033 = vor.u32 %v3032, 8388608
    %v3034 = vsub.s32 0, %v3033
    %v3035 = vadd.s32 %v3030, 1
    %vm3036 = vcmp.gt.s32.totalorder %v3035, 0
    %v3037 = vsel %vm3036, %v3035, 0
    %v3038 = vshrl.u32 %v3037, 5
    %v3039 = vand.u32 %v3037, 31
    %v3040 = vsub.s32 32, %v3039
    %v3041 = vshrl.u32 683565275, %v3040
    %v3042 = vshll.u32 683565275, %v3039
    %v3043 = vshrl.u32 2475754826, %v3040
    %v3044 = vor.u32 %v3042, %v3043
    %v3045 = vshll.u32 2475754826, %v3039
    %v3046 = vshrl.u32 2131351028, %v3040
    %v3047 = vor.u32 %v3045, %v3046
    %v3048 = vshll.u32 2131351028, %v3039
    %v3049 = vshrl.u32 2102212464, %v3040
    %v3050 = vor.u32 %v3048, %v3049
    %v3051 = vshll.u32 2102212464, %v3039
    %v3052 = vshrl.u32 920167782, %v3040
    %v3053 = vor.u32 %v3051, %v3052
    %v3054 = vshll.u32 920167782, %v3039
    %v3055 = vshrl.u32 1326507024, %v3040
    %v3056 = vor.u32 %v3054, %v3055
    %vm3057 = vcmp.lt.s32.totalorder %v3038, 1
    %vm3058 = vcmp.lt.s32.totalorder %v3038, 2
    %vm3059 = vcmp.lt.s32.totalorder %v3038, 3
    %vm3060 = vcmp.lt.s32.totalorder %v3038, 4
    %v3061 = vsel %vm3057, %v3041, %v3044
    %v3062 = vsel %vm3060, %v3050, 2102212464
    %v3063 = vsel %vm3059, %v3047, %v3062
    %v3064 = vsel %vm3058, %v3061, %v3063
    %v3065 = vsel %vm3057, %v3044, %v3047
    %v3066 = vsel %vm3060, %v3053, 920167782
    %v3067 = vsel %vm3059, %v3050, %v3066
    %v3068 = vsel %vm3058, %v3065, %v3067
    %v3069 = vsel %vm3057, %v3047, %v3050
    %v3070 = vsel %vm3060, %v3056, 1326507024
    %v3071 = vsel %vm3059, %v3053, %v3070
    %v3072 = vsel %vm3058, %v3069, %v3071
    %v3073 = vshll.u32 %v3033, 8
    %v3074 = vmul.u32.u64.compose %v3073, %v3072
    %v3075 = vextract.low.u32 %v3074
    %v3076 = vextract.high.u32 %v3074
    %v3077 = vmul.u32.u64.compose %v3073, %v3068
    %v3078 = vextract.low.u32 %v3077
    %v3079 = vextract.high.u32 %v3077
    %v3080 = vmul.u32 %v3073, %v3064
    %v3081 = vadd.s32 %v3076, %v3078
    %vm3082 = vc.u32 %v3076, %v3078
    %v3083 = vadd.s32 %v3079, 1
    %v3084 = vsel %vm3082, %v3083, %v3079
    %v3085 = vadd.s32 %v3080, %v3084
    %v3086 = vadd.s32 %v3085, 536870912
    %v3087 = vshrl.u32 %v3086, 30
    %v3088 = vshll.u32 %v3087, 30
    %v3089 = vsub.s32 %v3085, %v3088
    %vm3090 = vcmp.lt.s32.totalorder %v3089, 0
    %v3091 = vsub.s32 0, %v3089
    %v3092 = vsel %vm3090, %v3091, %v3089
    %v3093 = vclz %v3092
    %v3094 = vsub.s32 %v3093, 2
    %vm3095 = vcmp.gt.s32.totalorder 0, %v3094
    %v3096 = vsel %vm3095, 0, %v3094
    %v3097 = vsub.s32 32, %v3096
    %v3098 = vshll.u32 %v3089, %v3096
    %v3099 = vshrl.u32 %v3081, %v3097
    %v3100 = vor.u32 %v3098, %v3099
    %v3101 = vsub.s32 4294967266, %v3096
    %v3102 = vadd.s32 %v3101, 127
    %v3103 = vshll.u32 %v3102, 23
    %v3104 = vor.u32 4788187, %v3103
    %v3105 = vand.u32 2147483647, %v3104
    %v3107 = vcvt.s32.f32 %v3100
    %v3108 = vmul.f32 %v3107, %v3105
    %v3109 = vxor.u32 %v3108, 2147483648
    %v3110 = vsel %vm3027, %v3109, %v3108
    %v3111 = vsub.s32 4, %v3087
    %v3112 = vsel %vm3027, %v3111, %v3087
    %v3113 = vsel %vm3026, %v2185, %v3110
    %v3114 = vsel %vm3026, 0, %v3112
    %v3115 = vcosq.f32.pop %v3113
    %v3116 = vsinq.f32.pop %v3113
    %vm3117 = vweird.f32 %v2185
    %v3118 = vadd.s32 %v3114, 3
    %v3119 = vand.u32 %v3118, 3
    %vm3120 = vcmp.lt.s32.totalorder %v3119, 2
    %vm3121 = vcmp.eq.s32.totalorder %v3119, 0
    %v3122 = vxor.u32 %v3116, 2147483648
    %v3123 = vsel %vm3121, %v3115, %v3122
    %vm3124 = vcmp.eq.s32.totalorder %v3119, 2
    %v3125 = vxor.u32 %v3115, 2147483648
    %v3126 = vsel %vm3124, %v3125, %v3116
    %v3127 = vsel %vm3120, %v3123, %v3126
    %v3128 = vsel %vm3117, nan, %v3127
    %v3129 = vand.u32 2147483647, %v2186
    %vm3130 = vcmp.le.f32.partialorder %v3129, 0.7853982
    %vm3131 = vcmp.lt.s32.totalorder %v2186, 0
    %v3132 = vand.u32 %v2186, 2139095040
    %v3133 = vshrl.u32 %v3132, 23
    %v3134 = vsub.s32 %v3133, 127
    %v3135 = vand.u32 2147483647, %v2186
    %v3136 = vand.u32 %v3135, 8388607
    %v3137 = vor.u32 %v3136, 8388608
    %v3138 = vsub.s32 0, %v3137
    %v3139 = vadd.s32 %v3134, 1
    %vm3140 = vcmp.gt.s32.totalorder %v3139, 0
    %v3141 = vsel %vm3140, %v3139, 0
    %v3142 = vshrl.u32 %v3141, 5
    %v3143 = vand.u32 %v3141, 31
    %v3144 = vsub.s32 32, %v3143
    %v3145 = vshrl.u32 683565275, %v3144
    %v3146 = vshll.u32 683565275, %v3143
    %v3147 = vshrl.u32 2475754826, %v3144
    %v3148 = vor.u32 %v3146, %v3147
    %v3149 = vshll.u32 2475754826, %v3143
    %v3150 = vshrl.u32 2131351028, %v3144
    %v3151 = vor.u32 %v3149, %v3150
    %v3152 = vshll.u32 2131351028, %v3143
    %v3153 = vshrl.u32 2102212464, %v3144
    %v3154 = vor.u32 %v3152, %v3153
    %v3155 = vshll.u32 2102212464, %v3143
    %v3156 = vshrl.u32 920167782, %v3144
    %v3157 = vor.u32 %v3155, %v3156
    %v3158 = vshll.u32 920167782, %v3143
    %v3159 = vshrl.u32 1326507024, %v3144
    %v3160 = vor.u32 %v3158, %v3159
    %vm3161 = vcmp.lt.s32.totalorder %v3142, 1
    %vm3162 = vcmp.lt.s32.totalorder %v3142, 2
    %vm3163 = vcmp.lt.s32.totalorder %v3142, 3
    %vm3164 = vcmp.lt.s32.totalorder %v3142, 4
    %v3165 = vsel %vm3161, %v3145, %v3148
    %v3166 = vsel %vm3164, %v3154, 2102212464
    %v3167 = vsel %vm3163, %v3151, %v3166
    %v3168 = vsel %vm3162, %v3165, %v3167
    %v3169 = vsel %vm3161, %v3148, %v3151
    %v3170 = vsel %vm3164, %v3157, 920167782
    %v3171 = vsel %vm3163, %v3154, %v3170
    %v3172 = vsel %vm3162, %v3169, %v3171
    %v3173 = vsel %vm3161, %v3151, %v3154
    %v3174 = vsel %vm3164, %v3160, 1326507024
    %v3175 = vsel %vm3163, %v3157, %v3174
    %v3176 = vsel %vm3162, %v3173, %v3175
    %v3177 = vshll.u32 %v3137, 8
    %v3178 = vmul.u32.u64.compose %v3177, %v3176
    %v3179 = vextract.low.u32 %v3178
    %v3180 = vextract.high.u32 %v3178
    %v3181 = vmul.u32.u64.compose %v3177, %v3172
    %v3182 = vextract.low.u32 %v3181
    %v3183 = vextract.high.u32 %v3181
    %v3184 = vmul.u32 %v3177, %v3168
    %v3185 = vadd.s32 %v3180, %v3182
    %vm3186 = vc.u32 %v3180, %v3182
    %v3187 = vadd.s32 %v3183, 1
    %v3188 = vsel %vm3186, %v3187, %v3183
    %v3189 = vadd.s32 %v3184, %v3188
    %v3190 = vadd.s32 %v3189, 536870912
    %v3191 = vshrl.u32 %v3190, 30
    %v3192 = vshll.u32 %v3191, 30
    %v3193 = vsub.s32 %v3189, %v3192
    %vm3194 = vcmp.lt.s32.totalorder %v3193, 0
    %v3195 = vsub.s32 0, %v3193
    %v3196 = vsel %vm3194, %v3195, %v3193
    %v3197 = vclz %v3196
    %v3198 = vsub.s32 %v3197, 2
    %vm3199 = vcmp.gt.s32.totalorder 0, %v3198
    %v3200 = vsel %vm3199, 0, %v3198
    %v3201 = vsub.s32 32, %v3200
    %v3202 = vshll.u32 %v3193, %v3200
    %v3203 = vshrl.u32 %v3185, %v3201
    %v3204 = vor.u32 %v3202, %v3203
    %v3205 = vsub.s32 4294967266, %v3200
    %v3206 = vadd.s32 %v3205, 127
    %v3207 = vshll.u32 %v3206, 23
    %v3208 = vor.u32 4788187, %v3207
    %v3209 = vand.u32 2147483647, %v3208
    %v3211 = vcvt.s32.f32 %v3204
    %v3212 = vmul.f32 %v3211, %v3209
    %v3213 = vxor.u32 %v3212, 2147483648
    %v3214 = vsel %vm3131, %v3213, %v3212
    %v3215 = vsub.s32 4, %v3191
    %v3216 = vsel %vm3131, %v3215, %v3191
    %v3217 = vsel %vm3130, %v2186, %v3214
    %v3218 = vsel %vm3130, 0, %v3216
    %v3219 = vcosq.f32.pop %v3217
    %v3220 = vsinq.f32.pop %v3217
    %vm3221 = vweird.f32 %v2186
    %v3222 = vadd.s32 %v3218, 3
    %v3223 = vand.u32 %v3222, 3
    %vm3224 = vcmp.lt.s32.totalorder %v3223, 2
    %vm3225 = vcmp.eq.s32.totalorder %v3223, 0
    %v3226 = vxor.u32 %v3220, 2147483648
    %v3227 = vsel %vm3225, %v3219, %v3226
    %vm3228 = vcmp.eq.s32.totalorder %v3223, 2
    %v3229 = vxor.u32 %v3219, 2147483648
    %v3230 = vsel %vm3228, %v3229, %v3220
    %v3231 = vsel %vm3224, %v3227, %v3230
    %v3232 = vsel %vm3221, nan, %v3231
    %v3233 = vand.u32 2147483647, %v2187
    %vm3234 = vcmp.le.f32.partialorder %v3233, 0.7853982
    %vm3235 = vcmp.lt.s32.totalorder %v2187, 0
    %v3236 = vand.u32 %v2187, 2139095040
    %v3237 = vshrl.u32 %v3236, 23
    %v3238 = vsub.s32 %v3237, 127
    %v3239 = vand.u32 2147483647, %v2187
    %v3240 = vand.u32 %v3239, 8388607
    %v3241 = vor.u32 %v3240, 8388608
    %v3242 = vsub.s32 0, %v3241
    %v3243 = vadd.s32 %v3238, 1
    %vm3244 = vcmp.gt.s32.totalorder %v3243, 0
    %v3245 = vsel %vm3244, %v3243, 0
    %v3246 = vshrl.u32 %v3245, 5
    %v3247 = vand.u32 %v3245, 31
    %v3248 = vsub.s32 32, %v3247
    %v3249 = vshrl.u32 683565275, %v3248
    %v3250 = vshll.u32 683565275, %v3247
    %v3251 = vshrl.u32 2475754826, %v3248
    %v3252 = vor.u32 %v3250, %v3251
    %v3253 = vshll.u32 2475754826, %v3247
    %v3254 = vshrl.u32 2131351028, %v3248
    %v3255 = vor.u32 %v3253, %v3254
    %v3256 = vshll.u32 2131351028, %v3247
    %v3257 = vshrl.u32 2102212464, %v3248
    %v3258 = vor.u32 %v3256, %v3257
    %v3259 = vshll.u32 2102212464, %v3247
    %v3260 = vshrl.u32 920167782, %v3248
    %v3261 = vor.u32 %v3259, %v3260
    %v3262 = vshll.u32 920167782, %v3247
    %v3263 = vshrl.u32 1326507024, %v3248
    %v3264 = vor.u32 %v3262, %v3263
    %vm3265 = vcmp.lt.s32.totalorder %v3246, 1
    %vm3266 = vcmp.lt.s32.totalorder %v3246, 2
    %vm3267 = vcmp.lt.s32.totalorder %v3246, 3
    %vm3268 = vcmp.lt.s32.totalorder %v3246, 4
    %v3269 = vsel %vm3265, %v3249, %v3252
    %v3270 = vsel %vm3268, %v3258, 2102212464
    %v3271 = vsel %vm3267, %v3255, %v3270
    %v3272 = vsel %vm3266, %v3269, %v3271
    %v3273 = vsel %vm3265, %v3252, %v3255
    %v3274 = vsel %vm3268, %v3261, 920167782
    %v3275 = vsel %vm3267, %v3258, %v3274
    %v3276 = vsel %vm3266, %v3273, %v3275
    %v3277 = vsel %vm3265, %v3255, %v3258
    %v3278 = vsel %vm3268, %v3264, 1326507024
    %v3279 = vsel %vm3267, %v3261, %v3278
    %v3280 = vsel %vm3266, %v3277, %v3279
    %v3281 = vshll.u32 %v3241, 8
    %v3282 = vmul.u32.u64.compose %v3281, %v3280
    %v3283 = vextract.low.u32 %v3282
    %v3284 = vextract.high.u32 %v3282
    %v3285 = vmul.u32.u64.compose %v3281, %v3276
    %v3286 = vextract.low.u32 %v3285
    %v3287 = vextract.high.u32 %v3285
    %v3288 = vmul.u32 %v3281, %v3272
    %v3289 = vadd.s32 %v3284, %v3286
    %vm3290 = vc.u32 %v3284, %v3286
    %v3291 = vadd.s32 %v3287, 1
    %v3292 = vsel %vm3290, %v3291, %v3287
    %v3293 = vadd.s32 %v3288, %v3292
    %v3294 = vadd.s32 %v3293, 536870912
    %v3295 = vshrl.u32 %v3294, 30
    %v3296 = vshll.u32 %v3295, 30
    %v3297 = vsub.s32 %v3293, %v3296
    %vm3298 = vcmp.lt.s32.totalorder %v3297, 0
    %v3299 = vsub.s32 0, %v3297
    %v3300 = vsel %vm3298, %v3299, %v3297
    %v3301 = vclz %v3300
    %v3302 = vsub.s32 %v3301, 2
    %vm3303 = vcmp.gt.s32.totalorder 0, %v3302
    %v3304 = vsel %vm3303, 0, %v3302
    %v3305 = vsub.s32 32, %v3304
    %v3306 = vshll.u32 %v3297, %v3304
    %v3307 = vshrl.u32 %v3289, %v3305
    %v3308 = vor.u32 %v3306, %v3307
    %v3309 = vsub.s32 4294967266, %v3304
    %v3310 = vadd.s32 %v3309, 127
    %v3311 = vshll.u32 %v3310, 23
    %v3312 = vor.u32 4788187, %v3311
    %v3313 = vand.u32 2147483647, %v3312
    %v3315 = vcvt.s32.f32 %v3308
    %v3316 = vmul.f32 %v3315, %v3313
    %v3317 = vxor.u32 %v3316, 2147483648
    %v3318 = vsel %vm3235, %v3317, %v3316
    %v3319 = vsub.s32 4, %v3295
    %v3320 = vsel %vm3235, %v3319, %v3295
    %v3321 = vsel %vm3234, %v2187, %v3318
    %v3322 = vsel %vm3234, 0, %v3320
    %v3323 = vcosq.f32.pop %v3321
    %v3324 = vsinq.f32.pop %v3321
    %vm3325 = vweird.f32 %v2187
    %v3326 = vadd.s32 %v3322, 3
    %v3327 = vand.u32 %v3326, 3
    %vm3328 = vcmp.lt.s32.totalorder %v3327, 2
    %vm3329 = vcmp.eq.s32.totalorder %v3327, 0
    %v3330 = vxor.u32 %v3324, 2147483648
    %v3331 = vsel %vm3329, %v3323, %v3330
    %vm3332 = vcmp.eq.s32.totalorder %v3327, 2
    %v3333 = vxor.u32 %v3323, 2147483648
    %v3334 = vsel %vm3332, %v3333, %v3324
    %v3335 = vsel %vm3328, %v3331, %v3334
    %v3336 = vsel %vm3325, nan, %v3335
    %v3337 = vand.u32 2147483647, %v2188
    %vm3338 = vcmp.le.f32.partialorder %v3337, 0.7853982
    %vm3339 = vcmp.lt.s32.totalorder %v2188, 0
    %v3340 = vand.u32 %v2188, 2139095040
    %v3341 = vshrl.u32 %v3340, 23
    %v3342 = vsub.s32 %v3341, 127
    %v3343 = vand.u32 2147483647, %v2188
    %v3344 = vand.u32 %v3343, 8388607
    %v3345 = vor.u32 %v3344, 8388608
    %v3346 = vsub.s32 0, %v3345
    %v3347 = vadd.s32 %v3342, 1
    %vm3348 = vcmp.gt.s32.totalorder %v3347, 0
    %v3349 = vsel %vm3348, %v3347, 0
    %v3350 = vshrl.u32 %v3349, 5
    %v3351 = vand.u32 %v3349, 31
    %v3352 = vsub.s32 32, %v3351
    %v3353 = vshrl.u32 683565275, %v3352
    %v3354 = vshll.u32 683565275, %v3351
    %v3355 = vshrl.u32 2475754826, %v3352
    %v3356 = vor.u32 %v3354, %v3355
    %v3357 = vshll.u32 2475754826, %v3351
    %v3358 = vshrl.u32 2131351028, %v3352
    %v3359 = vor.u32 %v3357, %v3358
    %v3360 = vshll.u32 2131351028, %v3351
    %v3361 = vshrl.u32 2102212464, %v3352
    %v3362 = vor.u32 %v3360, %v3361
    %v3363 = vshll.u32 2102212464, %v3351
    %v3364 = vshrl.u32 920167782, %v3352
    %v3365 = vor.u32 %v3363, %v3364
    %v3366 = vshll.u32 920167782, %v3351
    %v3367 = vshrl.u32 1326507024, %v3352
    %v3368 = vor.u32 %v3366, %v3367
    %vm3369 = vcmp.lt.s32.totalorder %v3350, 1
    %vm3370 = vcmp.lt.s32.totalorder %v3350, 2
    %vm3371 = vcmp.lt.s32.totalorder %v3350, 3
    %vm3372 = vcmp.lt.s32.totalorder %v3350, 4
    %v3373 = vsel %vm3369, %v3353, %v3356
    %v3374 = vsel %vm3372, %v3362, 2102212464
    %v3375 = vsel %vm3371, %v3359, %v3374
    %v3376 = vsel %vm3370, %v3373, %v3375
    %v3377 = vsel %vm3369, %v3356, %v3359
    %v3378 = vsel %vm3372, %v3365, 920167782
    %v3379 = vsel %vm3371, %v3362, %v3378
    %v3380 = vsel %vm3370, %v3377, %v3379
    %v3381 = vsel %vm3369, %v3359, %v3362
    %v3382 = vsel %vm3372, %v3368, 1326507024
    %v3383 = vsel %vm3371, %v3365, %v3382
    %v3384 = vsel %vm3370, %v3381, %v3383
    %v3385 = vshll.u32 %v3345, 8
    %v3386 = vmul.u32.u64.compose %v3385, %v3384
    %v3387 = vextract.low.u32 %v3386
    %v3388 = vextract.high.u32 %v3386
    %v3389 = vmul.u32.u64.compose %v3385, %v3380
    %v3390 = vextract.low.u32 %v3389
    %v3391 = vextract.high.u32 %v3389
    %v3392 = vmul.u32 %v3385, %v3376
    %v3393 = vadd.s32 %v3388, %v3390
    %vm3394 = vc.u32 %v3388, %v3390
    %v3395 = vadd.s32 %v3391, 1
    %v3396 = vsel %vm3394, %v3395, %v3391
    %v3397 = vadd.s32 %v3392, %v3396
    %v3398 = vadd.s32 %v3397, 536870912
    %v3399 = vshrl.u32 %v3398, 30
    %v3400 = vshll.u32 %v3399, 30
    %v3401 = vsub.s32 %v3397, %v3400
    %vm3402 = vcmp.lt.s32.totalorder %v3401, 0
    %v3403 = vsub.s32 0, %v3401
    %v3404 = vsel %vm3402, %v3403, %v3401
    %v3405 = vclz %v3404
    %v3406 = vsub.s32 %v3405, 2
    %vm3407 = vcmp.gt.s32.totalorder 0, %v3406
    %v3408 = vsel %vm3407, 0, %v3406
    %v3409 = vsub.s32 32, %v3408
    %v3410 = vshll.u32 %v3401, %v3408
    %v3411 = vshrl.u32 %v3393, %v3409
    %v3412 = vor.u32 %v3410, %v3411
    %v3413 = vsub.s32 4294967266, %v3408
    %v3414 = vadd.s32 %v3413, 127
    %v3415 = vshll.u32 %v3414, 23
    %v3416 = vor.u32 4788187, %v3415
    %v3417 = vand.u32 2147483647, %v3416
    %v3419 = vcvt.s32.f32 %v3412
    %v3420 = vmul.f32 %v3419, %v3417
    %v3421 = vxor.u32 %v3420, 2147483648
    %v3422 = vsel %vm3339, %v3421, %v3420
    %v3423 = vsub.s32 4, %v3399
    %v3424 = vsel %vm3339, %v3423, %v3399
    %v3425 = vsel %vm3338, %v2188, %v3422
    %v3426 = vsel %vm3338, 0, %v3424
    %v3427 = vcosq.f32.pop %v3425
    %v3428 = vsinq.f32.pop %v3425
    %vm3429 = vweird.f32 %v2188
    %v3430 = vadd.s32 %v3426, 3
    %v3431 = vand.u32 %v3430, 3
    %vm3432 = vcmp.lt.s32.totalorder %v3431, 2
    %vm3433 = vcmp.eq.s32.totalorder %v3431, 0
    %v3434 = vxor.u32 %v3428, 2147483648
    %v3435 = vsel %vm3433, %v3427, %v3434
    %vm3436 = vcmp.eq.s32.totalorder %v3431, 2
    %v3437 = vxor.u32 %v3427, 2147483648
    %v3438 = vsel %vm3436, %v3437, %v3428
    %v3439 = vsel %vm3432, %v3435, %v3438
    %v3440 = vsel %vm3429, nan, %v3439
    %v3441 = vand.u32 2147483647, %v2189
    %vm3442 = vcmp.le.f32.partialorder %v3441, 0.7853982
    %vm3443 = vcmp.lt.s32.totalorder %v2189, 0
    %v3444 = vand.u32 %v2189, 2139095040
    %v3445 = vshrl.u32 %v3444, 23
    %v3446 = vsub.s32 %v3445, 127
    %v3447 = vand.u32 2147483647, %v2189
    %v3448 = vand.u32 %v3447, 8388607
    %v3449 = vor.u32 %v3448, 8388608
    %v3450 = vsub.s32 0, %v3449
    %v3451 = vadd.s32 %v3446, 1
    %vm3452 = vcmp.gt.s32.totalorder %v3451, 0
    %v3453 = vsel %vm3452, %v3451, 0
    %v3454 = vshrl.u32 %v3453, 5
    %v3455 = vand.u32 %v3453, 31
    %v3456 = vsub.s32 32, %v3455
    %v3457 = vshrl.u32 683565275, %v3456
    %v3458 = vshll.u32 683565275, %v3455
    %v3459 = vshrl.u32 2475754826, %v3456
    %v3460 = vor.u32 %v3458, %v3459
    %v3461 = vshll.u32 2475754826, %v3455
    %v3462 = vshrl.u32 2131351028, %v3456
    %v3463 = vor.u32 %v3461, %v3462
    %v3464 = vshll.u32 2131351028, %v3455
    %v3465 = vshrl.u32 2102212464, %v3456
    %v3466 = vor.u32 %v3464, %v3465
    %v3467 = vshll.u32 2102212464, %v3455
    %v3468 = vshrl.u32 920167782, %v3456
    %v3469 = vor.u32 %v3467, %v3468
    %v3470 = vshll.u32 920167782, %v3455
    %v3471 = vshrl.u32 1326507024, %v3456
    %v3472 = vor.u32 %v3470, %v3471
    %vm3473 = vcmp.lt.s32.totalorder %v3454, 1
    %vm3474 = vcmp.lt.s32.totalorder %v3454, 2
    %vm3475 = vcmp.lt.s32.totalorder %v3454, 3
    %vm3476 = vcmp.lt.s32.totalorder %v3454, 4
    %v3477 = vsel %vm3473, %v3457, %v3460
    %v3478 = vsel %vm3476, %v3466, 2102212464
    %v3479 = vsel %vm3475, %v3463, %v3478
    %v3480 = vsel %vm3474, %v3477, %v3479
    %v3481 = vsel %vm3473, %v3460, %v3463
    %v3482 = vsel %vm3476, %v3469, 920167782
    %v3483 = vsel %vm3475, %v3466, %v3482
    %v3484 = vsel %vm3474, %v3481, %v3483
    %v3485 = vsel %vm3473, %v3463, %v3466
    %v3486 = vsel %vm3476, %v3472, 1326507024
    %v3487 = vsel %vm3475, %v3469, %v3486
    %v3488 = vsel %vm3474, %v3485, %v3487
    %v3489 = vshll.u32 %v3449, 8
    %v3490 = vmul.u32.u64.compose %v3489, %v3488
    %v3491 = vextract.low.u32 %v3490
    %v3492 = vextract.high.u32 %v3490
    %v3493 = vmul.u32.u64.compose %v3489, %v3484
    %v3494 = vextract.low.u32 %v3493
    %v3495 = vextract.high.u32 %v3493
    %v3496 = vmul.u32 %v3489, %v3480
    %v3497 = vadd.s32 %v3492, %v3494
    %vm3498 = vc.u32 %v3492, %v3494
    %v3499 = vadd.s32 %v3495, 1
    %v3500 = vsel %vm3498, %v3499, %v3495
    %v3501 = vadd.s32 %v3496, %v3500
    %v3502 = vadd.s32 %v3501, 536870912
    %v3503 = vshrl.u32 %v3502, 30
    %v3504 = vshll.u32 %v3503, 30
    %v3505 = vsub.s32 %v3501, %v3504
    %vm3506 = vcmp.lt.s32.totalorder %v3505, 0
    %v3507 = vsub.s32 0, %v3505
    %v3508 = vsel %vm3506, %v3507, %v3505
    %v3509 = vclz %v3508
    %v3510 = vsub.s32 %v3509, 2
    %vm3511 = vcmp.gt.s32.totalorder 0, %v3510
    %v3512 = vsel %vm3511, 0, %v3510
    %v3513 = vsub.s32 32, %v3512
    %v3514 = vshll.u32 %v3505, %v3512
    %v3515 = vshrl.u32 %v3497, %v3513
    %v3516 = vor.u32 %v3514, %v3515
    %v3517 = vsub.s32 4294967266, %v3512
    %v3518 = vadd.s32 %v3517, 127
    %v3519 = vshll.u32 %v3518, 23
    %v3520 = vor.u32 4788187, %v3519
    %v3521 = vand.u32 2147483647, %v3520
    %v3523 = vcvt.s32.f32 %v3516
    %v3524 = vmul.f32 %v3523, %v3521
    %v3525 = vxor.u32 %v3524, 2147483648
    %v3526 = vsel %vm3443, %v3525, %v3524
    %v3527 = vsub.s32 4, %v3503
    %v3528 = vsel %vm3443, %v3527, %v3503
    %v3529 = vsel %vm3442, %v2189, %v3526
    %v3530 = vsel %vm3442, 0, %v3528
    %v3531 = vcosq.f32.pop %v3529
    %v3532 = vsinq.f32.pop %v3529
    %vm3533 = vweird.f32 %v2189
    %v3534 = vadd.s32 %v3530, 3
    %v3535 = vand.u32 %v3534, 3
    %vm3536 = vcmp.lt.s32.totalorder %v3535, 2
    %vm3537 = vcmp.eq.s32.totalorder %v3535, 0
    %v3538 = vxor.u32 %v3532, 2147483648
    %v3539 = vsel %vm3537, %v3531, %v3538
    %vm3540 = vcmp.eq.s32.totalorder %v3535, 2
    %v3541 = vxor.u32 %v3531, 2147483648
    %v3542 = vsel %vm3540, %v3541, %v3532
    %v3543 = vsel %vm3536, %v3539, %v3542
    %v3544 = vsel %vm3533, nan, %v3543
    %v3545 = vand.u32 2147483647, %v2190
    %vm3546 = vcmp.le.f32.partialorder %v3545, 0.7853982
    %vm3547 = vcmp.lt.s32.totalorder %v2190, 0
    %v3548 = vand.u32 %v2190, 2139095040
    %v3549 = vshrl.u32 %v3548, 23
    %v3550 = vsub.s32 %v3549, 127
    %v3551 = vand.u32 2147483647, %v2190
    %v3552 = vand.u32 %v3551, 8388607
    %v3553 = vor.u32 %v3552, 8388608
    %v3554 = vsub.s32 0, %v3553
    %v3555 = vadd.s32 %v3550, 1
    %vm3556 = vcmp.gt.s32.totalorder %v3555, 0
    %v3557 = vsel %vm3556, %v3555, 0
    %v3558 = vshrl.u32 %v3557, 5
    %v3559 = vand.u32 %v3557, 31
    %v3560 = vsub.s32 32, %v3559
    %v3561 = vshrl.u32 683565275, %v3560
    %v3562 = vshll.u32 683565275, %v3559
    %v3563 = vshrl.u32 2475754826, %v3560
    %v3564 = vor.u32 %v3562, %v3563
    %v3565 = vshll.u32 2475754826, %v3559
    %v3566 = vshrl.u32 2131351028, %v3560
    %v3567 = vor.u32 %v3565, %v3566
    %v3568 = vshll.u32 2131351028, %v3559
    %v3569 = vshrl.u32 2102212464, %v3560
    %v3570 = vor.u32 %v3568, %v3569
    %v3571 = vshll.u32 2102212464, %v3559
    %v3572 = vshrl.u32 920167782, %v3560
    %v3573 = vor.u32 %v3571, %v3572
    %v3574 = vshll.u32 920167782, %v3559
    %v3575 = vshrl.u32 1326507024, %v3560
    %v3576 = vor.u32 %v3574, %v3575
    %vm3577 = vcmp.lt.s32.totalorder %v3558, 1
    %vm3578 = vcmp.lt.s32.totalorder %v3558, 2
    %vm3579 = vcmp.lt.s32.totalorder %v3558, 3
    %vm3580 = vcmp.lt.s32.totalorder %v3558, 4
    %v3581 = vsel %vm3577, %v3561, %v3564
    %v3582 = vsel %vm3580, %v3570, 2102212464
    %v3583 = vsel %vm3579, %v3567, %v3582
    %v3584 = vsel %vm3578, %v3581, %v3583
    %v3585 = vsel %vm3577, %v3564, %v3567
    %v3586 = vsel %vm3580, %v3573, 920167782
    %v3587 = vsel %vm3579, %v3570, %v3586
    %v3588 = vsel %vm3578, %v3585, %v3587
    %v3589 = vsel %vm3577, %v3567, %v3570
    %v3590 = vsel %vm3580, %v3576, 1326507024
    %v3591 = vsel %vm3579, %v3573, %v3590
    %v3592 = vsel %vm3578, %v3589, %v3591
    %v3593 = vshll.u32 %v3553, 8
    %v3594 = vmul.u32.u64.compose %v3593, %v3592
    %v3595 = vextract.low.u32 %v3594
    %v3596 = vextract.high.u32 %v3594
    %v3597 = vmul.u32.u64.compose %v3593, %v3588
    %v3598 = vextract.low.u32 %v3597
    %v3599 = vextract.high.u32 %v3597
    %v3600 = vmul.u32 %v3593, %v3584
    %v3601 = vadd.s32 %v3596, %v3598
    %vm3602 = vc.u32 %v3596, %v3598
    %v3603 = vadd.s32 %v3599, 1
    %v3604 = vsel %vm3602, %v3603, %v3599
    %v3605 = vadd.s32 %v3600, %v3604
    %v3606 = vadd.s32 %v3605, 536870912
    %v3607 = vshrl.u32 %v3606, 30
    %v3608 = vshll.u32 %v3607, 30
    %v3609 = vsub.s32 %v3605, %v3608
    %vm3610 = vcmp.lt.s32.totalorder %v3609, 0
    %v3611 = vsub.s32 0, %v3609
    %v3612 = vsel %vm3610, %v3611, %v3609
    %v3613 = vclz %v3612
    %v3614 = vsub.s32 %v3613, 2
    %vm3615 = vcmp.gt.s32.totalorder 0, %v3614
    %v3616 = vsel %vm3615, 0, %v3614
    %v3617 = vsub.s32 32, %v3616
    %v3618 = vshll.u32 %v3609, %v3616
    %v3619 = vshrl.u32 %v3601, %v3617
    %v3620 = vor.u32 %v3618, %v3619
    %v3621 = vsub.s32 4294967266, %v3616
    %v3622 = vadd.s32 %v3621, 127
    %v3623 = vshll.u32 %v3622, 23
    %v3624 = vor.u32 4788187, %v3623
    %v3625 = vand.u32 2147483647, %v3624
    %v3627 = vcvt.s32.f32 %v3620
    %v3628 = vmul.f32 %v3627, %v3625
    %v3629 = vxor.u32 %v3628, 2147483648
    %v3630 = vsel %vm3547, %v3629, %v3628
    %v3631 = vsub.s32 4, %v3607
    %v3632 = vsel %vm3547, %v3631, %v3607
    %v3633 = vsel %vm3546, %v2190, %v3630
    %v3634 = vsel %vm3546, 0, %v3632
    %v3635 = vcosq.f32.pop %v3633
    %v3636 = vsinq.f32.pop %v3633
    %vm3637 = vweird.f32 %v2190
    %v3638 = vadd.s32 %v3634, 3
    %v3639 = vand.u32 %v3638, 3
    %vm3640 = vcmp.lt.s32.totalorder %v3639, 2
    %vm3641 = vcmp.eq.s32.totalorder %v3639, 0
    %v3642 = vxor.u32 %v3636, 2147483648
    %v3643 = vsel %vm3641, %v3635, %v3642
    %vm3644 = vcmp.eq.s32.totalorder %v3639, 2
    %v3645 = vxor.u32 %v3635, 2147483648
    %v3646 = vsel %vm3644, %v3645, %v3636
    %v3647 = vsel %vm3640, %v3643, %v3646
    %v3648 = vsel %vm3637, nan, %v3647
    %v3649 = vand.u32 2147483647, %v2191
    %vm3650 = vcmp.le.f32.partialorder %v3649, 0.7853982
    %vm3651 = vcmp.lt.s32.totalorder %v2191, 0
    %v3652 = vand.u32 %v2191, 2139095040
    %v3653 = vshrl.u32 %v3652, 23
    %v3654 = vsub.s32 %v3653, 127
    %v3655 = vand.u32 2147483647, %v2191
    %v3656 = vand.u32 %v3655, 8388607
    %v3657 = vor.u32 %v3656, 8388608
    %v3658 = vsub.s32 0, %v3657
    %v3659 = vadd.s32 %v3654, 1
    %vm3660 = vcmp.gt.s32.totalorder %v3659, 0
    %v3661 = vsel %vm3660, %v3659, 0
    %v3662 = vshrl.u32 %v3661, 5
    %v3663 = vand.u32 %v3661, 31
    %v3664 = vsub.s32 32, %v3663
    %v3665 = vshrl.u32 683565275, %v3664
    %v3666 = vshll.u32 683565275, %v3663
    %v3667 = vshrl.u32 2475754826, %v3664
    %v3668 = vor.u32 %v3666, %v3667
    %v3669 = vshll.u32 2475754826, %v3663
    %v3670 = vshrl.u32 2131351028, %v3664
    %v3671 = vor.u32 %v3669, %v3670
    %v3672 = vshll.u32 2131351028, %v3663
    %v3673 = vshrl.u32 2102212464, %v3664
    %v3674 = vor.u32 %v3672, %v3673
    %v3675 = vshll.u32 2102212464, %v3663
    %v3676 = vshrl.u32 920167782, %v3664
    %v3677 = vor.u32 %v3675, %v3676
    %v3678 = vshll.u32 920167782, %v3663
    %v3679 = vshrl.u32 1326507024, %v3664
    %v3680 = vor.u32 %v3678, %v3679
    %vm3681 = vcmp.lt.s32.totalorder %v3662, 1
    %vm3682 = vcmp.lt.s32.totalorder %v3662, 2
    %vm3683 = vcmp.lt.s32.totalorder %v3662, 3
    %vm3684 = vcmp.lt.s32.totalorder %v3662, 4
    %v3685 = vsel %vm3681, %v3665, %v3668
    %v3686 = vsel %vm3684, %v3674, 2102212464
    %v3687 = vsel %vm3683, %v3671, %v3686
    %v3688 = vsel %vm3682, %v3685, %v3687
    %v3689 = vsel %vm3681, %v3668, %v3671
    %v3690 = vsel %vm3684, %v3677, 920167782
    %v3691 = vsel %vm3683, %v3674, %v3690
    %v3692 = vsel %vm3682, %v3689, %v3691
    %v3693 = vsel %vm3681, %v3671, %v3674
    %v3694 = vsel %vm3684, %v3680, 1326507024
    %v3695 = vsel %vm3683, %v3677, %v3694
    %v3696 = vsel %vm3682, %v3693, %v3695
    %v3697 = vshll.u32 %v3657, 8
    %v3698 = vmul.u32.u64.compose %v3697, %v3696
    %v3699 = vextract.low.u32 %v3698
    %v3700 = vextract.high.u32 %v3698
    %v3701 = vmul.u32.u64.compose %v3697, %v3692
    %v3702 = vextract.low.u32 %v3701
    %v3703 = vextract.high.u32 %v3701
    %v3704 = vmul.u32 %v3697, %v3688
    %v3705 = vadd.s32 %v3700, %v3702
    %vm3706 = vc.u32 %v3700, %v3702
    %v3707 = vadd.s32 %v3703, 1
    %v3708 = vsel %vm3706, %v3707, %v3703
    %v3709 = vadd.s32 %v3704, %v3708
    %v3710 = vadd.s32 %v3709, 536870912
    %v3711 = vshrl.u32 %v3710, 30
    %v3712 = vshll.u32 %v3711, 30
    %v3713 = vsub.s32 %v3709, %v3712
    %vm3714 = vcmp.lt.s32.totalorder %v3713, 0
    %v3715 = vsub.s32 0, %v3713
    %v3716 = vsel %vm3714, %v3715, %v3713
    %v3717 = vclz %v3716
    %v3718 = vsub.s32 %v3717, 2
    %vm3719 = vcmp.gt.s32.totalorder 0, %v3718
    %v3720 = vsel %vm3719, 0, %v3718
    %v3721 = vsub.s32 32, %v3720
    %v3722 = vshll.u32 %v3713, %v3720
    %v3723 = vshrl.u32 %v3705, %v3721
    %v3724 = vor.u32 %v3722, %v3723
    %v3725 = vsub.s32 4294967266, %v3720
    %v3726 = vadd.s32 %v3725, 127
    %v3727 = vshll.u32 %v3726, 23
    %v3728 = vor.u32 4788187, %v3727
    %v3729 = vand.u32 2147483647, %v3728
    %v3731 = vcvt.s32.f32 %v3724
    %v3732 = vmul.f32 %v3731, %v3729
    %v3733 = vxor.u32 %v3732, 2147483648
    %v3734 = vsel %vm3651, %v3733, %v3732
    %v3735 = vsub.s32 4, %v3711
    %v3736 = vsel %vm3651, %v3735, %v3711
    %v3737 = vsel %vm3650, %v2191, %v3734
    %v3738 = vsel %vm3650, 0, %v3736
    %v3739 = vcosq.f32.pop %v3737
    %v3740 = vsinq.f32.pop %v3737
    %vm3741 = vweird.f32 %v2191
    %v3742 = vadd.s32 %v3738, 3
    %v3743 = vand.u32 %v3742, 3
    %vm3744 = vcmp.lt.s32.totalorder %v3743, 2
    %vm3745 = vcmp.eq.s32.totalorder %v3743, 0
    %v3746 = vxor.u32 %v3740, 2147483648
    %v3747 = vsel %vm3745, %v3739, %v3746
    %vm3748 = vcmp.eq.s32.totalorder %v3743, 2
    %v3749 = vxor.u32 %v3739, 2147483648
    %v3750 = vsel %vm3748, %v3749, %v3740
    %v3751 = vsel %vm3744, %v3747, %v3750
    %v3752 = vsel %vm3741, nan, %v3751
    %v3753 = vand.u32 2147483647, %v2192
    %vm3754 = vcmp.le.f32.partialorder %v3753, 0.7853982
    %vm3755 = vcmp.lt.s32.totalorder %v2192, 0
    %v3756 = vand.u32 %v2192, 2139095040
    %v3757 = vshrl.u32 %v3756, 23
    %v3758 = vsub.s32 %v3757, 127
    %v3759 = vand.u32 2147483647, %v2192
    %v3760 = vand.u32 %v3759, 8388607
    %v3761 = vor.u32 %v3760, 8388608
    %v3762 = vsub.s32 0, %v3761
    %v3763 = vadd.s32 %v3758, 1
    %vm3764 = vcmp.gt.s32.totalorder %v3763, 0
    %v3765 = vsel %vm3764, %v3763, 0
    %v3766 = vshrl.u32 %v3765, 5
    %v3767 = vand.u32 %v3765, 31
    %v3768 = vsub.s32 32, %v3767
    %v3769 = vshrl.u32 683565275, %v3768
    %v3770 = vshll.u32 683565275, %v3767
    %v3771 = vshrl.u32 2475754826, %v3768
    %v3772 = vor.u32 %v3770, %v3771
    %v3773 = vshll.u32 2475754826, %v3767
    %v3774 = vshrl.u32 2131351028, %v3768
    %v3775 = vor.u32 %v3773, %v3774
    %v3776 = vshll.u32 2131351028, %v3767
    %v3777 = vshrl.u32 2102212464, %v3768
    %v3778 = vor.u32 %v3776, %v3777
    %v3779 = vshll.u32 2102212464, %v3767
    %v3780 = vshrl.u32 920167782, %v3768
    %v3781 = vor.u32 %v3779, %v3780
    %v3782 = vshll.u32 920167782, %v3767
    %v3783 = vshrl.u32 1326507024, %v3768
    %v3784 = vor.u32 %v3782, %v3783
    %vm3785 = vcmp.lt.s32.totalorder %v3766, 1
    %vm3786 = vcmp.lt.s32.totalorder %v3766, 2
    %vm3787 = vcmp.lt.s32.totalorder %v3766, 3
    %vm3788 = vcmp.lt.s32.totalorder %v3766, 4
    %v3789 = vsel %vm3785, %v3769, %v3772
    %v3790 = vsel %vm3788, %v3778, 2102212464
    %v3791 = vsel %vm3787, %v3775, %v3790
    %v3792 = vsel %vm3786, %v3789, %v3791
    %v3793 = vsel %vm3785, %v3772, %v3775
    %v3794 = vsel %vm3788, %v3781, 920167782
    %v3795 = vsel %vm3787, %v3778, %v3794
    %v3796 = vsel %vm3786, %v3793, %v3795
    %v3797 = vsel %vm3785, %v3775, %v3778
    %v3798 = vsel %vm3788, %v3784, 1326507024
    %v3799 = vsel %vm3787, %v3781, %v3798
    %v3800 = vsel %vm3786, %v3797, %v3799
    %v3801 = vshll.u32 %v3761, 8
    %v3802 = vmul.u32.u64.compose %v3801, %v3800
    %v3803 = vextract.low.u32 %v3802
    %v3804 = vextract.high.u32 %v3802
    %v3805 = vmul.u32.u64.compose %v3801, %v3796
    %v3806 = vextract.low.u32 %v3805
    %v3807 = vextract.high.u32 %v3805
    %v3808 = vmul.u32 %v3801, %v3792
    %v3809 = vadd.s32 %v3804, %v3806
    %vm3810 = vc.u32 %v3804, %v3806
    %v3811 = vadd.s32 %v3807, 1
    %v3812 = vsel %vm3810, %v3811, %v3807
    %v3813 = vadd.s32 %v3808, %v3812
    %v3814 = vadd.s32 %v3813, 536870912
    %v3815 = vshrl.u32 %v3814, 30
    %v3816 = vshll.u32 %v3815, 30
    %v3817 = vsub.s32 %v3813, %v3816
    %vm3818 = vcmp.lt.s32.totalorder %v3817, 0
    %v3819 = vsub.s32 0, %v3817
    %v3820 = vsel %vm3818, %v3819, %v3817
    %v3821 = vclz %v3820
    %v3822 = vsub.s32 %v3821, 2
    %vm3823 = vcmp.gt.s32.totalorder 0, %v3822
    %v3824 = vsel %vm3823, 0, %v3822
    %v3825 = vsub.s32 32, %v3824
    %v3826 = vshll.u32 %v3817, %v3824
    %v3827 = vshrl.u32 %v3809, %v3825
    %v3828 = vor.u32 %v3826, %v3827
    %v3829 = vsub.s32 4294967266, %v3824
    %v3830 = vadd.s32 %v3829, 127
    %v3831 = vshll.u32 %v3830, 23
    %v3832 = vor.u32 4788187, %v3831
    %v3833 = vand.u32 2147483647, %v3832
    %v3835 = vcvt.s32.f32 %v3828
    %v3836 = vmul.f32 %v3835, %v3833
    %v3837 = vxor.u32 %v3836, 2147483648
    %v3838 = vsel %vm3755, %v3837, %v3836
    %v3839 = vsub.s32 4, %v3815
    %v3840 = vsel %vm3755, %v3839, %v3815
    %v3841 = vsel %vm3754, %v2192, %v3838
    %v3842 = vsel %vm3754, 0, %v3840
    %v3843 = vcosq.f32.pop %v3841
    %v3844 = vsinq.f32.pop %v3841
    %vm3845 = vweird.f32 %v2192
    %v3846 = vadd.s32 %v3842, 3
    %v3847 = vand.u32 %v3846, 3
    %vm3848 = vcmp.lt.s32.totalorder %v3847, 2
    %vm3849 = vcmp.eq.s32.totalorder %v3847, 0
    %v3850 = vxor.u32 %v3844, 2147483648
    %v3851 = vsel %vm3849, %v3843, %v3850
    %vm3852 = vcmp.eq.s32.totalorder %v3847, 2
    %v3853 = vxor.u32 %v3843, 2147483648
    %v3854 = vsel %vm3852, %v3853, %v3844
    %v3855 = vsel %vm3848, %v3851, %v3854
    %v3856 = vsel %vm3845, nan, %v3855
    %3857 = vst [vmem:[#allocation3 + $0x80] sm:$0xff] %v2296
    %3858 = vst [vmem:[#allocation3 + $0x88] sm:$0xff] %v2400
    %3859 = vst [vmem:[#allocation3 + $0x90] sm:$0xff] %v2504
    %3860 = vst [vmem:[#allocation3 + $0x98] sm:$0xff] %v2608
    %3861 = vst [vmem:[#allocation3 + $0xa0] sm:$0xff] %v2712
    %3862 = vst [vmem:[#allocation3 + $0xa8] sm:$0xff] %v2816
    %3863 = vst [vmem:[#allocation3 + $0xb0] sm:$0xff] %v2920
    %3864 = vst [vmem:[#allocation3 + $0xb8] sm:$0xff] %v3024
    %3865 = vst [vmem:[#allocation3 + $0xc0] sm:$0xff] %v3128
    %3866 = vst [vmem:[#allocation3 + $0xc8] sm:$0xff] %v3232
    %3867 = vst [vmem:[#allocation3 + $0xd0] sm:$0xff] %v3336
    %3868 = vst [vmem:[#allocation3 + $0xd8] sm:$0xff] %v3440
    %3869 = vst [vmem:[#allocation3 + $0xe0] sm:$0xff] %v3544
    %3870 = vst [vmem:[#allocation3 + $0xe8] sm:$0xff] %v3648
    %3871 = vst [vmem:[#allocation3 + $0xf0] sm:$0xff] %v3752
    %3872 = vst [vmem:[#allocation3 + $0xf8] sm:$0xff] %v3856
    %s3873 = scalar_lea.vmem %s0, 8
    %v3874 = vld [vmem:[%s3873] sm:$0xf]
    %v3875 = vld [vmem:[%s3873 + $0x4] sm:$0xf]
    %s3876 = sadd.s32 %s25, 2
    %s3877 = smul.addr %s3876, 4
    %s3878 = scalar_lea.vmem %s0, %s3877
    %v3879 = vld [vmem:[%s3878] sm:$0xf]
    %v3880 = vld [vmem:[%s3878 + $0x4] sm:$0xf]
    %v3883 = vunpack.c.l.b16 %v3874
    %v3884 = vunpack.c.l.b16 %v3875
    %v3885 = vpack.c.b16 %v3884, %v3883
    %3887 = vmatprep.subr.bf16.mxu0 0
    %3888 = vmatpush1.bf16.msra.mxu0 %v3885
    %3889 = vmatprep.subr.bf16.mxu0 0
    %3890 = vmatpush1.bf16.msra.mxu0 0
    %3891 = vmatprep.subr.bf16.mxu0 0
    %3892 = vmatpush1.bf16.msra.mxu0 0
    %3893 = vmatprep.subr.bf16.mxu0 0
    %3894 = vmatpush1.bf16.msra.mxu0 0
    %3895 = vmatprep.subr.bf16.mxu0 0
    %3896 = vmatpush1.bf16.msra.mxu0 0
    %3897 = vmatprep.subr.bf16.mxu0 0
    %3898 = vmatpush1.bf16.msra.mxu0 0
    %3899 = vmatprep.subr.bf16.mxu0 0
    %3900 = vmatpush1.bf16.msra.mxu0 0
    %3901 = vmatprep.subr.bf16.mxu0 0
    %3902 = vmatpush1.bf16.msra.mxu0 0
    %3903 = vmatprep.subr.bf16.mxu0 0
    %3904 = vmatpush1.bf16.msra.mxu0 0
    %3905 = vmatprep.subr.bf16.mxu0 0
    %3906 = vmatpush1.bf16.msra.mxu0 0
    %3907 = vmatprep.subr.bf16.mxu0 0
    %3908 = vmatpush1.bf16.msra.mxu0 0
    %3909 = vmatprep.subr.bf16.mxu0 0
    %3910 = vmatpush1.bf16.msra.mxu0 0
    %3911 = vmatprep.subr.bf16.mxu0 0
    %3912 = vmatpush1.bf16.msra.mxu0 0
    %3913 = vmatprep.subr.bf16.mxu0 0
    %3914 = vmatpush1.bf16.msra.mxu0 0
    %3915 = vmatprep.subr.bf16.mxu0 0
    %3916 = vmatpush1.bf16.msra.mxu0 0
    %3917 = vmatprep.subr.bf16.mxu0 0
    %3918 = vmatpush1.bf16.msra.mxu0 0
    %3919 = vmatprep.mubr.bf16.mxu0 0
    %3920 = vmatmul.mubr.bf16.gmra.mrb[0].mxu0 %v146
    %v3921 = vpop.f32.mrb[0].mxu0
    %v3922 = vadd.f32 0.0, %v3921
    %v3923 = vpop.f32.mrb[0].mxu0
    %v3924 = vpop.f32.mrb[0].mxu0
    %v3925 = vadd.f32 0.0, %v3924
    %v3926 = vpop.f32.mrb[0].mxu0
    %3927 = vdwg.mxu0
    %v3930 = vunpack.c.l.b16 %v3879
    %v3931 = vunpack.c.l.b16 %v3880
    %v3932 = vpack.c.b16 %v3931, %v3930
    %v3934 = vsel %vm144, %v3932, 0
    %3936 = vmatprep.subr.bf16.mxu0 0
    %3937 = vmatpush1.bf16.msra.mxu0 %v198
    %3938 = vmatprep.subr.bf16.mxu0 0
    %3939 = vmatpush1.bf16.msra.mxu0 0
    %3940 = vmatprep.subr.bf16.mxu0 0
    %3941 = vmatpush1.bf16.msra.mxu0 0
    %3942 = vmatprep.subr.bf16.mxu0 0
    %3943 = vmatpush1.bf16.msra.mxu0 0
    %3944 = vmatprep.subr.bf16.mxu0 0
    %3945 = vmatpush1.bf16.msra.mxu0 0
    %3946 = vmatprep.subr.bf16.mxu0 0
    %3947 = vmatpush1.bf16.msra.mxu0 0
    %3948 = vmatprep.subr.bf16.mxu0 0
    %3949 = vmatpush1.bf16.msra.mxu0 0
    %3950 = vmatprep.subr.bf16.mxu0 0
    %3951 = vmatpush1.bf16.msra.mxu0 0
    %3952 = vmatprep.subr.bf16.mxu0 0
    %3953 = vmatpush1.bf16.msra.mxu0 0
    %3954 = vmatprep.subr.bf16.mxu0 0
    %3955 = vmatpush1.bf16.msra.mxu0 0
    %3956 = vmatprep.subr.bf16.mxu0 0
    %3957 = vmatpush1.bf16.msra.mxu0 0
    %3958 = vmatprep.subr.bf16.mxu0 0
    %3959 = vmatpush1.bf16.msra.mxu0 0
    %3960 = vmatprep.subr.bf16.mxu0 0
    %3961 = vmatpush1.bf16.msra.mxu0 0
    %3962 = vmatprep.subr.bf16.mxu0 0
    %3963 = vmatpush1.bf16.msra.mxu0 0
    %3964 = vmatprep.subr.bf16.mxu0 0
    %3965 = vmatpush1.bf16.msra.mxu0 0
    %3966 = vmatprep.subr.bf16.mxu0 0
    %3967 = vmatpush1.bf16.msra.mxu0 0
    %3968 = vmatprep.mubr.bf16.mxu0 0
    %3969 = vmatmul.mubr.bf16.gmra.mrb[0].mxu0 %v3934
    %v3970 = vpop.f32.mrb[0].mxu0
    %v3971 = vadd.f32 0.0, %v3970
    %v3972 = vpop.f32.mrb[0].mxu0
    %v3973 = vpop.f32.mrb[0].mxu0
    %v3974 = vadd.f32 0.0, %v3973
    %v3975 = vpop.f32.mrb[0].mxu0
    %3976 = vdwg.mxu0
    %3977 = vst.msk [vmem:[#allocation2 + $0x2] sm:$0x1] %vm244, %v3922
    %3978 = vst.msk [vmem:[#allocation2 + $0x3] sm:$0x1] %vm244, %v3971
    %v3980 = vrot.slane %v3922, 5
    %v3981 = vrot.slane %v3980, 4
    %3982 = vrot.lane.b32.xlu0 %v3981, 16
    %v3983 = vpop.permute.xlu0 %3982
    %3985 = vst.msk [vmem:[#allocation2 + $0x2] sm:$0x1] %vm253, %v3983
    %v3987 = vrot.slane %v3971, 5
    %v3988 = vrot.slane %v3987, 4
    %3989 = vrot.lane.b32.xlu0 %v3988, 16
    %v3990 = vpop.permute.xlu0 %3989
    %3992 = vst.msk [vmem:[#allocation2 + $0x3] sm:$0x1] %vm253, %v3990
    %v3993 = vrot.slane %v3922, 6
    %v3994 = vrot.slane %v3993, 4
    %3995 = vrot.lane.b32.xlu0 %v3994, 32
    %v3996 = vpop.permute.xlu0 %3995
    %3998 = vst.msk [vmem:[#allocation2 + $0x2] sm:$0x1] %vm267, %v3996
    %v3999 = vrot.slane %v3971, 6
    %v4000 = vrot.slane %v3999, 4
    %4001 = vrot.lane.b32.xlu0 %v4000, 32
    %v4002 = vpop.permute.xlu0 %4001
    %4004 = vst.msk [vmem:[#allocation2 + $0x3] sm:$0x1] %vm267, %v4002
    %v4005 = vrot.slane %v3922, 7
    %v4006 = vrot.slane %v4005, 4
    %4007 = vrot.lane.b32.xlu0 %v4006, 48
    %v4008 = vpop.permute.xlu0 %4007
    %4010 = vst.msk [vmem:[#allocation2 + $0x2] sm:$0x1] %vm280, %v4008
    %v4011 = vrot.slane %v3971, 7
    %v4012 = vrot.slane %v4011, 4
    %4013 = vrot.lane.b32.xlu0 %v4012, 48
    %v4014 = vpop.permute.xlu0 %4013
    %4016 = vst.msk [vmem:[#allocation2 + $0x3] sm:$0x1] %vm280, %v4014
    %v4017 = vcombine.high %v3922, %v3922
    %4018 = vrot.lane.b32.xlu0 %v4017, 64
    %v4019 = vpop.permute.xlu0 %4018
    %4021 = vst.msk [vmem:[#allocation2 + $0x2] sm:$0x1] %vm292, %v4019
    %v4022 = vcombine.high %v3971, %v3971
    %4023 = vrot.lane.b32.xlu0 %v4022, 64
    %v4024 = vpop.permute.xlu0 %4023
    %4026 = vst.msk [vmem:[#allocation2 + $0x3] sm:$0x1] %vm292, %v4024
    %v4027 = vrot.slane %v4017, 5
    %v4028 = vrot.slane %v4027, 4
    %4029 = vrot.lane.b32.xlu0 %v4028, 80
    %v4030 = vpop.permute.xlu0 %4029
    %4032 = vst.msk [vmem:[#allocation2 + $0x2] sm:$0x1] %vm304, %v4030
    %v4033 = vrot.slane %v4022, 5
    %v4034 = vrot.slane %v4033, 4
    %4035 = vrot.lane.b32.xlu0 %v4034, 80
    %v4036 = vpop.permute.xlu0 %4035
    %4038 = vst.msk [vmem:[#allocation2 + $0x3] sm:$0x1] %vm304, %v4036
    %v4039 = vrot.slane %v4017, 6
    %v4040 = vrot.slane %v4039, 4
    %4041 = vrot.lane.b32.xlu0 %v4040, 96
    %v4042 = vpop.permute.xlu0 %4041
    %4044 = vst.msk [vmem:[#allocation2 + $0x2] sm:$0x1] %vm317, %v4042
    %v4045 = vrot.slane %v4022, 6
    %v4046 = vrot.slane %v4045, 4
    %4047 = vrot.lane.b32.xlu0 %v4046, 96
    %v4048 = vpop.permute.xlu0 %4047
    %4050 = vst.msk [vmem:[#allocation2 + $0x3] sm:$0x1] %vm317, %v4048
    %v4051 = vrot.slane %v4017, 7
    %v4052 = vrot.slane %v4051, 4
    %4053 = vrot.lane.b32.xlu0 %v4052, 112
    %v4054 = vpop.permute.xlu0 %4053
    %4056 = vst.msk [vmem:[#allocation2 + $0x2] sm:$0x1] %vm330, %v4054
    %v4057 = vrot.slane %v4022, 7
    %v4058 = vrot.slane %v4057, 4
    %4059 = vrot.lane.b32.xlu0 %v4058, 112
    %v4060 = vpop.permute.xlu0 %4059
    %4062 = vst.msk [vmem:[#allocation2 + $0x3] sm:$0x1] %vm330, %v4060
    %4063 = vst.msk [vmem:[#allocation2 + $0x6] sm:$0x1] %vm244, %v3925
    %4064 = vst.msk [vmem:[#allocation2 + $0x7] sm:$0x1] %vm244, %v3974
    %v4066 = vrot.slane %v3925, 5
    %v4067 = vrot.slane %v4066, 4
    %4068 = vrot.lane.b32.xlu0 %v4067, 16
    %v4069 = vpop.permute.xlu0 %4068
    %4071 = vst.msk [vmem:[#allocation2 + $0x6] sm:$0x1] %vm253, %v4069
    %v4073 = vrot.slane %v3974, 5
    %v4074 = vrot.slane %v4073, 4
    %4075 = vrot.lane.b32.xlu0 %v4074, 16
    %v4076 = vpop.permute.xlu0 %4075
    %4078 = vst.msk [vmem:[#allocation2 + $0x7] sm:$0x1] %vm253, %v4076
    %v4079 = vrot.slane %v3925, 6
    %v4080 = vrot.slane %v4079, 4
    %4081 = vrot.lane.b32.xlu0 %v4080, 32
    %v4082 = vpop.permute.xlu0 %4081
    %4084 = vst.msk [vmem:[#allocation2 + $0x6] sm:$0x1] %vm267, %v4082
    %v4085 = vrot.slane %v3974, 6
    %v4086 = vrot.slane %v4085, 4
    %4087 = vrot.lane.b32.xlu0 %v4086, 32
    %v4088 = vpop.permute.xlu0 %4087
    %4090 = vst.msk [vmem:[#allocation2 + $0x7] sm:$0x1] %vm267, %v4088
    %v4091 = vrot.slane %v3925, 7
    %v4092 = vrot.slane %v4091, 4
    %4093 = vrot.lane.b32.xlu0 %v4092, 48
    %v4094 = vpop.permute.xlu0 %4093
    %4096 = vst.msk [vmem:[#allocation2 + $0x6] sm:$0x1] %vm280, %v4094
    %v4097 = vrot.slane %v3974, 7
    %v4098 = vrot.slane %v4097, 4
    %4099 = vrot.lane.b32.xlu0 %v4098, 48
    %v4100 = vpop.permute.xlu0 %4099
    %4102 = vst.msk [vmem:[#allocation2 + $0x7] sm:$0x1] %vm280, %v4100
    %v4103 = vcombine.high %v3925, %v3925
    %4104 = vrot.lane.b32.xlu0 %v4103, 64
    %v4105 = vpop.permute.xlu0 %4104
    %4107 = vst.msk [vmem:[#allocation2 + $0x6] sm:$0x1] %vm292, %v4105
    %v4108 = vcombine.high %v3974, %v3974
    %4109 = vrot.lane.b32.xlu0 %v4108, 64
    %v4110 = vpop.permute.xlu0 %4109
    %4112 = vst.msk [vmem:[#allocation2 + $0x7] sm:$0x1] %vm292, %v4110
    %v4113 = vrot.slane %v4103, 5
    %v4114 = vrot.slane %v4113, 4
    %4115 = vrot.lane.b32.xlu0 %v4114, 80
    %v4116 = vpop.permute.xlu0 %4115
    %4118 = vst.msk [vmem:[#allocation2 + $0x6] sm:$0x1] %vm304, %v4116
    %v4119 = vrot.slane %v4108, 5
    %v4120 = vrot.slane %v4119, 4
    %4121 = vrot.lane.b32.xlu0 %v4120, 80
    %v4122 = vpop.permute.xlu0 %4121
    %4124 = vst.msk [vmem:[#allocation2 + $0x7] sm:$0x1] %vm304, %v4122
    %v4125 = vrot.slane %v4103, 6
    %v4126 = vrot.slane %v4125, 4
    %4127 = vrot.lane.b32.xlu0 %v4126, 96
    %v4128 = vpop.permute.xlu0 %4127
    %4130 = vst.msk [vmem:[#allocation2 + $0x6] sm:$0x1] %vm317, %v4128
    %v4131 = vrot.slane %v4108, 6
    %v4132 = vrot.slane %v4131, 4
    %4133 = vrot.lane.b32.xlu0 %v4132, 96
    %v4134 = vpop.permute.xlu0 %4133
    %4136 = vst.msk [vmem:[#allocation2 + $0x7] sm:$0x1] %vm317, %v4134
    %v4137 = vrot.slane %v4103, 7
    %v4138 = vrot.slane %v4137, 4
    %4139 = vrot.lane.b32.xlu0 %v4138, 112
    %v4140 = vpop.permute.xlu0 %4139
    %4142 = vst.msk [vmem:[#allocation2 + $0x6] sm:$0x1] %vm330, %v4140
    %v4143 = vrot.slane %v4108, 7
    %v4144 = vrot.slane %v4143, 4
    %4145 = vrot.lane.b32.xlu0 %v4144, 112
    %v4146 = vpop.permute.xlu0 %4145
    %4148 = vst.msk [vmem:[#allocation2 + $0x7] sm:$0x1] %vm330, %v4146
    %s4149 = scalar_lea.vmem [#allocation2], 2
    %v4150 = vld [vmem:[%s4149] ss:$4 sm:$0x3]
    %s4151 = scalar_lea.vmem [#allocation2], 3
    %v4152 = vld [vmem:[%s4151] ss:$4 sm:$0x3]
    %v4154 = vlaneseq
    %v4155 = vshrl.u32 %v4154, 7
    %v4156 = vsub.s32 0, %v4155
    %v4157 = vrot.slane %v4150, %v4156
    %v4158 = vlaneseq
    %v4159 = vshrl.u32 %v4158, 7
    %v4160 = vsub.s32 1, %v4159
    %v4161 = vrot.slane %v4150, %v4160
    %v4164 = vmul.f32 %v4157, %v42
    %v4165 = vmul.f32 %v4161, %v42
    %v4166 = vmul.f32 %v4157, %v47
    %v4167 = vmul.f32 %v4161, %v47
    %v4168 = vmul.f32 %v4157, %v52
    %v4169 = vmul.f32 %v4161, %v52
    %v4170 = vmul.f32 %v4157, %v57
    %v4171 = vmul.f32 %v4161, %v57
    %v4172 = vmul.f32 %v4157, %v62
    %v4173 = vmul.f32 %v4161, %v62
    %v4174 = vmul.f32 %v4157, %v67
    %v4175 = vmul.f32 %v4161, %v67
    %v4176 = vmul.f32 %v4157, %v72
    %v4177 = vmul.f32 %v4161, %v72
    %v4178 = vmul.f32 %v4157, %v77
    %v4179 = vmul.f32 %v4161, %v77
    %v4180 = vadd.f32 %v4164, %v90
    %v4181 = vadd.f32 %v4165, %v90
    %v4182 = vadd.f32 %v4166, %v95
    %v4183 = vadd.f32 %v4167, %v95
    %v4184 = vadd.f32 %v4168, %v100
    %v4185 = vadd.f32 %v4169, %v100
    %v4186 = vadd.f32 %v4170, %v105
    %v4187 = vadd.f32 %v4171, %v105
    %v4188 = vadd.f32 %v4172, %v110
    %v4189 = vadd.f32 %v4173, %v110
    %v4190 = vadd.f32 %v4174, %v115
    %v4191 = vadd.f32 %v4175, %v115
    %v4192 = vadd.f32 %v4176, %v120
    %v4193 = vadd.f32 %v4177, %v120
    %v4194 = vadd.f32 %v4178, %v125
    %v4195 = vadd.f32 %v4179, %v125
    %v4196 = vand.u32 2147483647, %v4180
    %vm4197 = vcmp.le.f32.partialorder %v4196, 0.7853982
    %vm4198 = vcmp.lt.s32.totalorder %v4180, 0
    %v4199 = vand.u32 %v4180, 2139095040
    %v4200 = vshrl.u32 %v4199, 23
    %v4201 = vsub.s32 %v4200, 127
    %v4202 = vand.u32 2147483647, %v4180
    %v4203 = vand.u32 %v4202, 8388607
    %v4204 = vor.u32 %v4203, 8388608
    %v4205 = vsub.s32 0, %v4204
    %v4206 = vadd.s32 %v4201, 1
    %vm4207 = vcmp.gt.s32.totalorder %v4206, 0
    %v4208 = vsel %vm4207, %v4206, 0
    %v4209 = vshrl.u32 %v4208, 5
    %v4210 = vand.u32 %v4208, 31
    %v4211 = vsub.s32 32, %v4210
    %v4212 = vshrl.u32 683565275, %v4211
    %v4213 = vshll.u32 683565275, %v4210
    %v4214 = vshrl.u32 2475754826, %v4211
    %v4215 = vor.u32 %v4213, %v4214
    %v4216 = vshll.u32 2475754826, %v4210
    %v4217 = vshrl.u32 2131351028, %v4211
    %v4218 = vor.u32 %v4216, %v4217
    %v4219 = vshll.u32 2131351028, %v4210
    %v4220 = vshrl.u32 2102212464, %v4211
    %v4221 = vor.u32 %v4219, %v4220
    %v4222 = vshll.u32 2102212464, %v4210
    %v4223 = vshrl.u32 920167782, %v4211
    %v4224 = vor.u32 %v4222, %v4223
    %v4225 = vshll.u32 920167782, %v4210
    %v4226 = vshrl.u32 1326507024, %v4211
    %v4227 = vor.u32 %v4225, %v4226
    %vm4228 = vcmp.lt.s32.totalorder %v4209, 1
    %vm4229 = vcmp.lt.s32.totalorder %v4209, 2
    %vm4230 = vcmp.lt.s32.totalorder %v4209, 3
    %vm4231 = vcmp.lt.s32.totalorder %v4209, 4
    %v4232 = vsel %vm4228, %v4212, %v4215
    %v4233 = vsel %vm4231, %v4221, 2102212464
    %v4234 = vsel %vm4230, %v4218, %v4233
    %v4235 = vsel %vm4229, %v4232, %v4234
    %v4236 = vsel %vm4228, %v4215, %v4218
    %v4237 = vsel %vm4231, %v4224, 920167782
    %v4238 = vsel %vm4230, %v4221, %v4237
    %v4239 = vsel %vm4229, %v4236, %v4238
    %v4240 = vsel %vm4228, %v4218, %v4221
    %v4241 = vsel %vm4231, %v4227, 1326507024
    %v4242 = vsel %vm4230, %v4224, %v4241
    %v4243 = vsel %vm4229, %v4240, %v4242
    %v4244 = vshll.u32 %v4204, 8
    %v4245 = vmul.u32.u64.compose %v4244, %v4243
    %v4246 = vextract.low.u32 %v4245
    %v4247 = vextract.high.u32 %v4245
    %v4248 = vmul.u32.u64.compose %v4244, %v4239
    %v4249 = vextract.low.u32 %v4248
    %v4250 = vextract.high.u32 %v4248
    %v4251 = vmul.u32 %v4244, %v4235
    %v4252 = vadd.s32 %v4247, %v4249
    %vm4253 = vc.u32 %v4247, %v4249
    %v4254 = vadd.s32 %v4250, 1
    %v4255 = vsel %vm4253, %v4254, %v4250
    %v4256 = vadd.s32 %v4251, %v4255
    %v4257 = vadd.s32 %v4256, 536870912
    %v4258 = vshrl.u32 %v4257, 30
    %v4259 = vshll.u32 %v4258, 30
    %v4260 = vsub.s32 %v4256, %v4259
    %vm4261 = vcmp.lt.s32.totalorder %v4260, 0
    %v4262 = vsub.s32 0, %v4260
    %v4263 = vsel %vm4261, %v4262, %v4260
    %v4264 = vclz %v4263
    %v4265 = vsub.s32 %v4264, 2
    %vm4266 = vcmp.gt.s32.totalorder 0, %v4265
    %v4267 = vsel %vm4266, 0, %v4265
    %v4268 = vsub.s32 32, %v4267
    %v4269 = vshll.u32 %v4260, %v4267
    %v4270 = vshrl.u32 %v4252, %v4268
    %v4271 = vor.u32 %v4269, %v4270
    %v4272 = vsub.s32 4294967266, %v4267
    %v4273 = vadd.s32 %v4272, 127
    %v4274 = vshll.u32 %v4273, 23
    %v4275 = vor.u32 4788187, %v4274
    %v4276 = vand.u32 2147483647, %v4275
    %v4278 = vcvt.s32.f32 %v4271
    %v4279 = vmul.f32 %v4278, %v4276
    %v4280 = vxor.u32 %v4279, 2147483648
    %v4281 = vsel %vm4198, %v4280, %v4279
    %v4282 = vsub.s32 4, %v4258
    %v4283 = vsel %vm4198, %v4282, %v4258
    %v4284 = vsel %vm4197, %v4180, %v4281
    %v4285 = vsel %vm4197, 0, %v4283
    %v4286 = vcosq.f32.pop %v4284
    %v4287 = vsinq.f32.pop %v4284
    %vm4288 = vweird.f32 %v4180
    %v4289 = vadd.s32 %v4285, 3
    %v4290 = vand.u32 %v4289, 3
    %vm4291 = vcmp.lt.s32.totalorder %v4290, 2
    %vm4292 = vcmp.eq.s32.totalorder %v4290, 0
    %v4293 = vxor.u32 %v4287, 2147483648
    %v4294 = vsel %vm4292, %v4286, %v4293
    %vm4295 = vcmp.eq.s32.totalorder %v4290, 2
    %v4296 = vxor.u32 %v4286, 2147483648
    %v4297 = vsel %vm4295, %v4296, %v4287
    %v4298 = vsel %vm4291, %v4294, %v4297
    %v4299 = vsel %vm4288, nan, %v4298
    %v4300 = vand.u32 2147483647, %v4181
    %vm4301 = vcmp.le.f32.partialorder %v4300, 0.7853982
    %vm4302 = vcmp.lt.s32.totalorder %v4181, 0
    %v4303 = vand.u32 %v4181, 2139095040
    %v4304 = vshrl.u32 %v4303, 23
    %v4305 = vsub.s32 %v4304, 127
    %v4306 = vand.u32 2147483647, %v4181
    %v4307 = vand.u32 %v4306, 8388607
    %v4308 = vor.u32 %v4307, 8388608
    %v4309 = vsub.s32 0, %v4308
    %v4310 = vadd.s32 %v4305, 1
    %vm4311 = vcmp.gt.s32.totalorder %v4310, 0
    %v4312 = vsel %vm4311, %v4310, 0
    %v4313 = vshrl.u32 %v4312, 5
    %v4314 = vand.u32 %v4312, 31
    %v4315 = vsub.s32 32, %v4314
    %v4316 = vshrl.u32 683565275, %v4315
    %v4317 = vshll.u32 683565275, %v4314
    %v4318 = vshrl.u32 2475754826, %v4315
    %v4319 = vor.u32 %v4317, %v4318
    %v4320 = vshll.u32 2475754826, %v4314
    %v4321 = vshrl.u32 2131351028, %v4315
    %v4322 = vor.u32 %v4320, %v4321
    %v4323 = vshll.u32 2131351028, %v4314
    %v4324 = vshrl.u32 2102212464, %v4315
    %v4325 = vor.u32 %v4323, %v4324
    %v4326 = vshll.u32 2102212464, %v4314
    %v4327 = vshrl.u32 920167782, %v4315
    %v4328 = vor.u32 %v4326, %v4327
    %v4329 = vshll.u32 920167782, %v4314
    %v4330 = vshrl.u32 1326507024, %v4315
    %v4331 = vor.u32 %v4329, %v4330
    %vm4332 = vcmp.lt.s32.totalorder %v4313, 1
    %vm4333 = vcmp.lt.s32.totalorder %v4313, 2
    %vm4334 = vcmp.lt.s32.totalorder %v4313, 3
    %vm4335 = vcmp.lt.s32.totalorder %v4313, 4
    %v4336 = vsel %vm4332, %v4316, %v4319
    %v4337 = vsel %vm4335, %v4325, 2102212464
    %v4338 = vsel %vm4334, %v4322, %v4337
    %v4339 = vsel %vm4333, %v4336, %v4338
    %v4340 = vsel %vm4332, %v4319, %v4322
    %v4341 = vsel %vm4335, %v4328, 920167782
    %v4342 = vsel %vm4334, %v4325, %v4341
    %v4343 = vsel %vm4333, %v4340, %v4342
    %v4344 = vsel %vm4332, %v4322, %v4325
    %v4345 = vsel %vm4335, %v4331, 1326507024
    %v4346 = vsel %vm4334, %v4328, %v4345
    %v4347 = vsel %vm4333, %v4344, %v4346
    %v4348 = vshll.u32 %v4308, 8
    %v4349 = vmul.u32.u64.compose %v4348, %v4347
    %v4350 = vextract.low.u32 %v4349
    %v4351 = vextract.high.u32 %v4349
    %v4352 = vmul.u32.u64.compose %v4348, %v4343
    %v4353 = vextract.low.u32 %v4352
    %v4354 = vextract.high.u32 %v4352
    %v4355 = vmul.u32 %v4348, %v4339
    %v4356 = vadd.s32 %v4351, %v4353
    %vm4357 = vc.u32 %v4351, %v4353
    %v4358 = vadd.s32 %v4354, 1
    %v4359 = vsel %vm4357, %v4358, %v4354
    %v4360 = vadd.s32 %v4355, %v4359
    %v4361 = vadd.s32 %v4360, 536870912
    %v4362 = vshrl.u32 %v4361, 30
    %v4363 = vshll.u32 %v4362, 30
    %v4364 = vsub.s32 %v4360, %v4363
    %vm4365 = vcmp.lt.s32.totalorder %v4364, 0
    %v4366 = vsub.s32 0, %v4364
    %v4367 = vsel %vm4365, %v4366, %v4364
    %v4368 = vclz %v4367
    %v4369 = vsub.s32 %v4368, 2
    %vm4370 = vcmp.gt.s32.totalorder 0, %v4369
    %v4371 = vsel %vm4370, 0, %v4369
    %v4372 = vsub.s32 32, %v4371
    %v4373 = vshll.u32 %v4364, %v4371
    %v4374 = vshrl.u32 %v4356, %v4372
    %v4375 = vor.u32 %v4373, %v4374
    %v4376 = vsub.s32 4294967266, %v4371
    %v4377 = vadd.s32 %v4376, 127
    %v4378 = vshll.u32 %v4377, 23
    %v4379 = vor.u32 4788187, %v4378
    %v4380 = vand.u32 2147483647, %v4379
    %v4382 = vcvt.s32.f32 %v4375
    %v4383 = vmul.f32 %v4382, %v4380
    %v4384 = vxor.u32 %v4383, 2147483648
    %v4385 = vsel %vm4302, %v4384, %v4383
    %v4386 = vsub.s32 4, %v4362
    %v4387 = vsel %vm4302, %v4386, %v4362
    %v4388 = vsel %vm4301, %v4181, %v4385
    %v4389 = vsel %vm4301, 0, %v4387
    %v4390 = vcosq.f32.pop %v4388
    %v4391 = vsinq.f32.pop %v4388
    %vm4392 = vweird.f32 %v4181
    %v4393 = vadd.s32 %v4389, 3
    %v4394 = vand.u32 %v4393, 3
    %vm4395 = vcmp.lt.s32.totalorder %v4394, 2
    %vm4396 = vcmp.eq.s32.totalorder %v4394, 0
    %v4397 = vxor.u32 %v4391, 2147483648
    %v4398 = vsel %vm4396, %v4390, %v4397
    %vm4399 = vcmp.eq.s32.totalorder %v4394, 2
    %v4400 = vxor.u32 %v4390, 2147483648
    %v4401 = vsel %vm4399, %v4400, %v4391
    %v4402 = vsel %vm4395, %v4398, %v4401
    %v4403 = vsel %vm4392, nan, %v4402
    %v4404 = vand.u32 2147483647, %v4182
    %vm4405 = vcmp.le.f32.partialorder %v4404, 0.7853982
    %vm4406 = vcmp.lt.s32.totalorder %v4182, 0
    %v4407 = vand.u32 %v4182, 2139095040
    %v4408 = vshrl.u32 %v4407, 23
    %v4409 = vsub.s32 %v4408, 127
    %v4410 = vand.u32 2147483647, %v4182
    %v4411 = vand.u32 %v4410, 8388607
    %v4412 = vor.u32 %v4411, 8388608
    %v4413 = vsub.s32 0, %v4412
    %v4414 = vadd.s32 %v4409, 1
    %vm4415 = vcmp.gt.s32.totalorder %v4414, 0
    %v4416 = vsel %vm4415, %v4414, 0
    %v4417 = vshrl.u32 %v4416, 5
    %v4418 = vand.u32 %v4416, 31
    %v4419 = vsub.s32 32, %v4418
    %v4420 = vshrl.u32 683565275, %v4419
    %v4421 = vshll.u32 683565275, %v4418
    %v4422 = vshrl.u32 2475754826, %v4419
    %v4423 = vor.u32 %v4421, %v4422
    %v4424 = vshll.u32 2475754826, %v4418
    %v4425 = vshrl.u32 2131351028, %v4419
    %v4426 = vor.u32 %v4424, %v4425
    %v4427 = vshll.u32 2131351028, %v4418
    %v4428 = vshrl.u32 2102212464, %v4419
    %v4429 = vor.u32 %v4427, %v4428
    %v4430 = vshll.u32 2102212464, %v4418
    %v4431 = vshrl.u32 920167782, %v4419
    %v4432 = vor.u32 %v4430, %v4431
    %v4433 = vshll.u32 920167782, %v4418
    %v4434 = vshrl.u32 1326507024, %v4419
    %v4435 = vor.u32 %v4433, %v4434
    %vm4436 = vcmp.lt.s32.totalorder %v4417, 1
    %vm4437 = vcmp.lt.s32.totalorder %v4417, 2
    %vm4438 = vcmp.lt.s32.totalorder %v4417, 3
    %vm4439 = vcmp.lt.s32.totalorder %v4417, 4
    %v4440 = vsel %vm4436, %v4420, %v4423
    %v4441 = vsel %vm4439, %v4429, 2102212464
    %v4442 = vsel %vm4438, %v4426, %v4441
    %v4443 = vsel %vm4437, %v4440, %v4442
    %v4444 = vsel %vm4436, %v4423, %v4426
    %v4445 = vsel %vm4439, %v4432, 920167782
    %v4446 = vsel %vm4438, %v4429, %v4445
    %v4447 = vsel %vm4437, %v4444, %v4446
    %v4448 = vsel %vm4436, %v4426, %v4429
    %v4449 = vsel %vm4439, %v4435, 1326507024
    %v4450 = vsel %vm4438, %v4432, %v4449
    %v4451 = vsel %vm4437, %v4448, %v4450
    %v4452 = vshll.u32 %v4412, 8
    %v4453 = vmul.u32.u64.compose %v4452, %v4451
    %v4454 = vextract.low.u32 %v4453
    %v4455 = vextract.high.u32 %v4453
    %v4456 = vmul.u32.u64.compose %v4452, %v4447
    %v4457 = vextract.low.u32 %v4456
    %v4458 = vextract.high.u32 %v4456
    %v4459 = vmul.u32 %v4452, %v4443
    %v4460 = vadd.s32 %v4455, %v4457
    %vm4461 = vc.u32 %v4455, %v4457
    %v4462 = vadd.s32 %v4458, 1
    %v4463 = vsel %vm4461, %v4462, %v4458
    %v4464 = vadd.s32 %v4459, %v4463
    %v4465 = vadd.s32 %v4464, 536870912
    %v4466 = vshrl.u32 %v4465, 30
    %v4467 = vshll.u32 %v4466, 30
    %v4468 = vsub.s32 %v4464, %v4467
    %vm4469 = vcmp.lt.s32.totalorder %v4468, 0
    %v4470 = vsub.s32 0, %v4468
    %v4471 = vsel %vm4469, %v4470, %v4468
    %v4472 = vclz %v4471
    %v4473 = vsub.s32 %v4472, 2
    %vm4474 = vcmp.gt.s32.totalorder 0, %v4473
    %v4475 = vsel %vm4474, 0, %v4473
    %v4476 = vsub.s32 32, %v4475
    %v4477 = vshll.u32 %v4468, %v4475
    %v4478 = vshrl.u32 %v4460, %v4476
    %v4479 = vor.u32 %v4477, %v4478
    %v4480 = vsub.s32 4294967266, %v4475
    %v4481 = vadd.s32 %v4480, 127
    %v4482 = vshll.u32 %v4481, 23
    %v4483 = vor.u32 4788187, %v4482
    %v4484 = vand.u32 2147483647, %v4483
    %v4486 = vcvt.s32.f32 %v4479
    %v4487 = vmul.f32 %v4486, %v4484
    %v4488 = vxor.u32 %v4487, 2147483648
    %v4489 = vsel %vm4406, %v4488, %v4487
    %v4490 = vsub.s32 4, %v4466
    %v4491 = vsel %vm4406, %v4490, %v4466
    %v4492 = vsel %vm4405, %v4182, %v4489
    %v4493 = vsel %vm4405, 0, %v4491
    %v4494 = vcosq.f32.pop %v4492
    %v4495 = vsinq.f32.pop %v4492
    %vm4496 = vweird.f32 %v4182
    %v4497 = vadd.s32 %v4493, 3
    %v4498 = vand.u32 %v4497, 3
    %vm4499 = vcmp.lt.s32.totalorder %v4498, 2
    %vm4500 = vcmp.eq.s32.totalorder %v4498, 0
    %v4501 = vxor.u32 %v4495, 2147483648
    %v4502 = vsel %vm4500, %v4494, %v4501
    %vm4503 = vcmp.eq.s32.totalorder %v4498, 2
    %v4504 = vxor.u32 %v4494, 2147483648
    %v4505 = vsel %vm4503, %v4504, %v4495
    %v4506 = vsel %vm4499, %v4502, %v4505
    %v4507 = vsel %vm4496, nan, %v4506
    %v4508 = vand.u32 2147483647, %v4183
    %vm4509 = vcmp.le.f32.partialorder %v4508, 0.7853982
    %vm4510 = vcmp.lt.s32.totalorder %v4183, 0
    %v4511 = vand.u32 %v4183, 2139095040
    %v4512 = vshrl.u32 %v4511, 23
    %v4513 = vsub.s32 %v4512, 127
    %v4514 = vand.u32 2147483647, %v4183
    %v4515 = vand.u32 %v4514, 8388607
    %v4516 = vor.u32 %v4515, 8388608
    %v4517 = vsub.s32 0, %v4516
    %v4518 = vadd.s32 %v4513, 1
    %vm4519 = vcmp.gt.s32.totalorder %v4518, 0
    %v4520 = vsel %vm4519, %v4518, 0
    %v4521 = vshrl.u32 %v4520, 5
    %v4522 = vand.u32 %v4520, 31
    %v4523 = vsub.s32 32, %v4522
    %v4524 = vshrl.u32 683565275, %v4523
    %v4525 = vshll.u32 683565275, %v4522
    %v4526 = vshrl.u32 2475754826, %v4523
    %v4527 = vor.u32 %v4525, %v4526
    %v4528 = vshll.u32 2475754826, %v4522
    %v4529 = vshrl.u32 2131351028, %v4523
    %v4530 = vor.u32 %v4528, %v4529
    %v4531 = vshll.u32 2131351028, %v4522
    %v4532 = vshrl.u32 2102212464, %v4523
    %v4533 = vor.u32 %v4531, %v4532
    %v4534 = vshll.u32 2102212464, %v4522
    %v4535 = vshrl.u32 920167782, %v4523
    %v4536 = vor.u32 %v4534, %v4535
    %v4537 = vshll.u32 920167782, %v4522
    %v4538 = vshrl.u32 1326507024, %v4523
    %v4539 = vor.u32 %v4537, %v4538
    %vm4540 = vcmp.lt.s32.totalorder %v4521, 1
    %vm4541 = vcmp.lt.s32.totalorder %v4521, 2
    %vm4542 = vcmp.lt.s32.totalorder %v4521, 3
    %vm4543 = vcmp.lt.s32.totalorder %v4521, 4
    %v4544 = vsel %vm4540, %v4524, %v4527
    %v4545 = vsel %vm4543, %v4533, 2102212464
    %v4546 = vsel %vm4542, %v4530, %v4545
    %v4547 = vsel %vm4541, %v4544, %v4546
    %v4548 = vsel %vm4540, %v4527, %v4530
    %v4549 = vsel %vm4543, %v4536, 920167782
    %v4550 = vsel %vm4542, %v4533, %v4549
    %v4551 = vsel %vm4541, %v4548, %v4550
    %v4552 = vsel %vm4540, %v4530, %v4533
    %v4553 = vsel %vm4543, %v4539, 1326507024
    %v4554 = vsel %vm4542, %v4536, %v4553
    %v4555 = vsel %vm4541, %v4552, %v4554
    %v4556 = vshll.u32 %v4516, 8
    %v4557 = vmul.u32.u64.compose %v4556, %v4555
    %v4558 = vextract.low.u32 %v4557
    %v4559 = vextract.high.u32 %v4557
    %v4560 = vmul.u32.u64.compose %v4556, %v4551
    %v4561 = vextract.low.u32 %v4560
    %v4562 = vextract.high.u32 %v4560
    %v4563 = vmul.u32 %v4556, %v4547
    %v4564 = vadd.s32 %v4559, %v4561
    %vm4565 = vc.u32 %v4559, %v4561
    %v4566 = vadd.s32 %v4562, 1
    %v4567 = vsel %vm4565, %v4566, %v4562
    %v4568 = vadd.s32 %v4563, %v4567
    %v4569 = vadd.s32 %v4568, 536870912
    %v4570 = vshrl.u32 %v4569, 30
    %v4571 = vshll.u32 %v4570, 30
    %v4572 = vsub.s32 %v4568, %v4571
    %vm4573 = vcmp.lt.s32.totalorder %v4572, 0
    %v4574 = vsub.s32 0, %v4572
    %v4575 = vsel %vm4573, %v4574, %v4572
    %v4576 = vclz %v4575
    %v4577 = vsub.s32 %v4576, 2
    %vm4578 = vcmp.gt.s32.totalorder 0, %v4577
    %v4579 = vsel %vm4578, 0, %v4577
    %v4580 = vsub.s32 32, %v4579
    %v4581 = vshll.u32 %v4572, %v4579
    %v4582 = vshrl.u32 %v4564, %v4580
    %v4583 = vor.u32 %v4581, %v4582
    %v4584 = vsub.s32 4294967266, %v4579
    %v4585 = vadd.s32 %v4584, 127
    %v4586 = vshll.u32 %v4585, 23
    %v4587 = vor.u32 4788187, %v4586
    %v4588 = vand.u32 2147483647, %v4587
    %v4590 = vcvt.s32.f32 %v4583
    %v4591 = vmul.f32 %v4590, %v4588
    %v4592 = vxor.u32 %v4591, 2147483648
    %v4593 = vsel %vm4510, %v4592, %v4591
    %v4594 = vsub.s32 4, %v4570
    %v4595 = vsel %vm4510, %v4594, %v4570
    %v4596 = vsel %vm4509, %v4183, %v4593
    %v4597 = vsel %vm4509, 0, %v4595
    %v4598 = vcosq.f32.pop %v4596
    %v4599 = vsinq.f32.pop %v4596
    %vm4600 = vweird.f32 %v4183
    %v4601 = vadd.s32 %v4597, 3
    %v4602 = vand.u32 %v4601, 3
    %vm4603 = vcmp.lt.s32.totalorder %v4602, 2
    %vm4604 = vcmp.eq.s32.totalorder %v4602, 0
    %v4605 = vxor.u32 %v4599, 2147483648
    %v4606 = vsel %vm4604, %v4598, %v4605
    %vm4607 = vcmp.eq.s32.totalorder %v4602, 2
    %v4608 = vxor.u32 %v4598, 2147483648
    %v4609 = vsel %vm4607, %v4608, %v4599
    %v4610 = vsel %vm4603, %v4606, %v4609
    %v4611 = vsel %vm4600, nan, %v4610
    %v4612 = vand.u32 2147483647, %v4184
    %vm4613 = vcmp.le.f32.partialorder %v4612, 0.7853982
    %vm4614 = vcmp.lt.s32.totalorder %v4184, 0
    %v4615 = vand.u32 %v4184, 2139095040
    %v4616 = vshrl.u32 %v4615, 23
    %v4617 = vsub.s32 %v4616, 127
    %v4618 = vand.u32 2147483647, %v4184
    %v4619 = vand.u32 %v4618, 8388607
    %v4620 = vor.u32 %v4619, 8388608
    %v4621 = vsub.s32 0, %v4620
    %v4622 = vadd.s32 %v4617, 1
    %vm4623 = vcmp.gt.s32.totalorder %v4622, 0
    %v4624 = vsel %vm4623, %v4622, 0
    %v4625 = vshrl.u32 %v4624, 5
    %v4626 = vand.u32 %v4624, 31
    %v4627 = vsub.s32 32, %v4626
    %v4628 = vshrl.u32 683565275, %v4627
    %v4629 = vshll.u32 683565275, %v4626
    %v4630 = vshrl.u32 2475754826, %v4627
    %v4631 = vor.u32 %v4629, %v4630
    %v4632 = vshll.u32 2475754826, %v4626
    %v4633 = vshrl.u32 2131351028, %v4627
    %v4634 = vor.u32 %v4632, %v4633
    %v4635 = vshll.u32 2131351028, %v4626
    %v4636 = vshrl.u32 2102212464, %v4627
    %v4637 = vor.u32 %v4635, %v4636
    %v4638 = vshll.u32 2102212464, %v4626
    %v4639 = vshrl.u32 920167782, %v4627
    %v4640 = vor.u32 %v4638, %v4639
    %v4641 = vshll.u32 920167782, %v4626
    %v4642 = vshrl.u32 1326507024, %v4627
    %v4643 = vor.u32 %v4641, %v4642
    %vm4644 = vcmp.lt.s32.totalorder %v4625, 1
    %vm4645 = vcmp.lt.s32.totalorder %v4625, 2
    %vm4646 = vcmp.lt.s32.totalorder %v4625, 3
    %vm4647 = vcmp.lt.s32.totalorder %v4625, 4
    %v4648 = vsel %vm4644, %v4628, %v4631
    %v4649 = vsel %vm4647, %v4637, 2102212464
    %v4650 = vsel %vm4646, %v4634, %v4649
    %v4651 = vsel %vm4645, %v4648, %v4650
    %v4652 = vsel %vm4644, %v4631, %v4634
    %v4653 = vsel %vm4647, %v4640, 920167782
    %v4654 = vsel %vm4646, %v4637, %v4653
    %v4655 = vsel %vm4645, %v4652, %v4654
    %v4656 = vsel %vm4644, %v4634, %v4637
    %v4657 = vsel %vm4647, %v4643, 1326507024
    %v4658 = vsel %vm4646, %v4640, %v4657
    %v4659 = vsel %vm4645, %v4656, %v4658
    %v4660 = vshll.u32 %v4620, 8
    %v4661 = vmul.u32.u64.compose %v4660, %v4659
    %v4662 = vextract.low.u32 %v4661
    %v4663 = vextract.high.u32 %v4661
    %v4664 = vmul.u32.u64.compose %v4660, %v4655
    %v4665 = vextract.low.u32 %v4664
    %v4666 = vextract.high.u32 %v4664
    %v4667 = vmul.u32 %v4660, %v4651
    %v4668 = vadd.s32 %v4663, %v4665
    %vm4669 = vc.u32 %v4663, %v4665
    %v4670 = vadd.s32 %v4666, 1
    %v4671 = vsel %vm4669, %v4670, %v4666
    %v4672 = vadd.s32 %v4667, %v4671
    %v4673 = vadd.s32 %v4672, 536870912
    %v4674 = vshrl.u32 %v4673, 30
    %v4675 = vshll.u32 %v4674, 30
    %v4676 = vsub.s32 %v4672, %v4675
    %vm4677 = vcmp.lt.s32.totalorder %v4676, 0
    %v4678 = vsub.s32 0, %v4676
    %v4679 = vsel %vm4677, %v4678, %v4676
    %v4680 = vclz %v4679
    %v4681 = vsub.s32 %v4680, 2
    %vm4682 = vcmp.gt.s32.totalorder 0, %v4681
    %v4683 = vsel %vm4682, 0, %v4681
    %v4684 = vsub.s32 32, %v4683
    %v4685 = vshll.u32 %v4676, %v4683
    %v4686 = vshrl.u32 %v4668, %v4684
    %v4687 = vor.u32 %v4685, %v4686
    %v4688 = vsub.s32 4294967266, %v4683
    %v4689 = vadd.s32 %v4688, 127
    %v4690 = vshll.u32 %v4689, 23
    %v4691 = vor.u32 4788187, %v4690
    %v4692 = vand.u32 2147483647, %v4691
    %v4694 = vcvt.s32.f32 %v4687
    %v4695 = vmul.f32 %v4694, %v4692
    %v4696 = vxor.u32 %v4695, 2147483648
    %v4697 = vsel %vm4614, %v4696, %v4695
    %v4698 = vsub.s32 4, %v4674
    %v4699 = vsel %vm4614, %v4698, %v4674
    %v4700 = vsel %vm4613, %v4184, %v4697
    %v4701 = vsel %vm4613, 0, %v4699
    %v4702 = vcosq.f32.pop %v4700
    %v4703 = vsinq.f32.pop %v4700
    %vm4704 = vweird.f32 %v4184
    %v4705 = vadd.s32 %v4701, 3
    %v4706 = vand.u32 %v4705, 3
    %vm4707 = vcmp.lt.s32.totalorder %v4706, 2
    %vm4708 = vcmp.eq.s32.totalorder %v4706, 0
    %v4709 = vxor.u32 %v4703, 2147483648
    %v4710 = vsel %vm4708, %v4702, %v4709
    %vm4711 = vcmp.eq.s32.totalorder %v4706, 2
    %v4712 = vxor.u32 %v4702, 2147483648
    %v4713 = vsel %vm4711, %v4712, %v4703
    %v4714 = vsel %vm4707, %v4710, %v4713
    %v4715 = vsel %vm4704, nan, %v4714
    %v4716 = vand.u32 2147483647, %v4185
    %vm4717 = vcmp.le.f32.partialorder %v4716, 0.7853982
    %vm4718 = vcmp.lt.s32.totalorder %v4185, 0
    %v4719 = vand.u32 %v4185, 2139095040
    %v4720 = vshrl.u32 %v4719, 23
    %v4721 = vsub.s32 %v4720, 127
    %v4722 = vand.u32 2147483647, %v4185
    %v4723 = vand.u32 %v4722, 8388607
    %v4724 = vor.u32 %v4723, 8388608
    %v4725 = vsub.s32 0, %v4724
    %v4726 = vadd.s32 %v4721, 1
    %vm4727 = vcmp.gt.s32.totalorder %v4726, 0
    %v4728 = vsel %vm4727, %v4726, 0
    %v4729 = vshrl.u32 %v4728, 5
    %v4730 = vand.u32 %v4728, 31
    %v4731 = vsub.s32 32, %v4730
    %v4732 = vshrl.u32 683565275, %v4731
    %v4733 = vshll.u32 683565275, %v4730
    %v4734 = vshrl.u32 2475754826, %v4731
    %v4735 = vor.u32 %v4733, %v4734
    %v4736 = vshll.u32 2475754826, %v4730
    %v4737 = vshrl.u32 2131351028, %v4731
    %v4738 = vor.u32 %v4736, %v4737
    %v4739 = vshll.u32 2131351028, %v4730
    %v4740 = vshrl.u32 2102212464, %v4731
    %v4741 = vor.u32 %v4739, %v4740
    %v4742 = vshll.u32 2102212464, %v4730
    %v4743 = vshrl.u32 920167782, %v4731
    %v4744 = vor.u32 %v4742, %v4743
    %v4745 = vshll.u32 920167782, %v4730
    %v4746 = vshrl.u32 1326507024, %v4731
    %v4747 = vor.u32 %v4745, %v4746
    %vm4748 = vcmp.lt.s32.totalorder %v4729, 1
    %vm4749 = vcmp.lt.s32.totalorder %v4729, 2
    %vm4750 = vcmp.lt.s32.totalorder %v4729, 3
    %vm4751 = vcmp.lt.s32.totalorder %v4729, 4
    %v4752 = vsel %vm4748, %v4732, %v4735
    %v4753 = vsel %vm4751, %v4741, 2102212464
    %v4754 = vsel %vm4750, %v4738, %v4753
    %v4755 = vsel %vm4749, %v4752, %v4754
    %v4756 = vsel %vm4748, %v4735, %v4738
    %v4757 = vsel %vm4751, %v4744, 920167782
    %v4758 = vsel %vm4750, %v4741, %v4757
    %v4759 = vsel %vm4749, %v4756, %v4758
    %v4760 = vsel %vm4748, %v4738, %v4741
    %v4761 = vsel %vm4751, %v4747, 1326507024
    %v4762 = vsel %vm4750, %v4744, %v4761
    %v4763 = vsel %vm4749, %v4760, %v4762
    %v4764 = vshll.u32 %v4724, 8
    %v4765 = vmul.u32.u64.compose %v4764, %v4763
    %v4766 = vextract.low.u32 %v4765
    %v4767 = vextract.high.u32 %v4765
    %v4768 = vmul.u32.u64.compose %v4764, %v4759
    %v4769 = vextract.low.u32 %v4768
    %v4770 = vextract.high.u32 %v4768
    %v4771 = vmul.u32 %v4764, %v4755
    %v4772 = vadd.s32 %v4767, %v4769
    %vm4773 = vc.u32 %v4767, %v4769
    %v4774 = vadd.s32 %v4770, 1
    %v4775 = vsel %vm4773, %v4774, %v4770
    %v4776 = vadd.s32 %v4771, %v4775
    %v4777 = vadd.s32 %v4776, 536870912
    %v4778 = vshrl.u32 %v4777, 30
    %v4779 = vshll.u32 %v4778, 30
    %v4780 = vsub.s32 %v4776, %v4779
    %vm4781 = vcmp.lt.s32.totalorder %v4780, 0
    %v4782 = vsub.s32 0, %v4780
    %v4783 = vsel %vm4781, %v4782, %v4780
    %v4784 = vclz %v4783
    %v4785 = vsub.s32 %v4784, 2
    %vm4786 = vcmp.gt.s32.totalorder 0, %v4785
    %v4787 = vsel %vm4786, 0, %v4785
    %v4788 = vsub.s32 32, %v4787
    %v4789 = vshll.u32 %v4780, %v4787
    %v4790 = vshrl.u32 %v4772, %v4788
    %v4791 = vor.u32 %v4789, %v4790
    %v4792 = vsub.s32 4294967266, %v4787
    %v4793 = vadd.s32 %v4792, 127
    %v4794 = vshll.u32 %v4793, 23
    %v4795 = vor.u32 4788187, %v4794
    %v4796 = vand.u32 2147483647, %v4795
    %v4798 = vcvt.s32.f32 %v4791
    %v4799 = vmul.f32 %v4798, %v4796
    %v4800 = vxor.u32 %v4799, 2147483648
    %v4801 = vsel %vm4718, %v4800, %v4799
    %v4802 = vsub.s32 4, %v4778
    %v4803 = vsel %vm4718, %v4802, %v4778
    %v4804 = vsel %vm4717, %v4185, %v4801
    %v4805 = vsel %vm4717, 0, %v4803
    %v4806 = vcosq.f32.pop %v4804
    %v4807 = vsinq.f32.pop %v4804
    %vm4808 = vweird.f32 %v4185
    %v4809 = vadd.s32 %v4805, 3
    %v4810 = vand.u32 %v4809, 3
    %vm4811 = vcmp.lt.s32.totalorder %v4810, 2
    %vm4812 = vcmp.eq.s32.totalorder %v4810, 0
    %v4813 = vxor.u32 %v4807, 2147483648
    %v4814 = vsel %vm4812, %v4806, %v4813
    %vm4815 = vcmp.eq.s32.totalorder %v4810, 2
    %v4816 = vxor.u32 %v4806, 2147483648
    %v4817 = vsel %vm4815, %v4816, %v4807
    %v4818 = vsel %vm4811, %v4814, %v4817
    %v4819 = vsel %vm4808, nan, %v4818
    %v4820 = vand.u32 2147483647, %v4186
    %vm4821 = vcmp.le.f32.partialorder %v4820, 0.7853982
    %vm4822 = vcmp.lt.s32.totalorder %v4186, 0
    %v4823 = vand.u32 %v4186, 2139095040
    %v4824 = vshrl.u32 %v4823, 23
    %v4825 = vsub.s32 %v4824, 127
    %v4826 = vand.u32 2147483647, %v4186
    %v4827 = vand.u32 %v4826, 8388607
    %v4828 = vor.u32 %v4827, 8388608
    %v4829 = vsub.s32 0, %v4828
    %v4830 = vadd.s32 %v4825, 1
    %vm4831 = vcmp.gt.s32.totalorder %v4830, 0
    %v4832 = vsel %vm4831, %v4830, 0
    %v4833 = vshrl.u32 %v4832, 5
    %v4834 = vand.u32 %v4832, 31
    %v4835 = vsub.s32 32, %v4834
    %v4836 = vshrl.u32 683565275, %v4835
    %v4837 = vshll.u32 683565275, %v4834
    %v4838 = vshrl.u32 2475754826, %v4835
    %v4839 = vor.u32 %v4837, %v4838
    %v4840 = vshll.u32 2475754826, %v4834
    %v4841 = vshrl.u32 2131351028, %v4835
    %v4842 = vor.u32 %v4840, %v4841
    %v4843 = vshll.u32 2131351028, %v4834
    %v4844 = vshrl.u32 2102212464, %v4835
    %v4845 = vor.u32 %v4843, %v4844
    %v4846 = vshll.u32 2102212464, %v4834
    %v4847 = vshrl.u32 920167782, %v4835
    %v4848 = vor.u32 %v4846, %v4847
    %v4849 = vshll.u32 920167782, %v4834
    %v4850 = vshrl.u32 1326507024, %v4835
    %v4851 = vor.u32 %v4849, %v4850
    %vm4852 = vcmp.lt.s32.totalorder %v4833, 1
    %vm4853 = vcmp.lt.s32.totalorder %v4833, 2
    %vm4854 = vcmp.lt.s32.totalorder %v4833, 3
    %vm4855 = vcmp.lt.s32.totalorder %v4833, 4
    %v4856 = vsel %vm4852, %v4836, %v4839
    %v4857 = vsel %vm4855, %v4845, 2102212464
    %v4858 = vsel %vm4854, %v4842, %v4857
    %v4859 = vsel %vm4853, %v4856, %v4858
    %v4860 = vsel %vm4852, %v4839, %v4842
    %v4861 = vsel %vm4855, %v4848, 920167782
    %v4862 = vsel %vm4854, %v4845, %v4861
    %v4863 = vsel %vm4853, %v4860, %v4862
    %v4864 = vsel %vm4852, %v4842, %v4845
    %v4865 = vsel %vm4855, %v4851, 1326507024
    %v4866 = vsel %vm4854, %v4848, %v4865
    %v4867 = vsel %vm4853, %v4864, %v4866
    %v4868 = vshll.u32 %v4828, 8
    %v4869 = vmul.u32.u64.compose %v4868, %v4867
    %v4870 = vextract.low.u32 %v4869
    %v4871 = vextract.high.u32 %v4869
    %v4872 = vmul.u32.u64.compose %v4868, %v4863
    %v4873 = vextract.low.u32 %v4872
    %v4874 = vextract.high.u32 %v4872
    %v4875 = vmul.u32 %v4868, %v4859
    %v4876 = vadd.s32 %v4871, %v4873
    %vm4877 = vc.u32 %v4871, %v4873
    %v4878 = vadd.s32 %v4874, 1
    %v4879 = vsel %vm4877, %v4878, %v4874
    %v4880 = vadd.s32 %v4875, %v4879
    %v4881 = vadd.s32 %v4880, 536870912
    %v4882 = vshrl.u32 %v4881, 30
    %v4883 = vshll.u32 %v4882, 30
    %v4884 = vsub.s32 %v4880, %v4883
    %vm4885 = vcmp.lt.s32.totalorder %v4884, 0
    %v4886 = vsub.s32 0, %v4884
    %v4887 = vsel %vm4885, %v4886, %v4884
    %v4888 = vclz %v4887
    %v4889 = vsub.s32 %v4888, 2
    %vm4890 = vcmp.gt.s32.totalorder 0, %v4889
    %v4891 = vsel %vm4890, 0, %v4889
    %v4892 = vsub.s32 32, %v4891
    %v4893 = vshll.u32 %v4884, %v4891
    %v4894 = vshrl.u32 %v4876, %v4892
    %v4895 = vor.u32 %v4893, %v4894
    %v4896 = vsub.s32 4294967266, %v4891
    %v4897 = vadd.s32 %v4896, 127
    %v4898 = vshll.u32 %v4897, 23
    %v4899 = vor.u32 4788187, %v4898
    %v4900 = vand.u32 2147483647, %v4899
    %v4902 = vcvt.s32.f32 %v4895
    %v4903 = vmul.f32 %v4902, %v4900
    %v4904 = vxor.u32 %v4903, 2147483648
    %v4905 = vsel %vm4822, %v4904, %v4903
    %v4906 = vsub.s32 4, %v4882
    %v4907 = vsel %vm4822, %v4906, %v4882
    %v4908 = vsel %vm4821, %v4186, %v4905
    %v4909 = vsel %vm4821, 0, %v4907
    %v4910 = vcosq.f32.pop %v4908
    %v4911 = vsinq.f32.pop %v4908
    %vm4912 = vweird.f32 %v4186
    %v4913 = vadd.s32 %v4909, 3
    %v4914 = vand.u32 %v4913, 3
    %vm4915 = vcmp.lt.s32.totalorder %v4914, 2
    %vm4916 = vcmp.eq.s32.totalorder %v4914, 0
    %v4917 = vxor.u32 %v4911, 2147483648
    %v4918 = vsel %vm4916, %v4910, %v4917
    %vm4919 = vcmp.eq.s32.totalorder %v4914, 2
    %v4920 = vxor.u32 %v4910, 2147483648
    %v4921 = vsel %vm4919, %v4920, %v4911
    %v4922 = vsel %vm4915, %v4918, %v4921
    %v4923 = vsel %vm4912, nan, %v4922
    %v4924 = vand.u32 2147483647, %v4187
    %vm4925 = vcmp.le.f32.partialorder %v4924, 0.7853982
    %vm4926 = vcmp.lt.s32.totalorder %v4187, 0
    %v4927 = vand.u32 %v4187, 2139095040
    %v4928 = vshrl.u32 %v4927, 23
    %v4929 = vsub.s32 %v4928, 127
    %v4930 = vand.u32 2147483647, %v4187
    %v4931 = vand.u32 %v4930, 8388607
    %v4932 = vor.u32 %v4931, 8388608
    %v4933 = vsub.s32 0, %v4932
    %v4934 = vadd.s32 %v4929, 1
    %vm4935 = vcmp.gt.s32.totalorder %v4934, 0
    %v4936 = vsel %vm4935, %v4934, 0
    %v4937 = vshrl.u32 %v4936, 5
    %v4938 = vand.u32 %v4936, 31
    %v4939 = vsub.s32 32, %v4938
    %v4940 = vshrl.u32 683565275, %v4939
    %v4941 = vshll.u32 683565275, %v4938
    %v4942 = vshrl.u32 2475754826, %v4939
    %v4943 = vor.u32 %v4941, %v4942
    %v4944 = vshll.u32 2475754826, %v4938
    %v4945 = vshrl.u32 2131351028, %v4939
    %v4946 = vor.u32 %v4944, %v4945
    %v4947 = vshll.u32 2131351028, %v4938
    %v4948 = vshrl.u32 2102212464, %v4939
    %v4949 = vor.u32 %v4947, %v4948
    %v4950 = vshll.u32 2102212464, %v4938
    %v4951 = vshrl.u32 920167782, %v4939
    %v4952 = vor.u32 %v4950, %v4951
    %v4953 = vshll.u32 920167782, %v4938
    %v4954 = vshrl.u32 1326507024, %v4939
    %v4955 = vor.u32 %v4953, %v4954
    %vm4956 = vcmp.lt.s32.totalorder %v4937, 1
    %vm4957 = vcmp.lt.s32.totalorder %v4937, 2
    %vm4958 = vcmp.lt.s32.totalorder %v4937, 3
    %vm4959 = vcmp.lt.s32.totalorder %v4937, 4
    %v4960 = vsel %vm4956, %v4940, %v4943
    %v4961 = vsel %vm4959, %v4949, 2102212464
    %v4962 = vsel %vm4958, %v4946, %v4961
    %v4963 = vsel %vm4957, %v4960, %v4962
    %v4964 = vsel %vm4956, %v4943, %v4946
    %v4965 = vsel %vm4959, %v4952, 920167782
    %v4966 = vsel %vm4958, %v4949, %v4965
    %v4967 = vsel %vm4957, %v4964, %v4966
    %v4968 = vsel %vm4956, %v4946, %v4949
    %v4969 = vsel %vm4959, %v4955, 1326507024
    %v4970 = vsel %vm4958, %v4952, %v4969
    %v4971 = vsel %vm4957, %v4968, %v4970
    %v4972 = vshll.u32 %v4932, 8
    %v4973 = vmul.u32.u64.compose %v4972, %v4971
    %v4974 = vextract.low.u32 %v4973
    %v4975 = vextract.high.u32 %v4973
    %v4976 = vmul.u32.u64.compose %v4972, %v4967
    %v4977 = vextract.low.u32 %v4976
    %v4978 = vextract.high.u32 %v4976
    %v4979 = vmul.u32 %v4972, %v4963
    %v4980 = vadd.s32 %v4975, %v4977
    %vm4981 = vc.u32 %v4975, %v4977
    %v4982 = vadd.s32 %v4978, 1
    %v4983 = vsel %vm4981, %v4982, %v4978
    %v4984 = vadd.s32 %v4979, %v4983
    %v4985 = vadd.s32 %v4984, 536870912
    %v4986 = vshrl.u32 %v4985, 30
    %v4987 = vshll.u32 %v4986, 30
    %v4988 = vsub.s32 %v4984, %v4987
    %vm4989 = vcmp.lt.s32.totalorder %v4988, 0
    %v4990 = vsub.s32 0, %v4988
    %v4991 = vsel %vm4989, %v4990, %v4988
    %v4992 = vclz %v4991
    %v4993 = vsub.s32 %v4992, 2
    %vm4994 = vcmp.gt.s32.totalorder 0, %v4993
    %v4995 = vsel %vm4994, 0, %v4993
    %v4996 = vsub.s32 32, %v4995
    %v4997 = vshll.u32 %v4988, %v4995
    %v4998 = vshrl.u32 %v4980, %v4996
    %v4999 = vor.u32 %v4997, %v4998
    %v5000 = vsub.s32 4294967266, %v4995
    %v5001 = vadd.s32 %v5000, 127
    %v5002 = vshll.u32 %v5001, 23
    %v5003 = vor.u32 4788187, %v5002
    %v5004 = vand.u32 2147483647, %v5003
    %v5006 = vcvt.s32.f32 %v4999
    %v5007 = vmul.f32 %v5006, %v5004
    %v5008 = vxor.u32 %v5007, 2147483648
    %v5009 = vsel %vm4926, %v5008, %v5007
    %v5010 = vsub.s32 4, %v4986
    %v5011 = vsel %vm4926, %v5010, %v4986
    %v5012 = vsel %vm4925, %v4187, %v5009
    %v5013 = vsel %vm4925, 0, %v5011
    %v5014 = vcosq.f32.pop %v5012
    %v5015 = vsinq.f32.pop %v5012
    %vm5016 = vweird.f32 %v4187
    %v5017 = vadd.s32 %v5013, 3
    %v5018 = vand.u32 %v5017, 3
    %vm5019 = vcmp.lt.s32.totalorder %v5018, 2
    %vm5020 = vcmp.eq.s32.totalorder %v5018, 0
    %v5021 = vxor.u32 %v5015, 2147483648
    %v5022 = vsel %vm5020, %v5014, %v5021
    %vm5023 = vcmp.eq.s32.totalorder %v5018, 2
    %v5024 = vxor.u32 %v5014, 2147483648
    %v5025 = vsel %vm5023, %v5024, %v5015
    %v5026 = vsel %vm5019, %v5022, %v5025
    %v5027 = vsel %vm5016, nan, %v5026
    %v5028 = vand.u32 2147483647, %v4188
    %vm5029 = vcmp.le.f32.partialorder %v5028, 0.7853982
    %vm5030 = vcmp.lt.s32.totalorder %v4188, 0
    %v5031 = vand.u32 %v4188, 2139095040
    %v5032 = vshrl.u32 %v5031, 23
    %v5033 = vsub.s32 %v5032, 127
    %v5034 = vand.u32 2147483647, %v4188
    %v5035 = vand.u32 %v5034, 8388607
    %v5036 = vor.u32 %v5035, 8388608
    %v5037 = vsub.s32 0, %v5036
    %v5038 = vadd.s32 %v5033, 1
    %vm5039 = vcmp.gt.s32.totalorder %v5038, 0
    %v5040 = vsel %vm5039, %v5038, 0
    %v5041 = vshrl.u32 %v5040, 5
    %v5042 = vand.u32 %v5040, 31
    %v5043 = vsub.s32 32, %v5042
    %v5044 = vshrl.u32 683565275, %v5043
    %v5045 = vshll.u32 683565275, %v5042
    %v5046 = vshrl.u32 2475754826, %v5043
    %v5047 = vor.u32 %v5045, %v5046
    %v5048 = vshll.u32 2475754826, %v5042
    %v5049 = vshrl.u32 2131351028, %v5043
    %v5050 = vor.u32 %v5048, %v5049
    %v5051 = vshll.u32 2131351028, %v5042
    %v5052 = vshrl.u32 2102212464, %v5043
    %v5053 = vor.u32 %v5051, %v5052
    %v5054 = vshll.u32 2102212464, %v5042
    %v5055 = vshrl.u32 920167782, %v5043
    %v5056 = vor.u32 %v5054, %v5055
    %v5057 = vshll.u32 920167782, %v5042
    %v5058 = vshrl.u32 1326507024, %v5043
    %v5059 = vor.u32 %v5057, %v5058
    %vm5060 = vcmp.lt.s32.totalorder %v5041, 1
    %vm5061 = vcmp.lt.s32.totalorder %v5041, 2
    %vm5062 = vcmp.lt.s32.totalorder %v5041, 3
    %vm5063 = vcmp.lt.s32.totalorder %v5041, 4
    %v5064 = vsel %vm5060, %v5044, %v5047
    %v5065 = vsel %vm5063, %v5053, 2102212464
    %v5066 = vsel %vm5062, %v5050, %v5065
    %v5067 = vsel %vm5061, %v5064, %v5066
    %v5068 = vsel %vm5060, %v5047, %v5050
    %v5069 = vsel %vm5063, %v5056, 920167782
    %v5070 = vsel %vm5062, %v5053, %v5069
    %v5071 = vsel %vm5061, %v5068, %v5070
    %v5072 = vsel %vm5060, %v5050, %v5053
    %v5073 = vsel %vm5063, %v5059, 1326507024
    %v5074 = vsel %vm5062, %v5056, %v5073
    %v5075 = vsel %vm5061, %v5072, %v5074
    %v5076 = vshll.u32 %v5036, 8
    %v5077 = vmul.u32.u64.compose %v5076, %v5075
    %v5078 = vextract.low.u32 %v5077
    %v5079 = vextract.high.u32 %v5077
    %v5080 = vmul.u32.u64.compose %v5076, %v5071
    %v5081 = vextract.low.u32 %v5080
    %v5082 = vextract.high.u32 %v5080
    %v5083 = vmul.u32 %v5076, %v5067
    %v5084 = vadd.s32 %v5079, %v5081
    %vm5085 = vc.u32 %v5079, %v5081
    %v5086 = vadd.s32 %v5082, 1
    %v5087 = vsel %vm5085, %v5086, %v5082
    %v5088 = vadd.s32 %v5083, %v5087
    %v5089 = vadd.s32 %v5088, 536870912
    %v5090 = vshrl.u32 %v5089, 30
    %v5091 = vshll.u32 %v5090, 30
    %v5092 = vsub.s32 %v5088, %v5091
    %vm5093 = vcmp.lt.s32.totalorder %v5092, 0
    %v5094 = vsub.s32 0, %v5092
    %v5095 = vsel %vm5093, %v5094, %v5092
    %v5096 = vclz %v5095
    %v5097 = vsub.s32 %v5096, 2
    %vm5098 = vcmp.gt.s32.totalorder 0, %v5097
    %v5099 = vsel %vm5098, 0, %v5097
    %v5100 = vsub.s32 32, %v5099
    %v5101 = vshll.u32 %v5092, %v5099
    %v5102 = vshrl.u32 %v5084, %v5100
    %v5103 = vor.u32 %v5101, %v5102
    %v5104 = vsub.s32 4294967266, %v5099
    %v5105 = vadd.s32 %v5104, 127
    %v5106 = vshll.u32 %v5105, 23
    %v5107 = vor.u32 4788187, %v5106
    %v5108 = vand.u32 2147483647, %v5107
    %v5110 = vcvt.s32.f32 %v5103
    %v5111 = vmul.f32 %v5110, %v5108
    %v5112 = vxor.u32 %v5111, 2147483648
    %v5113 = vsel %vm5030, %v5112, %v5111
    %v5114 = vsub.s32 4, %v5090
    %v5115 = vsel %vm5030, %v5114, %v5090
    %v5116 = vsel %vm5029, %v4188, %v5113
    %v5117 = vsel %vm5029, 0, %v5115
    %v5118 = vcosq.f32.pop %v5116
    %v5119 = vsinq.f32.pop %v5116
    %vm5120 = vweird.f32 %v4188
    %v5121 = vadd.s32 %v5117, 3
    %v5122 = vand.u32 %v5121, 3
    %vm5123 = vcmp.lt.s32.totalorder %v5122, 2
    %vm5124 = vcmp.eq.s32.totalorder %v5122, 0
    %v5125 = vxor.u32 %v5119, 2147483648
    %v5126 = vsel %vm5124, %v5118, %v5125
    %vm5127 = vcmp.eq.s32.totalorder %v5122, 2
    %v5128 = vxor.u32 %v5118, 2147483648
    %v5129 = vsel %vm5127, %v5128, %v5119
    %v5130 = vsel %vm5123, %v5126, %v5129
    %v5131 = vsel %vm5120, nan, %v5130
    %v5132 = vand.u32 2147483647, %v4189
    %vm5133 = vcmp.le.f32.partialorder %v5132, 0.7853982
    %vm5134 = vcmp.lt.s32.totalorder %v4189, 0
    %v5135 = vand.u32 %v4189, 2139095040
    %v5136 = vshrl.u32 %v5135, 23
    %v5137 = vsub.s32 %v5136, 127
    %v5138 = vand.u32 2147483647, %v4189
    %v5139 = vand.u32 %v5138, 8388607
    %v5140 = vor.u32 %v5139, 8388608
    %v5141 = vsub.s32 0, %v5140
    %v5142 = vadd.s32 %v5137, 1
    %vm5143 = vcmp.gt.s32.totalorder %v5142, 0
    %v5144 = vsel %vm5143, %v5142, 0
    %v5145 = vshrl.u32 %v5144, 5
    %v5146 = vand.u32 %v5144, 31
    %v5147 = vsub.s32 32, %v5146
    %v5148 = vshrl.u32 683565275, %v5147
    %v5149 = vshll.u32 683565275, %v5146
    %v5150 = vshrl.u32 2475754826, %v5147
    %v5151 = vor.u32 %v5149, %v5150
    %v5152 = vshll.u32 2475754826, %v5146
    %v5153 = vshrl.u32 2131351028, %v5147
    %v5154 = vor.u32 %v5152, %v5153
    %v5155 = vshll.u32 2131351028, %v5146
    %v5156 = vshrl.u32 2102212464, %v5147
    %v5157 = vor.u32 %v5155, %v5156
    %v5158 = vshll.u32 2102212464, %v5146
    %v5159 = vshrl.u32 920167782, %v5147
    %v5160 = vor.u32 %v5158, %v5159
    %v5161 = vshll.u32 920167782, %v5146
    %v5162 = vshrl.u32 1326507024, %v5147
    %v5163 = vor.u32 %v5161, %v5162
    %vm5164 = vcmp.lt.s32.totalorder %v5145, 1
    %vm5165 = vcmp.lt.s32.totalorder %v5145, 2
    %vm5166 = vcmp.lt.s32.totalorder %v5145, 3
    %vm5167 = vcmp.lt.s32.totalorder %v5145, 4
    %v5168 = vsel %vm5164, %v5148, %v5151
    %v5169 = vsel %vm5167, %v5157, 2102212464
    %v5170 = vsel %vm5166, %v5154, %v5169
    %v5171 = vsel %vm5165, %v5168, %v5170
    %v5172 = vsel %vm5164, %v5151, %v5154
    %v5173 = vsel %vm5167, %v5160, 920167782
    %v5174 = vsel %vm5166, %v5157, %v5173
    %v5175 = vsel %vm5165, %v5172, %v5174
    %v5176 = vsel %vm5164, %v5154, %v5157
    %v5177 = vsel %vm5167, %v5163, 1326507024
    %v5178 = vsel %vm5166, %v5160, %v5177
    %v5179 = vsel %vm5165, %v5176, %v5178
    %v5180 = vshll.u32 %v5140, 8
    %v5181 = vmul.u32.u64.compose %v5180, %v5179
    %v5182 = vextract.low.u32 %v5181
    %v5183 = vextract.high.u32 %v5181
    %v5184 = vmul.u32.u64.compose %v5180, %v5175
    %v5185 = vextract.low.u32 %v5184
    %v5186 = vextract.high.u32 %v5184
    %v5187 = vmul.u32 %v5180, %v5171
    %v5188 = vadd.s32 %v5183, %v5185
    %vm5189 = vc.u32 %v5183, %v5185
    %v5190 = vadd.s32 %v5186, 1
    %v5191 = vsel %vm5189, %v5190, %v5186
    %v5192 = vadd.s32 %v5187, %v5191
    %v5193 = vadd.s32 %v5192, 536870912
    %v5194 = vshrl.u32 %v5193, 30
    %v5195 = vshll.u32 %v5194, 30
    %v5196 = vsub.s32 %v5192, %v5195
    %vm5197 = vcmp.lt.s32.totalorder %v5196, 0
    %v5198 = vsub.s32 0, %v5196
    %v5199 = vsel %vm5197, %v5198, %v5196
    %v5200 = vclz %v5199
    %v5201 = vsub.s32 %v5200, 2
    %vm5202 = vcmp.gt.s32.totalorder 0, %v5201
    %v5203 = vsel %vm5202, 0, %v5201
    %v5204 = vsub.s32 32, %v5203
    %v5205 = vshll.u32 %v5196, %v5203
    %v5206 = vshrl.u32 %v5188, %v5204
    %v5207 = vor.u32 %v5205, %v5206
    %v5208 = vsub.s32 4294967266, %v5203
    %v5209 = vadd.s32 %v5208, 127
    %v5210 = vshll.u32 %v5209, 23
    %v5211 = vor.u32 4788187, %v5210
    %v5212 = vand.u32 2147483647, %v5211
    %v5214 = vcvt.s32.f32 %v5207
    %v5215 = vmul.f32 %v5214, %v5212
    %v5216 = vxor.u32 %v5215, 2147483648
    %v5217 = vsel %vm5134, %v5216, %v5215
    %v5218 = vsub.s32 4, %v5194
    %v5219 = vsel %vm5134, %v5218, %v5194
    %v5220 = vsel %vm5133, %v4189, %v5217
    %v5221 = vsel %vm5133, 0, %v5219
    %v5222 = vcosq.f32.pop %v5220
    %v5223 = vsinq.f32.pop %v5220
    %vm5224 = vweird.f32 %v4189
    %v5225 = vadd.s32 %v5221, 3
    %v5226 = vand.u32 %v5225, 3
    %vm5227 = vcmp.lt.s32.totalorder %v5226, 2
    %vm5228 = vcmp.eq.s32.totalorder %v5226, 0
    %v5229 = vxor.u32 %v5223, 2147483648
    %v5230 = vsel %vm5228, %v5222, %v5229
    %vm5231 = vcmp.eq.s32.totalorder %v5226, 2
    %v5232 = vxor.u32 %v5222, 2147483648
    %v5233 = vsel %vm5231, %v5232, %v5223
    %v5234 = vsel %vm5227, %v5230, %v5233
    %v5235 = vsel %vm5224, nan, %v5234
    %v5236 = vand.u32 2147483647, %v4190
    %vm5237 = vcmp.le.f32.partialorder %v5236, 0.7853982
    %vm5238 = vcmp.lt.s32.totalorder %v4190, 0
    %v5239 = vand.u32 %v4190, 2139095040
    %v5240 = vshrl.u32 %v5239, 23
    %v5241 = vsub.s32 %v5240, 127
    %v5242 = vand.u32 2147483647, %v4190
    %v5243 = vand.u32 %v5242, 8388607
    %v5244 = vor.u32 %v5243, 8388608
    %v5245 = vsub.s32 0, %v5244
    %v5246 = vadd.s32 %v5241, 1
    %vm5247 = vcmp.gt.s32.totalorder %v5246, 0
    %v5248 = vsel %vm5247, %v5246, 0
    %v5249 = vshrl.u32 %v5248, 5
    %v5250 = vand.u32 %v5248, 31
    %v5251 = vsub.s32 32, %v5250
    %v5252 = vshrl.u32 683565275, %v5251
    %v5253 = vshll.u32 683565275, %v5250
    %v5254 = vshrl.u32 2475754826, %v5251
    %v5255 = vor.u32 %v5253, %v5254
    %v5256 = vshll.u32 2475754826, %v5250
    %v5257 = vshrl.u32 2131351028, %v5251
    %v5258 = vor.u32 %v5256, %v5257
    %v5259 = vshll.u32 2131351028, %v5250
    %v5260 = vshrl.u32 2102212464, %v5251
    %v5261 = vor.u32 %v5259, %v5260
    %v5262 = vshll.u32 2102212464, %v5250
    %v5263 = vshrl.u32 920167782, %v5251
    %v5264 = vor.u32 %v5262, %v5263
    %v5265 = vshll.u32 920167782, %v5250
    %v5266 = vshrl.u32 1326507024, %v5251
    %v5267 = vor.u32 %v5265, %v5266
    %vm5268 = vcmp.lt.s32.totalorder %v5249, 1
    %vm5269 = vcmp.lt.s32.totalorder %v5249, 2
    %vm5270 = vcmp.lt.s32.totalorder %v5249, 3
    %vm5271 = vcmp.lt.s32.totalorder %v5249, 4
    %v5272 = vsel %vm5268, %v5252, %v5255
    %v5273 = vsel %vm5271, %v5261, 2102212464
    %v5274 = vsel %vm5270, %v5258, %v5273
    %v5275 = vsel %vm5269, %v5272, %v5274
    %v5276 = vsel %vm5268, %v5255, %v5258
    %v5277 = vsel %vm5271, %v5264, 920167782
    %v5278 = vsel %vm5270, %v5261, %v5277
    %v5279 = vsel %vm5269, %v5276, %v5278
    %v5280 = vsel %vm5268, %v5258, %v5261
    %v5281 = vsel %vm5271, %v5267, 1326507024
    %v5282 = vsel %vm5270, %v5264, %v5281
    %v5283 = vsel %vm5269, %v5280, %v5282
    %v5284 = vshll.u32 %v5244, 8
    %v5285 = vmul.u32.u64.compose %v5284, %v5283
    %v5286 = vextract.low.u32 %v5285
    %v5287 = vextract.high.u32 %v5285
    %v5288 = vmul.u32.u64.compose %v5284, %v5279
    %v5289 = vextract.low.u32 %v5288
    %v5290 = vextract.high.u32 %v5288
    %v5291 = vmul.u32 %v5284, %v5275
    %v5292 = vadd.s32 %v5287, %v5289
    %vm5293 = vc.u32 %v5287, %v5289
    %v5294 = vadd.s32 %v5290, 1
    %v5295 = vsel %vm5293, %v5294, %v5290
    %v5296 = vadd.s32 %v5291, %v5295
    %v5297 = vadd.s32 %v5296, 536870912
    %v5298 = vshrl.u32 %v5297, 30
    %v5299 = vshll.u32 %v5298, 30
    %v5300 = vsub.s32 %v5296, %v5299
    %vm5301 = vcmp.lt.s32.totalorder %v5300, 0
    %v5302 = vsub.s32 0, %v5300
    %v5303 = vsel %vm5301, %v5302, %v5300
    %v5304 = vclz %v5303
    %v5305 = vsub.s32 %v5304, 2
    %vm5306 = vcmp.gt.s32.totalorder 0, %v5305
    %v5307 = vsel %vm5306, 0, %v5305
    %v5308 = vsub.s32 32, %v5307
    %v5309 = vshll.u32 %v5300, %v5307
    %v5310 = vshrl.u32 %v5292, %v5308
    %v5311 = vor.u32 %v5309, %v5310
    %v5312 = vsub.s32 4294967266, %v5307
    %v5313 = vadd.s32 %v5312, 127
    %v5314 = vshll.u32 %v5313, 23
    %v5315 = vor.u32 4788187, %v5314
    %v5316 = vand.u32 2147483647, %v5315
    %v5318 = vcvt.s32.f32 %v5311
    %v5319 = vmul.f32 %v5318, %v5316
    %v5320 = vxor.u32 %v5319, 2147483648
    %v5321 = vsel %vm5238, %v5320, %v5319
    %v5322 = vsub.s32 4, %v5298
    %v5323 = vsel %vm5238, %v5322, %v5298
    %v5324 = vsel %vm5237, %v4190, %v5321
    %v5325 = vsel %vm5237, 0, %v5323
    %v5326 = vcosq.f32.pop %v5324
    %v5327 = vsinq.f32.pop %v5324
    %vm5328 = vweird.f32 %v4190
    %v5329 = vadd.s32 %v5325, 3
    %v5330 = vand.u32 %v5329, 3
    %vm5331 = vcmp.lt.s32.totalorder %v5330, 2
    %vm5332 = vcmp.eq.s32.totalorder %v5330, 0
    %v5333 = vxor.u32 %v5327, 2147483648
    %v5334 = vsel %vm5332, %v5326, %v5333
    %vm5335 = vcmp.eq.s32.totalorder %v5330, 2
    %v5336 = vxor.u32 %v5326, 2147483648
    %v5337 = vsel %vm5335, %v5336, %v5327
    %v5338 = vsel %vm5331, %v5334, %v5337
    %v5339 = vsel %vm5328, nan, %v5338
    %v5340 = vand.u32 2147483647, %v4191
    %vm5341 = vcmp.le.f32.partialorder %v5340, 0.7853982
    %vm5342 = vcmp.lt.s32.totalorder %v4191, 0
    %v5343 = vand.u32 %v4191, 2139095040
    %v5344 = vshrl.u32 %v5343, 23
    %v5345 = vsub.s32 %v5344, 127
    %v5346 = vand.u32 2147483647, %v4191
    %v5347 = vand.u32 %v5346, 8388607
    %v5348 = vor.u32 %v5347, 8388608
    %v5349 = vsub.s32 0, %v5348
    %v5350 = vadd.s32 %v5345, 1
    %vm5351 = vcmp.gt.s32.totalorder %v5350, 0
    %v5352 = vsel %vm5351, %v5350, 0
    %v5353 = vshrl.u32 %v5352, 5
    %v5354 = vand.u32 %v5352, 31
    %v5355 = vsub.s32 32, %v5354
    %v5356 = vshrl.u32 683565275, %v5355
    %v5357 = vshll.u32 683565275, %v5354
    %v5358 = vshrl.u32 2475754826, %v5355
    %v5359 = vor.u32 %v5357, %v5358
    %v5360 = vshll.u32 2475754826, %v5354
    %v5361 = vshrl.u32 2131351028, %v5355
    %v5362 = vor.u32 %v5360, %v5361
    %v5363 = vshll.u32 2131351028, %v5354
    %v5364 = vshrl.u32 2102212464, %v5355
    %v5365 = vor.u32 %v5363, %v5364
    %v5366 = vshll.u32 2102212464, %v5354
    %v5367 = vshrl.u32 920167782, %v5355
    %v5368 = vor.u32 %v5366, %v5367
    %v5369 = vshll.u32 920167782, %v5354
    %v5370 = vshrl.u32 1326507024, %v5355
    %v5371 = vor.u32 %v5369, %v5370
    %vm5372 = vcmp.lt.s32.totalorder %v5353, 1
    %vm5373 = vcmp.lt.s32.totalorder %v5353, 2
    %vm5374 = vcmp.lt.s32.totalorder %v5353, 3
    %vm5375 = vcmp.lt.s32.totalorder %v5353, 4
    %v5376 = vsel %vm5372, %v5356, %v5359
    %v5377 = vsel %vm5375, %v5365, 2102212464
    %v5378 = vsel %vm5374, %v5362, %v5377
    %v5379 = vsel %vm5373, %v5376, %v5378
    %v5380 = vsel %vm5372, %v5359, %v5362
    %v5381 = vsel %vm5375, %v5368, 920167782
    %v5382 = vsel %vm5374, %v5365, %v5381
    %v5383 = vsel %vm5373, %v5380, %v5382
    %v5384 = vsel %vm5372, %v5362, %v5365
    %v5385 = vsel %vm5375, %v5371, 1326507024
    %v5386 = vsel %vm5374, %v5368, %v5385
    %v5387 = vsel %vm5373, %v5384, %v5386
    %v5388 = vshll.u32 %v5348, 8
    %v5389 = vmul.u32.u64.compose %v5388, %v5387
    %v5390 = vextract.low.u32 %v5389
    %v5391 = vextract.high.u32 %v5389
    %v5392 = vmul.u32.u64.compose %v5388, %v5383
    %v5393 = vextract.low.u32 %v5392
    %v5394 = vextract.high.u32 %v5392
    %v5395 = vmul.u32 %v5388, %v5379
    %v5396 = vadd.s32 %v5391, %v5393
    %vm5397 = vc.u32 %v5391, %v5393
    %v5398 = vadd.s32 %v5394, 1
    %v5399 = vsel %vm5397, %v5398, %v5394
    %v5400 = vadd.s32 %v5395, %v5399
    %v5401 = vadd.s32 %v5400, 536870912
    %v5402 = vshrl.u32 %v5401, 30
    %v5403 = vshll.u32 %v5402, 30
    %v5404 = vsub.s32 %v5400, %v5403
    %vm5405 = vcmp.lt.s32.totalorder %v5404, 0
    %v5406 = vsub.s32 0, %v5404
    %v5407 = vsel %vm5405, %v5406, %v5404
    %v5408 = vclz %v5407
    %v5409 = vsub.s32 %v5408, 2
    %vm5410 = vcmp.gt.s32.totalorder 0, %v5409
    %v5411 = vsel %vm5410, 0, %v5409
    %v5412 = vsub.s32 32, %v5411
    %v5413 = vshll.u32 %v5404, %v5411
    %v5414 = vshrl.u32 %v5396, %v5412
    %v5415 = vor.u32 %v5413, %v5414
    %v5416 = vsub.s32 4294967266, %v5411
    %v5417 = vadd.s32 %v5416, 127
    %v5418 = vshll.u32 %v5417, 23
    %v5419 = vor.u32 4788187, %v5418
    %v5420 = vand.u32 2147483647, %v5419
    %v5422 = vcvt.s32.f32 %v5415
    %v5423 = vmul.f32 %v5422, %v5420
    %v5424 = vxor.u32 %v5423, 2147483648
    %v5425 = vsel %vm5342, %v5424, %v5423
    %v5426 = vsub.s32 4, %v5402
    %v5427 = vsel %vm5342, %v5426, %v5402
    %v5428 = vsel %vm5341, %v4191, %v5425
    %v5429 = vsel %vm5341, 0, %v5427
    %v5430 = vcosq.f32.pop %v5428
    %v5431 = vsinq.f32.pop %v5428
    %vm5432 = vweird.f32 %v4191
    %v5433 = vadd.s32 %v5429, 3
    %v5434 = vand.u32 %v5433, 3
    %vm5435 = vcmp.lt.s32.totalorder %v5434, 2
    %vm5436 = vcmp.eq.s32.totalorder %v5434, 0
    %v5437 = vxor.u32 %v5431, 2147483648
    %v5438 = vsel %vm5436, %v5430, %v5437
    %vm5439 = vcmp.eq.s32.totalorder %v5434, 2
    %v5440 = vxor.u32 %v5430, 2147483648
    %v5441 = vsel %vm5439, %v5440, %v5431
    %v5442 = vsel %vm5435, %v5438, %v5441
    %v5443 = vsel %vm5432, nan, %v5442
    %v5444 = vand.u32 2147483647, %v4192
    %vm5445 = vcmp.le.f32.partialorder %v5444, 0.7853982
    %vm5446 = vcmp.lt.s32.totalorder %v4192, 0
    %v5447 = vand.u32 %v4192, 2139095040
    %v5448 = vshrl.u32 %v5447, 23
    %v5449 = vsub.s32 %v5448, 127
    %v5450 = vand.u32 2147483647, %v4192
    %v5451 = vand.u32 %v5450, 8388607
    %v5452 = vor.u32 %v5451, 8388608
    %v5453 = vsub.s32 0, %v5452
    %v5454 = vadd.s32 %v5449, 1
    %vm5455 = vcmp.gt.s32.totalorder %v5454, 0
    %v5456 = vsel %vm5455, %v5454, 0
    %v5457 = vshrl.u32 %v5456, 5
    %v5458 = vand.u32 %v5456, 31
    %v5459 = vsub.s32 32, %v5458
    %v5460 = vshrl.u32 683565275, %v5459
    %v5461 = vshll.u32 683565275, %v5458
    %v5462 = vshrl.u32 2475754826, %v5459
    %v5463 = vor.u32 %v5461, %v5462
    %v5464 = vshll.u32 2475754826, %v5458
    %v5465 = vshrl.u32 2131351028, %v5459
    %v5466 = vor.u32 %v5464, %v5465
    %v5467 = vshll.u32 2131351028, %v5458
    %v5468 = vshrl.u32 2102212464, %v5459
    %v5469 = vor.u32 %v5467, %v5468
    %v5470 = vshll.u32 2102212464, %v5458
    %v5471 = vshrl.u32 920167782, %v5459
    %v5472 = vor.u32 %v5470, %v5471
    %v5473 = vshll.u32 920167782, %v5458
    %v5474 = vshrl.u32 1326507024, %v5459
    %v5475 = vor.u32 %v5473, %v5474
    %vm5476 = vcmp.lt.s32.totalorder %v5457, 1
    %vm5477 = vcmp.lt.s32.totalorder %v5457, 2
    %vm5478 = vcmp.lt.s32.totalorder %v5457, 3
    %vm5479 = vcmp.lt.s32.totalorder %v5457, 4
    %v5480 = vsel %vm5476, %v5460, %v5463
    %v5481 = vsel %vm5479, %v5469, 2102212464
    %v5482 = vsel %vm5478, %v5466, %v5481
    %v5483 = vsel %vm5477, %v5480, %v5482
    %v5484 = vsel %vm5476, %v5463, %v5466
    %v5485 = vsel %vm5479, %v5472, 920167782
    %v5486 = vsel %vm5478, %v5469, %v5485
    %v5487 = vsel %vm5477, %v5484, %v5486
    %v5488 = vsel %vm5476, %v5466, %v5469
    %v5489 = vsel %vm5479, %v5475, 1326507024
    %v5490 = vsel %vm5478, %v5472, %v5489
    %v5491 = vsel %vm5477, %v5488, %v5490
    %v5492 = vshll.u32 %v5452, 8
    %v5493 = vmul.u32.u64.compose %v5492, %v5491
    %v5494 = vextract.low.u32 %v5493
    %v5495 = vextract.high.u32 %v5493
    %v5496 = vmul.u32.u64.compose %v5492, %v5487
    %v5497 = vextract.low.u32 %v5496
    %v5498 = vextract.high.u32 %v5496
    %v5499 = vmul.u32 %v5492, %v5483
    %v5500 = vadd.s32 %v5495, %v5497
    %vm5501 = vc.u32 %v5495, %v5497
    %v5502 = vadd.s32 %v5498, 1
    %v5503 = vsel %vm5501, %v5502, %v5498
    %v5504 = vadd.s32 %v5499, %v5503
    %v5505 = vadd.s32 %v5504, 536870912
    %v5506 = vshrl.u32 %v5505, 30
    %v5507 = vshll.u32 %v5506, 30
    %v5508 = vsub.s32 %v5504, %v5507
    %vm5509 = vcmp.lt.s32.totalorder %v5508, 0
    %v5510 = vsub.s32 0, %v5508
    %v5511 = vsel %vm5509, %v5510, %v5508
    %v5512 = vclz %v5511
    %v5513 = vsub.s32 %v5512, 2
    %vm5514 = vcmp.gt.s32.totalorder 0, %v5513
    %v5515 = vsel %vm5514, 0, %v5513
    %v5516 = vsub.s32 32, %v5515
    %v5517 = vshll.u32 %v5508, %v5515
    %v5518 = vshrl.u32 %v5500, %v5516
    %v5519 = vor.u32 %v5517, %v5518
    %v5520 = vsub.s32 4294967266, %v5515
    %v5521 = vadd.s32 %v5520, 127
    %v5522 = vshll.u32 %v5521, 23
    %v5523 = vor.u32 4788187, %v5522
    %v5524 = vand.u32 2147483647, %v5523
    %v5526 = vcvt.s32.f32 %v5519
    %v5527 = vmul.f32 %v5526, %v5524
    %v5528 = vxor.u32 %v5527, 2147483648
    %v5529 = vsel %vm5446, %v5528, %v5527
    %v5530 = vsub.s32 4, %v5506
    %v5531 = vsel %vm5446, %v5530, %v5506
    %v5532 = vsel %vm5445, %v4192, %v5529
    %v5533 = vsel %vm5445, 0, %v5531
    %v5534 = vcosq.f32.pop %v5532
    %v5535 = vsinq.f32.pop %v5532
    %vm5536 = vweird.f32 %v4192
    %v5537 = vadd.s32 %v5533, 3
    %v5538 = vand.u32 %v5537, 3
    %vm5539 = vcmp.lt.s32.totalorder %v5538, 2
    %vm5540 = vcmp.eq.s32.totalorder %v5538, 0
    %v5541 = vxor.u32 %v5535, 2147483648
    %v5542 = vsel %vm5540, %v5534, %v5541
    %vm5543 = vcmp.eq.s32.totalorder %v5538, 2
    %v5544 = vxor.u32 %v5534, 2147483648
    %v5545 = vsel %vm5543, %v5544, %v5535
    %v5546 = vsel %vm5539, %v5542, %v5545
    %v5547 = vsel %vm5536, nan, %v5546
    %v5548 = vand.u32 2147483647, %v4193
    %vm5549 = vcmp.le.f32.partialorder %v5548, 0.7853982
    %vm5550 = vcmp.lt.s32.totalorder %v4193, 0
    %v5551 = vand.u32 %v4193, 2139095040
    %v5552 = vshrl.u32 %v5551, 23
    %v5553 = vsub.s32 %v5552, 127
    %v5554 = vand.u32 2147483647, %v4193
    %v5555 = vand.u32 %v5554, 8388607
    %v5556 = vor.u32 %v5555, 8388608
    %v5557 = vsub.s32 0, %v5556
    %v5558 = vadd.s32 %v5553, 1
    %vm5559 = vcmp.gt.s32.totalorder %v5558, 0
    %v5560 = vsel %vm5559, %v5558, 0
    %v5561 = vshrl.u32 %v5560, 5
    %v5562 = vand.u32 %v5560, 31
    %v5563 = vsub.s32 32, %v5562
    %v5564 = vshrl.u32 683565275, %v5563
    %v5565 = vshll.u32 683565275, %v5562
    %v5566 = vshrl.u32 2475754826, %v5563
    %v5567 = vor.u32 %v5565, %v5566
    %v5568 = vshll.u32 2475754826, %v5562
    %v5569 = vshrl.u32 2131351028, %v5563
    %v5570 = vor.u32 %v5568, %v5569
    %v5571 = vshll.u32 2131351028, %v5562
    %v5572 = vshrl.u32 2102212464, %v5563
    %v5573 = vor.u32 %v5571, %v5572
    %v5574 = vshll.u32 2102212464, %v5562
    %v5575 = vshrl.u32 920167782, %v5563
    %v5576 = vor.u32 %v5574, %v5575
    %v5577 = vshll.u32 920167782, %v5562
    %v5578 = vshrl.u32 1326507024, %v5563
    %v5579 = vor.u32 %v5577, %v5578
    %vm5580 = vcmp.lt.s32.totalorder %v5561, 1
    %vm5581 = vcmp.lt.s32.totalorder %v5561, 2
    %vm5582 = vcmp.lt.s32.totalorder %v5561, 3
    %vm5583 = vcmp.lt.s32.totalorder %v5561, 4
    %v5584 = vsel %vm5580, %v5564, %v5567
    %v5585 = vsel %vm5583, %v5573, 2102212464
    %v5586 = vsel %vm5582, %v5570, %v5585
    %v5587 = vsel %vm5581, %v5584, %v5586
    %v5588 = vsel %vm5580, %v5567, %v5570
    %v5589 = vsel %vm5583, %v5576, 920167782
    %v5590 = vsel %vm5582, %v5573, %v5589
    %v5591 = vsel %vm5581, %v5588, %v5590
    %v5592 = vsel %vm5580, %v5570, %v5573
    %v5593 = vsel %vm5583, %v5579, 1326507024
    %v5594 = vsel %vm5582, %v5576, %v5593
    %v5595 = vsel %vm5581, %v5592, %v5594
    %v5596 = vshll.u32 %v5556, 8
    %v5597 = vmul.u32.u64.compose %v5596, %v5595
    %v5598 = vextract.low.u32 %v5597
    %v5599 = vextract.high.u32 %v5597
    %v5600 = vmul.u32.u64.compose %v5596, %v5591
    %v5601 = vextract.low.u32 %v5600
    %v5602 = vextract.high.u32 %v5600
    %v5603 = vmul.u32 %v5596, %v5587
    %v5604 = vadd.s32 %v5599, %v5601
    %vm5605 = vc.u32 %v5599, %v5601
    %v5606 = vadd.s32 %v5602, 1
    %v5607 = vsel %vm5605, %v5606, %v5602
    %v5608 = vadd.s32 %v5603, %v5607
    %v5609 = vadd.s32 %v5608, 536870912
    %v5610 = vshrl.u32 %v5609, 30
    %v5611 = vshll.u32 %v5610, 30
    %v5612 = vsub.s32 %v5608, %v5611
    %vm5613 = vcmp.lt.s32.totalorder %v5612, 0
    %v5614 = vsub.s32 0, %v5612
    %v5615 = vsel %vm5613, %v5614, %v5612
    %v5616 = vclz %v5615
    %v5617 = vsub.s32 %v5616, 2
    %vm5618 = vcmp.gt.s32.totalorder 0, %v5617
    %v5619 = vsel %vm5618, 0, %v5617
    %v5620 = vsub.s32 32, %v5619
    %v5621 = vshll.u32 %v5612, %v5619
    %v5622 = vshrl.u32 %v5604, %v5620
    %v5623 = vor.u32 %v5621, %v5622
    %v5624 = vsub.s32 4294967266, %v5619
    %v5625 = vadd.s32 %v5624, 127
    %v5626 = vshll.u32 %v5625, 23
    %v5627 = vor.u32 4788187, %v5626
    %v5628 = vand.u32 2147483647, %v5627
    %v5630 = vcvt.s32.f32 %v5623
    %v5631 = vmul.f32 %v5630, %v5628
    %v5632 = vxor.u32 %v5631, 2147483648
    %v5633 = vsel %vm5550, %v5632, %v5631
    %v5634 = vsub.s32 4, %v5610
    %v5635 = vsel %vm5550, %v5634, %v5610
    %v5636 = vsel %vm5549, %v4193, %v5633
    %v5637 = vsel %vm5549, 0, %v5635
    %v5638 = vcosq.f32.pop %v5636
    %v5639 = vsinq.f32.pop %v5636
    %vm5640 = vweird.f32 %v4193
    %v5641 = vadd.s32 %v5637, 3
    %v5642 = vand.u32 %v5641, 3
    %vm5643 = vcmp.lt.s32.totalorder %v5642, 2
    %vm5644 = vcmp.eq.s32.totalorder %v5642, 0
    %v5645 = vxor.u32 %v5639, 2147483648
    %v5646 = vsel %vm5644, %v5638, %v5645
    %vm5647 = vcmp.eq.s32.totalorder %v5642, 2
    %v5648 = vxor.u32 %v5638, 2147483648
    %v5649 = vsel %vm5647, %v5648, %v5639
    %v5650 = vsel %vm5643, %v5646, %v5649
    %v5651 = vsel %vm5640, nan, %v5650
    %v5652 = vand.u32 2147483647, %v4194
    %vm5653 = vcmp.le.f32.partialorder %v5652, 0.7853982
    %vm5654 = vcmp.lt.s32.totalorder %v4194, 0
    %v5655 = vand.u32 %v4194, 2139095040
    %v5656 = vshrl.u32 %v5655, 23
    %v5657 = vsub.s32 %v5656, 127
    %v5658 = vand.u32 2147483647, %v4194
    %v5659 = vand.u32 %v5658, 8388607
    %v5660 = vor.u32 %v5659, 8388608
    %v5661 = vsub.s32 0, %v5660
    %v5662 = vadd.s32 %v5657, 1
    %vm5663 = vcmp.gt.s32.totalorder %v5662, 0
    %v5664 = vsel %vm5663, %v5662, 0
    %v5665 = vshrl.u32 %v5664, 5
    %v5666 = vand.u32 %v5664, 31
    %v5667 = vsub.s32 32, %v5666
    %v5668 = vshrl.u32 683565275, %v5667
    %v5669 = vshll.u32 683565275, %v5666
    %v5670 = vshrl.u32 2475754826, %v5667
    %v5671 = vor.u32 %v5669, %v5670
    %v5672 = vshll.u32 2475754826, %v5666
    %v5673 = vshrl.u32 2131351028, %v5667
    %v5674 = vor.u32 %v5672, %v5673
    %v5675 = vshll.u32 2131351028, %v5666
    %v5676 = vshrl.u32 2102212464, %v5667
    %v5677 = vor.u32 %v5675, %v5676
    %v5678 = vshll.u32 2102212464, %v5666
    %v5679 = vshrl.u32 920167782, %v5667
    %v5680 = vor.u32 %v5678, %v5679
    %v5681 = vshll.u32 920167782, %v5666
    %v5682 = vshrl.u32 1326507024, %v5667
    %v5683 = vor.u32 %v5681, %v5682
    %vm5684 = vcmp.lt.s32.totalorder %v5665, 1
    %vm5685 = vcmp.lt.s32.totalorder %v5665, 2
    %vm5686 = vcmp.lt.s32.totalorder %v5665, 3
    %vm5687 = vcmp.lt.s32.totalorder %v5665, 4
    %v5688 = vsel %vm5684, %v5668, %v5671
    %v5689 = vsel %vm5687, %v5677, 2102212464
    %v5690 = vsel %vm5686, %v5674, %v5689
    %v5691 = vsel %vm5685, %v5688, %v5690
    %v5692 = vsel %vm5684, %v5671, %v5674
    %v5693 = vsel %vm5687, %v5680, 920167782
    %v5694 = vsel %vm5686, %v5677, %v5693
    %v5695 = vsel %vm5685, %v5692, %v5694
    %v5696 = vsel %vm5684, %v5674, %v5677
    %v5697 = vsel %vm5687, %v5683, 1326507024
    %v5698 = vsel %vm5686, %v5680, %v5697
    %v5699 = vsel %vm5685, %v5696, %v5698
    %v5700 = vshll.u32 %v5660, 8
    %v5701 = vmul.u32.u64.compose %v5700, %v5699
    %v5702 = vextract.low.u32 %v5701
    %v5703 = vextract.high.u32 %v5701
    %v5704 = vmul.u32.u64.compose %v5700, %v5695
    %v5705 = vextract.low.u32 %v5704
    %v5706 = vextract.high.u32 %v5704
    %v5707 = vmul.u32 %v5700, %v5691
    %v5708 = vadd.s32 %v5703, %v5705
    %vm5709 = vc.u32 %v5703, %v5705
    %v5710 = vadd.s32 %v5706, 1
    %v5711 = vsel %vm5709, %v5710, %v5706
    %v5712 = vadd.s32 %v5707, %v5711
    %v5713 = vadd.s32 %v5712, 536870912
    %v5714 = vshrl.u32 %v5713, 30
    %v5715 = vshll.u32 %v5714, 30
    %v5716 = vsub.s32 %v5712, %v5715
    %vm5717 = vcmp.lt.s32.totalorder %v5716, 0
    %v5718 = vsub.s32 0, %v5716
    %v5719 = vsel %vm5717, %v5718, %v5716
    %v5720 = vclz %v5719
    %v5721 = vsub.s32 %v5720, 2
    %vm5722 = vcmp.gt.s32.totalorder 0, %v5721
    %v5723 = vsel %vm5722, 0, %v5721
    %v5724 = vsub.s32 32, %v5723
    %v5725 = vshll.u32 %v5716, %v5723
    %v5726 = vshrl.u32 %v5708, %v5724
    %v5727 = vor.u32 %v5725, %v5726
    %v5728 = vsub.s32 4294967266, %v5723
    %v5729 = vadd.s32 %v5728, 127
    %v5730 = vshll.u32 %v5729, 23
    %v5731 = vor.u32 4788187, %v5730
    %v5732 = vand.u32 2147483647, %v5731
    %v5734 = vcvt.s32.f32 %v5727
    %v5735 = vmul.f32 %v5734, %v5732
    %v5736 = vxor.u32 %v5735, 2147483648
    %v5737 = vsel %vm5654, %v5736, %v5735
    %v5738 = vsub.s32 4, %v5714
    %v5739 = vsel %vm5654, %v5738, %v5714
    %v5740 = vsel %vm5653, %v4194, %v5737
    %v5741 = vsel %vm5653, 0, %v5739
    %v5742 = vcosq.f32.pop %v5740
    %v5743 = vsinq.f32.pop %v5740
    %vm5744 = vweird.f32 %v4194
    %v5745 = vadd.s32 %v5741, 3
    %v5746 = vand.u32 %v5745, 3
    %vm5747 = vcmp.lt.s32.totalorder %v5746, 2
    %vm5748 = vcmp.eq.s32.totalorder %v5746, 0
    %v5749 = vxor.u32 %v5743, 2147483648
    %v5750 = vsel %vm5748, %v5742, %v5749
    %vm5751 = vcmp.eq.s32.totalorder %v5746, 2
    %v5752 = vxor.u32 %v5742, 2147483648
    %v5753 = vsel %vm5751, %v5752, %v5743
    %v5754 = vsel %vm5747, %v5750, %v5753
    %v5755 = vsel %vm5744, nan, %v5754
    %v5756 = vand.u32 2147483647, %v4195
    %vm5757 = vcmp.le.f32.partialorder %v5756, 0.7853982
    %vm5758 = vcmp.lt.s32.totalorder %v4195, 0
    %v5759 = vand.u32 %v4195, 2139095040
    %v5760 = vshrl.u32 %v5759, 23
    %v5761 = vsub.s32 %v5760, 127
    %v5762 = vand.u32 2147483647, %v4195
    %v5763 = vand.u32 %v5762, 8388607
    %v5764 = vor.u32 %v5763, 8388608
    %v5765 = vsub.s32 0, %v5764
    %v5766 = vadd.s32 %v5761, 1
    %vm5767 = vcmp.gt.s32.totalorder %v5766, 0
    %v5768 = vsel %vm5767, %v5766, 0
    %v5769 = vshrl.u32 %v5768, 5
    %v5770 = vand.u32 %v5768, 31
    %v5771 = vsub.s32 32, %v5770
    %v5772 = vshrl.u32 683565275, %v5771
    %v5773 = vshll.u32 683565275, %v5770
    %v5774 = vshrl.u32 2475754826, %v5771
    %v5775 = vor.u32 %v5773, %v5774
    %v5776 = vshll.u32 2475754826, %v5770
    %v5777 = vshrl.u32 2131351028, %v5771
    %v5778 = vor.u32 %v5776, %v5777
    %v5779 = vshll.u32 2131351028, %v5770
    %v5780 = vshrl.u32 2102212464, %v5771
    %v5781 = vor.u32 %v5779, %v5780
    %v5782 = vshll.u32 2102212464, %v5770
    %v5783 = vshrl.u32 920167782, %v5771
    %v5784 = vor.u32 %v5782, %v5783
    %v5785 = vshll.u32 920167782, %v5770
    %v5786 = vshrl.u32 1326507024, %v5771
    %v5787 = vor.u32 %v5785, %v5786
    %vm5788 = vcmp.lt.s32.totalorder %v5769, 1
    %vm5789 = vcmp.lt.s32.totalorder %v5769, 2
    %vm5790 = vcmp.lt.s32.totalorder %v5769, 3
    %vm5791 = vcmp.lt.s32.totalorder %v5769, 4
    %v5792 = vsel %vm5788, %v5772, %v5775
    %v5793 = vsel %vm5791, %v5781, 2102212464
    %v5794 = vsel %vm5790, %v5778, %v5793
    %v5795 = vsel %vm5789, %v5792, %v5794
    %v5796 = vsel %vm5788, %v5775, %v5778
    %v5797 = vsel %vm5791, %v5784, 920167782
    %v5798 = vsel %vm5790, %v5781, %v5797
    %v5799 = vsel %vm5789, %v5796, %v5798
    %v5800 = vsel %vm5788, %v5778, %v5781
    %v5801 = vsel %vm5791, %v5787, 1326507024
    %v5802 = vsel %vm5790, %v5784, %v5801
    %v5803 = vsel %vm5789, %v5800, %v5802
    %v5804 = vshll.u32 %v5764, 8
    %v5805 = vmul.u32.u64.compose %v5804, %v5803
    %v5806 = vextract.low.u32 %v5805
    %v5807 = vextract.high.u32 %v5805
    %v5808 = vmul.u32.u64.compose %v5804, %v5799
    %v5809 = vextract.low.u32 %v5808
    %v5810 = vextract.high.u32 %v5808
    %v5811 = vmul.u32 %v5804, %v5795
    %v5812 = vadd.s32 %v5807, %v5809
    %vm5813 = vc.u32 %v5807, %v5809
    %v5814 = vadd.s32 %v5810, 1
    %v5815 = vsel %vm5813, %v5814, %v5810
    %v5816 = vadd.s32 %v5811, %v5815
    %v5817 = vadd.s32 %v5816, 536870912
    %v5818 = vshrl.u32 %v5817, 30
    %v5819 = vshll.u32 %v5818, 30
    %v5820 = vsub.s32 %v5816, %v5819
    %vm5821 = vcmp.lt.s32.totalorder %v5820, 0
    %v5822 = vsub.s32 0, %v5820
    %v5823 = vsel %vm5821, %v5822, %v5820
    %v5824 = vclz %v5823
    %v5825 = vsub.s32 %v5824, 2
    %vm5826 = vcmp.gt.s32.totalorder 0, %v5825
    %v5827 = vsel %vm5826, 0, %v5825
    %v5828 = vsub.s32 32, %v5827
    %v5829 = vshll.u32 %v5820, %v5827
    %v5830 = vshrl.u32 %v5812, %v5828
    %v5831 = vor.u32 %v5829, %v5830
    %v5832 = vsub.s32 4294967266, %v5827
    %v5833 = vadd.s32 %v5832, 127
    %v5834 = vshll.u32 %v5833, 23
    %v5835 = vor.u32 4788187, %v5834
    %v5836 = vand.u32 2147483647, %v5835
    %v5838 = vcvt.s32.f32 %v5831
    %v5839 = vmul.f32 %v5838, %v5836
    %v5840 = vxor.u32 %v5839, 2147483648
    %v5841 = vsel %vm5758, %v5840, %v5839
    %v5842 = vsub.s32 4, %v5818
    %v5843 = vsel %vm5758, %v5842, %v5818
    %v5844 = vsel %vm5757, %v4195, %v5841
    %v5845 = vsel %vm5757, 0, %v5843
    %v5846 = vcosq.f32.pop %v5844
    %v5847 = vsinq.f32.pop %v5844
    %vm5848 = vweird.f32 %v4195
    %v5849 = vadd.s32 %v5845, 3
    %v5850 = vand.u32 %v5849, 3
    %vm5851 = vcmp.lt.s32.totalorder %v5850, 2
    %vm5852 = vcmp.eq.s32.totalorder %v5850, 0
    %v5853 = vxor.u32 %v5847, 2147483648
    %v5854 = vsel %vm5852, %v5846, %v5853
    %vm5855 = vcmp.eq.s32.totalorder %v5850, 2
    %v5856 = vxor.u32 %v5846, 2147483648
    %v5857 = vsel %vm5855, %v5856, %v5847
    %v5858 = vsel %vm5851, %v5854, %v5857
    %v5859 = vsel %vm5848, nan, %v5858
    %s5860 = scalar_lea.vmem [#allocation3], 256
    %5861 = vst [vmem:[%s5860] sm:$0xff] %v4299
    %5862 = vst [vmem:[%s5860 + $0x8] sm:$0xff] %v4403
    %5863 = vst [vmem:[%s5860 + $0x10] sm:$0xff] %v4507
    %5864 = vst [vmem:[%s5860 + $0x18] sm:$0xff] %v4611
    %5865 = vst [vmem:[%s5860 + $0x20] sm:$0xff] %v4715
    %5866 = vst [vmem:[%s5860 + $0x28] sm:$0xff] %v4819
    %5867 = vst [vmem:[%s5860 + $0x30] sm:$0xff] %v4923
    %5868 = vst [vmem:[%s5860 + $0x38] sm:$0xff] %v5027
    %5869 = vst [vmem:[%s5860 + $0x40] sm:$0xff] %v5131
    %5870 = vst [vmem:[%s5860 + $0x48] sm:$0xff] %v5235
    %5871 = vst [vmem:[%s5860 + $0x50] sm:$0xff] %v5339
    %5872 = vst [vmem:[%s5860 + $0x58] sm:$0xff] %v5443
    %5873 = vst [vmem:[%s5860 + $0x60] sm:$0xff] %v5547
    %5874 = vst [vmem:[%s5860 + $0x68] sm:$0xff] %v5651
    %5875 = vst [vmem:[%s5860 + $0x70] sm:$0xff] %v5755
    %5876 = vst [vmem:[%s5860 + $0x78] sm:$0xff] %v5859
    %v5878 = vlaneseq
    %v5879 = vshrl.u32 %v5878, 7
    %v5880 = vsub.s32 0, %v5879
    %v5881 = vrot.slane %v4152, %v5880
    %v5882 = vlaneseq
    %v5883 = vshrl.u32 %v5882, 7
    %v5884 = vsub.s32 1, %v5883
    %v5885 = vrot.slane %v4152, %v5884
    %v5888 = vmul.f32 %v5881, %v42
    %v5889 = vmul.f32 %v5885, %v42
    %v5890 = vmul.f32 %v5881, %v47
    %v5891 = vmul.f32 %v5885, %v47
    %v5892 = vmul.f32 %v5881, %v52
    %v5893 = vmul.f32 %v5885, %v52
    %v5894 = vmul.f32 %v5881, %v57
    %v5895 = vmul.f32 %v5885, %v57
    %v5896 = vmul.f32 %v5881, %v62
    %v5897 = vmul.f32 %v5885, %v62
    %v5898 = vmul.f32 %v5881, %v67
    %v5899 = vmul.f32 %v5885, %v67
    %v5900 = vmul.f32 %v5881, %v72
    %v5901 = vmul.f32 %v5885, %v72
    %v5902 = vmul.f32 %v5881, %v77
    %v5903 = vmul.f32 %v5885, %v77
    %v5904 = vadd.f32 %v5888, %v90
    %v5905 = vadd.f32 %v5889, %v90
    %v5906 = vadd.f32 %v5890, %v95
    %v5907 = vadd.f32 %v5891, %v95
    %v5908 = vadd.f32 %v5892, %v100
    %v5909 = vadd.f32 %v5893, %v100
    %v5910 = vadd.f32 %v5894, %v105
    %v5911 = vadd.f32 %v5895, %v105
    %v5912 = vadd.f32 %v5896, %v110
    %v5913 = vadd.f32 %v5897, %v110
    %v5914 = vadd.f32 %v5898, %v115
    %v5915 = vadd.f32 %v5899, %v115
    %v5916 = vadd.f32 %v5900, %v120
    %v5917 = vadd.f32 %v5901, %v120
    %v5918 = vadd.f32 %v5902, %v125
    %v5919 = vadd.f32 %v5903, %v125
    %v5920 = vand.u32 2147483647, %v5904
    %vm5921 = vcmp.le.f32.partialorder %v5920, 0.7853982
    %vm5922 = vcmp.lt.s32.totalorder %v5904, 0
    %v5923 = vand.u32 %v5904, 2139095040
    %v5924 = vshrl.u32 %v5923, 23
    %v5925 = vsub.s32 %v5924, 127
    %v5926 = vand.u32 2147483647, %v5904
    %v5927 = vand.u32 %v5926, 8388607
    %v5928 = vor.u32 %v5927, 8388608
    %v5929 = vsub.s32 0, %v5928
    %v5930 = vadd.s32 %v5925, 1
    %vm5931 = vcmp.gt.s32.totalorder %v5930, 0
    %v5932 = vsel %vm5931, %v5930, 0
    %v5933 = vshrl.u32 %v5932, 5
    %v5934 = vand.u32 %v5932, 31
    %v5935 = vsub.s32 32, %v5934
    %v5936 = vshrl.u32 683565275, %v5935
    %v5937 = vshll.u32 683565275, %v5934
    %v5938 = vshrl.u32 2475754826, %v5935
    %v5939 = vor.u32 %v5937, %v5938
    %v5940 = vshll.u32 2475754826, %v5934
    %v5941 = vshrl.u32 2131351028, %v5935
    %v5942 = vor.u32 %v5940, %v5941
    %v5943 = vshll.u32 2131351028, %v5934
    %v5944 = vshrl.u32 2102212464, %v5935
    %v5945 = vor.u32 %v5943, %v5944
    %v5946 = vshll.u32 2102212464, %v5934
    %v5947 = vshrl.u32 920167782, %v5935
    %v5948 = vor.u32 %v5946, %v5947
    %v5949 = vshll.u32 920167782, %v5934
    %v5950 = vshrl.u32 1326507024, %v5935
    %v5951 = vor.u32 %v5949, %v5950
    %vm5952 = vcmp.lt.s32.totalorder %v5933, 1
    %vm5953 = vcmp.lt.s32.totalorder %v5933, 2
    %vm5954 = vcmp.lt.s32.totalorder %v5933, 3
    %vm5955 = vcmp.lt.s32.totalorder %v5933, 4
    %v5956 = vsel %vm5952, %v5936, %v5939
    %v5957 = vsel %vm5955, %v5945, 2102212464
    %v5958 = vsel %vm5954, %v5942, %v5957
    %v5959 = vsel %vm5953, %v5956, %v5958
    %v5960 = vsel %vm5952, %v5939, %v5942
    %v5961 = vsel %vm5955, %v5948, 920167782
    %v5962 = vsel %vm5954, %v5945, %v5961
    %v5963 = vsel %vm5953, %v5960, %v5962
    %v5964 = vsel %vm5952, %v5942, %v5945
    %v5965 = vsel %vm5955, %v5951, 1326507024
    %v5966 = vsel %vm5954, %v5948, %v5965
    %v5967 = vsel %vm5953, %v5964, %v5966
    %v5968 = vshll.u32 %v5928, 8
    %v5969 = vmul.u32.u64.compose %v5968, %v5967
    %v5970 = vextract.low.u32 %v5969
    %v5971 = vextract.high.u32 %v5969
    %v5972 = vmul.u32.u64.compose %v5968, %v5963
    %v5973 = vextract.low.u32 %v5972
    %v5974 = vextract.high.u32 %v5972
    %v5975 = vmul.u32 %v5968, %v5959
    %v5976 = vadd.s32 %v5971, %v5973
    %vm5977 = vc.u32 %v5971, %v5973
    %v5978 = vadd.s32 %v5974, 1
    %v5979 = vsel %vm5977, %v5978, %v5974
    %v5980 = vadd.s32 %v5975, %v5979
    %v5981 = vadd.s32 %v5980, 536870912
    %v5982 = vshrl.u32 %v5981, 30
    %v5983 = vshll.u32 %v5982, 30
    %v5984 = vsub.s32 %v5980, %v5983
    %vm5985 = vcmp.lt.s32.totalorder %v5984, 0
    %v5986 = vsub.s32 0, %v5984
    %v5987 = vsel %vm5985, %v5986, %v5984
    %v5988 = vclz %v5987
    %v5989 = vsub.s32 %v5988, 2
    %vm5990 = vcmp.gt.s32.totalorder 0, %v5989
    %v5991 = vsel %vm5990, 0, %v5989
    %v5992 = vsub.s32 32, %v5991
    %v5993 = vshll.u32 %v5984, %v5991
    %v5994 = vshrl.u32 %v5976, %v5992
    %v5995 = vor.u32 %v5993, %v5994
    %v5996 = vsub.s32 4294967266, %v5991
    %v5997 = vadd.s32 %v5996, 127
    %v5998 = vshll.u32 %v5997, 23
    %v5999 = vor.u32 4788187, %v5998
    %v6000 = vand.u32 2147483647, %v5999
    %v6002 = vcvt.s32.f32 %v5995
    %v6003 = vmul.f32 %v6002, %v6000
    %v6004 = vxor.u32 %v6003, 2147483648
    %v6005 = vsel %vm5922, %v6004, %v6003
    %v6006 = vsub.s32 4, %v5982
    %v6007 = vsel %vm5922, %v6006, %v5982
    %v6008 = vsel %vm5921, %v5904, %v6005
    %v6009 = vsel %vm5921, 0, %v6007
    %v6010 = vcosq.f32.pop %v6008
    %v6011 = vsinq.f32.pop %v6008
    %vm6012 = vweird.f32 %v5904
    %v6013 = vadd.s32 %v6009, 3
    %v6014 = vand.u32 %v6013, 3
    %vm6015 = vcmp.lt.s32.totalorder %v6014, 2
    %vm6016 = vcmp.eq.s32.totalorder %v6014, 0
    %v6017 = vxor.u32 %v6011, 2147483648
    %v6018 = vsel %vm6016, %v6010, %v6017
    %vm6019 = vcmp.eq.s32.totalorder %v6014, 2
    %v6020 = vxor.u32 %v6010, 2147483648
    %v6021 = vsel %vm6019, %v6020, %v6011
    %v6022 = vsel %vm6015, %v6018, %v6021
    %v6023 = vsel %vm6012, nan, %v6022
    %v6024 = vand.u32 2147483647, %v5905
    %vm6025 = vcmp.le.f32.partialorder %v6024, 0.7853982
    %vm6026 = vcmp.lt.s32.totalorder %v5905, 0
    %v6027 = vand.u32 %v5905, 2139095040
    %v6028 = vshrl.u32 %v6027, 23
    %v6029 = vsub.s32 %v6028, 127
    %v6030 = vand.u32 2147483647, %v5905
    %v6031 = vand.u32 %v6030, 8388607
    %v6032 = vor.u32 %v6031, 8388608
    %v6033 = vsub.s32 0, %v6032
    %v6034 = vadd.s32 %v6029, 1
    %vm6035 = vcmp.gt.s32.totalorder %v6034, 0
    %v6036 = vsel %vm6035, %v6034, 0
    %v6037 = vshrl.u32 %v6036, 5
    %v6038 = vand.u32 %v6036, 31
    %v6039 = vsub.s32 32, %v6038
    %v6040 = vshrl.u32 683565275, %v6039
    %v6041 = vshll.u32 683565275, %v6038
    %v6042 = vshrl.u32 2475754826, %v6039
    %v6043 = vor.u32 %v6041, %v6042
    %v6044 = vshll.u32 2475754826, %v6038
    %v6045 = vshrl.u32 2131351028, %v6039
    %v6046 = vor.u32 %v6044, %v6045
    %v6047 = vshll.u32 2131351028, %v6038
    %v6048 = vshrl.u32 2102212464, %v6039
    %v6049 = vor.u32 %v6047, %v6048
    %v6050 = vshll.u32 2102212464, %v6038
    %v6051 = vshrl.u32 920167782, %v6039
    %v6052 = vor.u32 %v6050, %v6051
    %v6053 = vshll.u32 920167782, %v6038
    %v6054 = vshrl.u32 1326507024, %v6039
    %v6055 = vor.u32 %v6053, %v6054
    %vm6056 = vcmp.lt.s32.totalorder %v6037, 1
    %vm6057 = vcmp.lt.s32.totalorder %v6037, 2
    %vm6058 = vcmp.lt.s32.totalorder %v6037, 3
    %vm6059 = vcmp.lt.s32.totalorder %v6037, 4
    %v6060 = vsel %vm6056, %v6040, %v6043
    %v6061 = vsel %vm6059, %v6049, 2102212464
    %v6062 = vsel %vm6058, %v6046, %v6061
    %v6063 = vsel %vm6057, %v6060, %v6062
    %v6064 = vsel %vm6056, %v6043, %v6046
    %v6065 = vsel %vm6059, %v6052, 920167782
    %v6066 = vsel %vm6058, %v6049, %v6065
    %v6067 = vsel %vm6057, %v6064, %v6066
    %v6068 = vsel %vm6056, %v6046, %v6049
    %v6069 = vsel %vm6059, %v6055, 1326507024
    %v6070 = vsel %vm6058, %v6052, %v6069
    %v6071 = vsel %vm6057, %v6068, %v6070
    %v6072 = vshll.u32 %v6032, 8
    %v6073 = vmul.u32.u64.compose %v6072, %v6071
    %v6074 = vextract.low.u32 %v6073
    %v6075 = vextract.high.u32 %v6073
    %v6076 = vmul.u32.u64.compose %v6072, %v6067
    %v6077 = vextract.low.u32 %v6076
    %v6078 = vextract.high.u32 %v6076
    %v6079 = vmul.u32 %v6072, %v6063
    %v6080 = vadd.s32 %v6075, %v6077
    %vm6081 = vc.u32 %v6075, %v6077
    %v6082 = vadd.s32 %v6078, 1
    %v6083 = vsel %vm6081, %v6082, %v6078
    %v6084 = vadd.s32 %v6079, %v6083
    %v6085 = vadd.s32 %v6084, 536870912
    %v6086 = vshrl.u32 %v6085, 30
    %v6087 = vshll.u32 %v6086, 30
    %v6088 = vsub.s32 %v6084, %v6087
    %vm6089 = vcmp.lt.s32.totalorder %v6088, 0
    %v6090 = vsub.s32 0, %v6088
    %v6091 = vsel %vm6089, %v6090, %v6088
    %v6092 = vclz %v6091
    %v6093 = vsub.s32 %v6092, 2
    %vm6094 = vcmp.gt.s32.totalorder 0, %v6093
    %v6095 = vsel %vm6094, 0, %v6093
    %v6096 = vsub.s32 32, %v6095
    %v6097 = vshll.u32 %v6088, %v6095
    %v6098 = vshrl.u32 %v6080, %v6096
    %v6099 = vor.u32 %v6097, %v6098
    %v6100 = vsub.s32 4294967266, %v6095
    %v6101 = vadd.s32 %v6100, 127
    %v6102 = vshll.u32 %v6101, 23
    %v6103 = vor.u32 4788187, %v6102
    %v6104 = vand.u32 2147483647, %v6103
    %v6106 = vcvt.s32.f32 %v6099
    %v6107 = vmul.f32 %v6106, %v6104
    %v6108 = vxor.u32 %v6107, 2147483648
    %v6109 = vsel %vm6026, %v6108, %v6107
    %v6110 = vsub.s32 4, %v6086
    %v6111 = vsel %vm6026, %v6110, %v6086
    %v6112 = vsel %vm6025, %v5905, %v6109
    %v6113 = vsel %vm6025, 0, %v6111
    %v6114 = vcosq.f32.pop %v6112
    %v6115 = vsinq.f32.pop %v6112
    %vm6116 = vweird.f32 %v5905
    %v6117 = vadd.s32 %v6113, 3
    %v6118 = vand.u32 %v6117, 3
    %vm6119 = vcmp.lt.s32.totalorder %v6118, 2
    %vm6120 = vcmp.eq.s32.totalorder %v6118, 0
    %v6121 = vxor.u32 %v6115, 2147483648
    %v6122 = vsel %vm6120, %v6114, %v6121
    %vm6123 = vcmp.eq.s32.totalorder %v6118, 2
    %v6124 = vxor.u32 %v6114, 2147483648
    %v6125 = vsel %vm6123, %v6124, %v6115
    %v6126 = vsel %vm6119, %v6122, %v6125
    %v6127 = vsel %vm6116, nan, %v6126
    %v6128 = vand.u32 2147483647, %v5906
    %vm6129 = vcmp.le.f32.partialorder %v6128, 0.7853982
    %vm6130 = vcmp.lt.s32.totalorder %v5906, 0
    %v6131 = vand.u32 %v5906, 2139095040
    %v6132 = vshrl.u32 %v6131, 23
    %v6133 = vsub.s32 %v6132, 127
    %v6134 = vand.u32 2147483647, %v5906
    %v6135 = vand.u32 %v6134, 8388607
    %v6136 = vor.u32 %v6135, 8388608
    %v6137 = vsub.s32 0, %v6136
    %v6138 = vadd.s32 %v6133, 1
    %vm6139 = vcmp.gt.s32.totalorder %v6138, 0
    %v6140 = vsel %vm6139, %v6138, 0
    %v6141 = vshrl.u32 %v6140, 5
    %v6142 = vand.u32 %v6140, 31
    %v6143 = vsub.s32 32, %v6142
    %v6144 = vshrl.u32 683565275, %v6143
    %v6145 = vshll.u32 683565275, %v6142
    %v6146 = vshrl.u32 2475754826, %v6143
    %v6147 = vor.u32 %v6145, %v6146
    %v6148 = vshll.u32 2475754826, %v6142
    %v6149 = vshrl.u32 2131351028, %v6143
    %v6150 = vor.u32 %v6148, %v6149
    %v6151 = vshll.u32 2131351028, %v6142
    %v6152 = vshrl.u32 2102212464, %v6143
    %v6153 = vor.u32 %v6151, %v6152
    %v6154 = vshll.u32 2102212464, %v6142
    %v6155 = vshrl.u32 920167782, %v6143
    %v6156 = vor.u32 %v6154, %v6155
    %v6157 = vshll.u32 920167782, %v6142
    %v6158 = vshrl.u32 1326507024, %v6143
    %v6159 = vor.u32 %v6157, %v6158
    %vm6160 = vcmp.lt.s32.totalorder %v6141, 1
    %vm6161 = vcmp.lt.s32.totalorder %v6141, 2
    %vm6162 = vcmp.lt.s32.totalorder %v6141, 3
    %vm6163 = vcmp.lt.s32.totalorder %v6141, 4
    %v6164 = vsel %vm6160, %v6144, %v6147
    %v6165 = vsel %vm6163, %v6153, 2102212464
    %v6166 = vsel %vm6162, %v6150, %v6165
    %v6167 = vsel %vm6161, %v6164, %v6166
    %v6168 = vsel %vm6160, %v6147, %v6150
    %v6169 = vsel %vm6163, %v6156, 920167782
    %v6170 = vsel %vm6162, %v6153, %v6169
    %v6171 = vsel %vm6161, %v6168, %v6170
    %v6172 = vsel %vm6160, %v6150, %v6153
    %v6173 = vsel %vm6163, %v6159, 1326507024
    %v6174 = vsel %vm6162, %v6156, %v6173
    %v6175 = vsel %vm6161, %v6172, %v6174
    %v6176 = vshll.u32 %v6136, 8
    %v6177 = vmul.u32.u64.compose %v6176, %v6175
    %v6178 = vextract.low.u32 %v6177
    %v6179 = vextract.high.u32 %v6177
    %v6180 = vmul.u32.u64.compose %v6176, %v6171
    %v6181 = vextract.low.u32 %v6180
    %v6182 = vextract.high.u32 %v6180
    %v6183 = vmul.u32 %v6176, %v6167
    %v6184 = vadd.s32 %v6179, %v6181
    %vm6185 = vc.u32 %v6179, %v6181
    %v6186 = vadd.s32 %v6182, 1
    %v6187 = vsel %vm6185, %v6186, %v6182
    %v6188 = vadd.s32 %v6183, %v6187
    %v6189 = vadd.s32 %v6188, 536870912
    %v6190 = vshrl.u32 %v6189, 30
    %v6191 = vshll.u32 %v6190, 30
    %v6192 = vsub.s32 %v6188, %v6191
    %vm6193 = vcmp.lt.s32.totalorder %v6192, 0
    %v6194 = vsub.s32 0, %v6192
    %v6195 = vsel %vm6193, %v6194, %v6192
    %v6196 = vclz %v6195
    %v6197 = vsub.s32 %v6196, 2
    %vm6198 = vcmp.gt.s32.totalorder 0, %v6197
    %v6199 = vsel %vm6198, 0, %v6197
    %v6200 = vsub.s32 32, %v6199
    %v6201 = vshll.u32 %v6192, %v6199
    %v6202 = vshrl.u32 %v6184, %v6200
    %v6203 = vor.u32 %v6201, %v6202
    %v6204 = vsub.s32 4294967266, %v6199
    %v6205 = vadd.s32 %v6204, 127
    %v6206 = vshll.u32 %v6205, 23
    %v6207 = vor.u32 4788187, %v6206
    %v6208 = vand.u32 2147483647, %v6207
    %v6210 = vcvt.s32.f32 %v6203
    %v6211 = vmul.f32 %v6210, %v6208
    %v6212 = vxor.u32 %v6211, 2147483648
    %v6213 = vsel %vm6130, %v6212, %v6211
    %v6214 = vsub.s32 4, %v6190
    %v6215 = vsel %vm6130, %v6214, %v6190
    %v6216 = vsel %vm6129, %v5906, %v6213
    %v6217 = vsel %vm6129, 0, %v6215
    %v6218 = vcosq.f32.pop %v6216
    %v6219 = vsinq.f32.pop %v6216
    %vm6220 = vweird.f32 %v5906
    %v6221 = vadd.s32 %v6217, 3
    %v6222 = vand.u32 %v6221, 3
    %vm6223 = vcmp.lt.s32.totalorder %v6222, 2
    %vm6224 = vcmp.eq.s32.totalorder %v6222, 0
    %v6225 = vxor.u32 %v6219, 2147483648
    %v6226 = vsel %vm6224, %v6218, %v6225
    %vm6227 = vcmp.eq.s32.totalorder %v6222, 2
    %v6228 = vxor.u32 %v6218, 2147483648
    %v6229 = vsel %vm6227, %v6228, %v6219
    %v6230 = vsel %vm6223, %v6226, %v6229
    %v6231 = vsel %vm6220, nan, %v6230
    %v6232 = vand.u32 2147483647, %v5907
    %vm6233 = vcmp.le.f32.partialorder %v6232, 0.7853982
    %vm6234 = vcmp.lt.s32.totalorder %v5907, 0
    %v6235 = vand.u32 %v5907, 2139095040
    %v6236 = vshrl.u32 %v6235, 23
    %v6237 = vsub.s32 %v6236, 127
    %v6238 = vand.u32 2147483647, %v5907
    %v6239 = vand.u32 %v6238, 8388607
    %v6240 = vor.u32 %v6239, 8388608
    %v6241 = vsub.s32 0, %v6240
    %v6242 = vadd.s32 %v6237, 1
    %vm6243 = vcmp.gt.s32.totalorder %v6242, 0
    %v6244 = vsel %vm6243, %v6242, 0
    %v6245 = vshrl.u32 %v6244, 5
    %v6246 = vand.u32 %v6244, 31
    %v6247 = vsub.s32 32, %v6246
    %v6248 = vshrl.u32 683565275, %v6247
    %v6249 = vshll.u32 683565275, %v6246
    %v6250 = vshrl.u32 2475754826, %v6247
    %v6251 = vor.u32 %v6249, %v6250
    %v6252 = vshll.u32 2475754826, %v6246
    %v6253 = vshrl.u32 2131351028, %v6247
    %v6254 = vor.u32 %v6252, %v6253
    %v6255 = vshll.u32 2131351028, %v6246
    %v6256 = vshrl.u32 2102212464, %v6247
    %v6257 = vor.u32 %v6255, %v6256
    %v6258 = vshll.u32 2102212464, %v6246
    %v6259 = vshrl.u32 920167782, %v6247
    %v6260 = vor.u32 %v6258, %v6259
    %v6261 = vshll.u32 920167782, %v6246
    %v6262 = vshrl.u32 1326507024, %v6247
    %v6263 = vor.u32 %v6261, %v6262
    %vm6264 = vcmp.lt.s32.totalorder %v6245, 1
    %vm6265 = vcmp.lt.s32.totalorder %v6245, 2
    %vm6266 = vcmp.lt.s32.totalorder %v6245, 3
    %vm6267 = vcmp.lt.s32.totalorder %v6245, 4
    %v6268 = vsel %vm6264, %v6248, %v6251
    %v6269 = vsel %vm6267, %v6257, 2102212464
    %v6270 = vsel %vm6266, %v6254, %v6269
    %v6271 = vsel %vm6265, %v6268, %v6270
    %v6272 = vsel %vm6264, %v6251, %v6254
    %v6273 = vsel %vm6267, %v6260, 920167782
    %v6274 = vsel %vm6266, %v6257, %v6273
    %v6275 = vsel %vm6265, %v6272, %v6274
    %v6276 = vsel %vm6264, %v6254, %v6257
    %v6277 = vsel %vm6267, %v6263, 1326507024
    %v6278 = vsel %vm6266, %v6260, %v6277
    %v6279 = vsel %vm6265, %v6276, %v6278
    %v6280 = vshll.u32 %v6240, 8
    %v6281 = vmul.u32.u64.compose %v6280, %v6279
    %v6282 = vextract.low.u32 %v6281
    %v6283 = vextract.high.u32 %v6281
    %v6284 = vmul.u32.u64.compose %v6280, %v6275
    %v6285 = vextract.low.u32 %v6284
    %v6286 = vextract.high.u32 %v6284
    %v6287 = vmul.u32 %v6280, %v6271
    %v6288 = vadd.s32 %v6283, %v6285
    %vm6289 = vc.u32 %v6283, %v6285
    %v6290 = vadd.s32 %v6286, 1
    %v6291 = vsel %vm6289, %v6290, %v6286
    %v6292 = vadd.s32 %v6287, %v6291
    %v6293 = vadd.s32 %v6292, 536870912
    %v6294 = vshrl.u32 %v6293, 30
    %v6295 = vshll.u32 %v6294, 30
    %v6296 = vsub.s32 %v6292, %v6295
    %vm6297 = vcmp.lt.s32.totalorder %v6296, 0
    %v6298 = vsub.s32 0, %v6296
    %v6299 = vsel %vm6297, %v6298, %v6296
    %v6300 = vclz %v6299
    %v6301 = vsub.s32 %v6300, 2
    %vm6302 = vcmp.gt.s32.totalorder 0, %v6301
    %v6303 = vsel %vm6302, 0, %v6301
    %v6304 = vsub.s32 32, %v6303
    %v6305 = vshll.u32 %v6296, %v6303
    %v6306 = vshrl.u32 %v6288, %v6304
    %v6307 = vor.u32 %v6305, %v6306
    %v6308 = vsub.s32 4294967266, %v6303
    %v6309 = vadd.s32 %v6308, 127
    %v6310 = vshll.u32 %v6309, 23
    %v6311 = vor.u32 4788187, %v6310
    %v6312 = vand.u32 2147483647, %v6311
    %v6314 = vcvt.s32.f32 %v6307
    %v6315 = vmul.f32 %v6314, %v6312
    %v6316 = vxor.u32 %v6315, 2147483648
    %v6317 = vsel %vm6234, %v6316, %v6315
    %v6318 = vsub.s32 4, %v6294
    %v6319 = vsel %vm6234, %v6318, %v6294
    %v6320 = vsel %vm6233, %v5907, %v6317
    %v6321 = vsel %vm6233, 0, %v6319
    %v6322 = vcosq.f32.pop %v6320
    %v6323 = vsinq.f32.pop %v6320
    %vm6324 = vweird.f32 %v5907
    %v6325 = vadd.s32 %v6321, 3
    %v6326 = vand.u32 %v6325, 3
    %vm6327 = vcmp.lt.s32.totalorder %v6326, 2
    %vm6328 = vcmp.eq.s32.totalorder %v6326, 0
    %v6329 = vxor.u32 %v6323, 2147483648
    %v6330 = vsel %vm6328, %v6322, %v6329
    %vm6331 = vcmp.eq.s32.totalorder %v6326, 2
    %v6332 = vxor.u32 %v6322, 2147483648
    %v6333 = vsel %vm6331, %v6332, %v6323
    %v6334 = vsel %vm6327, %v6330, %v6333
    %v6335 = vsel %vm6324, nan, %v6334
    %v6336 = vand.u32 2147483647, %v5908
    %vm6337 = vcmp.le.f32.partialorder %v6336, 0.7853982
    %vm6338 = vcmp.lt.s32.totalorder %v5908, 0
    %v6339 = vand.u32 %v5908, 2139095040
    %v6340 = vshrl.u32 %v6339, 23
    %v6341 = vsub.s32 %v6340, 127
    %v6342 = vand.u32 2147483647, %v5908
    %v6343 = vand.u32 %v6342, 8388607
    %v6344 = vor.u32 %v6343, 8388608
    %v6345 = vsub.s32 0, %v6344
    %v6346 = vadd.s32 %v6341, 1
    %vm6347 = vcmp.gt.s32.totalorder %v6346, 0
    %v6348 = vsel %vm6347, %v6346, 0
    %v6349 = vshrl.u32 %v6348, 5
    %v6350 = vand.u32 %v6348, 31
    %v6351 = vsub.s32 32, %v6350
    %v6352 = vshrl.u32 683565275, %v6351
    %v6353 = vshll.u32 683565275, %v6350
    %v6354 = vshrl.u32 2475754826, %v6351
    %v6355 = vor.u32 %v6353, %v6354
    %v6356 = vshll.u32 2475754826, %v6350
    %v6357 = vshrl.u32 2131351028, %v6351
    %v6358 = vor.u32 %v6356, %v6357
    %v6359 = vshll.u32 2131351028, %v6350
    %v6360 = vshrl.u32 2102212464, %v6351
    %v6361 = vor.u32 %v6359, %v6360
    %v6362 = vshll.u32 2102212464, %v6350
    %v6363 = vshrl.u32 920167782, %v6351
    %v6364 = vor.u32 %v6362, %v6363
    %v6365 = vshll.u32 920167782, %v6350
    %v6366 = vshrl.u32 1326507024, %v6351
    %v6367 = vor.u32 %v6365, %v6366
    %vm6368 = vcmp.lt.s32.totalorder %v6349, 1
    %vm6369 = vcmp.lt.s32.totalorder %v6349, 2
    %vm6370 = vcmp.lt.s32.totalorder %v6349, 3
    %vm6371 = vcmp.lt.s32.totalorder %v6349, 4
    %v6372 = vsel %vm6368, %v6352, %v6355
    %v6373 = vsel %vm6371, %v6361, 2102212464
    %v6374 = vsel %vm6370, %v6358, %v6373
    %v6375 = vsel %vm6369, %v6372, %v6374
    %v6376 = vsel %vm6368, %v6355, %v6358
    %v6377 = vsel %vm6371, %v6364, 920167782
    %v6378 = vsel %vm6370, %v6361, %v6377
    %v6379 = vsel %vm6369, %v6376, %v6378
    %v6380 = vsel %vm6368, %v6358, %v6361
    %v6381 = vsel %vm6371, %v6367, 1326507024
    %v6382 = vsel %vm6370, %v6364, %v6381
    %v6383 = vsel %vm6369, %v6380, %v6382
    %v6384 = vshll.u32 %v6344, 8
    %v6385 = vmul.u32.u64.compose %v6384, %v6383
    %v6386 = vextract.low.u32 %v6385
    %v6387 = vextract.high.u32 %v6385
    %v6388 = vmul.u32.u64.compose %v6384, %v6379
    %v6389 = vextract.low.u32 %v6388
    %v6390 = vextract.high.u32 %v6388
    %v6391 = vmul.u32 %v6384, %v6375
    %v6392 = vadd.s32 %v6387, %v6389
    %vm6393 = vc.u32 %v6387, %v6389
    %v6394 = vadd.s32 %v6390, 1
    %v6395 = vsel %vm6393, %v6394, %v6390
    %v6396 = vadd.s32 %v6391, %v6395
    %v6397 = vadd.s32 %v6396, 536870912
    %v6398 = vshrl.u32 %v6397, 30
    %v6399 = vshll.u32 %v6398, 30
    %v6400 = vsub.s32 %v6396, %v6399
    %vm6401 = vcmp.lt.s32.totalorder %v6400, 0
    %v6402 = vsub.s32 0, %v6400
    %v6403 = vsel %vm6401, %v6402, %v6400
    %v6404 = vclz %v6403
    %v6405 = vsub.s32 %v6404, 2
    %vm6406 = vcmp.gt.s32.totalorder 0, %v6405
    %v6407 = vsel %vm6406, 0, %v6405
    %v6408 = vsub.s32 32, %v6407
    %v6409 = vshll.u32 %v6400, %v6407
    %v6410 = vshrl.u32 %v6392, %v6408
    %v6411 = vor.u32 %v6409, %v6410
    %v6412 = vsub.s32 4294967266, %v6407
    %v6413 = vadd.s32 %v6412, 127
    %v6414 = vshll.u32 %v6413, 23
    %v6415 = vor.u32 4788187, %v6414
    %v6416 = vand.u32 2147483647, %v6415
    %v6418 = vcvt.s32.f32 %v6411
    %v6419 = vmul.f32 %v6418, %v6416
    %v6420 = vxor.u32 %v6419, 2147483648
    %v6421 = vsel %vm6338, %v6420, %v6419
    %v6422 = vsub.s32 4, %v6398
    %v6423 = vsel %vm6338, %v6422, %v6398
    %v6424 = vsel %vm6337, %v5908, %v6421
    %v6425 = vsel %vm6337, 0, %v6423
    %v6426 = vcosq.f32.pop %v6424
    %v6427 = vsinq.f32.pop %v6424
    %vm6428 = vweird.f32 %v5908
    %v6429 = vadd.s32 %v6425, 3
    %v6430 = vand.u32 %v6429, 3
    %vm6431 = vcmp.lt.s32.totalorder %v6430, 2
    %vm6432 = vcmp.eq.s32.totalorder %v6430, 0
    %v6433 = vxor.u32 %v6427, 2147483648
    %v6434 = vsel %vm6432, %v6426, %v6433
    %vm6435 = vcmp.eq.s32.totalorder %v6430, 2
    %v6436 = vxor.u32 %v6426, 2147483648
    %v6437 = vsel %vm6435, %v6436, %v6427
    %v6438 = vsel %vm6431, %v6434, %v6437
    %v6439 = vsel %vm6428, nan, %v6438
    %v6440 = vand.u32 2147483647, %v5909
    %vm6441 = vcmp.le.f32.partialorder %v6440, 0.7853982
    %vm6442 = vcmp.lt.s32.totalorder %v5909, 0
    %v6443 = vand.u32 %v5909, 2139095040
    %v6444 = vshrl.u32 %v6443, 23
    %v6445 = vsub.s32 %v6444, 127
    %v6446 = vand.u32 2147483647, %v5909
    %v6447 = vand.u32 %v6446, 8388607
    %v6448 = vor.u32 %v6447, 8388608
    %v6449 = vsub.s32 0, %v6448
    %v6450 = vadd.s32 %v6445, 1
    %vm6451 = vcmp.gt.s32.totalorder %v6450, 0
    %v6452 = vsel %vm6451, %v6450, 0
    %v6453 = vshrl.u32 %v6452, 5
    %v6454 = vand.u32 %v6452, 31
    %v6455 = vsub.s32 32, %v6454
    %v6456 = vshrl.u32 683565275, %v6455
    %v6457 = vshll.u32 683565275, %v6454
    %v6458 = vshrl.u32 2475754826, %v6455
    %v6459 = vor.u32 %v6457, %v6458
    %v6460 = vshll.u32 2475754826, %v6454
    %v6461 = vshrl.u32 2131351028, %v6455
    %v6462 = vor.u32 %v6460, %v6461
    %v6463 = vshll.u32 2131351028, %v6454
    %v6464 = vshrl.u32 2102212464, %v6455
    %v6465 = vor.u32 %v6463, %v6464
    %v6466 = vshll.u32 2102212464, %v6454
    %v6467 = vshrl.u32 920167782, %v6455
    %v6468 = vor.u32 %v6466, %v6467
    %v6469 = vshll.u32 920167782, %v6454
    %v6470 = vshrl.u32 1326507024, %v6455
    %v6471 = vor.u32 %v6469, %v6470
    %vm6472 = vcmp.lt.s32.totalorder %v6453, 1
    %vm6473 = vcmp.lt.s32.totalorder %v6453, 2
    %vm6474 = vcmp.lt.s32.totalorder %v6453, 3
    %vm6475 = vcmp.lt.s32.totalorder %v6453, 4
    %v6476 = vsel %vm6472, %v6456, %v6459
    %v6477 = vsel %vm6475, %v6465, 2102212464
    %v6478 = vsel %vm6474, %v6462, %v6477
    %v6479 = vsel %vm6473, %v6476, %v6478
    %v6480 = vsel %vm6472, %v6459, %v6462
    %v6481 = vsel %vm6475, %v6468, 920167782
    %v6482 = vsel %vm6474, %v6465, %v6481
    %v6483 = vsel %vm6473, %v6480, %v6482
    %v6484 = vsel %vm6472, %v6462, %v6465
    %v6485 = vsel %vm6475, %v6471, 1326507024
    %v6486 = vsel %vm6474, %v6468, %v6485
    %v6487 = vsel %vm6473, %v6484, %v6486
    %v6488 = vshll.u32 %v6448, 8
    %v6489 = vmul.u32.u64.compose %v6488, %v6487
    %v6490 = vextract.low.u32 %v6489
    %v6491 = vextract.high.u32 %v6489
    %v6492 = vmul.u32.u64.compose %v6488, %v6483
    %v6493 = vextract.low.u32 %v6492
    %v6494 = vextract.high.u32 %v6492
    %v6495 = vmul.u32 %v6488, %v6479
    %v6496 = vadd.s32 %v6491, %v6493
    %vm6497 = vc.u32 %v6491, %v6493
    %v6498 = vadd.s32 %v6494, 1
    %v6499 = vsel %vm6497, %v6498, %v6494
    %v6500 = vadd.s32 %v6495, %v6499
    %v6501 = vadd.s32 %v6500, 536870912
    %v6502 = vshrl.u32 %v6501, 30
    %v6503 = vshll.u32 %v6502, 30
    %v6504 = vsub.s32 %v6500, %v6503
    %vm6505 = vcmp.lt.s32.totalorder %v6504, 0
    %v6506 = vsub.s32 0, %v6504
    %v6507 = vsel %vm6505, %v6506, %v6504
    %v6508 = vclz %v6507
    %v6509 = vsub.s32 %v6508, 2
    %vm6510 = vcmp.gt.s32.totalorder 0, %v6509
    %v6511 = vsel %vm6510, 0, %v6509
    %v6512 = vsub.s32 32, %v6511
    %v6513 = vshll.u32 %v6504, %v6511
    %v6514 = vshrl.u32 %v6496, %v6512
    %v6515 = vor.u32 %v6513, %v6514
    %v6516 = vsub.s32 4294967266, %v6511
    %v6517 = vadd.s32 %v6516, 127
    %v6518 = vshll.u32 %v6517, 23
    %v6519 = vor.u32 4788187, %v6518
    %v6520 = vand.u32 2147483647, %v6519
    %v6522 = vcvt.s32.f32 %v6515
    %v6523 = vmul.f32 %v6522, %v6520
    %v6524 = vxor.u32 %v6523, 2147483648
    %v6525 = vsel %vm6442, %v6524, %v6523
    %v6526 = vsub.s32 4, %v6502
    %v6527 = vsel %vm6442, %v6526, %v6502
    %v6528 = vsel %vm6441, %v5909, %v6525
    %v6529 = vsel %vm6441, 0, %v6527
    %v6530 = vcosq.f32.pop %v6528
    %v6531 = vsinq.f32.pop %v6528
    %vm6532 = vweird.f32 %v5909
    %v6533 = vadd.s32 %v6529, 3
    %v6534 = vand.u32 %v6533, 3
    %vm6535 = vcmp.lt.s32.totalorder %v6534, 2
    %vm6536 = vcmp.eq.s32.totalorder %v6534, 0
    %v6537 = vxor.u32 %v6531, 2147483648
    %v6538 = vsel %vm6536, %v6530, %v6537
    %vm6539 = vcmp.eq.s32.totalorder %v6534, 2
    %v6540 = vxor.u32 %v6530, 2147483648
    %v6541 = vsel %vm6539, %v6540, %v6531
    %v6542 = vsel %vm6535, %v6538, %v6541
    %v6543 = vsel %vm6532, nan, %v6542
    %v6544 = vand.u32 2147483647, %v5910
    %vm6545 = vcmp.le.f32.partialorder %v6544, 0.7853982
    %vm6546 = vcmp.lt.s32.totalorder %v5910, 0
    %v6547 = vand.u32 %v5910, 2139095040
    %v6548 = vshrl.u32 %v6547, 23
    %v6549 = vsub.s32 %v6548, 127
    %v6550 = vand.u32 2147483647, %v5910
    %v6551 = vand.u32 %v6550, 8388607
    %v6552 = vor.u32 %v6551, 8388608
    %v6553 = vsub.s32 0, %v6552
    %v6554 = vadd.s32 %v6549, 1
    %vm6555 = vcmp.gt.s32.totalorder %v6554, 0
    %v6556 = vsel %vm6555, %v6554, 0
    %v6557 = vshrl.u32 %v6556, 5
    %v6558 = vand.u32 %v6556, 31
    %v6559 = vsub.s32 32, %v6558
    %v6560 = vshrl.u32 683565275, %v6559
    %v6561 = vshll.u32 683565275, %v6558
    %v6562 = vshrl.u32 2475754826, %v6559
    %v6563 = vor.u32 %v6561, %v6562
    %v6564 = vshll.u32 2475754826, %v6558
    %v6565 = vshrl.u32 2131351028, %v6559
    %v6566 = vor.u32 %v6564, %v6565
    %v6567 = vshll.u32 2131351028, %v6558
    %v6568 = vshrl.u32 2102212464, %v6559
    %v6569 = vor.u32 %v6567, %v6568
    %v6570 = vshll.u32 2102212464, %v6558
    %v6571 = vshrl.u32 920167782, %v6559
    %v6572 = vor.u32 %v6570, %v6571
    %v6573 = vshll.u32 920167782, %v6558
    %v6574 = vshrl.u32 1326507024, %v6559
    %v6575 = vor.u32 %v6573, %v6574
    %vm6576 = vcmp.lt.s32.totalorder %v6557, 1
    %vm6577 = vcmp.lt.s32.totalorder %v6557, 2
    %vm6578 = vcmp.lt.s32.totalorder %v6557, 3
    %vm6579 = vcmp.lt.s32.totalorder %v6557, 4
    %v6580 = vsel %vm6576, %v6560, %v6563
    %v6581 = vsel %vm6579, %v6569, 2102212464
    %v6582 = vsel %vm6578, %v6566, %v6581
    %v6583 = vsel %vm6577, %v6580, %v6582
    %v6584 = vsel %vm6576, %v6563, %v6566
    %v6585 = vsel %vm6579, %v6572, 920167782
    %v6586 = vsel %vm6578, %v6569, %v6585
    %v6587 = vsel %vm6577, %v6584, %v6586
    %v6588 = vsel %vm6576, %v6566, %v6569
    %v6589 = vsel %vm6579, %v6575, 1326507024
    %v6590 = vsel %vm6578, %v6572, %v6589
    %v6591 = vsel %vm6577, %v6588, %v6590
    %v6592 = vshll.u32 %v6552, 8
    %v6593 = vmul.u32.u64.compose %v6592, %v6591
    %v6594 = vextract.low.u32 %v6593
    %v6595 = vextract.high.u32 %v6593
    %v6596 = vmul.u32.u64.compose %v6592, %v6587
    %v6597 = vextract.low.u32 %v6596
    %v6598 = vextract.high.u32 %v6596
    %v6599 = vmul.u32 %v6592, %v6583
    %v6600 = vadd.s32 %v6595, %v6597
    %vm6601 = vc.u32 %v6595, %v6597
    %v6602 = vadd.s32 %v6598, 1
    %v6603 = vsel %vm6601, %v6602, %v6598
    %v6604 = vadd.s32 %v6599, %v6603
    %v6605 = vadd.s32 %v6604, 536870912
    %v6606 = vshrl.u32 %v6605, 30
    %v6607 = vshll.u32 %v6606, 30
    %v6608 = vsub.s32 %v6604, %v6607
    %vm6609 = vcmp.lt.s32.totalorder %v6608, 0
    %v6610 = vsub.s32 0, %v6608
    %v6611 = vsel %vm6609, %v6610, %v6608
    %v6612 = vclz %v6611
    %v6613 = vsub.s32 %v6612, 2
    %vm6614 = vcmp.gt.s32.totalorder 0, %v6613
    %v6615 = vsel %vm6614, 0, %v6613
    %v6616 = vsub.s32 32, %v6615
    %v6617 = vshll.u32 %v6608, %v6615
    %v6618 = vshrl.u32 %v6600, %v6616
    %v6619 = vor.u32 %v6617, %v6618
    %v6620 = vsub.s32 4294967266, %v6615
    %v6621 = vadd.s32 %v6620, 127
    %v6622 = vshll.u32 %v6621, 23
    %v6623 = vor.u32 4788187, %v6622
    %v6624 = vand.u32 2147483647, %v6623
    %v6626 = vcvt.s32.f32 %v6619
    %v6627 = vmul.f32 %v6626, %v6624
    %v6628 = vxor.u32 %v6627, 2147483648
    %v6629 = vsel %vm6546, %v6628, %v6627
    %v6630 = vsub.s32 4, %v6606
    %v6631 = vsel %vm6546, %v6630, %v6606
    %v6632 = vsel %vm6545, %v5910, %v6629
    %v6633 = vsel %vm6545, 0, %v6631
    %v6634 = vcosq.f32.pop %v6632
    %v6635 = vsinq.f32.pop %v6632
    %vm6636 = vweird.f32 %v5910
    %v6637 = vadd.s32 %v6633, 3
    %v6638 = vand.u32 %v6637, 3
    %vm6639 = vcmp.lt.s32.totalorder %v6638, 2
    %vm6640 = vcmp.eq.s32.totalorder %v6638, 0
    %v6641 = vxor.u32 %v6635, 2147483648
    %v6642 = vsel %vm6640, %v6634, %v6641
    %vm6643 = vcmp.eq.s32.totalorder %v6638, 2
    %v6644 = vxor.u32 %v6634, 2147483648
    %v6645 = vsel %vm6643, %v6644, %v6635
    %v6646 = vsel %vm6639, %v6642, %v6645
    %v6647 = vsel %vm6636, nan, %v6646
    %v6648 = vand.u32 2147483647, %v5911
    %vm6649 = vcmp.le.f32.partialorder %v6648, 0.7853982
    %vm6650 = vcmp.lt.s32.totalorder %v5911, 0
    %v6651 = vand.u32 %v5911, 2139095040
    %v6652 = vshrl.u32 %v6651, 23
    %v6653 = vsub.s32 %v6652, 127
    %v6654 = vand.u32 2147483647, %v5911
    %v6655 = vand.u32 %v6654, 8388607
    %v6656 = vor.u32 %v6655, 8388608
    %v6657 = vsub.s32 0, %v6656
    %v6658 = vadd.s32 %v6653, 1
    %vm6659 = vcmp.gt.s32.totalorder %v6658, 0
    %v6660 = vsel %vm6659, %v6658, 0
    %v6661 = vshrl.u32 %v6660, 5
    %v6662 = vand.u32 %v6660, 31
    %v6663 = vsub.s32 32, %v6662
    %v6664 = vshrl.u32 683565275, %v6663
    %v6665 = vshll.u32 683565275, %v6662
    %v6666 = vshrl.u32 2475754826, %v6663
    %v6667 = vor.u32 %v6665, %v6666
    %v6668 = vshll.u32 2475754826, %v6662
    %v6669 = vshrl.u32 2131351028, %v6663
    %v6670 = vor.u32 %v6668, %v6669
    %v6671 = vshll.u32 2131351028, %v6662
    %v6672 = vshrl.u32 2102212464, %v6663
    %v6673 = vor.u32 %v6671, %v6672
    %v6674 = vshll.u32 2102212464, %v6662
    %v6675 = vshrl.u32 920167782, %v6663
    %v6676 = vor.u32 %v6674, %v6675
    %v6677 = vshll.u32 920167782, %v6662
    %v6678 = vshrl.u32 1326507024, %v6663
    %v6679 = vor.u32 %v6677, %v6678
    %vm6680 = vcmp.lt.s32.totalorder %v6661, 1
    %vm6681 = vcmp.lt.s32.totalorder %v6661, 2
    %vm6682 = vcmp.lt.s32.totalorder %v6661, 3
    %vm6683 = vcmp.lt.s32.totalorder %v6661, 4
    %v6684 = vsel %vm6680, %v6664, %v6667
    %v6685 = vsel %vm6683, %v6673, 2102212464
    %v6686 = vsel %vm6682, %v6670, %v6685
    %v6687 = vsel %vm6681, %v6684, %v6686
    %v6688 = vsel %vm6680, %v6667, %v6670
    %v6689 = vsel %vm6683, %v6676, 920167782
    %v6690 = vsel %vm6682, %v6673, %v6689
    %v6691 = vsel %vm6681, %v6688, %v6690
    %v6692 = vsel %vm6680, %v6670, %v6673
    %v6693 = vsel %vm6683, %v6679, 1326507024
    %v6694 = vsel %vm6682, %v6676, %v6693
    %v6695 = vsel %vm6681, %v6692, %v6694
    %v6696 = vshll.u32 %v6656, 8
    %v6697 = vmul.u32.u64.compose %v6696, %v6695
    %v6698 = vextract.low.u32 %v6697
    %v6699 = vextract.high.u32 %v6697
    %v6700 = vmul.u32.u64.compose %v6696, %v6691
    %v6701 = vextract.low.u32 %v6700
    %v6702 = vextract.high.u32 %v6700
    %v6703 = vmul.u32 %v6696, %v6687
    %v6704 = vadd.s32 %v6699, %v6701
    %vm6705 = vc.u32 %v6699, %v6701
    %v6706 = vadd.s32 %v6702, 1
    %v6707 = vsel %vm6705, %v6706, %v6702
    %v6708 = vadd.s32 %v6703, %v6707
    %v6709 = vadd.s32 %v6708, 536870912
    %v6710 = vshrl.u32 %v6709, 30
    %v6711 = vshll.u32 %v6710, 30
    %v6712 = vsub.s32 %v6708, %v6711
    %vm6713 = vcmp.lt.s32.totalorder %v6712, 0
    %v6714 = vsub.s32 0, %v6712
    %v6715 = vsel %vm6713, %v6714, %v6712
    %v6716 = vclz %v6715
    %v6717 = vsub.s32 %v6716, 2
    %vm6718 = vcmp.gt.s32.totalorder 0, %v6717
    %v6719 = vsel %vm6718, 0, %v6717
    %v6720 = vsub.s32 32, %v6719
    %v6721 = vshll.u32 %v6712, %v6719
    %v6722 = vshrl.u32 %v6704, %v6720
    %v6723 = vor.u32 %v6721, %v6722
    %v6724 = vsub.s32 4294967266, %v6719
    %v6725 = vadd.s32 %v6724, 127
    %v6726 = vshll.u32 %v6725, 23
    %v6727 = vor.u32 4788187, %v6726
    %v6728 = vand.u32 2147483647, %v6727
    %v6730 = vcvt.s32.f32 %v6723
    %v6731 = vmul.f32 %v6730, %v6728
    %v6732 = vxor.u32 %v6731, 2147483648
    %v6733 = vsel %vm6650, %v6732, %v6731
    %v6734 = vsub.s32 4, %v6710
    %v6735 = vsel %vm6650, %v6734, %v6710
    %v6736 = vsel %vm6649, %v5911, %v6733
    %v6737 = vsel %vm6649, 0, %v6735
    %v6738 = vcosq.f32.pop %v6736
    %v6739 = vsinq.f32.pop %v6736
    %vm6740 = vweird.f32 %v5911
    %v6741 = vadd.s32 %v6737, 3
    %v6742 = vand.u32 %v6741, 3
    %vm6743 = vcmp.lt.s32.totalorder %v6742, 2
    %vm6744 = vcmp.eq.s32.totalorder %v6742, 0
    %v6745 = vxor.u32 %v6739, 2147483648
    %v6746 = vsel %vm6744, %v6738, %v6745
    %vm6747 = vcmp.eq.s32.totalorder %v6742, 2
    %v6748 = vxor.u32 %v6738, 2147483648
    %v6749 = vsel %vm6747, %v6748, %v6739
    %v6750 = vsel %vm6743, %v6746, %v6749
    %v6751 = vsel %vm6740, nan, %v6750
    %v6752 = vand.u32 2147483647, %v5912
    %vm6753 = vcmp.le.f32.partialorder %v6752, 0.7853982
    %vm6754 = vcmp.lt.s32.totalorder %v5912, 0
    %v6755 = vand.u32 %v5912, 2139095040
    %v6756 = vshrl.u32 %v6755, 23
    %v6757 = vsub.s32 %v6756, 127
    %v6758 = vand.u32 2147483647, %v5912
    %v6759 = vand.u32 %v6758, 8388607
    %v6760 = vor.u32 %v6759, 8388608
    %v6761 = vsub.s32 0, %v6760
    %v6762 = vadd.s32 %v6757, 1
    %vm6763 = vcmp.gt.s32.totalorder %v6762, 0
    %v6764 = vsel %vm6763, %v6762, 0
    %v6765 = vshrl.u32 %v6764, 5
    %v6766 = vand.u32 %v6764, 31
    %v6767 = vsub.s32 32, %v6766
    %v6768 = vshrl.u32 683565275, %v6767
    %v6769 = vshll.u32 683565275, %v6766
    %v6770 = vshrl.u32 2475754826, %v6767
    %v6771 = vor.u32 %v6769, %v6770
    %v6772 = vshll.u32 2475754826, %v6766
    %v6773 = vshrl.u32 2131351028, %v6767
    %v6774 = vor.u32 %v6772, %v6773
    %v6775 = vshll.u32 2131351028, %v6766
    %v6776 = vshrl.u32 2102212464, %v6767
    %v6777 = vor.u32 %v6775, %v6776
    %v6778 = vshll.u32 2102212464, %v6766
    %v6779 = vshrl.u32 920167782, %v6767
    %v6780 = vor.u32 %v6778, %v6779
    %v6781 = vshll.u32 920167782, %v6766
    %v6782 = vshrl.u32 1326507024, %v6767
    %v6783 = vor.u32 %v6781, %v6782
    %vm6784 = vcmp.lt.s32.totalorder %v6765, 1
    %vm6785 = vcmp.lt.s32.totalorder %v6765, 2
    %vm6786 = vcmp.lt.s32.totalorder %v6765, 3
    %vm6787 = vcmp.lt.s32.totalorder %v6765, 4
    %v6788 = vsel %vm6784, %v6768, %v6771
    %v6789 = vsel %vm6787, %v6777, 2102212464
    %v6790 = vsel %vm6786, %v6774, %v6789
    %v6791 = vsel %vm6785, %v6788, %v6790
    %v6792 = vsel %vm6784, %v6771, %v6774
    %v6793 = vsel %vm6787, %v6780, 920167782
    %v6794 = vsel %vm6786, %v6777, %v6793
    %v6795 = vsel %vm6785, %v6792, %v6794
    %v6796 = vsel %vm6784, %v6774, %v6777
    %v6797 = vsel %vm6787, %v6783, 1326507024
    %v6798 = vsel %vm6786, %v6780, %v6797
    %v6799 = vsel %vm6785, %v6796, %v6798
    %v6800 = vshll.u32 %v6760, 8
    %v6801 = vmul.u32.u64.compose %v6800, %v6799
    %v6802 = vextract.low.u32 %v6801
    %v6803 = vextract.high.u32 %v6801
    %v6804 = vmul.u32.u64.compose %v6800, %v6795
    %v6805 = vextract.low.u32 %v6804
    %v6806 = vextract.high.u32 %v6804
    %v6807 = vmul.u32 %v6800, %v6791
    %v6808 = vadd.s32 %v6803, %v6805
    %vm6809 = vc.u32 %v6803, %v6805
    %v6810 = vadd.s32 %v6806, 1
    %v6811 = vsel %vm6809, %v6810, %v6806
    %v6812 = vadd.s32 %v6807, %v6811
    %v6813 = vadd.s32 %v6812, 536870912
    %v6814 = vshrl.u32 %v6813, 30
    %v6815 = vshll.u32 %v6814, 30
    %v6816 = vsub.s32 %v6812, %v6815
    %vm6817 = vcmp.lt.s32.totalorder %v6816, 0
    %v6818 = vsub.s32 0, %v6816
    %v6819 = vsel %vm6817, %v6818, %v6816
    %v6820 = vclz %v6819
    %v6821 = vsub.s32 %v6820, 2
    %vm6822 = vcmp.gt.s32.totalorder 0, %v6821
    %v6823 = vsel %vm6822, 0, %v6821
    %v6824 = vsub.s32 32, %v6823
    %v6825 = vshll.u32 %v6816, %v6823
    %v6826 = vshrl.u32 %v6808, %v6824
    %v6827 = vor.u32 %v6825, %v6826
    %v6828 = vsub.s32 4294967266, %v6823
    %v6829 = vadd.s32 %v6828, 127
    %v6830 = vshll.u32 %v6829, 23
    %v6831 = vor.u32 4788187, %v6830
    %v6832 = vand.u32 2147483647, %v6831
    %v6834 = vcvt.s32.f32 %v6827
    %v6835 = vmul.f32 %v6834, %v6832
    %v6836 = vxor.u32 %v6835, 2147483648
    %v6837 = vsel %vm6754, %v6836, %v6835
    %v6838 = vsub.s32 4, %v6814
    %v6839 = vsel %vm6754, %v6838, %v6814
    %v6840 = vsel %vm6753, %v5912, %v6837
    %v6841 = vsel %vm6753, 0, %v6839
    %v6842 = vcosq.f32.pop %v6840
    %v6843 = vsinq.f32.pop %v6840
    %vm6844 = vweird.f32 %v5912
    %v6845 = vadd.s32 %v6841, 3
    %v6846 = vand.u32 %v6845, 3
    %vm6847 = vcmp.lt.s32.totalorder %v6846, 2
    %vm6848 = vcmp.eq.s32.totalorder %v6846, 0
    %v6849 = vxor.u32 %v6843, 2147483648
    %v6850 = vsel %vm6848, %v6842, %v6849
    %vm6851 = vcmp.eq.s32.totalorder %v6846, 2
    %v6852 = vxor.u32 %v6842, 2147483648
    %v6853 = vsel %vm6851, %v6852, %v6843
    %v6854 = vsel %vm6847, %v6850, %v6853
    %v6855 = vsel %vm6844, nan, %v6854
    %v6856 = vand.u32 2147483647, %v5913
    %vm6857 = vcmp.le.f32.partialorder %v6856, 0.7853982
    %vm6858 = vcmp.lt.s32.totalorder %v5913, 0
    %v6859 = vand.u32 %v5913, 2139095040
    %v6860 = vshrl.u32 %v6859, 23
    %v6861 = vsub.s32 %v6860, 127
    %v6862 = vand.u32 2147483647, %v5913
    %v6863 = vand.u32 %v6862, 8388607
    %v6864 = vor.u32 %v6863, 8388608
    %v6865 = vsub.s32 0, %v6864
    %v6866 = vadd.s32 %v6861, 1
    %vm6867 = vcmp.gt.s32.totalorder %v6866, 0
    %v6868 = vsel %vm6867, %v6866, 0
    %v6869 = vshrl.u32 %v6868, 5
    %v6870 = vand.u32 %v6868, 31
    %v6871 = vsub.s32 32, %v6870
    %v6872 = vshrl.u32 683565275, %v6871
    %v6873 = vshll.u32 683565275, %v6870
    %v6874 = vshrl.u32 2475754826, %v6871
    %v6875 = vor.u32 %v6873, %v6874
    %v6876 = vshll.u32 2475754826, %v6870
    %v6877 = vshrl.u32 2131351028, %v6871
    %v6878 = vor.u32 %v6876, %v6877
    %v6879 = vshll.u32 2131351028, %v6870
    %v6880 = vshrl.u32 2102212464, %v6871
    %v6881 = vor.u32 %v6879, %v6880
    %v6882 = vshll.u32 2102212464, %v6870
    %v6883 = vshrl.u32 920167782, %v6871
    %v6884 = vor.u32 %v6882, %v6883
    %v6885 = vshll.u32 920167782, %v6870
    %v6886 = vshrl.u32 1326507024, %v6871
    %v6887 = vor.u32 %v6885, %v6886
    %vm6888 = vcmp.lt.s32.totalorder %v6869, 1
    %vm6889 = vcmp.lt.s32.totalorder %v6869, 2
    %vm6890 = vcmp.lt.s32.totalorder %v6869, 3
    %vm6891 = vcmp.lt.s32.totalorder %v6869, 4
    %v6892 = vsel %vm6888, %v6872, %v6875
    %v6893 = vsel %vm6891, %v6881, 2102212464
    %v6894 = vsel %vm6890, %v6878, %v6893
    %v6895 = vsel %vm6889, %v6892, %v6894
    %v6896 = vsel %vm6888, %v6875, %v6878
    %v6897 = vsel %vm6891, %v6884, 920167782
    %v6898 = vsel %vm6890, %v6881, %v6897
    %v6899 = vsel %vm6889, %v6896, %v6898
    %v6900 = vsel %vm6888, %v6878, %v6881
    %v6901 = vsel %vm6891, %v6887, 1326507024
    %v6902 = vsel %vm6890, %v6884, %v6901
    %v6903 = vsel %vm6889, %v6900, %v6902
    %v6904 = vshll.u32 %v6864, 8
    %v6905 = vmul.u32.u64.compose %v6904, %v6903
    %v6906 = vextract.low.u32 %v6905
    %v6907 = vextract.high.u32 %v6905
    %v6908 = vmul.u32.u64.compose %v6904, %v6899
    %v6909 = vextract.low.u32 %v6908
    %v6910 = vextract.high.u32 %v6908
    %v6911 = vmul.u32 %v6904, %v6895
    %v6912 = vadd.s32 %v6907, %v6909
    %vm6913 = vc.u32 %v6907, %v6909
    %v6914 = vadd.s32 %v6910, 1
    %v6915 = vsel %vm6913, %v6914, %v6910
    %v6916 = vadd.s32 %v6911, %v6915
    %v6917 = vadd.s32 %v6916, 536870912
    %v6918 = vshrl.u32 %v6917, 30
    %v6919 = vshll.u32 %v6918, 30
    %v6920 = vsub.s32 %v6916, %v6919
    %vm6921 = vcmp.lt.s32.totalorder %v6920, 0
    %v6922 = vsub.s32 0, %v6920
    %v6923 = vsel %vm6921, %v6922, %v6920
    %v6924 = vclz %v6923
    %v6925 = vsub.s32 %v6924, 2
    %vm6926 = vcmp.gt.s32.totalorder 0, %v6925
    %v6927 = vsel %vm6926, 0, %v6925
    %v6928 = vsub.s32 32, %v6927
    %v6929 = vshll.u32 %v6920, %v6927
    %v6930 = vshrl.u32 %v6912, %v6928
    %v6931 = vor.u32 %v6929, %v6930
    %v6932 = vsub.s32 4294967266, %v6927
    %v6933 = vadd.s32 %v6932, 127
    %v6934 = vshll.u32 %v6933, 23
    %v6935 = vor.u32 4788187, %v6934
    %v6936 = vand.u32 2147483647, %v6935
    %v6938 = vcvt.s32.f32 %v6931
    %v6939 = vmul.f32 %v6938, %v6936
    %v6940 = vxor.u32 %v6939, 2147483648
    %v6941 = vsel %vm6858, %v6940, %v6939
    %v6942 = vsub.s32 4, %v6918
    %v6943 = vsel %vm6858, %v6942, %v6918
    %v6944 = vsel %vm6857, %v5913, %v6941
    %v6945 = vsel %vm6857, 0, %v6943
    %v6946 = vcosq.f32.pop %v6944
    %v6947 = vsinq.f32.pop %v6944
    %vm6948 = vweird.f32 %v5913
    %v6949 = vadd.s32 %v6945, 3
    %v6950 = vand.u32 %v6949, 3
    %vm6951 = vcmp.lt.s32.totalorder %v6950, 2
    %vm6952 = vcmp.eq.s32.totalorder %v6950, 0
    %v6953 = vxor.u32 %v6947, 2147483648
    %v6954 = vsel %vm6952, %v6946, %v6953
    %vm6955 = vcmp.eq.s32.totalorder %v6950, 2
    %v6956 = vxor.u32 %v6946, 2147483648
    %v6957 = vsel %vm6955, %v6956, %v6947
    %v6958 = vsel %vm6951, %v6954, %v6957
    %v6959 = vsel %vm6948, nan, %v6958
    %v6960 = vand.u32 2147483647, %v5914
    %vm6961 = vcmp.le.f32.partialorder %v6960, 0.7853982
    %vm6962 = vcmp.lt.s32.totalorder %v5914, 0
    %v6963 = vand.u32 %v5914, 2139095040
    %v6964 = vshrl.u32 %v6963, 23
    %v6965 = vsub.s32 %v6964, 127
    %v6966 = vand.u32 2147483647, %v5914
    %v6967 = vand.u32 %v6966, 8388607
    %v6968 = vor.u32 %v6967, 8388608
    %v6969 = vsub.s32 0, %v6968
    %v6970 = vadd.s32 %v6965, 1
    %vm6971 = vcmp.gt.s32.totalorder %v6970, 0
    %v6972 = vsel %vm6971, %v6970, 0
    %v6973 = vshrl.u32 %v6972, 5
    %v6974 = vand.u32 %v6972, 31
    %v6975 = vsub.s32 32, %v6974
    %v6976 = vshrl.u32 683565275, %v6975
    %v6977 = vshll.u32 683565275, %v6974
    %v6978 = vshrl.u32 2475754826, %v6975
    %v6979 = vor.u32 %v6977, %v6978
    %v6980 = vshll.u32 2475754826, %v6974
    %v6981 = vshrl.u32 2131351028, %v6975
    %v6982 = vor.u32 %v6980, %v6981
    %v6983 = vshll.u32 2131351028, %v6974
    %v6984 = vshrl.u32 2102212464, %v6975
    %v6985 = vor.u32 %v6983, %v6984
    %v6986 = vshll.u32 2102212464, %v6974
    %v6987 = vshrl.u32 920167782, %v6975
    %v6988 = vor.u32 %v6986, %v6987
    %v6989 = vshll.u32 920167782, %v6974
    %v6990 = vshrl.u32 1326507024, %v6975
    %v6991 = vor.u32 %v6989, %v6990
    %vm6992 = vcmp.lt.s32.totalorder %v6973, 1
    %vm6993 = vcmp.lt.s32.totalorder %v6973, 2
    %vm6994 = vcmp.lt.s32.totalorder %v6973, 3
    %vm6995 = vcmp.lt.s32.totalorder %v6973, 4
    %v6996 = vsel %vm6992, %v6976, %v6979
    %v6997 = vsel %vm6995, %v6985, 2102212464
    %v6998 = vsel %vm6994, %v6982, %v6997
    %v6999 = vsel %vm6993, %v6996, %v6998
    %v7000 = vsel %vm6992, %v6979, %v6982
    %v7001 = vsel %vm6995, %v6988, 920167782
    %v7002 = vsel %vm6994, %v6985, %v7001
    %v7003 = vsel %vm6993, %v7000, %v7002
    %v7004 = vsel %vm6992, %v6982, %v6985
    %v7005 = vsel %vm6995, %v6991, 1326507024
    %v7006 = vsel %vm6994, %v6988, %v7005
    %v7007 = vsel %vm6993, %v7004, %v7006
    %v7008 = vshll.u32 %v6968, 8
    %v7009 = vmul.u32.u64.compose %v7008, %v7007
    %v7010 = vextract.low.u32 %v7009
    %v7011 = vextract.high.u32 %v7009
    %v7012 = vmul.u32.u64.compose %v7008, %v7003
    %v7013 = vextract.low.u32 %v7012
    %v7014 = vextract.high.u32 %v7012
    %v7015 = vmul.u32 %v7008, %v6999
    %v7016 = vadd.s32 %v7011, %v7013
    %vm7017 = vc.u32 %v7011, %v7013
    %v7018 = vadd.s32 %v7014, 1
    %v7019 = vsel %vm7017, %v7018, %v7014
    %v7020 = vadd.s32 %v7015, %v7019
    %v7021 = vadd.s32 %v7020, 536870912
    %v7022 = vshrl.u32 %v7021, 30
    %v7023 = vshll.u32 %v7022, 30
    %v7024 = vsub.s32 %v7020, %v7023
    %vm7025 = vcmp.lt.s32.totalorder %v7024, 0
    %v7026 = vsub.s32 0, %v7024
    %v7027 = vsel %vm7025, %v7026, %v7024
    %v7028 = vclz %v7027
    %v7029 = vsub.s32 %v7028, 2
    %vm7030 = vcmp.gt.s32.totalorder 0, %v7029
    %v7031 = vsel %vm7030, 0, %v7029
    %v7032 = vsub.s32 32, %v7031
    %v7033 = vshll.u32 %v7024, %v7031
    %v7034 = vshrl.u32 %v7016, %v7032
    %v7035 = vor.u32 %v7033, %v7034
    %v7036 = vsub.s32 4294967266, %v7031
    %v7037 = vadd.s32 %v7036, 127
    %v7038 = vshll.u32 %v7037, 23
    %v7039 = vor.u32 4788187, %v7038
    %v7040 = vand.u32 2147483647, %v7039
    %v7042 = vcvt.s32.f32 %v7035
    %v7043 = vmul.f32 %v7042, %v7040
    %v7044 = vxor.u32 %v7043, 2147483648
    %v7045 = vsel %vm6962, %v7044, %v7043
    %v7046 = vsub.s32 4, %v7022
    %v7047 = vsel %vm6962, %v7046, %v7022
    %v7048 = vsel %vm6961, %v5914, %v7045
    %v7049 = vsel %vm6961, 0, %v7047
    %v7050 = vcosq.f32.pop %v7048
    %v7051 = vsinq.f32.pop %v7048
    %vm7052 = vweird.f32 %v5914
    %v7053 = vadd.s32 %v7049, 3
    %v7054 = vand.u32 %v7053, 3
    %vm7055 = vcmp.lt.s32.totalorder %v7054, 2
    %vm7056 = vcmp.eq.s32.totalorder %v7054, 0
    %v7057 = vxor.u32 %v7051, 2147483648
    %v7058 = vsel %vm7056, %v7050, %v7057
    %vm7059 = vcmp.eq.s32.totalorder %v7054, 2
    %v7060 = vxor.u32 %v7050, 2147483648
    %v7061 = vsel %vm7059, %v7060, %v7051
    %v7062 = vsel %vm7055, %v7058, %v7061
    %v7063 = vsel %vm7052, nan, %v7062
    %v7064 = vand.u32 2147483647, %v5915
    %vm7065 = vcmp.le.f32.partialorder %v7064, 0.7853982
    %vm7066 = vcmp.lt.s32.totalorder %v5915, 0
    %v7067 = vand.u32 %v5915, 2139095040
    %v7068 = vshrl.u32 %v7067, 23
    %v7069 = vsub.s32 %v7068, 127
    %v7070 = vand.u32 2147483647, %v5915
    %v7071 = vand.u32 %v7070, 8388607
    %v7072 = vor.u32 %v7071, 8388608
    %v7073 = vsub.s32 0, %v7072
    %v7074 = vadd.s32 %v7069, 1
    %vm7075 = vcmp.gt.s32.totalorder %v7074, 0
    %v7076 = vsel %vm7075, %v7074, 0
    %v7077 = vshrl.u32 %v7076, 5
    %v7078 = vand.u32 %v7076, 31
    %v7079 = vsub.s32 32, %v7078
    %v7080 = vshrl.u32 683565275, %v7079
    %v7081 = vshll.u32 683565275, %v7078
    %v7082 = vshrl.u32 2475754826, %v7079
    %v7083 = vor.u32 %v7081, %v7082
    %v7084 = vshll.u32 2475754826, %v7078
    %v7085 = vshrl.u32 2131351028, %v7079
    %v7086 = vor.u32 %v7084, %v7085
    %v7087 = vshll.u32 2131351028, %v7078
    %v7088 = vshrl.u32 2102212464, %v7079
    %v7089 = vor.u32 %v7087, %v7088
    %v7090 = vshll.u32 2102212464, %v7078
    %v7091 = vshrl.u32 920167782, %v7079
    %v7092 = vor.u32 %v7090, %v7091
    %v7093 = vshll.u32 920167782, %v7078
    %v7094 = vshrl.u32 1326507024, %v7079
    %v7095 = vor.u32 %v7093, %v7094
    %vm7096 = vcmp.lt.s32.totalorder %v7077, 1
    %vm7097 = vcmp.lt.s32.totalorder %v7077, 2
    %vm7098 = vcmp.lt.s32.totalorder %v7077, 3
    %vm7099 = vcmp.lt.s32.totalorder %v7077, 4
    %v7100 = vsel %vm7096, %v7080, %v7083
    %v7101 = vsel %vm7099, %v7089, 2102212464
    %v7102 = vsel %vm7098, %v7086, %v7101
    %v7103 = vsel %vm7097, %v7100, %v7102
    %v7104 = vsel %vm7096, %v7083, %v7086
    %v7105 = vsel %vm7099, %v7092, 920167782
    %v7106 = vsel %vm7098, %v7089, %v7105
    %v7107 = vsel %vm7097, %v7104, %v7106
    %v7108 = vsel %vm7096, %v7086, %v7089
    %v7109 = vsel %vm7099, %v7095, 1326507024
    %v7110 = vsel %vm7098, %v7092, %v7109
    %v7111 = vsel %vm7097, %v7108, %v7110
    %v7112 = vshll.u32 %v7072, 8
    %v7113 = vmul.u32.u64.compose %v7112, %v7111
    %v7114 = vextract.low.u32 %v7113
    %v7115 = vextract.high.u32 %v7113
    %v7116 = vmul.u32.u64.compose %v7112, %v7107
    %v7117 = vextract.low.u32 %v7116
    %v7118 = vextract.high.u32 %v7116
    %v7119 = vmul.u32 %v7112, %v7103
    %v7120 = vadd.s32 %v7115, %v7117
    %vm7121 = vc.u32 %v7115, %v7117
    %v7122 = vadd.s32 %v7118, 1
    %v7123 = vsel %vm7121, %v7122, %v7118
    %v7124 = vadd.s32 %v7119, %v7123
    %v7125 = vadd.s32 %v7124, 536870912
    %v7126 = vshrl.u32 %v7125, 30
    %v7127 = vshll.u32 %v7126, 30
    %v7128 = vsub.s32 %v7124, %v7127
    %vm7129 = vcmp.lt.s32.totalorder %v7128, 0
    %v7130 = vsub.s32 0, %v7128
    %v7131 = vsel %vm7129, %v7130, %v7128
    %v7132 = vclz %v7131
    %v7133 = vsub.s32 %v7132, 2
    %vm7134 = vcmp.gt.s32.totalorder 0, %v7133
    %v7135 = vsel %vm7134, 0, %v7133
    %v7136 = vsub.s32 32, %v7135
    %v7137 = vshll.u32 %v7128, %v7135
    %v7138 = vshrl.u32 %v7120, %v7136
    %v7139 = vor.u32 %v7137, %v7138
    %v7140 = vsub.s32 4294967266, %v7135
    %v7141 = vadd.s32 %v7140, 127
    %v7142 = vshll.u32 %v7141, 23
    %v7143 = vor.u32 4788187, %v7142
    %v7144 = vand.u32 2147483647, %v7143
    %v7146 = vcvt.s32.f32 %v7139
    %v7147 = vmul.f32 %v7146, %v7144
    %v7148 = vxor.u32 %v7147, 2147483648
    %v7149 = vsel %vm7066, %v7148, %v7147
    %v7150 = vsub.s32 4, %v7126
    %v7151 = vsel %vm7066, %v7150, %v7126
    %v7152 = vsel %vm7065, %v5915, %v7149
    %v7153 = vsel %vm7065, 0, %v7151
    %v7154 = vcosq.f32.pop %v7152
    %v7155 = vsinq.f32.pop %v7152
    %vm7156 = vweird.f32 %v5915
    %v7157 = vadd.s32 %v7153, 3
    %v7158 = vand.u32 %v7157, 3
    %vm7159 = vcmp.lt.s32.totalorder %v7158, 2
    %vm7160 = vcmp.eq.s32.totalorder %v7158, 0
    %v7161 = vxor.u32 %v7155, 2147483648
    %v7162 = vsel %vm7160, %v7154, %v7161
    %vm7163 = vcmp.eq.s32.totalorder %v7158, 2
    %v7164 = vxor.u32 %v7154, 2147483648
    %v7165 = vsel %vm7163, %v7164, %v7155
    %v7166 = vsel %vm7159, %v7162, %v7165
    %v7167 = vsel %vm7156, nan, %v7166
    %v7168 = vand.u32 2147483647, %v5916
    %vm7169 = vcmp.le.f32.partialorder %v7168, 0.7853982
    %vm7170 = vcmp.lt.s32.totalorder %v5916, 0
    %v7171 = vand.u32 %v5916, 2139095040
    %v7172 = vshrl.u32 %v7171, 23
    %v7173 = vsub.s32 %v7172, 127
    %v7174 = vand.u32 2147483647, %v5916
    %v7175 = vand.u32 %v7174, 8388607
    %v7176 = vor.u32 %v7175, 8388608
    %v7177 = vsub.s32 0, %v7176
    %v7178 = vadd.s32 %v7173, 1
    %vm7179 = vcmp.gt.s32.totalorder %v7178, 0
    %v7180 = vsel %vm7179, %v7178, 0
    %v7181 = vshrl.u32 %v7180, 5
    %v7182 = vand.u32 %v7180, 31
    %v7183 = vsub.s32 32, %v7182
    %v7184 = vshrl.u32 683565275, %v7183
    %v7185 = vshll.u32 683565275, %v7182
    %v7186 = vshrl.u32 2475754826, %v7183
    %v7187 = vor.u32 %v7185, %v7186
    %v7188 = vshll.u32 2475754826, %v7182
    %v7189 = vshrl.u32 2131351028, %v7183
    %v7190 = vor.u32 %v7188, %v7189
    %v7191 = vshll.u32 2131351028, %v7182
    %v7192 = vshrl.u32 2102212464, %v7183
    %v7193 = vor.u32 %v7191, %v7192
    %v7194 = vshll.u32 2102212464, %v7182
    %v7195 = vshrl.u32 920167782, %v7183
    %v7196 = vor.u32 %v7194, %v7195
    %v7197 = vshll.u32 920167782, %v7182
    %v7198 = vshrl.u32 1326507024, %v7183
    %v7199 = vor.u32 %v7197, %v7198
    %vm7200 = vcmp.lt.s32.totalorder %v7181, 1
    %vm7201 = vcmp.lt.s32.totalorder %v7181, 2
    %vm7202 = vcmp.lt.s32.totalorder %v7181, 3
    %vm7203 = vcmp.lt.s32.totalorder %v7181, 4
    %v7204 = vsel %vm7200, %v7184, %v7187
    %v7205 = vsel %vm7203, %v7193, 2102212464
    %v7206 = vsel %vm7202, %v7190, %v7205
    %v7207 = vsel %vm7201, %v7204, %v7206
    %v7208 = vsel %vm7200, %v7187, %v7190
    %v7209 = vsel %vm7203, %v7196, 920167782
    %v7210 = vsel %vm7202, %v7193, %v7209
    %v7211 = vsel %vm7201, %v7208, %v7210
    %v7212 = vsel %vm7200, %v7190, %v7193
    %v7213 = vsel %vm7203, %v7199, 1326507024
    %v7214 = vsel %vm7202, %v7196, %v7213
    %v7215 = vsel %vm7201, %v7212, %v7214
    %v7216 = vshll.u32 %v7176, 8
    %v7217 = vmul.u32.u64.compose %v7216, %v7215
    %v7218 = vextract.low.u32 %v7217
    %v7219 = vextract.high.u32 %v7217
    %v7220 = vmul.u32.u64.compose %v7216, %v7211
    %v7221 = vextract.low.u32 %v7220
    %v7222 = vextract.high.u32 %v7220
    %v7223 = vmul.u32 %v7216, %v7207
    %v7224 = vadd.s32 %v7219, %v7221
    %vm7225 = vc.u32 %v7219, %v7221
    %v7226 = vadd.s32 %v7222, 1
    %v7227 = vsel %vm7225, %v7226, %v7222
    %v7228 = vadd.s32 %v7223, %v7227
    %v7229 = vadd.s32 %v7228, 536870912
    %v7230 = vshrl.u32 %v7229, 30
    %v7231 = vshll.u32 %v7230, 30
    %v7232 = vsub.s32 %v7228, %v7231
    %vm7233 = vcmp.lt.s32.totalorder %v7232, 0
    %v7234 = vsub.s32 0, %v7232
    %v7235 = vsel %vm7233, %v7234, %v7232
    %v7236 = vclz %v7235
    %v7237 = vsub.s32 %v7236, 2
    %vm7238 = vcmp.gt.s32.totalorder 0, %v7237
    %v7239 = vsel %vm7238, 0, %v7237
    %v7240 = vsub.s32 32, %v7239
    %v7241 = vshll.u32 %v7232, %v7239
    %v7242 = vshrl.u32 %v7224, %v7240
    %v7243 = vor.u32 %v7241, %v7242
    %v7244 = vsub.s32 4294967266, %v7239
    %v7245 = vadd.s32 %v7244, 127
    %v7246 = vshll.u32 %v7245, 23
    %v7247 = vor.u32 4788187, %v7246
    %v7248 = vand.u32 2147483647, %v7247
    %v7250 = vcvt.s32.f32 %v7243
    %v7251 = vmul.f32 %v7250, %v7248
    %v7252 = vxor.u32 %v7251, 2147483648
    %v7253 = vsel %vm7170, %v7252, %v7251
    %v7254 = vsub.s32 4, %v7230
    %v7255 = vsel %vm7170, %v7254, %v7230
    %v7256 = vsel %vm7169, %v5916, %v7253
    %v7257 = vsel %vm7169, 0, %v7255
    %v7258 = vcosq.f32.pop %v7256
    %v7259 = vsinq.f32.pop %v7256
    %vm7260 = vweird.f32 %v5916
    %v7261 = vadd.s32 %v7257, 3
    %v7262 = vand.u32 %v7261, 3
    %vm7263 = vcmp.lt.s32.totalorder %v7262, 2
    %vm7264 = vcmp.eq.s32.totalorder %v7262, 0
    %v7265 = vxor.u32 %v7259, 2147483648
    %v7266 = vsel %vm7264, %v7258, %v7265
    %vm7267 = vcmp.eq.s32.totalorder %v7262, 2
    %v7268 = vxor.u32 %v7258, 2147483648
    %v7269 = vsel %vm7267, %v7268, %v7259
    %v7270 = vsel %vm7263, %v7266, %v7269
    %v7271 = vsel %vm7260, nan, %v7270
    %v7272 = vand.u32 2147483647, %v5917
    %vm7273 = vcmp.le.f32.partialorder %v7272, 0.7853982
    %vm7274 = vcmp.lt.s32.totalorder %v5917, 0
    %v7275 = vand.u32 %v5917, 2139095040
    %v7276 = vshrl.u32 %v7275, 23
    %v7277 = vsub.s32 %v7276, 127
    %v7278 = vand.u32 2147483647, %v5917
    %v7279 = vand.u32 %v7278, 8388607
    %v7280 = vor.u32 %v7279, 8388608
    %v7281 = vsub.s32 0, %v7280
    %v7282 = vadd.s32 %v7277, 1
    %vm7283 = vcmp.gt.s32.totalorder %v7282, 0
    %v7284 = vsel %vm7283, %v7282, 0
    %v7285 = vshrl.u32 %v7284, 5
    %v7286 = vand.u32 %v7284, 31
    %v7287 = vsub.s32 32, %v7286
    %v7288 = vshrl.u32 683565275, %v7287
    %v7289 = vshll.u32 683565275, %v7286
    %v7290 = vshrl.u32 2475754826, %v7287
    %v7291 = vor.u32 %v7289, %v7290
    %v7292 = vshll.u32 2475754826, %v7286
    %v7293 = vshrl.u32 2131351028, %v7287
    %v7294 = vor.u32 %v7292, %v7293
    %v7295 = vshll.u32 2131351028, %v7286
    %v7296 = vshrl.u32 2102212464, %v7287
    %v7297 = vor.u32 %v7295, %v7296
    %v7298 = vshll.u32 2102212464, %v7286
    %v7299 = vshrl.u32 920167782, %v7287
    %v7300 = vor.u32 %v7298, %v7299
    %v7301 = vshll.u32 920167782, %v7286
    %v7302 = vshrl.u32 1326507024, %v7287
    %v7303 = vor.u32 %v7301, %v7302
    %vm7304 = vcmp.lt.s32.totalorder %v7285, 1
    %vm7305 = vcmp.lt.s32.totalorder %v7285, 2
    %vm7306 = vcmp.lt.s32.totalorder %v7285, 3
    %vm7307 = vcmp.lt.s32.totalorder %v7285, 4
    %v7308 = vsel %vm7304, %v7288, %v7291
    %v7309 = vsel %vm7307, %v7297, 2102212464
    %v7310 = vsel %vm7306, %v7294, %v7309
    %v7311 = vsel %vm7305, %v7308, %v7310
    %v7312 = vsel %vm7304, %v7291, %v7294
    %v7313 = vsel %vm7307, %v7300, 920167782
    %v7314 = vsel %vm7306, %v7297, %v7313
    %v7315 = vsel %vm7305, %v7312, %v7314
    %v7316 = vsel %vm7304, %v7294, %v7297
    %v7317 = vsel %vm7307, %v7303, 1326507024
    %v7318 = vsel %vm7306, %v7300, %v7317
    %v7319 = vsel %vm7305, %v7316, %v7318
    %v7320 = vshll.u32 %v7280, 8
    %v7321 = vmul.u32.u64.compose %v7320, %v7319
    %v7322 = vextract.low.u32 %v7321
    %v7323 = vextract.high.u32 %v7321
    %v7324 = vmul.u32.u64.compose %v7320, %v7315
    %v7325 = vextract.low.u32 %v7324
    %v7326 = vextract.high.u32 %v7324
    %v7327 = vmul.u32 %v7320, %v7311
    %v7328 = vadd.s32 %v7323, %v7325
    %vm7329 = vc.u32 %v7323, %v7325
    %v7330 = vadd.s32 %v7326, 1
    %v7331 = vsel %vm7329, %v7330, %v7326
    %v7332 = vadd.s32 %v7327, %v7331
    %v7333 = vadd.s32 %v7332, 536870912
    %v7334 = vshrl.u32 %v7333, 30
    %v7335 = vshll.u32 %v7334, 30
    %v7336 = vsub.s32 %v7332, %v7335
    %vm7337 = vcmp.lt.s32.totalorder %v7336, 0
    %v7338 = vsub.s32 0, %v7336
    %v7339 = vsel %vm7337, %v7338, %v7336
    %v7340 = vclz %v7339
    %v7341 = vsub.s32 %v7340, 2
    %vm7342 = vcmp.gt.s32.totalorder 0, %v7341
    %v7343 = vsel %vm7342, 0, %v7341
    %v7344 = vsub.s32 32, %v7343
    %v7345 = vshll.u32 %v7336, %v7343
    %v7346 = vshrl.u32 %v7328, %v7344
    %v7347 = vor.u32 %v7345, %v7346
    %v7348 = vsub.s32 4294967266, %v7343
    %v7349 = vadd.s32 %v7348, 127
    %v7350 = vshll.u32 %v7349, 23
    %v7351 = vor.u32 4788187, %v7350
    %v7352 = vand.u32 2147483647, %v7351
    %v7354 = vcvt.s32.f32 %v7347
    %v7355 = vmul.f32 %v7354, %v7352
    %v7356 = vxor.u32 %v7355, 2147483648
    %v7357 = vsel %vm7274, %v7356, %v7355
    %v7358 = vsub.s32 4, %v7334
    %v7359 = vsel %vm7274, %v7358, %v7334
    %v7360 = vsel %vm7273, %v5917, %v7357
    %v7361 = vsel %vm7273, 0, %v7359
    %v7362 = vcosq.f32.pop %v7360
    %v7363 = vsinq.f32.pop %v7360
    %vm7364 = vweird.f32 %v5917
    %v7365 = vadd.s32 %v7361, 3
    %v7366 = vand.u32 %v7365, 3
    %vm7367 = vcmp.lt.s32.totalorder %v7366, 2
    %vm7368 = vcmp.eq.s32.totalorder %v7366, 0
    %v7369 = vxor.u32 %v7363, 2147483648
    %v7370 = vsel %vm7368, %v7362, %v7369
    %vm7371 = vcmp.eq.s32.totalorder %v7366, 2
    %v7372 = vxor.u32 %v7362, 2147483648
    %v7373 = vsel %vm7371, %v7372, %v7363
    %v7374 = vsel %vm7367, %v7370, %v7373
    %v7375 = vsel %vm7364, nan, %v7374
    %v7376 = vand.u32 2147483647, %v5918
    %vm7377 = vcmp.le.f32.partialorder %v7376, 0.7853982
    %vm7378 = vcmp.lt.s32.totalorder %v5918, 0
    %v7379 = vand.u32 %v5918, 2139095040
    %v7380 = vshrl.u32 %v7379, 23
    %v7381 = vsub.s32 %v7380, 127
    %v7382 = vand.u32 2147483647, %v5918
    %v7383 = vand.u32 %v7382, 8388607
    %v7384 = vor.u32 %v7383, 8388608
    %v7385 = vsub.s32 0, %v7384
    %v7386 = vadd.s32 %v7381, 1
    %vm7387 = vcmp.gt.s32.totalorder %v7386, 0
    %v7388 = vsel %vm7387, %v7386, 0
    %v7389 = vshrl.u32 %v7388, 5
    %v7390 = vand.u32 %v7388, 31
    %v7391 = vsub.s32 32, %v7390
    %v7392 = vshrl.u32 683565275, %v7391
    %v7393 = vshll.u32 683565275, %v7390
    %v7394 = vshrl.u32 2475754826, %v7391
    %v7395 = vor.u32 %v7393, %v7394
    %v7396 = vshll.u32 2475754826, %v7390
    %v7397 = vshrl.u32 2131351028, %v7391
    %v7398 = vor.u32 %v7396, %v7397
    %v7399 = vshll.u32 2131351028, %v7390
    %v7400 = vshrl.u32 2102212464, %v7391
    %v7401 = vor.u32 %v7399, %v7400
    %v7402 = vshll.u32 2102212464, %v7390
    %v7403 = vshrl.u32 920167782, %v7391
    %v7404 = vor.u32 %v7402, %v7403
    %v7405 = vshll.u32 920167782, %v7390
    %v7406 = vshrl.u32 1326507024, %v7391
    %v7407 = vor.u32 %v7405, %v7406
    %vm7408 = vcmp.lt.s32.totalorder %v7389, 1
    %vm7409 = vcmp.lt.s32.totalorder %v7389, 2
    %vm7410 = vcmp.lt.s32.totalorder %v7389, 3
    %vm7411 = vcmp.lt.s32.totalorder %v7389, 4
    %v7412 = vsel %vm7408, %v7392, %v7395
    %v7413 = vsel %vm7411, %v7401, 2102212464
    %v7414 = vsel %vm7410, %v7398, %v7413
    %v7415 = vsel %vm7409, %v7412, %v7414
    %v7416 = vsel %vm7408, %v7395, %v7398
    %v7417 = vsel %vm7411, %v7404, 920167782
    %v7418 = vsel %vm7410, %v7401, %v7417
    %v7419 = vsel %vm7409, %v7416, %v7418
    %v7420 = vsel %vm7408, %v7398, %v7401
    %v7421 = vsel %vm7411, %v7407, 1326507024
    %v7422 = vsel %vm7410, %v7404, %v7421
    %v7423 = vsel %vm7409, %v7420, %v7422
    %v7424 = vshll.u32 %v7384, 8
    %v7425 = vmul.u32.u64.compose %v7424, %v7423
    %v7426 = vextract.low.u32 %v7425
    %v7427 = vextract.high.u32 %v7425
    %v7428 = vmul.u32.u64.compose %v7424, %v7419
    %v7429 = vextract.low.u32 %v7428
    %v7430 = vextract.high.u32 %v7428
    %v7431 = vmul.u32 %v7424, %v7415
    %v7432 = vadd.s32 %v7427, %v7429
    %vm7433 = vc.u32 %v7427, %v7429
    %v7434 = vadd.s32 %v7430, 1
    %v7435 = vsel %vm7433, %v7434, %v7430
    %v7436 = vadd.s32 %v7431, %v7435
    %v7437 = vadd.s32 %v7436, 536870912
    %v7438 = vshrl.u32 %v7437, 30
    %v7439 = vshll.u32 %v7438, 30
    %v7440 = vsub.s32 %v7436, %v7439
    %vm7441 = vcmp.lt.s32.totalorder %v7440, 0
    %v7442 = vsub.s32 0, %v7440
    %v7443 = vsel %vm7441, %v7442, %v7440
    %v7444 = vclz %v7443
    %v7445 = vsub.s32 %v7444, 2
    %vm7446 = vcmp.gt.s32.totalorder 0, %v7445
    %v7447 = vsel %vm7446, 0, %v7445
    %v7448 = vsub.s32 32, %v7447
    %v7449 = vshll.u32 %v7440, %v7447
    %v7450 = vshrl.u32 %v7432, %v7448
    %v7451 = vor.u32 %v7449, %v7450
    %v7452 = vsub.s32 4294967266, %v7447
    %v7453 = vadd.s32 %v7452, 127
    %v7454 = vshll.u32 %v7453, 23
    %v7455 = vor.u32 4788187, %v7454
    %v7456 = vand.u32 2147483647, %v7455
    %v7458 = vcvt.s32.f32 %v7451
    %v7459 = vmul.f32 %v7458, %v7456
    %v7460 = vxor.u32 %v7459, 2147483648
    %v7461 = vsel %vm7378, %v7460, %v7459
    %v7462 = vsub.s32 4, %v7438
    %v7463 = vsel %vm7378, %v7462, %v7438
    %v7464 = vsel %vm7377, %v5918, %v7461
    %v7465 = vsel %vm7377, 0, %v7463
    %v7466 = vcosq.f32.pop %v7464
    %v7467 = vsinq.f32.pop %v7464
    %vm7468 = vweird.f32 %v5918
    %v7469 = vadd.s32 %v7465, 3
    %v7470 = vand.u32 %v7469, 3
    %vm7471 = vcmp.lt.s32.totalorder %v7470, 2
    %vm7472 = vcmp.eq.s32.totalorder %v7470, 0
    %v7473 = vxor.u32 %v7467, 2147483648
    %v7474 = vsel %vm7472, %v7466, %v7473
    %vm7475 = vcmp.eq.s32.totalorder %v7470, 2
    %v7476 = vxor.u32 %v7466, 2147483648
    %v7477 = vsel %vm7475, %v7476, %v7467
    %v7478 = vsel %vm7471, %v7474, %v7477
    %v7479 = vsel %vm7468, nan, %v7478
    %v7480 = vand.u32 2147483647, %v5919
    %vm7481 = vcmp.le.f32.partialorder %v7480, 0.7853982
    %vm7482 = vcmp.lt.s32.totalorder %v5919, 0
    %v7483 = vand.u32 %v5919, 2139095040
    %v7484 = vshrl.u32 %v7483, 23
    %v7485 = vsub.s32 %v7484, 127
    %v7486 = vand.u32 2147483647, %v5919
    %v7487 = vand.u32 %v7486, 8388607
    %v7488 = vor.u32 %v7487, 8388608
    %v7489 = vsub.s32 0, %v7488
    %v7490 = vadd.s32 %v7485, 1
    %vm7491 = vcmp.gt.s32.totalorder %v7490, 0
    %v7492 = vsel %vm7491, %v7490, 0
    %v7493 = vshrl.u32 %v7492, 5
    %v7494 = vand.u32 %v7492, 31
    %v7495 = vsub.s32 32, %v7494
    %v7496 = vshrl.u32 683565275, %v7495
    %v7497 = vshll.u32 683565275, %v7494
    %v7498 = vshrl.u32 2475754826, %v7495
    %v7499 = vor.u32 %v7497, %v7498
    %v7500 = vshll.u32 2475754826, %v7494
    %v7501 = vshrl.u32 2131351028, %v7495
    %v7502 = vor.u32 %v7500, %v7501
    %v7503 = vshll.u32 2131351028, %v7494
    %v7504 = vshrl.u32 2102212464, %v7495
    %v7505 = vor.u32 %v7503, %v7504
    %v7506 = vshll.u32 2102212464, %v7494
    %v7507 = vshrl.u32 920167782, %v7495
    %v7508 = vor.u32 %v7506, %v7507
    %v7509 = vshll.u32 920167782, %v7494
    %v7510 = vshrl.u32 1326507024, %v7495
    %v7511 = vor.u32 %v7509, %v7510
    %vm7512 = vcmp.lt.s32.totalorder %v7493, 1
    %vm7513 = vcmp.lt.s32.totalorder %v7493, 2
    %vm7514 = vcmp.lt.s32.totalorder %v7493, 3
    %vm7515 = vcmp.lt.s32.totalorder %v7493, 4
    %v7516 = vsel %vm7512, %v7496, %v7499
    %v7517 = vsel %vm7515, %v7505, 2102212464
    %v7518 = vsel %vm7514, %v7502, %v7517
    %v7519 = vsel %vm7513, %v7516, %v7518
    %v7520 = vsel %vm7512, %v7499, %v7502
    %v7521 = vsel %vm7515, %v7508, 920167782
    %v7522 = vsel %vm7514, %v7505, %v7521
    %v7523 = vsel %vm7513, %v7520, %v7522
    %v7524 = vsel %vm7512, %v7502, %v7505
    %v7525 = vsel %vm7515, %v7511, 1326507024
    %v7526 = vsel %vm7514, %v7508, %v7525
    %v7527 = vsel %vm7513, %v7524, %v7526
    %v7528 = vshll.u32 %v7488, 8
    %v7529 = vmul.u32.u64.compose %v7528, %v7527
    %v7530 = vextract.low.u32 %v7529
    %v7531 = vextract.high.u32 %v7529
    %v7532 = vmul.u32.u64.compose %v7528, %v7523
    %v7533 = vextract.low.u32 %v7532
    %v7534 = vextract.high.u32 %v7532
    %v7535 = vmul.u32 %v7528, %v7519
    %v7536 = vadd.s32 %v7531, %v7533
    %vm7537 = vc.u32 %v7531, %v7533
    %v7538 = vadd.s32 %v7534, 1
    %v7539 = vsel %vm7537, %v7538, %v7534
    %v7540 = vadd.s32 %v7535, %v7539
    %v7541 = vadd.s32 %v7540, 536870912
    %v7542 = vshrl.u32 %v7541, 30
    %v7543 = vshll.u32 %v7542, 30
    %v7544 = vsub.s32 %v7540, %v7543
    %vm7545 = vcmp.lt.s32.totalorder %v7544, 0
    %v7546 = vsub.s32 0, %v7544
    %v7547 = vsel %vm7545, %v7546, %v7544
    %v7548 = vclz %v7547
    %v7549 = vsub.s32 %v7548, 2
    %vm7550 = vcmp.gt.s32.totalorder 0, %v7549
    %v7551 = vsel %vm7550, 0, %v7549
    %v7552 = vsub.s32 32, %v7551
    %v7553 = vshll.u32 %v7544, %v7551
    %v7554 = vshrl.u32 %v7536, %v7552
    %v7555 = vor.u32 %v7553, %v7554
    %v7556 = vsub.s32 4294967266, %v7551
    %v7557 = vadd.s32 %v7556, 127
    %v7558 = vshll.u32 %v7557, 23
    %v7559 = vor.u32 4788187, %v7558
    %v7560 = vand.u32 2147483647, %v7559
    %v7562 = vcvt.s32.f32 %v7555
    %v7563 = vmul.f32 %v7562, %v7560
    %v7564 = vxor.u32 %v7563, 2147483648
    %v7565 = vsel %vm7482, %v7564, %v7563
    %v7566 = vsub.s32 4, %v7542
    %v7567 = vsel %vm7482, %v7566, %v7542
    %v7568 = vsel %vm7481, %v5919, %v7565
    %v7569 = vsel %vm7481, 0, %v7567
    %v7570 = vcosq.f32.pop %v7568
    %v7571 = vsinq.f32.pop %v7568
    %vm7572 = vweird.f32 %v5919
    %v7573 = vadd.s32 %v7569, 3
    %v7574 = vand.u32 %v7573, 3
    %vm7575 = vcmp.lt.s32.totalorder %v7574, 2
    %vm7576 = vcmp.eq.s32.totalorder %v7574, 0
    %v7577 = vxor.u32 %v7571, 2147483648
    %v7578 = vsel %vm7576, %v7570, %v7577
    %vm7579 = vcmp.eq.s32.totalorder %v7574, 2
    %v7580 = vxor.u32 %v7570, 2147483648
    %v7581 = vsel %vm7579, %v7580, %v7571
    %v7582 = vsel %vm7575, %v7578, %v7581
    %v7583 = vsel %vm7572, nan, %v7582
    %7584 = vst [vmem:[%s5860 + $0x80] sm:$0xff] %v6023
    %7585 = vst [vmem:[%s5860 + $0x88] sm:$0xff] %v6127
    %7586 = vst [vmem:[%s5860 + $0x90] sm:$0xff] %v6231
    %7587 = vst [vmem:[%s5860 + $0x98] sm:$0xff] %v6335
    %7588 = vst [vmem:[%s5860 + $0xa0] sm:$0xff] %v6439
    %7589 = vst [vmem:[%s5860 + $0xa8] sm:$0xff] %v6543
    %7590 = vst [vmem:[%s5860 + $0xb0] sm:$0xff] %v6647
    %7591 = vst [vmem:[%s5860 + $0xb8] sm:$0xff] %v6751
    %7592 = vst [vmem:[%s5860 + $0xc0] sm:$0xff] %v6855
    %7593 = vst [vmem:[%s5860 + $0xc8] sm:$0xff] %v6959
    %7594 = vst [vmem:[%s5860 + $0xd0] sm:$0xff] %v7063
    %7595 = vst [vmem:[%s5860 + $0xd8] sm:$0xff] %v7167
    %7596 = vst [vmem:[%s5860 + $0xe0] sm:$0xff] %v7271
    %7597 = vst [vmem:[%s5860 + $0xe8] sm:$0xff] %v7375
    %7598 = vst [vmem:[%s5860 + $0xf0] sm:$0xff] %v7479
    %7599 = vst [vmem:[%s5860 + $0xf8] sm:$0xff] %v7583
    // Predicated region
    $region22: #{tpu_custom_call.1} parent=1 // pred_check
      _
    $region23: #{tpu_custom_call.1} parent=1 // pred_check_branch
      %7601 = sbr.rel (0) target = $region25
    $region24: #{tpu_custom_call.1} parent=1 // pred_region
      %s7603 = ssub.s32 8192, 8192
      %7604 = vsyncadd [#allocation4], %s7603
      %s7605 = sshll.u32 [#allocation3], 4
      %s7606 = int_to_ptr.vmem [resolvable:$true] %s7605
      %7611 = dma.vmem_to_hbm [thread:$0]  %s7606, 8192, %s5, [#allocation4], 256, 256, 16
    $region25: #{tpu_custom_call.1} parent=1 // pred_fallthru
      _
    // Predicated region
    $region26: #{tpu_custom_call.1} parent=1 // pred_check
      _
    $region27: #{tpu_custom_call.1} parent=1 // pred_check_branch
      %7613 = sbr.rel (0) target = $region29
    $region28: #{tpu_custom_call.1} parent=1 // pred_region
      %7614 = dma.done [#allocation4], 8192
    $region29: #{tpu_custom_call.1} parent=1 // pred_fallthru
      _
    %7615 = vsyncpa [#allocation4], 1

</llo_original>
